<compile_context>
chip_gen: v5e
topology: v5e:2x2
jax: 0.10.0
libtpu: 0.0.40
codegen_flags: <defaults>
</compile_context>

<pallas_src>
import functools

import jax
import jax.numpy as jnp
from jax import lax
from jax.experimental import pallas as pl
from jax.experimental.pallas import tpu as pltpu


# ----------------------------------------------------------------------------
# Small helpers
# ----------------------------------------------------------------------------
def _round_up(x, m):
    return (x + m - 1) // m * m


def _vmem_capacity_bytes():
    # v5e/v6e: 128 MiB per TensorCore; v7x: 64 MiB.  Conservative fallback if the query fails.
    try:
        return int(pltpu.get_tpu_info().vmem_capacity_bytes)
    except Exception:
        return 64 * (1 << 20)


def _use_fused_recurrence():
    # Block-diagonal (2B,2Hp)x(2Hp,3Hp) recurrent matmul fills the 256-wide MXU on v6e/v7x;
    # v5e's 128-K MXUs prefer the two independent small dots.
    try:
        kind = jax.devices()[0].device_kind.lower()
    except Exception:
        return True
    return not ("v5 lite" in kind or "v5e" in kind or "v5litepod" in kind)


def _pick_time_chunk(T, Bp, Hp, E, vmem_cap, requested=None):
    """Largest divisor of T whose per-chunk VMEM footprint fits ~40% of per-core VMEM.

    The f32 gi scratch (2 * Tc*Bp*3Hp*4B) is the dominant term at large Tc."""
    budget = (2 * vmem_cap) // 5

    def footprint(tc):
        gi = 2 * tc * Bp * 3 * Hp * 4                        # f32 gate-preactivation scratch
        xin = 2 * 2 * 2 * tc * Bp * max(E, Hp) * 2           # worst case: 2 streams x 2 orders x 2 bufs
        out = 2 * 2 * tc * Bp * Hp * 2                       # 2 seq outputs x 2 buffers (bf16)
        wts = 2 * 2 * (2 * Hp * 3 * Hp + Hp * 3 * Hp) * 2    # resident weights (double-buffered)
        return gi + xin + out + wts + (4 << 20)

    tc = T if requested is None else max(1, min(T, int(requested)))
    while tc > 1 and (T % tc != 0 or footprint(tc) > budget):
        tc -= 1
    return tc


# ----------------------------------------------------------------------------
# Pallas kernel factory: one bidirectional GRU layer, time-chunked sequential grid
# ----------------------------------------------------------------------------
def _make_bigru_kernel(*, num_x, single_chunk, emit_seq, fuse_rec, Tc, Bp, Hp):
    """num_x: 1 (layer 0: embeddings) or 2 (deeper layers: separate fwd/bwd feature streams).
    single_chunk: grid has a single step -> the reversed-order input copies are dropped.
    emit_seq: write the per-time-step outputs (False for the final layer).
    fuse_rec: fuse both directions' recurrent matmuls into one block-diagonal MXU dot."""
    nxr = num_x * (1 if single_chunk else 2)

    def kernel(*refs):
        it = iter(refs)
        x_refs = [next(it) for _ in range(nxr)]
        w_in_f_ref = next(it)
        w_in_b_ref = next(it)
        b_in_f_ref = next(it)
        b_in_b_ref = next(it)
        w_rec_ref = next(it)                 # (2Hp, 3Hp): [w_rec_fwd ; w_rec_bwd]
        b_hn_f_ref = next(it)
        b_hn_b_ref = next(it)
        if emit_seq:
            outf_ref = next(it)
            outb_ref = next(it)
        else:
            outf_ref = outb_ref = None
        hlastf_ref = next(it)
        hlastb_ref = next(it)
        gif_scr = next(it)
        gib_scr = next(it)
        h_scr = next(it)                     # (2*Bp, Hp) f32, carried across grid steps

        c = pl.program_id(0)
        nc = pl.num_programs(0)

        @pl.when(c == 0)
        def _():
            h_scr[...] = jnp.zeros_like(h_scr)

        # ---- hoisted input -> gates projection for the whole chunk (MXU matmuls) ----
        if num_x == 1:
            xf = x_refs[0][...]
            xb = xf if single_chunk else x_refs[1][...]
            gif_scr[...] = jnp.dot(xf, w_in_f_ref[...],
                                   preferred_element_type=jnp.float32) + b_in_f_ref[...]
            gib_scr[...] = jnp.dot(xb, w_in_b_ref[...],
                                   preferred_element_type=jnp.float32) + b_in_b_ref[...]
        else:
            xf_a = x_refs[0][...]
            xf_b = x_refs[1][...]
            if single_chunk:
                xb_a, xb_b = xf_a, xf_b
            else:
                xb_a = x_refs[2][...]
                xb_b = x_refs[3][...]
            # Previous layer's [fwd | bwd] concat is folded into two accumulating dots.
            gif_scr[...] = (
                jnp.dot(xf_a, w_in_f_ref[pl.ds(0, Hp), :], preferred_element_type=jnp.float32)
                + jnp.dot(xf_b, w_in_f_ref[pl.ds(Hp, Hp), :], preferred_element_type=jnp.float32)
                + b_in_f_ref[...])
            gib_scr[...] = (
                jnp.dot(xb_a, w_in_b_ref[pl.ds(0, Hp), :], preferred_element_type=jnp.float32)
                + jnp.dot(xb_b, w_in_b_ref[pl.ds(Hp, Hp), :], preferred_element_type=jnp.float32)
                + b_in_b_ref[...])

        # ---- loop invariants hoisted out of the recurrence ----
        bhn_f = jnp.broadcast_to(b_hn_f_ref[...], (Bp, Hp))
        bhn_b = jnp.broadcast_to(b_hn_b_ref[...], (Bp, Hp))
        rdt = w_rec_ref.dtype
        if fuse_rec:
            w_rec = w_rec_ref[...]                               # (2Hp, 3Hp)
            bhn2 = jnp.concatenate([bhn_f, bhn_b], axis=0)       # (2Bp, Hp)
            zero_blk = jnp.zeros((Bp, Hp), jnp.float32)
        else:
            w_rec_f = w_rec_ref[pl.ds(0, Hp), :]
            w_rec_b = w_rec_ref[pl.ds(Hp, Hp), :]

        def gates(gi, gh, bhn, h_prev):
            # gate blocks along lanes: [r | z | n], each Hp wide; b_hn must stay inside r*( ).
            r = jax.nn.sigmoid(gi[:, :Hp] + gh[:, :Hp])
            z = jax.nn.sigmoid(gi[:, Hp:2 * Hp] + gh[:, Hp:2 * Hp])
            n = jnp.tanh(gi[:, 2 * Hp:] + r * (gh[:, 2 * Hp:] + bhn))
            return (1.0 - z) * n + z * h_prev

        def one_step(s, h):
            # h: (2*Bp, Hp) f32; rows [0:Bp] = forward state, rows [Bp:] = backward state.
            off_f = s * Bp
            off_b = (Tc - 1 - s) * Bp
            if not isinstance(s, int):
                off_f = pl.multiple_of(off_f, 8)
                off_b = pl.multiple_of(off_b, 8)
            gi_f = gif_scr[pl.ds(off_f, Bp), :]                  # (Bp, 3Hp)
            gi_b = gib_scr[pl.ds(off_b, Bp), :]
            if fuse_rec:
                # one block-diagonal (2Bp, 2Hp) x (2Hp, 3Hp) MXU matmul for both directions
                lhs = jnp.concatenate(
                    [jnp.concatenate([h[:Bp], zero_blk], axis=1),
                     jnp.concatenate([zero_blk, h[Bp:]], axis=1)], axis=0).astype(rdt)
                gh = jnp.dot(lhs, w_rec, preferred_element_type=jnp.float32)   # (2Bp, 3Hp)
                h_new = gates(jnp.concatenate([gi_f, gi_b], axis=0), gh, bhn2, h)
            else:
                gh_f = jnp.dot(h[:Bp].astype(rdt), w_rec_f, preferred_element_type=jnp.float32)
                gh_b = jnp.dot(h[Bp:].astype(rdt), w_rec_b, preferred_element_type=jnp.float32)
                h_new = jnp.concatenate([gates(gi_f, gh_f, bhn_f, h[:Bp]),
                                         gates(gi_b, gh_b, bhn_b, h[Bp:])], axis=0)
            if emit_seq:
                outf_ref[s] = h_new[:Bp].astype(outf_ref.dtype)
                outb_ref[Tc - 1 - s] = h_new[Bp:].astype(outb_ref.dtype)
            return h_new

        h = h_scr[...]
        if Tc <= 8:
            for s in range(Tc):                                  # full unroll for tiny chunks
                h = one_step(s, h)
        else:
            unroll = 4 if Tc % 4 == 0 else (2 if Tc % 2 == 0 else 1)

            def body(i, hh):
                for u in range(unroll):
                    hh = one_step(i * unroll + u, hh)
                return hh

            h = lax.fori_loop(0, Tc // unroll, body, h)
        h_scr[...] = h

        @pl.when(c == nc - 1)
        def _():
            hlastf_ref[...] = h[:Bp]
            hlastb_ref[...] = h[Bp:]

    return kernel


# ----------------------------------------------------------------------------
# pallas_call wrapper for one bidirectional layer
# ----------------------------------------------------------------------------
def bigru_layer(x_list, lp, *, T, Bp, Hp, Tc, emit_seq, fuse_rec, vmem_cap):
    """x_list: [x2d (T*Bp, E)] for layer 0, or [out_f2d, out_b2d] ((T*Bp, Hp) each) deeper.
    Returns (out_f, out_b, hlast_f, hlast_b) or (hlast_f, hlast_b) when emit_seq=False."""
    num_x = len(x_list)
    nc = T // Tc
    single_chunk = (nc == 1)
    H3 = 3 * Hp
    const2 = lambda c: (0, 0)

    in_specs, args = [], []
    for x in x_list:                                             # forward-order chunks
        in_specs.append(pl.BlockSpec((Tc * Bp, x.shape[-1]), lambda c: (c, 0)))
        args.append(x)
    if not single_chunk:                                         # reversed-chunk-order copies
        for x in x_list:
            in_specs.append(pl.BlockSpec((Tc * Bp, x.shape[-1]), lambda c: (nc - 1 - c, 0)))
            args.append(x)
    weights = [lp["w_in_f"], lp["w_in_b"], lp["b_in_f"], lp["b_in_b"],
               lp["w_rec"], lp["b_hn_f"], lp["b_hn_b"]]
    for w in weights:
        in_specs.append(pl.BlockSpec(w.shape, const2))
        args.append(w)

    out_specs, out_shape = [], []
    if emit_seq:
        out_specs.append(pl.BlockSpec((Tc, Bp, Hp), lambda c: (c, 0, 0)))
        out_specs.append(pl.BlockSpec((Tc, Bp, Hp), lambda c: (nc - 1 - c, 0, 0)))
        out_shape.append(jax.ShapeDtypeStruct((T, Bp, Hp), jnp.bfloat16))
        out_shape.append(jax.ShapeDtypeStruct((T, Bp, Hp), jnp.bfloat16))
    # hlast relies on resident-output semantics (constant index map + pl.when at the last
    # chunk); the time grid axis must therefore stay "arbitrary".
    out_specs.append(pl.BlockSpec((Bp, Hp), const2))
    out_specs.append(pl.BlockSpec((Bp, Hp), const2))
    out_shape.append(jax.ShapeDtypeStruct((Bp, Hp), jnp.float32))
    out_shape.append(jax.ShapeDtypeStruct((Bp, Hp), jnp.float32))

    scratch_shapes = [
        pltpu.VMEM((Tc * Bp, H3), jnp.float32),      # hoisted gi (forward direction)
        pltpu.VMEM((Tc * Bp, H3), jnp.float32),      # hoisted gi (backward direction)
        pltpu.VMEM((2 * Bp, Hp), jnp.float32),       # running hidden states across chunks
    ]

    # Rough VMEM accounting -> scoped limit derived from the chip's real capacity.
    xin = sum(2 * Tc * Bp * x.shape[-1] * x.dtype.itemsize for x in x_list)
    if not single_chunk:
        xin *= 2
    outb = (2 * 2 * Tc * Bp * Hp * 2) if emit_seq else 0
    wb = 2 * sum(int(w.size) * w.dtype.itemsize for w in weights)
    scr = 2 * Tc * Bp * H3 * 4 + 2 * Bp * Hp * 4 + 2 * 2 * Bp * Hp * 4
    est = xin + outb + wb + scr + (2 << 20)
    vmem_limit = int(min(max(32 << 20, 2 * est), (3 * vmem_cap) // 4))

    kernel = _make_bigru_kernel(num_x=num_x, single_chunk=single_chunk, emit_seq=emit_seq,
                                fuse_rec=fuse_rec, Tc=Tc, Bp=Bp, Hp=Hp)
    return pl.pallas_call(
        kernel,
        grid=(nc,),
        in_specs=in_specs,
        out_specs=tuple(out_specs),
        out_shape=tuple(out_shape),
        scratch_shapes=scratch_shapes,
        compiler_params=pltpu.CompilerParams(
            dimension_semantics=("arbitrary",),
            vmem_limit_bytes=vmem_limit,
        ),
    )(*args)


# ----------------------------------------------------------------------------
# Parameter init (mirrors the nn.Module __init__, PyTorch layout)
# ----------------------------------------------------------------------------
def init_params(key, vocab_size, embedding_dim, hidden_dim, num_layers=2):
    keys = iter(jax.random.split(key, 64))
    k = 1.0 / jnp.sqrt(hidden_dim)

    emb = jax.random.normal(next(keys), (vocab_size, embedding_dim), jnp.float32)
    emb = emb.at[0].set(0.0)  # padding_idx=0

    gru = {}
    for layer in range(num_layers):
        din = embedding_dim if layer == 0 else 2 * hidden_dim
        for direction in range(2):
            gru[(layer, direction)] = dict(
                w_ih=jax.random.uniform(next(keys), (3 * hidden_dim, din), jnp.float32, -k, k),
                w_hh=jax.random.uniform(next(keys), (3 * hidden_dim, hidden_dim), jnp.float32, -k, k),
                b_ih=jax.random.uniform(next(keys), (3 * hidden_dim,), jnp.float32, -k, k),
                b_hh=jax.random.uniform(next(keys), (3 * hidden_dim,), jnp.float32, -k, k),
            )

    dense_w = jax.random.uniform(next(keys), (1, 2 * hidden_dim), jnp.float32, -k, k)
    dense_b = jax.random.uniform(next(keys), (1,), jnp.float32, -k, k)
    return dict(embedding=emb, gru=gru, dense_w=dense_w, dense_b=dense_b)


# ----------------------------------------------------------------------------
# One-time repacking of PyTorch-layout params into the padded kernel layout
# ----------------------------------------------------------------------------
def _pack_direction(w_ih, w_hh, b_ih, b_hh, H, Hp, first_layer, dtype):
    """One (layer, direction): gate blocks [r|z|n], each lane-padded to Hp columns."""
    din = w_ih.shape[1]
    din_k = din if first_layer else 2 * Hp   # deeper layers: rows [0:Hp]=fwd stream, [Hp:2Hp]=bwd
    w_in = jnp.zeros((din_k, 3 * Hp), jnp.float32)
    w_rec = jnp.zeros((Hp, 3 * Hp), jnp.float32)
    b_in = jnp.zeros((1, 3 * Hp), jnp.float32)
    for g in range(3):                       # g: 0=r, 1=z, 2=n (PyTorch gate order)
        wig = w_ih[g * H:(g + 1) * H, :]     # (H, din)
        if first_layer:
            w_in = w_in.at[:, g * Hp:g * Hp + H].set(wig.T)
        else:
            w_in = w_in.at[0:H, g * Hp:g * Hp + H].set(wig[:, 0:H].T)
            w_in = w_in.at[Hp:Hp + H, g * Hp:g * Hp + H].set(wig[:, H:2 * H].T)
        w_rec = w_rec.at[0:H, g * Hp:g * Hp + H].set(w_hh[g * H:(g + 1) * H, :].T)
        bg = b_ih[g * H:(g + 1) * H]
        if g < 2:                            # fold b_hr / b_hz into the hoisted projection bias
            bg = bg + b_hh[g * H:(g + 1) * H]
        b_in = b_in.at[0, g * Hp:g * Hp + H].set(bg)
    b_hn = jnp.zeros((1, Hp), jnp.float32).at[0, 0:H].set(b_hh[2 * H:3 * H])
    return dict(w_in=w_in.astype(dtype), w_rec=w_rec.astype(dtype), b_in=b_in, b_hn=b_hn)


def pack_params(params, dtype=jnp.bfloat16):
    H = params["gru"][(0, 0)]["w_hh"].shape[1]
    Hp = _round_up(H, 128)
    num_layers = 1 + max(l for (l, _) in params["gru"])
    layers = []
    for layer in range(num_layers):
        dirs = []
        for direction in range(2):
            p = params["gru"][(layer, direction)]
            dirs.append(_pack_direction(p["w_ih"], p["w_hh"], p["b_ih"], p["b_hh"],
                                        H, Hp, layer == 0, dtype))
        d_f, d_b = dirs
        layers.append(dict(
            w_in_f=d_f["w_in"], w_in_b=d_b["w_in"],
            b_in_f=d_f["b_in"], b_in_b=d_b["b_in"],
            w_rec=jnp.concatenate([d_f["w_rec"], d_b["w_rec"]], axis=0),   # (2Hp, 3Hp)
            b_hn_f=d_f["b_hn"], b_hn_b=d_b["b_hn"],
        ))
    # Dense head weights padded to match the [fwd Hp | bwd Hp] hidden layout.
    dw = jnp.zeros((2 * Hp, 1), jnp.float32)
    dw = dw.at[0:H, 0].set(params["dense_w"][0, 0:H])
    dw = dw.at[Hp:Hp + H, 0].set(params["dense_w"][0, H:2 * H])
    return dict(embedding=params["embedding"].astype(dtype),
                layers=layers, dense_w=dw, dense_b=params["dense_b"])


# ----------------------------------------------------------------------------
# Pure-JAX f32 reference (PyTorch GRU semantics) for correctness checking
# ----------------------------------------------------------------------------
def _gru_cell_ref(x, h, p):
    H = h.shape[-1]
    gi = x @ p["w_ih"].T + p["b_ih"]
    gh = h @ p["w_hh"].T + p["b_hh"]
    r = jax.nn.sigmoid(gi[:, :H] + gh[:, :H])
    z = jax.nn.sigmoid(gi[:, H:2 * H] + gh[:, H:2 * H])
    n = jnp.tanh(gi[:, 2 * H:] + r * gh[:, 2 * H:])
    return (1.0 - z) * n + z * h


def reference_forward(params, x):
    xt = x.T
    reviews = xt[1:, :]
    T, B = reviews.shape
    H = params["gru"][(0, 0)]["w_hh"].shape[1]
    num_layers = 1 + max(l for (l, _) in params["gru"])
    layer_in = params["embedding"][reviews]                      # (T, B, E) f32
    finals = {}
    for layer in range(num_layers):
        outs = []
        for direction in range(2):
            p = params["gru"][(layer, direction)]
            h = jnp.zeros((B, H), jnp.float32)
            order = range(T) if direction == 0 else range(T - 1, -1, -1)
            hs = [None] * T
            for t in order:
                h = _gru_cell_ref(layer_in[t], h, p)
                hs[t] = h
            outs.append(jnp.stack(hs))
            finals[(layer, direction)] = h
        layer_in = jnp.concatenate(outs, axis=-1)
    hcat = jnp.concatenate([finals[(num_layers - 1, 0)], finals[(num_layers - 1, 1)]], axis=1)
    logits = hcat @ params["dense_w"].T + params["dense_b"]
    return jax.nn.sigmoid(logits)[:, 0]


# ----------------------------------------------------------------------------
# Forward pass (matches LSTMClassifier.forward semantics, eval mode)
# ----------------------------------------------------------------------------
@functools.partial(jax.jit, static_argnames=("time_chunk",))
def lstm_classifier_forward(kparams, x, time_chunk=None):
    # x: (batch, 1 + seq_len) int32; column 0 = lengths (unused by the reference forward).
    xt = x.T
    _lengths = xt[0, :]                          # extracted but unused, as in the reference
    reviews = xt[1:, :]                          # (T, B)
    T, B = reviews.shape

    Hp = kparams["dense_w"].shape[0] // 2
    E = kparams["embedding"].shape[1]
    Bp = _round_up(max(B, 8), 8)                 # pad batch to the f32 sublane count
    vmem_cap = _vmem_capacity_bytes()
    fuse_rec = _use_fused_recurrence()
    Tc = _pick_time_chunk(T, Bp, Hp, E, vmem_cap, requested=time_chunk)

    reviews = jnp.pad(reviews, ((0, 0), (0, Bp - B)))            # pad rows use token 0
    embeds = jnp.take(kparams["embedding"], reviews, axis=0)     # (T, Bp, E) bf16; dropout = id
    x_list = [embeds.reshape(T * Bp, E)]                         # flatten in the wrapper (free)

    layers = kparams["layers"]
    hlast_f = hlast_b = None
    for li, lp in enumerate(layers):
        emit_seq = li + 1 < len(layers)          # final layer only needs the last hidden states
        outs = bigru_layer(x_list, lp, T=T, Bp=Bp, Hp=Hp, Tc=Tc,
                           emit_seq=emit_seq, fuse_rec=fuse_rec, vmem_cap=vmem_cap)
        if emit_seq:
            out_f, out_b, hlast_f, hlast_b = outs
            # No concat between layers: the fwd/bwd streams stay separate and the next layer
            # folds the concat into its input projection.  (T,Bp,Hp)->(T*Bp,Hp) is a free merge.
            x_list = [out_f.reshape(T * Bp, Hp), out_b.reshape(T * Bp, Hp)]
        else:
            hlast_f, hlast_b = outs

    # torch.cat((hidden[-2], hidden[-1]), dim=1) -> dropout(identity) -> dense -> sigmoid.
    hcat = jnp.concatenate([hlast_f[:B], hlast_b[:B]], axis=-1)  # (B, 2*Hp) f32
    logits = hcat @ kparams["dense_w"] + kparams["dense_b"]      # (B, 1)
    return jax.nn.sigmoid(logits)[:, 0]                          # (B,)


# ----------------------------------------------------------------------------
if __name__ == "__main__":
    embedding_dim = 32
    hidden_dim = 32
    vocab_size = 50
    batch = 2
    seq_len = 8

    key = jax.random.PRNGKey(0)
    pkey, xkey = jax.random.split(key)

    params = init_params(pkey, vocab_size, embedding_dim, hidden_dim)
    kparams = pack_params(params)

    # Input as the PyTorch module expects: column 0 = lengths, columns 1: = token ids.
    ids = jax.random.randint(xkey, (batch, seq_len), 0, vocab_size, jnp.int32)
    lengths = jnp.full((batch, 1), seq_len, jnp.int32)
    x = jnp.concatenate([lengths, ids], axis=1)                  # (batch, 1+seq_len)

    # Auto chunking (single chunk at this size -> exercises the de-duplicated input path) ...
    out = jax.block_until_ready(lstm_classifier_forward(kparams, x))
    # ... and a forced 2-chunk run to exercise the chunked sequential-grid path.
    out_chunked = jax.block_until_ready(lstm_classifier_forward(kparams, x, time_chunk=4))

    ref = reference_forward(params, x)                           # pure-JAX f32 reference

    assert out.shape == (batch,)
    assert bool(jnp.all(jnp.isfinite(out)))
    assert bool(jnp.all((out >= 0.0) & (out <= 1.0)))
    assert bool(jnp.allclose(out, out_chunked, atol=2e-3)), (out, out_chunked)
    assert bool(jnp.allclose(out, ref, atol=5e-2)), (out, ref)
    print("KERNEL_OK")
</pallas_src>

<mosaic_0001>
module attributes {stable_mosaic.version = 11 : i64} {
  func.func @kernel(%arg0: i32, %arg1: memref<64x32xbf16, #tpu.memory_space<vmem>>, %arg2: memref<32x384xbf16, #tpu.memory_space<vmem>>, %arg3: memref<32x384xbf16, #tpu.memory_space<vmem>>, %arg4: memref<1x384xf32, #tpu.memory_space<vmem>>, %arg5: memref<1x384xf32, #tpu.memory_space<vmem>>, %arg6: memref<256x384xbf16, #tpu.memory_space<vmem>>, %arg7: memref<1x128xf32, #tpu.memory_space<vmem>>, %arg8: memref<1x128xf32, #tpu.memory_space<vmem>>, %arg9: memref<8x8x128xbf16, #tpu.memory_space<vmem>>, %arg10: memref<8x8x128xbf16, #tpu.memory_space<vmem>>, %arg11: memref<8x128xf32, #tpu.memory_space<vmem>>, %arg12: memref<8x128xf32, #tpu.memory_space<vmem>>, %arg13: memref<64x384xf32, #tpu.memory_space<vmem>>, %arg14: memref<64x384xf32, #tpu.memory_space<vmem>>, %arg15: memref<16x128xf32, #tpu.memory_space<vmem>>) attributes {dimension_semantics = [#tpu.dimension_semantics<arbitrary>], iteration_bounds = array<i64: 1>, scalar_prefetch = 0 : i64, scratch_operands = 3 : i64, tpu.core_type = #tpu.core_type<tc>, window_params = [{transform_indices = @transform_0, window_bounds = array<i64: 64, 32>}, {pipeline_mode = #tpu.pipeline_mode<synchronous>, transform_indices = @transform_1, window_bounds = array<i64: 32, 384>}, {pipeline_mode = #tpu.pipeline_mode<synchronous>, transform_indices = @transform_2, window_bounds = array<i64: 32, 384>}, {pipeline_mode = #tpu.pipeline_mode<synchronous>, transform_indices = @transform_3, window_bounds = array<i64: 1, 384>}, {pipeline_mode = #tpu.pipeline_mode<synchronous>, transform_indices = @transform_4, window_bounds = array<i64: 1, 384>}, {pipeline_mode = #tpu.pipeline_mode<synchronous>, transform_indices = @transform_5, window_bounds = array<i64: 256, 384>}, {pipeline_mode = #tpu.pipeline_mode<synchronous>, transform_indices = @transform_6, window_bounds = array<i64: 1, 128>}, {pipeline_mode = #tpu.pipeline_mode<synchronous>, transform_indices = @transform_7, window_bounds = array<i64: 1, 128>}, {transform_indices = @transform_8, window_bounds = array<i64: 8, 8, 128>}, {transform_indices = @transform_9, window_bounds = array<i64: 8, 8, 128>}, {pipeline_mode = #tpu.pipeline_mode<synchronous>, transform_indices = @transform_10, window_bounds = array<i64: 8, 128>}, {pipeline_mode = #tpu.pipeline_mode<synchronous>, transform_indices = @transform_11, window_bounds = array<i64: 8, 128>}]} {
    %c0_i32 = arith.constant 0 : i32
    %0 = arith.cmpi eq, %arg0, %c0_i32 : i32
    %1 = arith.extui %0 : i1 to i32
    %c0_i32_0 = arith.constant 0 : i32
    %2 = arith.cmpi ne, %1, %c0_i32_0 : i32
    scf.if %2 {
      %cst_126 = arith.constant 0.000000e+00 : f32
      %406 = vector.broadcast %cst_126 : f32 to vector<16x128xf32>
      %c0_127 = arith.constant 0 : index
      %c0_128 = arith.constant 0 : index
      %407 = vector.load %arg15[%c0_127, %c0_128] : memref<16x128xf32, #tpu.memory_space<vmem>>, vector<16x128xf32>
      tpu.vector_store %arg15[%c0_127, %c0_128], %406 {strides = array<i32>} : memref<16x128xf32, #tpu.memory_space<vmem>>, vector<16x128xf32>,
    } else {
    }
    %c0 = arith.constant 0 : index
    %c0_1 = arith.constant 0 : index
    %3 = vector.load %arg1[%c0, %c0_1] : memref<64x32xbf16, #tpu.memory_space<vmem>>, vector<64x32xbf16>
    %c0_2 = arith.constant 0 : index
    %c0_3 = arith.constant 0 : index
    %4 = vector.load %arg2[%c0_2, %c0_3] : memref<32x384xbf16, #tpu.memory_space<vmem>>, vector<32x384xbf16>
    %cst = arith.constant dense<0.000000e+00> : vector<64x384xf32>
    %5 = tpu.matmul %3, %4, %cst {dimension_numbers = #tpu.dot_dimension_numbers<[1], [0], [0], [1], [0, 0, 1, 1], [], []>} : vector<64x32xbf16>, vector<32x384xbf16>, vector<64x384xf32> -> vector<64x384xf32>
    %c0_4 = arith.constant 0 : index
    %c0_5 = arith.constant 0 : index
    %6 = vector.load %arg4[%c0_4, %c0_5] : memref<1x384xf32, #tpu.memory_space<vmem>>, vector<1x384xf32>
    %7 = vector.broadcast %6 : vector<1x384xf32> to vector<64x384xf32>
    %8 = arith.addf %5, %7 : vector<64x384xf32>
    %c0_6 = arith.constant 0 : index
    %c0_7 = arith.constant 0 : index
    %9 = vector.load %arg13[%c0_6, %c0_7] : memref<64x384xf32, #tpu.memory_space<vmem>>, vector<64x384xf32>
    tpu.vector_store %arg13[%c0_6, %c0_7], %8 {strides = array<i32>} : memref<64x384xf32, #tpu.memory_space<vmem>>, vector<64x384xf32>,
    %c0_8 = arith.constant 0 : index
    %c0_9 = arith.constant 0 : index
    %10 = vector.load %arg3[%c0_8, %c0_9] : memref<32x384xbf16, #tpu.memory_space<vmem>>, vector<32x384xbf16>
    %cst_10 = arith.constant dense<0.000000e+00> : vector<64x384xf32>
    %11 = tpu.matmul %3, %10, %cst_10 {dimension_numbers = #tpu.dot_dimension_numbers<[1], [0], [0], [1], [0, 0, 1, 1], [], []>} : vector<64x32xbf16>, vector<32x384xbf16>, vector<64x384xf32> -> vector<64x384xf32>
    %c0_11 = arith.constant 0 : index
    %c0_12 = arith.constant 0 : index
    %12 = vector.load %arg5[%c0_11, %c0_12] : memref<1x384xf32, #tpu.memory_space<vmem>>, vector<1x384xf32>
    %13 = vector.broadcast %12 : vector<1x384xf32> to vector<64x384xf32>
    %14 = arith.addf %11, %13 : vector<64x384xf32>
    %c0_13 = arith.constant 0 : index
    %c0_14 = arith.constant 0 : index
    %15 = vector.load %arg14[%c0_13, %c0_14] : memref<64x384xf32, #tpu.memory_space<vmem>>, vector<64x384xf32>
    tpu.vector_store %arg14[%c0_13, %c0_14], %14 {strides = array<i32>} : memref<64x384xf32, #tpu.memory_space<vmem>>, vector<64x384xf32>,
    %c0_15 = arith.constant 0 : index
    %c0_16 = arith.constant 0 : index
    %16 = vector.load %arg7[%c0_15, %c0_16] : memref<1x128xf32, #tpu.memory_space<vmem>>, vector<1x128xf32>
    %17 = vector.shape_cast %16 : vector<1x128xf32> to vector<1x128xf32>
    %18 = vector.broadcast %17 : vector<1x128xf32> to vector<8x128xf32>
    %c0_17 = arith.constant 0 : index
    %c0_18 = arith.constant 0 : index
    %19 = vector.load %arg8[%c0_17, %c0_18] : memref<1x128xf32, #tpu.memory_space<vmem>>, vector<1x128xf32>
    %20 = vector.shape_cast %19 : vector<1x128xf32> to vector<1x128xf32>
    %21 = vector.broadcast %20 : vector<1x128xf32> to vector<8x128xf32>
    %c0_19 = arith.constant 0 : index
    %c0_20 = arith.constant 0 : index
    %22 = vector.load %arg6[%c0_19, %c0_20] : memref<256x384xbf16, #tpu.memory_space<vmem>>, vector<256x384xbf16>
    %23 = tpu.concatenate %18, %21 in 0 : vector<8x128xf32>, vector<8x128xf32> -> vector<16x128xf32>
    %cst_21 = arith.constant 0.000000e+00 : f32
    %24 = vector.broadcast %cst_21 : f32 to vector<8x128xf32>
    %c0_22 = arith.constant 0 : index
    %c0_23 = arith.constant 0 : index
    %25 = vector.load %arg15[%c0_22, %c0_23] : memref<16x128xf32, #tpu.memory_space<vmem>>, vector<16x128xf32>
    %c0_24 = arith.constant 0 : index
    %c0_25 = arith.constant 0 : index
    %26 = vector.load %arg13[%c0_24, %c0_25] : memref<64x384xf32, #tpu.memory_space<vmem>>, vector<8x384xf32>
    %c56 = arith.constant 56 : index
    %c0_26 = arith.constant 0 : index
    %27 = vector.load %arg14[%c56, %c0_26] : memref<64x384xf32, #tpu.memory_space<vmem>>, vector<8x384xf32>
    %28 = vector.extract_strided_slice %25 {offsets = [0, 0], sizes = [8, 128], strides = [1, 1]} : vector<16x128xf32> to vector<8x128xf32>
    %29 = tpu.concatenate %28, %24 in 1 : vector<8x128xf32>, vector<8x128xf32> -> vector<8x256xf32>
    %30 = vector.extract_strided_slice %25 {offsets = [8, 0], sizes = [8, 128], strides = [1, 1]} : vector<16x128xf32> to vector<8x128xf32>
    %31 = tpu.concatenate %24, %30 in 1 : vector<8x128xf32>, vector<8x128xf32> -> vector<8x256xf32>
    %32 = tpu.concatenate %29, %31 in 0 : vector<8x256xf32>, vector<8x256xf32> -> vector<16x256xf32>
    %33 = arith.truncf %32 : vector<16x256xf32> to vector<16x256xbf16>
    %cst_27 = arith.constant dense<0.000000e+00> : vector<16x384xf32>
    %34 = tpu.matmul %33, %22, %cst_27 {dimension_numbers = #tpu.dot_dimension_numbers<[1], [0], [0], [1], [0, 0, 1, 1], [], []>} : vector<16x256xbf16>, vector<256x384xbf16>, vector<16x384xf32> -> vector<16x384xf32>
    %35 = tpu.concatenate %26, %27 in 0 : vector<8x384xf32>, vector<8x384xf32> -> vector<16x384xf32>
    %36 = vector.extract_strided_slice %35 {offsets = [0, 0], sizes = [16, 128], strides = [1, 1]} : vector<16x384xf32> to vector<16x128xf32>
    %37 = vector.extract_strided_slice %34 {offsets = [0, 0], sizes = [16, 128], strides = [1, 1]} : vector<16x384xf32> to vector<16x128xf32>
    %38 = arith.addf %36, %37 : vector<16x128xf32>
    %39 = arith.negf %38 : vector<16x128xf32>
    %40 = math.exp %39 : vector<16x128xf32>
    %cst_28 = arith.constant 1.000000e+00 : f32
    %41 = vector.broadcast %cst_28 : f32 to vector<16x128xf32>
    %42 = arith.addf %41, %40 : vector<16x128xf32>
    %43 = arith.divf %41, %42 : vector<16x128xf32>
    %44 = vector.extract_strided_slice %35 {offsets = [0, 128], sizes = [16, 128], strides = [1, 1]} : vector<16x384xf32> to vector<16x128xf32>
    %45 = vector.extract_strided_slice %34 {offsets = [0, 128], sizes = [16, 128], strides = [1, 1]} : vector<16x384xf32> to vector<16x128xf32>
    %46 = arith.addf %44, %45 : vector<16x128xf32>
    %47 = arith.negf %46 : vector<16x128xf32>
    %48 = math.exp %47 : vector<16x128xf32>
    %cst_29 = arith.constant 1.000000e+00 : f32
    %49 = vector.broadcast %cst_29 : f32 to vector<16x128xf32>
    %50 = arith.addf %49, %48 : vector<16x128xf32>
    %51 = arith.divf %49, %50 : vector<16x128xf32>
    %52 = vector.extract_strided_slice %35 {offsets = [0, 256], sizes = [16, 128], strides = [1, 1]} : vector<16x384xf32> to vector<16x128xf32>
    %53 = vector.extract_strided_slice %34 {offsets = [0, 256], sizes = [16, 128], strides = [1, 1]} : vector<16x384xf32> to vector<16x128xf32>
    %54 = arith.addf %53, %23 : vector<16x128xf32>
    %55 = arith.mulf %43, %54 : vector<16x128xf32>
    %56 = arith.addf %52, %55 : vector<16x128xf32>
    %57 = math.tanh %56 : vector<16x128xf32>
    %cst_30 = arith.constant 1.000000e+00 : f32
    %58 = vector.broadcast %cst_30 : f32 to vector<16x128xf32>
    %59 = arith.subf %58, %51 : vector<16x128xf32>
    %60 = arith.mulf %59, %57 : vector<16x128xf32>
    %61 = arith.mulf %51, %25 : vector<16x128xf32>
    %62 = arith.addf %60, %61 : vector<16x128xf32>
    %63 = vector.extract_strided_slice %62 {offsets = [0, 0], sizes = [8, 128], strides = [1, 1]} : vector<16x128xf32> to vector<8x128xf32>
    %64 = arith.truncf %63 : vector<8x128xf32> to vector<8x128xbf16>
    %c0_31 = arith.constant 0 : index
    %c0_32 = arith.constant 0 : index
    %c0_33 = arith.constant 0 : index
    %65 = vector.load %arg9[%c0_31, %c0_32, %c0_33] : memref<8x8x128xbf16, #tpu.memory_space<vmem>>, vector<1x8x128xbf16>
    %66 = vector.shape_cast %65 : vector<1x8x128xbf16> to vector<8x128xbf16>
    %67 = vector.shape_cast %64 : vector<8x128xbf16> to vector<1x8x128xbf16>
    tpu.vector_store %arg9[%c0_31, %c0_32, %c0_33], %67 {strides = array<i32>} : memref<8x8x128xbf16, #tpu.memory_space<vmem>>, vector<1x8x128xbf16>,
    %68 = vector.extract_strided_slice %62 {offsets = [8, 0], sizes = [8, 128], strides = [1, 1]} : vector<16x128xf32> to vector<8x128xf32>
    %69 = arith.truncf %68 : vector<8x128xf32> to vector<8x128xbf16>
    %c7 = arith.constant 7 : index
    %c0_34 = arith.constant 0 : index
    %c0_35 = arith.constant 0 : index
    %70 = vector.load %arg10[%c7, %c0_34, %c0_35] : memref<8x8x128xbf16, #tpu.memory_space<vmem>>, vector<1x8x128xbf16>
    %71 = vector.shape_cast %70 : vector<1x8x128xbf16> to vector<8x128xbf16>
    %72 = vector.shape_cast %69 : vector<8x128xbf16> to vector<1x8x128xbf16>
    tpu.vector_store %arg10[%c7, %c0_34, %c0_35], %72 {strides = array<i32>} : memref<8x8x128xbf16, #tpu.memory_space<vmem>>, vector<1x8x128xbf16>,
    %c8 = arith.constant 8 : index
    %c0_36 = arith.constant 0 : index
    %73 = vector.load %arg13[%c8, %c0_36] : memref<64x384xf32, #tpu.memory_space<vmem>>, vector<8x384xf32>
    %c48 = arith.constant 48 : index
    %c0_37 = arith.constant 0 : index
    %74 = vector.load %arg14[%c48, %c0_37] : memref<64x384xf32, #tpu.memory_space<vmem>>, vector<8x384xf32>
    %75 = vector.extract_strided_slice %62 {offsets = [0, 0], sizes = [8, 128], strides = [1, 1]} : vector<16x128xf32> to vector<8x128xf32>
    %76 = tpu.concatenate %75, %24 in 1 : vector<8x128xf32>, vector<8x128xf32> -> vector<8x256xf32>
    %77 = vector.extract_strided_slice %62 {offsets = [8, 0], sizes = [8, 128], strides = [1, 1]} : vector<16x128xf32> to vector<8x128xf32>
    %78 = tpu.concatenate %24, %77 in 1 : vector<8x128xf32>, vector<8x128xf32> -> vector<8x256xf32>
    %79 = tpu.concatenate %76, %78 in 0 : vector<8x256xf32>, vector<8x256xf32> -> vector<16x256xf32>
    %80 = arith.truncf %79 : vector<16x256xf32> to vector<16x256xbf16>
    %cst_38 = arith.constant dense<0.000000e+00> : vector<16x384xf32>
    %81 = tpu.matmul %80, %22, %cst_38 {dimension_numbers = #tpu.dot_dimension_numbers<[1], [0], [0], [1], [0, 0, 1, 1], [], []>} : vector<16x256xbf16>, vector<256x384xbf16>, vector<16x384xf32> -> vector<16x384xf32>
    %82 = tpu.concatenate %73, %74 in 0 : vector<8x384xf32>, vector<8x384xf32> -> vector<16x384xf32>
    %83 = vector.extract_strided_slice %82 {offsets = [0, 0], sizes = [16, 128], strides = [1, 1]} : vector<16x384xf32> to vector<16x128xf32>
    %84 = vector.extract_strided_slice %81 {offsets = [0, 0], sizes = [16, 128], strides = [1, 1]} : vector<16x384xf32> to vector<16x128xf32>
    %85 = arith.addf %83, %84 : vector<16x128xf32>
    %86 = arith.negf %85 : vector<16x128xf32>
    %87 = math.exp %86 : vector<16x128xf32>
    %cst_39 = arith.constant 1.000000e+00 : f32
    %88 = vector.broadcast %cst_39 : f32 to vector<16x128xf32>
    %89 = arith.addf %88, %87 : vector<16x128xf32>
    %90 = arith.divf %88, %89 : vector<16x128xf32>
    %91 = vector.extract_strided_slice %82 {offsets = [0, 128], sizes = [16, 128], strides = [1, 1]} : vector<16x384xf32> to vector<16x128xf32>
    %92 = vector.extract_strided_slice %81 {offsets = [0, 128], sizes = [16, 128], strides = [1, 1]} : vector<16x384xf32> to vector<16x128xf32>
    %93 = arith.addf %91, %92 : vector<16x128xf32>
    %94 = arith.negf %93 : vector<16x128xf32>
    %95 = math.exp %94 : vector<16x128xf32>
    %cst_40 = arith.constant 1.000000e+00 : f32
    %96 = vector.broadcast %cst_40 : f32 to vector<16x128xf32>
    %97 = arith.addf %96, %95 : vector<16x128xf32>
    %98 = arith.divf %96, %97 : vector<16x128xf32>
    %99 = vector.extract_strided_slice %82 {offsets = [0, 256], sizes = [16, 128], strides = [1, 1]} : vector<16x384xf32> to vector<16x128xf32>
    %100 = vector.extract_strided_slice %81 {offsets = [0, 256], sizes = [16, 128], strides = [1, 1]} : vector<16x384xf32> to vector<16x128xf32>
    %101 = arith.addf %100, %23 : vector<16x128xf32>
    %102 = arith.mulf %90, %101 : vector<16x128xf32>
    %103 = arith.addf %99, %102 : vector<16x128xf32>
    %104 = math.tanh %103 : vector<16x128xf32>
    %cst_41 = arith.constant 1.000000e+00 : f32
    %105 = vector.broadcast %cst_41 : f32 to vector<16x128xf32>
    %106 = arith.subf %105, %98 : vector<16x128xf32>
    %107 = arith.mulf %106, %104 : vector<16x128xf32>
    %108 = arith.mulf %98, %62 : vector<16x128xf32>
    %109 = arith.addf %107, %108 : vector<16x128xf32>
    %110 = vector.extract_strided_slice %109 {offsets = [0, 0], sizes = [8, 128], strides = [1, 1]} : vector<16x128xf32> to vector<8x128xf32>
    %111 = arith.truncf %110 : vector<8x128xf32> to vector<8x128xbf16>
    %c1 = arith.constant 1 : index
    %c0_42 = arith.constant 0 : index
    %c0_43 = arith.constant 0 : index
    %112 = vector.load %arg9[%c1, %c0_42, %c0_43] : memref<8x8x128xbf16, #tpu.memory_space<vmem>>, vector<1x8x128xbf16>
    %113 = vector.shape_cast %112 : vector<1x8x128xbf16> to vector<8x128xbf16>
    %114 = vector.shape_cast %111 : vector<8x128xbf16> to vector<1x8x128xbf16>
    tpu.vector_store %arg9[%c1, %c0_42, %c0_43], %114 {strides = array<i32>} : memref<8x8x128xbf16, #tpu.memory_space<vmem>>, vector<1x8x128xbf16>,
    %115 = vector.extract_strided_slice %109 {offsets = [8, 0], sizes = [8, 128], strides = [1, 1]} : vector<16x128xf32> to vector<8x128xf32>
    %116 = arith.truncf %115 : vector<8x128xf32> to vector<8x128xbf16>
    %c6 = arith.constant 6 : index
    %c0_44 = arith.constant 0 : index
    %c0_45 = arith.constant 0 : index
    %117 = vector.load %arg10[%c6, %c0_44, %c0_45] : memref<8x8x128xbf16, #tpu.memory_space<vmem>>, vector<1x8x128xbf16>
    %118 = vector.shape_cast %117 : vector<1x8x128xbf16> to vector<8x128xbf16>
    %119 = vector.shape_cast %116 : vector<8x128xbf16> to vector<1x8x128xbf16>
    tpu.vector_store %arg10[%c6, %c0_44, %c0_45], %119 {strides = array<i32>} : memref<8x8x128xbf16, #tpu.memory_space<vmem>>, vector<1x8x128xbf16>,
    %c16 = arith.constant 16 : index
    %c0_46 = arith.constant 0 : index
    %120 = vector.load %arg13[%c16, %c0_46] : memref<64x384xf32, #tpu.memory_space<vmem>>, vector<8x384xf32>
    %c40 = arith.constant 40 : index
    %c0_47 = arith.constant 0 : index
    %121 = vector.load %arg14[%c40, %c0_47] : memref<64x384xf32, #tpu.memory_space<vmem>>, vector<8x384xf32>
    %122 = vector.extract_strided_slice %109 {offsets = [0, 0], sizes = [8, 128], strides = [1, 1]} : vector<16x128xf32> to vector<8x128xf32>
    %123 = tpu.concatenate %122, %24 in 1 : vector<8x128xf32>, vector<8x128xf32> -> vector<8x256xf32>
    %124 = vector.extract_strided_slice %109 {offsets = [8, 0], sizes = [8, 128], strides = [1, 1]} : vector<16x128xf32> to vector<8x128xf32>
    %125 = tpu.concatenate %24, %124 in 1 : vector<8x128xf32>, vector<8x128xf32> -> vector<8x256xf32>
    %126 = tpu.concatenate %123, %125 in 0 : vector<8x256xf32>, vector<8x256xf32> -> vector<16x256xf32>
    %127 = arith.truncf %126 : vector<16x256xf32> to vector<16x256xbf16>
    %cst_48 = arith.constant dense<0.000000e+00> : vector<16x384xf32>
    %128 = tpu.matmul %127, %22, %cst_48 {dimension_numbers = #tpu.dot_dimension_numbers<[1], [0], [0], [1], [0, 0, 1, 1], [], []>} : vector<16x256xbf16>, vector<256x384xbf16>, vector<16x384xf32> -> vector<16x384xf32>
    %129 = tpu.concatenate %120, %121 in 0 : vector<8x384xf32>, vector<8x384xf32> -> vector<16x384xf32>
    %130 = vector.extract_strided_slice %129 {offsets = [0, 0], sizes = [16, 128], strides = [1, 1]} : vector<16x384xf32> to vector<16x128xf32>
    %131 = vector.extract_strided_slice %128 {offsets = [0, 0], sizes = [16, 128], strides = [1, 1]} : vector<16x384xf32> to vector<16x128xf32>
    %132 = arith.addf %130, %131 : vector<16x128xf32>
    %133 = arith.negf %132 : vector<16x128xf32>
    %134 = math.exp %133 : vector<16x128xf32>
    %cst_49 = arith.constant 1.000000e+00 : f32
    %135 = vector.broadcast %cst_49 : f32 to vector<16x128xf32>
    %136 = arith.addf %135, %134 : vector<16x128xf32>
    %137 = arith.divf %135, %136 : vector<16x128xf32>
    %138 = vector.extract_strided_slice %129 {offsets = [0, 128], sizes = [16, 128], strides = [1, 1]} : vector<16x384xf32> to vector<16x128xf32>
    %139 = vector.extract_strided_slice %128 {offsets = [0, 128], sizes = [16, 128], strides = [1, 1]} : vector<16x384xf32> to vector<16x128xf32>
    %140 = arith.addf %138, %139 : vector<16x128xf32>
    %141 = arith.negf %140 : vector<16x128xf32>
    %142 = math.exp %141 : vector<16x128xf32>
    %cst_50 = arith.constant 1.000000e+00 : f32
    %143 = vector.broadcast %cst_50 : f32 to vector<16x128xf32>
    %144 = arith.addf %143, %142 : vector<16x128xf32>
    %145 = arith.divf %143, %144 : vector<16x128xf32>
    %146 = vector.extract_strided_slice %129 {offsets = [0, 256], sizes = [16, 128], strides = [1, 1]} : vector<16x384xf32> to vector<16x128xf32>
    %147 = vector.extract_strided_slice %128 {offsets = [0, 256], sizes = [16, 128], strides = [1, 1]} : vector<16x384xf32> to vector<16x128xf32>
    %148 = arith.addf %147, %23 : vector<16x128xf32>
    %149 = arith.mulf %137, %148 : vector<16x128xf32>
    %150 = arith.addf %146, %149 : vector<16x128xf32>
    %151 = math.tanh %150 : vector<16x128xf32>
    %cst_51 = arith.constant 1.000000e+00 : f32
    %152 = vector.broadcast %cst_51 : f32 to vector<16x128xf32>
    %153 = arith.subf %152, %145 : vector<16x128xf32>
    %154 = arith.mulf %153, %151 : vector<16x128xf32>
    %155 = arith.mulf %145, %109 : vector<16x128xf32>
    %156 = arith.addf %154, %155 : vector<16x128xf32>
    %157 = vector.extract_strided_slice %156 {offsets = [0, 0], sizes = [8, 128], strides = [1, 1]} : vector<16x128xf32> to vector<8x128xf32>
    %158 = arith.truncf %157 : vector<8x128xf32> to vector<8x128xbf16>
    %c2 = arith.constant 2 : index
    %c0_52 = arith.constant 0 : index
    %c0_53 = arith.constant 0 : index
    %159 = vector.load %arg9[%c2, %c0_52, %c0_53] : memref<8x8x128xbf16, #tpu.memory_space<vmem>>, vector<1x8x128xbf16>
    %160 = vector.shape_cast %159 : vector<1x8x128xbf16> to vector<8x128xbf16>
    %161 = vector.shape_cast %158 : vector<8x128xbf16> to vector<1x8x128xbf16>
    tpu.vector_store %arg9[%c2, %c0_52, %c0_53], %161 {strides = array<i32>} : memref<8x8x128xbf16, #tpu.memory_space<vmem>>, vector<1x8x128xbf16>,
    %162 = vector.extract_strided_slice %156 {offsets = [8, 0], sizes = [8, 128], strides = [1, 1]} : vector<16x128xf32> to vector<8x128xf32>
    %163 = arith.truncf %162 : vector<8x128xf32> to vector<8x128xbf16>
    %c5 = arith.constant 5 : index
    %c0_54 = arith.constant 0 : index
    %c0_55 = arith.constant 0 : index
    %164 = vector.load %arg10[%c5, %c0_54, %c0_55] : memref<8x8x128xbf16, #tpu.memory_space<vmem>>, vector<1x8x128xbf16>
    %165 = vector.shape_cast %164 : vector<1x8x128xbf16> to vector<8x128xbf16>
    %166 = vector.shape_cast %163 : vector<8x128xbf16> to vector<1x8x128xbf16>
    tpu.vector_store %arg10[%c5, %c0_54, %c0_55], %166 {strides = array<i32>} : memref<8x8x128xbf16, #tpu.memory_space<vmem>>, vector<1x8x128xbf16>,
    %c24 = arith.constant 24 : index
    %c0_56 = arith.constant 0 : index
    %167 = vector.load %arg13[%c24, %c0_56] : memref<64x384xf32, #tpu.memory_space<vmem>>, vector<8x384xf32>
    %c32 = arith.constant 32 : index
    %c0_57 = arith.constant 0 : index
    %168 = vector.load %arg14[%c32, %c0_57] : memref<64x384xf32, #tpu.memory_space<vmem>>, vector<8x384xf32>
    %169 = vector.extract_strided_slice %156 {offsets = [0, 0], sizes = [8, 128], strides = [1, 1]} : vector<16x128xf32> to vector<8x128xf32>
    %170 = tpu.concatenate %169, %24 in 1 : vector<8x128xf32>, vector<8x128xf32> -> vector<8x256xf32>
    %171 = vector.extract_strided_slice %156 {offsets = [8, 0], sizes = [8, 128], strides = [1, 1]} : vector<16x128xf32> to vector<8x128xf32>
    %172 = tpu.concatenate %24, %171 in 1 : vector<8x128xf32>, vector<8x128xf32> -> vector<8x256xf32>
    %173 = tpu.concatenate %170, %172 in 0 : vector<8x256xf32>, vector<8x256xf32> -> vector<16x256xf32>
    %174 = arith.truncf %173 : vector<16x256xf32> to vector<16x256xbf16>
    %cst_58 = arith.constant dense<0.000000e+00> : vector<16x384xf32>
    %175 = tpu.matmul %174, %22, %cst_58 {dimension_numbers = #tpu.dot_dimension_numbers<[1], [0], [0], [1], [0, 0, 1, 1], [], []>} : vector<16x256xbf16>, vector<256x384xbf16>, vector<16x384xf32> -> vector<16x384xf32>
    %176 = tpu.concatenate %167, %168 in 0 : vector<8x384xf32>, vector<8x384xf32> -> vector<16x384xf32>
    %177 = vector.extract_strided_slice %176 {offsets = [0, 0], sizes = [16, 128], strides = [1, 1]} : vector<16x384xf32> to vector<16x128xf32>
    %178 = vector.extract_strided_slice %175 {offsets = [0, 0], sizes = [16, 128], strides = [1, 1]} : vector<16x384xf32> to vector<16x128xf32>
    %179 = arith.addf %177, %178 : vector<16x128xf32>
    %180 = arith.negf %179 : vector<16x128xf32>
    %181 = math.exp %180 : vector<16x128xf32>
    %cst_59 = arith.constant 1.000000e+00 : f32
    %182 = vector.broadcast %cst_59 : f32 to vector<16x128xf32>
    %183 = arith.addf %182, %181 : vector<16x128xf32>
    %184 = arith.divf %182, %183 : vector<16x128xf32>
    %185 = vector.extract_strided_slice %176 {offsets = [0, 128], sizes = [16, 128], strides = [1, 1]} : vector<16x384xf32> to vector<16x128xf32>
    %186 = vector.extract_strided_slice %175 {offsets = [0, 128], sizes = [16, 128], strides = [1, 1]} : vector<16x384xf32> to vector<16x128xf32>
    %187 = arith.addf %185, %186 : vector<16x128xf32>
    %188 = arith.negf %187 : vector<16x128xf32>
    %189 = math.exp %188 : vector<16x128xf32>
    %cst_60 = arith.constant 1.000000e+00 : f32
    %190 = vector.broadcast %cst_60 : f32 to vector<16x128xf32>
    %191 = arith.addf %190, %189 : vector<16x128xf32>
    %192 = arith.divf %190, %191 : vector<16x128xf32>
    %193 = vector.extract_strided_slice %176 {offsets = [0, 256], sizes = [16, 128], strides = [1, 1]} : vector<16x384xf32> to vector<16x128xf32>
    %194 = vector.extract_strided_slice %175 {offsets = [0, 256], sizes = [16, 128], strides = [1, 1]} : vector<16x384xf32> to vector<16x128xf32>
    %195 = arith.addf %194, %23 : vector<16x128xf32>
    %196 = arith.mulf %184, %195 : vector<16x128xf32>
    %197 = arith.addf %193, %196 : vector<16x128xf32>
    %198 = math.tanh %197 : vector<16x128xf32>
    %cst_61 = arith.constant 1.000000e+00 : f32
    %199 = vector.broadcast %cst_61 : f32 to vector<16x128xf32>
    %200 = arith.subf %199, %192 : vector<16x128xf32>
    %201 = arith.mulf %200, %198 : vector<16x128xf32>
    %202 = arith.mulf %192, %156 : vector<16x128xf32>
    %203 = arith.addf %201, %202 : vector<16x128xf32>
    %204 = vector.extract_strided_slice %203 {offsets = [0, 0], sizes = [8, 128], strides = [1, 1]} : vector<16x128xf32> to vector<8x128xf32>
    %205 = arith.truncf %204 : vector<8x128xf32> to vector<8x128xbf16>
    %c3 = arith.constant 3 : index
    %c0_62 = arith.constant 0 : index
    %c0_63 = arith.constant 0 : index
    %206 = vector.load %arg9[%c3, %c0_62, %c0_63] : memref<8x8x128xbf16, #tpu.memory_space<vmem>>, vector<1x8x128xbf16>
    %207 = vector.shape_cast %206 : vector<1x8x128xbf16> to vector<8x128xbf16>
    %208 = vector.shape_cast %205 : vector<8x128xbf16> to vector<1x8x128xbf16>
    tpu.vector_store %arg9[%c3, %c0_62, %c0_63], %208 {strides = array<i32>} : memref<8x8x128xbf16, #tpu.memory_space<vmem>>, vector<1x8x128xbf16>,
    %209 = vector.extract_strided_slice %203 {offsets = [8, 0], sizes = [8, 128], strides = [1, 1]} : vector<16x128xf32> to vector<8x128xf32>
    %210 = arith.truncf %209 : vector<8x128xf32> to vector<8x128xbf16>
    %c4 = arith.constant 4 : index
    %c0_64 = arith.constant 0 : index
    %c0_65 = arith.constant 0 : index
    %211 = vector.load %arg10[%c4, %c0_64, %c0_65] : memref<8x8x128xbf16, #tpu.memory_space<vmem>>, vector<1x8x128xbf16>
    %212 = vector.shape_cast %211 : vector<1x8x128xbf16> to vector<8x128xbf16>
    %213 = vector.shape_cast %210 : vector<8x128xbf16> to vector<1x8x128xbf16>
    tpu.vector_store %arg10[%c4, %c0_64, %c0_65], %213 {strides = array<i32>} : memref<8x8x128xbf16, #tpu.memory_space<vmem>>, vector<1x8x128xbf16>,
    %c32_66 = arith.constant 32 : index
    %c0_67 = arith.constant 0 : index
    %214 = vector.load %arg13[%c32_66, %c0_67] : memref<64x384xf32, #tpu.memory_space<vmem>>, vector<8x384xf32>
    %c24_68 = arith.constant 24 : index
    %c0_69 = arith.constant 0 : index
    %215 = vector.load %arg14[%c24_68, %c0_69] : memref<64x384xf32, #tpu.memory_space<vmem>>, vector<8x384xf32>
    %216 = vector.extract_strided_slice %203 {offsets = [0, 0], sizes = [8, 128], strides = [1, 1]} : vector<16x128xf32> to vector<8x128xf32>
    %217 = tpu.concatenate %216, %24 in 1 : vector<8x128xf32>, vector<8x128xf32> -> vector<8x256xf32>
    %218 = vector.extract_strided_slice %203 {offsets = [8, 0], sizes = [8, 128], strides = [1, 1]} : vector<16x128xf32> to vector<8x128xf32>
    %219 = tpu.concatenate %24, %218 in 1 : vector<8x128xf32>, vector<8x128xf32> -> vector<8x256xf32>
    %220 = tpu.concatenate %217, %219 in 0 : vector<8x256xf32>, vector<8x256xf32> -> vector<16x256xf32>
    %221 = arith.truncf %220 : vector<16x256xf32> to vector<16x256xbf16>
    %cst_70 = arith.constant dense<0.000000e+00> : vector<16x384xf32>
    %222 = tpu.matmul %221, %22, %cst_70 {dimension_numbers = #tpu.dot_dimension_numbers<[1], [0], [0], [1], [0, 0, 1, 1], [], []>} : vector<16x256xbf16>, vector<256x384xbf16>, vector<16x384xf32> -> vector<16x384xf32>
    %223 = tpu.concatenate %214, %215 in 0 : vector<8x384xf32>, vector<8x384xf32> -> vector<16x384xf32>
    %224 = vector.extract_strided_slice %223 {offsets = [0, 0], sizes = [16, 128], strides = [1, 1]} : vector<16x384xf32> to vector<16x128xf32>
    %225 = vector.extract_strided_slice %222 {offsets = [0, 0], sizes = [16, 128], strides = [1, 1]} : vector<16x384xf32> to vector<16x128xf32>
    %226 = arith.addf %224, %225 : vector<16x128xf32>
    %227 = arith.negf %226 : vector<16x128xf32>
    %228 = math.exp %227 : vector<16x128xf32>
    %cst_71 = arith.constant 1.000000e+00 : f32
    %229 = vector.broadcast %cst_71 : f32 to vector<16x128xf32>
    %230 = arith.addf %229, %228 : vector<16x128xf32>
    %231 = arith.divf %229, %230 : vector<16x128xf32>
    %232 = vector.extract_strided_slice %223 {offsets = [0, 128], sizes = [16, 128], strides = [1, 1]} : vector<16x384xf32> to vector<16x128xf32>
    %233 = vector.extract_strided_slice %222 {offsets = [0, 128], sizes = [16, 128], strides = [1, 1]} : vector<16x384xf32> to vector<16x128xf32>
    %234 = arith.addf %232, %233 : vector<16x128xf32>
    %235 = arith.negf %234 : vector<16x128xf32>
    %236 = math.exp %235 : vector<16x128xf32>
    %cst_72 = arith.constant 1.000000e+00 : f32
    %237 = vector.broadcast %cst_72 : f32 to vector<16x128xf32>
    %238 = arith.addf %237, %236 : vector<16x128xf32>
    %239 = arith.divf %237, %238 : vector<16x128xf32>
    %240 = vector.extract_strided_slice %223 {offsets = [0, 256], sizes = [16, 128], strides = [1, 1]} : vector<16x384xf32> to vector<16x128xf32>
    %241 = vector.extract_strided_slice %222 {offsets = [0, 256], sizes = [16, 128], strides = [1, 1]} : vector<16x384xf32> to vector<16x128xf32>
    %242 = arith.addf %241, %23 : vector<16x128xf32>
    %243 = arith.mulf %231, %242 : vector<16x128xf32>
    %244 = arith.addf %240, %243 : vector<16x128xf32>
    %245 = math.tanh %244 : vector<16x128xf32>
    %cst_73 = arith.constant 1.000000e+00 : f32
    %246 = vector.broadcast %cst_73 : f32 to vector<16x128xf32>
    %247 = arith.subf %246, %239 : vector<16x128xf32>
    %248 = arith.mulf %247, %245 : vector<16x128xf32>
    %249 = arith.mulf %239, %203 : vector<16x128xf32>
    %250 = arith.addf %248, %249 : vector<16x128xf32>
    %251 = vector.extract_strided_slice %250 {offsets = [0, 0], sizes = [8, 128], strides = [1, 1]} : vector<16x128xf32> to vector<8x128xf32>
    %252 = arith.truncf %251 : vector<8x128xf32> to vector<8x128xbf16>
    %c4_74 = arith.constant 4 : index
    %c0_75 = arith.constant 0 : index
    %c0_76 = arith.constant 0 : index
    %253 = vector.load %arg9[%c4_74, %c0_75, %c0_76] : memref<8x8x128xbf16, #tpu.memory_space<vmem>>, vector<1x8x128xbf16>
    %254 = vector.shape_cast %253 : vector<1x8x128xbf16> to vector<8x128xbf16>
    %255 = vector.shape_cast %252 : vector<8x128xbf16> to vector<1x8x128xbf16>
    tpu.vector_store %arg9[%c4_74, %c0_75, %c0_76], %255 {strides = array<i32>} : memref<8x8x128xbf16, #tpu.memory_space<vmem>>, vector<1x8x128xbf16>,
    %256 = vector.extract_strided_slice %250 {offsets = [8, 0], sizes = [8, 128], strides = [1, 1]} : vector<16x128xf32> to vector<8x128xf32>
    %257 = arith.truncf %256 : vector<8x128xf32> to vector<8x128xbf16>
    %c3_77 = arith.constant 3 : index
    %c0_78 = arith.constant 0 : index
    %c0_79 = arith.constant 0 : index
    %258 = vector.load %arg10[%c3_77, %c0_78, %c0_79] : memref<8x8x128xbf16, #tpu.memory_space<vmem>>, vector<1x8x128xbf16>
    %259 = vector.shape_cast %258 : vector<1x8x128xbf16> to vector<8x128xbf16>
    %260 = vector.shape_cast %257 : vector<8x128xbf16> to vector<1x8x128xbf16>
    tpu.vector_store %arg10[%c3_77, %c0_78, %c0_79], %260 {strides = array<i32>} : memref<8x8x128xbf16, #tpu.memory_space<vmem>>, vector<1x8x128xbf16>,
    %c40_80 = arith.constant 40 : index
    %c0_81 = arith.constant 0 : index
    %261 = vector.load %arg13[%c40_80, %c0_81] : memref<64x384xf32, #tpu.memory_space<vmem>>, vector<8x384xf32>
    %c16_82 = arith.constant 16 : index
    %c0_83 = arith.constant 0 : index
    %262 = vector.load %arg14[%c16_82, %c0_83] : memref<64x384xf32, #tpu.memory_space<vmem>>, vector<8x384xf32>
    %263 = vector.extract_strided_slice %250 {offsets = [0, 0], sizes = [8, 128], strides = [1, 1]} : vector<16x128xf32> to vector<8x128xf32>
    %264 = tpu.concatenate %263, %24 in 1 : vector<8x128xf32>, vector<8x128xf32> -> vector<8x256xf32>
    %265 = vector.extract_strided_slice %250 {offsets = [8, 0], sizes = [8, 128], strides = [1, 1]} : vector<16x128xf32> to vector<8x128xf32>
    %266 = tpu.concatenate %24, %265 in 1 : vector<8x128xf32>, vector<8x128xf32> -> vector<8x256xf32>
    %267 = tpu.concatenate %264, %266 in 0 : vector<8x256xf32>, vector<8x256xf32> -> vector<16x256xf32>
    %268 = arith.truncf %267 : vector<16x256xf32> to vector<16x256xbf16>
    %cst_84 = arith.constant dense<0.000000e+00> : vector<16x384xf32>
    %269 = tpu.matmul %268, %22, %cst_84 {dimension_numbers = #tpu.dot_dimension_numbers<[1], [0], [0], [1], [0, 0, 1, 1], [], []>} : vector<16x256xbf16>, vector<256x384xbf16>, vector<16x384xf32> -> vector<16x384xf32>
    %270 = tpu.concatenate %261, %262 in 0 : vector<8x384xf32>, vector<8x384xf32> -> vector<16x384xf32>
    %271 = vector.extract_strided_slice %270 {offsets = [0, 0], sizes = [16, 128], strides = [1, 1]} : vector<16x384xf32> to vector<16x128xf32>
    %272 = vector.extract_strided_slice %269 {offsets = [0, 0], sizes = [16, 128], strides = [1, 1]} : vector<16x384xf32> to vector<16x128xf32>
    %273 = arith.addf %271, %272 : vector<16x128xf32>
    %274 = arith.negf %273 : vector<16x128xf32>
    %275 = math.exp %274 : vector<16x128xf32>
    %cst_85 = arith.constant 1.000000e+00 : f32
    %276 = vector.broadcast %cst_85 : f32 to vector<16x128xf32>
    %277 = arith.addf %276, %275 : vector<16x128xf32>
    %278 = arith.divf %276, %277 : vector<16x128xf32>
    %279 = vector.extract_strided_slice %270 {offsets = [0, 128], sizes = [16, 128], strides = [1, 1]} : vector<16x384xf32> to vector<16x128xf32>
    %280 = vector.extract_strided_slice %269 {offsets = [0, 128], sizes = [16, 128], strides = [1, 1]} : vector<16x384xf32> to vector<16x128xf32>
    %281 = arith.addf %279, %280 : vector<16x128xf32>
    %282 = arith.negf %281 : vector<16x128xf32>
    %283 = math.exp %282 : vector<16x128xf32>
    %cst_86 = arith.constant 1.000000e+00 : f32
    %284 = vector.broadcast %cst_86 : f32 to vector<16x128xf32>
    %285 = arith.addf %284, %283 : vector<16x128xf32>
    %286 = arith.divf %284, %285 : vector<16x128xf32>
    %287 = vector.extract_strided_slice %270 {offsets = [0, 256], sizes = [16, 128], strides = [1, 1]} : vector<16x384xf32> to vector<16x128xf32>
    %288 = vector.extract_strided_slice %269 {offsets = [0, 256], sizes = [16, 128], strides = [1, 1]} : vector<16x384xf32> to vector<16x128xf32>
    %289 = arith.addf %288, %23 : vector<16x128xf32>
    %290 = arith.mulf %278, %289 : vector<16x128xf32>
    %291 = arith.addf %287, %290 : vector<16x128xf32>
    %292 = math.tanh %291 : vector<16x128xf32>
    %cst_87 = arith.constant 1.000000e+00 : f32
    %293 = vector.broadcast %cst_87 : f32 to vector<16x128xf32>
    %294 = arith.subf %293, %286 : vector<16x128xf32>
    %295 = arith.mulf %294, %292 : vector<16x128xf32>
    %296 = arith.mulf %286, %250 : vector<16x128xf32>
    %297 = arith.addf %295, %296 : vector<16x128xf32>
    %298 = vector.extract_strided_slice %297 {offsets = [0, 0], sizes = [8, 128], strides = [1, 1]} : vector<16x128xf32> to vector<8x128xf32>
    %299 = arith.truncf %298 : vector<8x128xf32> to vector<8x128xbf16>
    %c5_88 = arith.constant 5 : index
    %c0_89 = arith.constant 0 : index
    %c0_90 = arith.constant 0 : index
    %300 = vector.load %arg9[%c5_88, %c0_89, %c0_90] : memref<8x8x128xbf16, #tpu.memory_space<vmem>>, vector<1x8x128xbf16>
    %301 = vector.shape_cast %300 : vector<1x8x128xbf16> to vector<8x128xbf16>
    %302 = vector.shape_cast %299 : vector<8x128xbf16> to vector<1x8x128xbf16>
    tpu.vector_store %arg9[%c5_88, %c0_89, %c0_90], %302 {strides = array<i32>} : memref<8x8x128xbf16, #tpu.memory_space<vmem>>, vector<1x8x128xbf16>,
    %303 = vector.extract_strided_slice %297 {offsets = [8, 0], sizes = [8, 128], strides = [1, 1]} : vector<16x128xf32> to vector<8x128xf32>
    %304 = arith.truncf %303 : vector<8x128xf32> to vector<8x128xbf16>
    %c2_91 = arith.constant 2 : index
    %c0_92 = arith.constant 0 : index
    %c0_93 = arith.constant 0 : index
    %305 = vector.load %arg10[%c2_91, %c0_92, %c0_93] : memref<8x8x128xbf16, #tpu.memory_space<vmem>>, vector<1x8x128xbf16>
    %306 = vector.shape_cast %305 : vector<1x8x128xbf16> to vector<8x128xbf16>
    %307 = vector.shape_cast %304 : vector<8x128xbf16> to vector<1x8x128xbf16>
    tpu.vector_store %arg10[%c2_91, %c0_92, %c0_93], %307 {strides = array<i32>} : memref<8x8x128xbf16, #tpu.memory_space<vmem>>, vector<1x8x128xbf16>,
    %c48_94 = arith.constant 48 : index
    %c0_95 = arith.constant 0 : index
    %308 = vector.load %arg13[%c48_94, %c0_95] : memref<64x384xf32, #tpu.memory_space<vmem>>, vector<8x384xf32>
    %c8_96 = arith.constant 8 : index
    %c0_97 = arith.constant 0 : index
    %309 = vector.load %arg14[%c8_96, %c0_97] : memref<64x384xf32, #tpu.memory_space<vmem>>, vector<8x384xf32>
    %310 = vector.extract_strided_slice %297 {offsets = [0, 0], sizes = [8, 128], strides = [1, 1]} : vector<16x128xf32> to vector<8x128xf32>
    %311 = tpu.concatenate %310, %24 in 1 : vector<8x128xf32>, vector<8x128xf32> -> vector<8x256xf32>
    %312 = vector.extract_strided_slice %297 {offsets = [8, 0], sizes = [8, 128], strides = [1, 1]} : vector<16x128xf32> to vector<8x128xf32>
    %313 = tpu.concatenate %24, %312 in 1 : vector<8x128xf32>, vector<8x128xf32> -> vector<8x256xf32>
    %314 = tpu.concatenate %311, %313 in 0 : vector<8x256xf32>, vector<8x256xf32> -> vector<16x256xf32>
    %315 = arith.truncf %314 : vector<16x256xf32> to vector<16x256xbf16>
    %cst_98 = arith.constant dense<0.000000e+00> : vector<16x384xf32>
    %316 = tpu.matmul %315, %22, %cst_98 {dimension_numbers = #tpu.dot_dimension_numbers<[1], [0], [0], [1], [0, 0, 1, 1], [], []>} : vector<16x256xbf16>, vector<256x384xbf16>, vector<16x384xf32> -> vector<16x384xf32>
    %317 = tpu.concatenate %308, %309 in 0 : vector<8x384xf32>, vector<8x384xf32> -> vector<16x384xf32>
    %318 = vector.extract_strided_slice %317 {offsets = [0, 0], sizes = [16, 128], strides = [1, 1]} : vector<16x384xf32> to vector<16x128xf32>
    %319 = vector.extract_strided_slice %316 {offsets = [0, 0], sizes = [16, 128], strides = [1, 1]} : vector<16x384xf32> to vector<16x128xf32>
    %320 = arith.addf %318, %319 : vector<16x128xf32>
    %321 = arith.negf %320 : vector<16x128xf32>
    %322 = math.exp %321 : vector<16x128xf32>
    %cst_99 = arith.constant 1.000000e+00 : f32
    %323 = vector.broadcast %cst_99 : f32 to vector<16x128xf32>
    %324 = arith.addf %323, %322 : vector<16x128xf32>
    %325 = arith.divf %323, %324 : vector<16x128xf32>
    %326 = vector.extract_strided_slice %317 {offsets = [0, 128], sizes = [16, 128], strides = [1, 1]} : vector<16x384xf32> to vector<16x128xf32>
    %327 = vector.extract_strided_slice %316 {offsets = [0, 128], sizes = [16, 128], strides = [1, 1]} : vector<16x384xf32> to vector<16x128xf32>
    %328 = arith.addf %326, %327 : vector<16x128xf32>
    %329 = arith.negf %328 : vector<16x128xf32>
    %330 = math.exp %329 : vector<16x128xf32>
    %cst_100 = arith.constant 1.000000e+00 : f32
    %331 = vector.broadcast %cst_100 : f32 to vector<16x128xf32>
    %332 = arith.addf %331, %330 : vector<16x128xf32>
    %333 = arith.divf %331, %332 : vector<16x128xf32>
    %334 = vector.extract_strided_slice %317 {offsets = [0, 256], sizes = [16, 128], strides = [1, 1]} : vector<16x384xf32> to vector<16x128xf32>
    %335 = vector.extract_strided_slice %316 {offsets = [0, 256], sizes = [16, 128], strides = [1, 1]} : vector<16x384xf32> to vector<16x128xf32>
    %336 = arith.addf %335, %23 : vector<16x128xf32>
    %337 = arith.mulf %325, %336 : vector<16x128xf32>
    %338 = arith.addf %334, %337 : vector<16x128xf32>
    %339 = math.tanh %338 : vector<16x128xf32>
    %cst_101 = arith.constant 1.000000e+00 : f32
    %340 = vector.broadcast %cst_101 : f32 to vector<16x128xf32>
    %341 = arith.subf %340, %333 : vector<16x128xf32>
    %342 = arith.mulf %341, %339 : vector<16x128xf32>
    %343 = arith.mulf %333, %297 : vector<16x128xf32>
    %344 = arith.addf %342, %343 : vector<16x128xf32>
    %345 = vector.extract_strided_slice %344 {offsets = [0, 0], sizes = [8, 128], strides = [1, 1]} : vector<16x128xf32> to vector<8x128xf32>
    %346 = arith.truncf %345 : vector<8x128xf32> to vector<8x128xbf16>
    %c6_102 = arith.constant 6 : index
    %c0_103 = arith.constant 0 : index
    %c0_104 = arith.constant 0 : index
    %347 = vector.load %arg9[%c6_102, %c0_103, %c0_104] : memref<8x8x128xbf16, #tpu.memory_space<vmem>>, vector<1x8x128xbf16>
    %348 = vector.shape_cast %347 : vector<1x8x128xbf16> to vector<8x128xbf16>
    %349 = vector.shape_cast %346 : vector<8x128xbf16> to vector<1x8x128xbf16>
    tpu.vector_store %arg9[%c6_102, %c0_103, %c0_104], %349 {strides = array<i32>} : memref<8x8x128xbf16, #tpu.memory_space<vmem>>, vector<1x8x128xbf16>,
    %350 = vector.extract_strided_slice %344 {offsets = [8, 0], sizes = [8, 128], strides = [1, 1]} : vector<16x128xf32> to vector<8x128xf32>
    %351 = arith.truncf %350 : vector<8x128xf32> to vector<8x128xbf16>
    %c1_105 = arith.constant 1 : index
    %c0_106 = arith.constant 0 : index
    %c0_107 = arith.constant 0 : index
    %352 = vector.load %arg10[%c1_105, %c0_106, %c0_107] : memref<8x8x128xbf16, #tpu.memory_space<vmem>>, vector<1x8x128xbf16>
    %353 = vector.shape_cast %352 : vector<1x8x128xbf16> to vector<8x128xbf16>
    %354 = vector.shape_cast %351 : vector<8x128xbf16> to vector<1x8x128xbf16>
    tpu.vector_store %arg10[%c1_105, %c0_106, %c0_107], %354 {strides = array<i32>} : memref<8x8x128xbf16, #tpu.memory_space<vmem>>, vector<1x8x128xbf16>,
    %c56_108 = arith.constant 56 : index
    %c0_109 = arith.constant 0 : index
    %355 = vector.load %arg13[%c56_108, %c0_109] : memref<64x384xf32, #tpu.memory_space<vmem>>, vector<8x384xf32>
    %c0_110 = arith.constant 0 : index
    %c0_111 = arith.constant 0 : index
    %356 = vector.load %arg14[%c0_110, %c0_111] : memref<64x384xf32, #tpu.memory_space<vmem>>, vector<8x384xf32>
    %357 = vector.extract_strided_slice %344 {offsets = [0, 0], sizes = [8, 128], strides = [1, 1]} : vector<16x128xf32> to vector<8x128xf32>
    %358 = tpu.concatenate %357, %24 in 1 : vector<8x128xf32>, vector<8x128xf32> -> vector<8x256xf32>
    %359 = vector.extract_strided_slice %344 {offsets = [8, 0], sizes = [8, 128], strides = [1, 1]} : vector<16x128xf32> to vector<8x128xf32>
    %360 = tpu.concatenate %24, %359 in 1 : vector<8x128xf32>, vector<8x128xf32> -> vector<8x256xf32>
    %361 = tpu.concatenate %358, %360 in 0 : vector<8x256xf32>, vector<8x256xf32> -> vector<16x256xf32>
    %362 = arith.truncf %361 : vector<16x256xf32> to vector<16x256xbf16>
    %cst_112 = arith.constant dense<0.000000e+00> : vector<16x384xf32>
    %363 = tpu.matmul %362, %22, %cst_112 {dimension_numbers = #tpu.dot_dimension_numbers<[1], [0], [0], [1], [0, 0, 1, 1], [], []>} : vector<16x256xbf16>, vector<256x384xbf16>, vector<16x384xf32> -> vector<16x384xf32>
    %364 = tpu.concatenate %355, %356 in 0 : vector<8x384xf32>, vector<8x384xf32> -> vector<16x384xf32>
    %365 = vector.extract_strided_slice %364 {offsets = [0, 0], sizes = [16, 128], strides = [1, 1]} : vector<16x384xf32> to vector<16x128xf32>
    %366 = vector.extract_strided_slice %363 {offsets = [0, 0], sizes = [16, 128], strides = [1, 1]} : vector<16x384xf32> to vector<16x128xf32>
    %367 = arith.addf %365, %366 : vector<16x128xf32>
    %368 = arith.negf %367 : vector<16x128xf32>
    %369 = math.exp %368 : vector<16x128xf32>
    %cst_113 = arith.constant 1.000000e+00 : f32
    %370 = vector.broadcast %cst_113 : f32 to vector<16x128xf32>
    %371 = arith.addf %370, %369 : vector<16x128xf32>
    %372 = arith.divf %370, %371 : vector<16x128xf32>
    %373 = vector.extract_strided_slice %364 {offsets = [0, 128], sizes = [16, 128], strides = [1, 1]} : vector<16x384xf32> to vector<16x128xf32>
    %374 = vector.extract_strided_slice %363 {offsets = [0, 128], sizes = [16, 128], strides = [1, 1]} : vector<16x384xf32> to vector<16x128xf32>
    %375 = arith.addf %373, %374 : vector<16x128xf32>
    %376 = arith.negf %375 : vector<16x128xf32>
    %377 = math.exp %376 : vector<16x128xf32>
    %cst_114 = arith.constant 1.000000e+00 : f32
    %378 = vector.broadcast %cst_114 : f32 to vector<16x128xf32>
    %379 = arith.addf %378, %377 : vector<16x128xf32>
    %380 = arith.divf %378, %379 : vector<16x128xf32>
    %381 = vector.extract_strided_slice %364 {offsets = [0, 256], sizes = [16, 128], strides = [1, 1]} : vector<16x384xf32> to vector<16x128xf32>
    %382 = vector.extract_strided_slice %363 {offsets = [0, 256], sizes = [16, 128], strides = [1, 1]} : vector<16x384xf32> to vector<16x128xf32>
    %383 = arith.addf %382, %23 : vector<16x128xf32>
    %384 = arith.mulf %372, %383 : vector<16x128xf32>
    %385 = arith.addf %381, %384 : vector<16x128xf32>
    %386 = math.tanh %385 : vector<16x128xf32>
    %cst_115 = arith.constant 1.000000e+00 : f32
    %387 = vector.broadcast %cst_115 : f32 to vector<16x128xf32>
    %388 = arith.subf %387, %380 : vector<16x128xf32>
    %389 = arith.mulf %388, %386 : vector<16x128xf32>
    %390 = arith.mulf %380, %344 : vector<16x128xf32>
    %391 = arith.addf %389, %390 : vector<16x128xf32>
    %392 = vector.extract_strided_slice %391 {offsets = [0, 0], sizes = [8, 128], strides = [1, 1]} : vector<16x128xf32> to vector<8x128xf32>
    %393 = arith.truncf %392 : vector<8x128xf32> to vector<8x128xbf16>
    %c7_116 = arith.constant 7 : index
    %c0_117 = arith.constant 0 : index
    %c0_118 = arith.constant 0 : index
    %394 = vector.load %arg9[%c7_116, %c0_117, %c0_118] : memref<8x8x128xbf16, #tpu.memory_space<vmem>>, vector<1x8x128xbf16>
    %395 = vector.shape_cast %394 : vector<1x8x128xbf16> to vector<8x128xbf16>
    %396 = vector.shape_cast %393 : vector<8x128xbf16> to vector<1x8x128xbf16>
    tpu.vector_store %arg9[%c7_116, %c0_117, %c0_118], %396 {strides = array<i32>} : memref<8x8x128xbf16, #tpu.memory_space<vmem>>, vector<1x8x128xbf16>,
    %397 = vector.extract_strided_slice %391 {offsets = [8, 0], sizes = [8, 128], strides = [1, 1]} : vector<16x128xf32> to vector<8x128xf32>
    %398 = arith.truncf %397 : vector<8x128xf32> to vector<8x128xbf16>
    %c0_119 = arith.constant 0 : index
    %c0_120 = arith.constant 0 : index
    %c0_121 = arith.constant 0 : index
    %399 = vector.load %arg10[%c0_119, %c0_120, %c0_121] : memref<8x8x128xbf16, #tpu.memory_space<vmem>>, vector<1x8x128xbf16>
    %400 = vector.shape_cast %399 : vector<1x8x128xbf16> to vector<8x128xbf16>
    %401 = vector.shape_cast %398 : vector<8x128xbf16> to vector<1x8x128xbf16>
    tpu.vector_store %arg10[%c0_119, %c0_120, %c0_121], %401 {strides = array<i32>} : memref<8x8x128xbf16, #tpu.memory_space<vmem>>, vector<1x8x128xbf16>,
    %c0_122 = arith.constant 0 : index
    %c0_123 = arith.constant 0 : index
    %402 = vector.load %arg15[%c0_122, %c0_123] : memref<16x128xf32, #tpu.memory_space<vmem>>, vector<16x128xf32>
    tpu.vector_store %arg15[%c0_122, %c0_123], %391 {strides = array<i32>} : memref<16x128xf32, #tpu.memory_space<vmem>>, vector<16x128xf32>,
    %c0_i32_124 = arith.constant 0 : i32
    %403 = arith.cmpi eq, %arg0, %c0_i32_124 : i32
    %404 = arith.extui %403 : i1 to i32
    %c0_i32_125 = arith.constant 0 : i32
    %405 = arith.cmpi ne, %404, %c0_i32_125 : i32
    scf.if %405 {
      %406 = vector.extract_strided_slice %391 {offsets = [0, 0], sizes = [8, 128], strides = [1, 1]} : vector<16x128xf32> to vector<8x128xf32>
      %c0_126 = arith.constant 0 : index
      %c0_127 = arith.constant 0 : index
      %407 = vector.load %arg11[%c0_126, %c0_127] : memref<8x128xf32, #tpu.memory_space<vmem>>, vector<8x128xf32>
      tpu.vector_store %arg11[%c0_126, %c0_127], %406 {strides = array<i32>} : memref<8x128xf32, #tpu.memory_space<vmem>>, vector<8x128xf32>,
      %408 = vector.extract_strided_slice %391 {offsets = [8, 0], sizes = [8, 128], strides = [1, 1]} : vector<16x128xf32> to vector<8x128xf32>
      %c0_128 = arith.constant 0 : index
      %c0_129 = arith.constant 0 : index
      %409 = vector.load %arg12[%c0_128, %c0_129] : memref<8x128xf32, #tpu.memory_space<vmem>>, vector<8x128xf32>
      tpu.vector_store %arg12[%c0_128, %c0_129], %408 {strides = array<i32>} : memref<8x128xf32, #tpu.memory_space<vmem>>, vector<8x128xf32>,
    } else {
    }
    return
  }
  func.func @transform_0(%arg0: i32) -> (i32, i32) {
    %c0_i32 = arith.constant 0 : i32
    %c0_i32_0 = arith.constant 0 : i32
    return %arg0, %c0_i32 : i32, i32
  }
  func.func @transform_1(%arg0: i32) -> (i32, i32) {
    %c0_i32 = arith.constant 0 : i32
    %c0_i32_0 = arith.constant 0 : i32
    %c0_i32_1 = arith.constant 0 : i32
    return %c0_i32, %c0_i32_0 : i32, i32
  }
  func.func @transform_2(%arg0: i32) -> (i32, i32) {
    %c0_i32 = arith.constant 0 : i32
    %c0_i32_0 = arith.constant 0 : i32
    %c0_i32_1 = arith.constant 0 : i32
    return %c0_i32, %c0_i32_0 : i32, i32
  }
  func.func @transform_3(%arg0: i32) -> (i32, i32) {
    %c0_i32 = arith.constant 0 : i32
    %c0_i32_0 = arith.constant 0 : i32
    %c0_i32_1 = arith.constant 0 : i32
    return %c0_i32, %c0_i32_0 : i32, i32
  }
  func.func @transform_4(%arg0: i32) -> (i32, i32) {
    %c0_i32 = arith.constant 0 : i32
    %c0_i32_0 = arith.constant 0 : i32
    %c0_i32_1 = arith.constant 0 : i32
    return %c0_i32, %c0_i32_0 : i32, i32
  }
  func.func @transform_5(%arg0: i32) -> (i32, i32) {
    %c0_i32 = arith.constant 0 : i32
    %c0_i32_0 = arith.constant 0 : i32
    %c0_i32_1 = arith.constant 0 : i32
    return %c0_i32, %c0_i32_0 : i32, i32
  }
  func.func @transform_6(%arg0: i32) -> (i32, i32) {
    %c0_i32 = arith.constant 0 : i32
    %c0_i32_0 = arith.constant 0 : i32
    %c0_i32_1 = arith.constant 0 : i32
    return %c0_i32, %c0_i32_0 : i32, i32
  }
  func.func @transform_7(%arg0: i32) -> (i32, i32) {
    %c0_i32 = arith.constant 0 : i32
    %c0_i32_0 = arith.constant 0 : i32
    %c0_i32_1 = arith.constant 0 : i32
    return %c0_i32, %c0_i32_0 : i32, i32
  }
  func.func @transform_8(%arg0: i32) -> (i32, i32, i32) {
    %c0_i32 = arith.constant 0 : i32
    %c0_i32_0 = arith.constant 0 : i32
    %c0_i32_1 = arith.constant 0 : i32
    return %arg0, %c0_i32, %c0_i32_0 : i32, i32, i32
  }
  func.func @transform_9(%arg0: i32) -> (i32, i32, i32) {
    %c0_i32 = arith.constant 0 : i32
    %0 = arith.subi %c0_i32, %arg0 : i32
    %c0_i32_0 = arith.constant 0 : i32
    %c0_i32_1 = arith.constant 0 : i32
    %c0_i32_2 = arith.constant 0 : i32
    return %0, %c0_i32_0, %c0_i32_1 : i32, i32, i32
  }
  func.func @transform_10(%arg0: i32) -> (i32, i32) {
    %c0_i32 = arith.constant 0 : i32
    %c0_i32_0 = arith.constant 0 : i32
    %c0_i32_1 = arith.constant 0 : i32
    return %c0_i32, %c0_i32_0 : i32, i32
  }
  func.func @transform_11(%arg0: i32) -> (i32, i32) {
    %c0_i32 = arith.constant 0 : i32
    %c0_i32_0 = arith.constant 0 : i32
    %c0_i32_1 = arith.constant 0 : i32
    return %c0_i32, %c0_i32_0 : i32, i32
  }
}

module attributes {stable_mosaic.version = 11 : i64} {
  func.func @kernel(%arg0: i32, %arg1: memref<64x128xbf16, #tpu.memory_space<vmem>>, %arg2: memref<64x128xbf16, #tpu.memory_space<vmem>>, %arg3: memref<256x384xbf16, #tpu.memory_space<vmem>>, %arg4: memref<256x384xbf16, #tpu.memory_space<vmem>>, %arg5: memref<1x384xf32, #tpu.memory_space<vmem>>, %arg6: memref<1x384xf32, #tpu.memory_space<vmem>>, %arg7: memref<256x384xbf16, #tpu.memory_space<vmem>>, %arg8: memref<1x128xf32, #tpu.memory_space<vmem>>, %arg9: memref<1x128xf32, #tpu.memory_space<vmem>>, %arg10: memref<8x128xf32, #tpu.memory_space<vmem>>, %arg11: memref<8x128xf32, #tpu.memory_space<vmem>>, %arg12: memref<64x384xf32, #tpu.memory_space<vmem>>, %arg13: memref<64x384xf32, #tpu.memory_space<vmem>>, %arg14: memref<16x128xf32, #tpu.memory_space<vmem>>) attributes {dimension_semantics = [#tpu.dimension_semantics<arbitrary>], iteration_bounds = array<i64: 1>, scalar_prefetch = 0 : i64, scratch_operands = 3 : i64, tpu.core_type = #tpu.core_type<tc>, window_params = [{transform_indices = @transform_0, window_bounds = array<i64: 64, 128>}, {transform_indices = @transform_1, window_bounds = array<i64: 64, 128>}, {pipeline_mode = #tpu.pipeline_mode<synchronous>, transform_indices = @transform_2, window_bounds = array<i64: 256, 384>}, {pipeline_mode = #tpu.pipeline_mode<synchronous>, transform_indices = @transform_3, window_bounds = array<i64: 256, 384>}, {pipeline_mode = #tpu.pipeline_mode<synchronous>, transform_indices = @transform_4, window_bounds = array<i64: 1, 384>}, {pipeline_mode = #tpu.pipeline_mode<synchronous>, transform_indices = @transform_5, window_bounds = array<i64: 1, 384>}, {pipeline_mode = #tpu.pipeline_mode<synchronous>, transform_indices = @transform_6, window_bounds = array<i64: 256, 384>}, {pipeline_mode = #tpu.pipeline_mode<synchronous>, transform_indices = @transform_7, window_bounds = array<i64: 1, 128>}, {pipeline_mode = #tpu.pipeline_mode<synchronous>, transform_indices = @transform_8, window_bounds = array<i64: 1, 128>}, {pipeline_mode = #tpu.pipeline_mode<synchronous>, transform_indices = @transform_9, window_bounds = array<i64: 8, 128>}, {pipeline_mode = #tpu.pipeline_mode<synchronous>, transform_indices = @transform_10, window_bounds = array<i64: 8, 128>}]} {
    %c0_i32 = arith.constant 0 : i32
    %0 = arith.cmpi eq, %arg0, %c0_i32 : i32
    %1 = arith.extui %0 : i1 to i32
    %c0_i32_0 = arith.constant 0 : i32
    %2 = arith.cmpi ne, %1, %c0_i32_0 : i32
    scf.if %2 {
      %cst_92 = arith.constant 0.000000e+00 : f32
      %333 = vector.broadcast %cst_92 : f32 to vector<16x128xf32>
      %c0_93 = arith.constant 0 : index
      %c0_94 = arith.constant 0 : index
      %334 = vector.load %arg14[%c0_93, %c0_94] : memref<16x128xf32, #tpu.memory_space<vmem>>, vector<16x128xf32>
      tpu.vector_store %arg14[%c0_93, %c0_94], %333 {strides = array<i32>} : memref<16x128xf32, #tpu.memory_space<vmem>>, vector<16x128xf32>,
    } else {
    }
    %c0 = arith.constant 0 : index
    %c0_1 = arith.constant 0 : index
    %3 = vector.load %arg1[%c0, %c0_1] : memref<64x128xbf16, #tpu.memory_space<vmem>>, vector<64x128xbf16>
    %c0_2 = arith.constant 0 : index
    %c0_3 = arith.constant 0 : index
    %4 = vector.load %arg2[%c0_2, %c0_3] : memref<64x128xbf16, #tpu.memory_space<vmem>>, vector<64x128xbf16>
    %c0_4 = arith.constant 0 : index
    %c0_5 = arith.constant 0 : index
    %5 = vector.load %arg3[%c0_4, %c0_5] : memref<256x384xbf16, #tpu.memory_space<vmem>>, vector<128x384xbf16>
    %cst = arith.constant dense<0.000000e+00> : vector<64x384xf32>
    %6 = tpu.matmul %3, %5, %cst {dimension_numbers = #tpu.dot_dimension_numbers<[1], [0], [0], [1], [0, 0, 1, 1], [], []>} : vector<64x128xbf16>, vector<128x384xbf16>, vector<64x384xf32> -> vector<64x384xf32>
    %c128 = arith.constant 128 : index
    %c0_6 = arith.constant 0 : index
    %7 = vector.load %arg3[%c128, %c0_6] : memref<256x384xbf16, #tpu.memory_space<vmem>>, vector<128x384xbf16>
    %cst_7 = arith.constant dense<0.000000e+00> : vector<64x384xf32>
    %8 = tpu.matmul %4, %7, %cst_7 {dimension_numbers = #tpu.dot_dimension_numbers<[1], [0], [0], [1], [0, 0, 1, 1], [], []>} : vector<64x128xbf16>, vector<128x384xbf16>, vector<64x384xf32> -> vector<64x384xf32>
    %9 = arith.addf %6, %8 : vector<64x384xf32>
    %c0_8 = arith.constant 0 : index
    %c0_9 = arith.constant 0 : index
    %10 = vector.load %arg5[%c0_8, %c0_9] : memref<1x384xf32, #tpu.memory_space<vmem>>, vector<1x384xf32>
    %11 = vector.broadcast %10 : vector<1x384xf32> to vector<64x384xf32>
    %12 = arith.addf %9, %11 : vector<64x384xf32>
    %c0_10 = arith.constant 0 : index
    %c0_11 = arith.constant 0 : index
    %13 = vector.load %arg12[%c0_10, %c0_11] : memref<64x384xf32, #tpu.memory_space<vmem>>, vector<64x384xf32>
    tpu.vector_store %arg12[%c0_10, %c0_11], %12 {strides = array<i32>} : memref<64x384xf32, #tpu.memory_space<vmem>>, vector<64x384xf32>,
    %c0_12 = arith.constant 0 : index
    %c0_13 = arith.constant 0 : index
    %14 = vector.load %arg4[%c0_12, %c0_13] : memref<256x384xbf16, #tpu.memory_space<vmem>>, vector<128x384xbf16>
    %cst_14 = arith.constant dense<0.000000e+00> : vector<64x384xf32>
    %15 = tpu.matmul %3, %14, %cst_14 {dimension_numbers = #tpu.dot_dimension_numbers<[1], [0], [0], [1], [0, 0, 1, 1], [], []>} : vector<64x128xbf16>, vector<128x384xbf16>, vector<64x384xf32> -> vector<64x384xf32>
    %c128_15 = arith.constant 128 : index
    %c0_16 = arith.constant 0 : index
    %16 = vector.load %arg4[%c128_15, %c0_16] : memref<256x384xbf16, #tpu.memory_space<vmem>>, vector<128x384xbf16>
    %cst_17 = arith.constant dense<0.000000e+00> : vector<64x384xf32>
    %17 = tpu.matmul %4, %16, %cst_17 {dimension_numbers = #tpu.dot_dimension_numbers<[1], [0], [0], [1], [0, 0, 1, 1], [], []>} : vector<64x128xbf16>, vector<128x384xbf16>, vector<64x384xf32> -> vector<64x384xf32>
    %18 = arith.addf %15, %17 : vector<64x384xf32>
    %c0_18 = arith.constant 0 : index
    %c0_19 = arith.constant 0 : index
    %19 = vector.load %arg6[%c0_18, %c0_19] : memref<1x384xf32, #tpu.memory_space<vmem>>, vector<1x384xf32>
    %20 = vector.broadcast %19 : vector<1x384xf32> to vector<64x384xf32>
    %21 = arith.addf %18, %20 : vector<64x384xf32>
    %c0_20 = arith.constant 0 : index
    %c0_21 = arith.constant 0 : index
    %22 = vector.load %arg13[%c0_20, %c0_21] : memref<64x384xf32, #tpu.memory_space<vmem>>, vector<64x384xf32>
    tpu.vector_store %arg13[%c0_20, %c0_21], %21 {strides = array<i32>} : memref<64x384xf32, #tpu.memory_space<vmem>>, vector<64x384xf32>,
    %c0_22 = arith.constant 0 : index
    %c0_23 = arith.constant 0 : index
    %23 = vector.load %arg8[%c0_22, %c0_23] : memref<1x128xf32, #tpu.memory_space<vmem>>, vector<1x128xf32>
    %24 = vector.shape_cast %23 : vector<1x128xf32> to vector<1x128xf32>
    %25 = vector.broadcast %24 : vector<1x128xf32> to vector<8x128xf32>
    %c0_24 = arith.constant 0 : index
    %c0_25 = arith.constant 0 : index
    %26 = vector.load %arg9[%c0_24, %c0_25] : memref<1x128xf32, #tpu.memory_space<vmem>>, vector<1x128xf32>
    %27 = vector.shape_cast %26 : vector<1x128xf32> to vector<1x128xf32>
    %28 = vector.broadcast %27 : vector<1x128xf32> to vector<8x128xf32>
    %c0_26 = arith.constant 0 : index
    %c0_27 = arith.constant 0 : index
    %29 = vector.load %arg7[%c0_26, %c0_27] : memref<256x384xbf16, #tpu.memory_space<vmem>>, vector<256x384xbf16>
    %30 = tpu.concatenate %25, %28 in 0 : vector<8x128xf32>, vector<8x128xf32> -> vector<16x128xf32>
    %cst_28 = arith.constant 0.000000e+00 : f32
    %31 = vector.broadcast %cst_28 : f32 to vector<8x128xf32>
    %c0_29 = arith.constant 0 : index
    %c0_30 = arith.constant 0 : index
    %32 = vector.load %arg14[%c0_29, %c0_30] : memref<16x128xf32, #tpu.memory_space<vmem>>, vector<16x128xf32>
    %c0_31 = arith.constant 0 : index
    %c0_32 = arith.constant 0 : index
    %33 = vector.load %arg12[%c0_31, %c0_32] : memref<64x384xf32, #tpu.memory_space<vmem>>, vector<8x384xf32>
    %c56 = arith.constant 56 : index
    %c0_33 = arith.constant 0 : index
    %34 = vector.load %arg13[%c56, %c0_33] : memref<64x384xf32, #tpu.memory_space<vmem>>, vector<8x384xf32>
    %35 = vector.extract_strided_slice %32 {offsets = [0, 0], sizes = [8, 128], strides = [1, 1]} : vector<16x128xf32> to vector<8x128xf32>
    %36 = tpu.concatenate %35, %31 in 1 : vector<8x128xf32>, vector<8x128xf32> -> vector<8x256xf32>
    %37 = vector.extract_strided_slice %32 {offsets = [8, 0], sizes = [8, 128], strides = [1, 1]} : vector<16x128xf32> to vector<8x128xf32>
    %38 = tpu.concatenate %31, %37 in 1 : vector<8x128xf32>, vector<8x128xf32> -> vector<8x256xf32>
    %39 = tpu.concatenate %36, %38 in 0 : vector<8x256xf32>, vector<8x256xf32> -> vector<16x256xf32>
    %40 = arith.truncf %39 : vector<16x256xf32> to vector<16x256xbf16>
    %cst_34 = arith.constant dense<0.000000e+00> : vector<16x384xf32>
    %41 = tpu.matmul %40, %29, %cst_34 {dimension_numbers = #tpu.dot_dimension_numbers<[1], [0], [0], [1], [0, 0, 1, 1], [], []>} : vector<16x256xbf16>, vector<256x384xbf16>, vector<16x384xf32> -> vector<16x384xf32>
    %42 = tpu.concatenate %33, %34 in 0 : vector<8x384xf32>, vector<8x384xf32> -> vector<16x384xf32>
    %43 = vector.extract_strided_slice %42 {offsets = [0, 0], sizes = [16, 128], strides = [1, 1]} : vector<16x384xf32> to vector<16x128xf32>
    %44 = vector.extract_strided_slice %41 {offsets = [0, 0], sizes = [16, 128], strides = [1, 1]} : vector<16x384xf32> to vector<16x128xf32>
    %45 = arith.addf %43, %44 : vector<16x128xf32>
    %46 = arith.negf %45 : vector<16x128xf32>
    %47 = math.exp %46 : vector<16x128xf32>
    %cst_35 = arith.constant 1.000000e+00 : f32
    %48 = vector.broadcast %cst_35 : f32 to vector<16x128xf32>
    %49 = arith.addf %48, %47 : vector<16x128xf32>
    %50 = arith.divf %48, %49 : vector<16x128xf32>
    %51 = vector.extract_strided_slice %42 {offsets = [0, 128], sizes = [16, 128], strides = [1, 1]} : vector<16x384xf32> to vector<16x128xf32>
    %52 = vector.extract_strided_slice %41 {offsets = [0, 128], sizes = [16, 128], strides = [1, 1]} : vector<16x384xf32> to vector<16x128xf32>
    %53 = arith.addf %51, %52 : vector<16x128xf32>
    %54 = arith.negf %53 : vector<16x128xf32>
    %55 = math.exp %54 : vector<16x128xf32>
    %cst_36 = arith.constant 1.000000e+00 : f32
    %56 = vector.broadcast %cst_36 : f32 to vector<16x128xf32>
    %57 = arith.addf %56, %55 : vector<16x128xf32>
    %58 = arith.divf %56, %57 : vector<16x128xf32>
    %59 = vector.extract_strided_slice %42 {offsets = [0, 256], sizes = [16, 128], strides = [1, 1]} : vector<16x384xf32> to vector<16x128xf32>
    %60 = vector.extract_strided_slice %41 {offsets = [0, 256], sizes = [16, 128], strides = [1, 1]} : vector<16x384xf32> to vector<16x128xf32>
    %61 = arith.addf %60, %30 : vector<16x128xf32>
    %62 = arith.mulf %50, %61 : vector<16x128xf32>
    %63 = arith.addf %59, %62 : vector<16x128xf32>
    %64 = math.tanh %63 : vector<16x128xf32>
    %cst_37 = arith.constant 1.000000e+00 : f32
    %65 = vector.broadcast %cst_37 : f32 to vector<16x128xf32>
    %66 = arith.subf %65, %58 : vector<16x128xf32>
    %67 = arith.mulf %66, %64 : vector<16x128xf32>
    %68 = arith.mulf %58, %32 : vector<16x128xf32>
    %69 = arith.addf %67, %68 : vector<16x128xf32>
    %c8 = arith.constant 8 : index
    %c0_38 = arith.constant 0 : index
    %70 = vector.load %arg12[%c8, %c0_38] : memref<64x384xf32, #tpu.memory_space<vmem>>, vector<8x384xf32>
    %c48 = arith.constant 48 : index
    %c0_39 = arith.constant 0 : index
    %71 = vector.load %arg13[%c48, %c0_39] : memref<64x384xf32, #tpu.memory_space<vmem>>, vector<8x384xf32>
    %72 = vector.extract_strided_slice %69 {offsets = [0, 0], sizes = [8, 128], strides = [1, 1]} : vector<16x128xf32> to vector<8x128xf32>
    %73 = tpu.concatenate %72, %31 in 1 : vector<8x128xf32>, vector<8x128xf32> -> vector<8x256xf32>
    %74 = vector.extract_strided_slice %69 {offsets = [8, 0], sizes = [8, 128], strides = [1, 1]} : vector<16x128xf32> to vector<8x128xf32>
    %75 = tpu.concatenate %31, %74 in 1 : vector<8x128xf32>, vector<8x128xf32> -> vector<8x256xf32>
    %76 = tpu.concatenate %73, %75 in 0 : vector<8x256xf32>, vector<8x256xf32> -> vector<16x256xf32>
    %77 = arith.truncf %76 : vector<16x256xf32> to vector<16x256xbf16>
    %cst_40 = arith.constant dense<0.000000e+00> : vector<16x384xf32>
    %78 = tpu.matmul %77, %29, %cst_40 {dimension_numbers = #tpu.dot_dimension_numbers<[1], [0], [0], [1], [0, 0, 1, 1], [], []>} : vector<16x256xbf16>, vector<256x384xbf16>, vector<16x384xf32> -> vector<16x384xf32>
    %79 = tpu.concatenate %70, %71 in 0 : vector<8x384xf32>, vector<8x384xf32> -> vector<16x384xf32>
    %80 = vector.extract_strided_slice %79 {offsets = [0, 0], sizes = [16, 128], strides = [1, 1]} : vector<16x384xf32> to vector<16x128xf32>
    %81 = vector.extract_strided_slice %78 {offsets = [0, 0], sizes = [16, 128], strides = [1, 1]} : vector<16x384xf32> to vector<16x128xf32>
    %82 = arith.addf %80, %81 : vector<16x128xf32>
    %83 = arith.negf %82 : vector<16x128xf32>
    %84 = math.exp %83 : vector<16x128xf32>
    %cst_41 = arith.constant 1.000000e+00 : f32
    %85 = vector.broadcast %cst_41 : f32 to vector<16x128xf32>
    %86 = arith.addf %85, %84 : vector<16x128xf32>
    %87 = arith.divf %85, %86 : vector<16x128xf32>
    %88 = vector.extract_strided_slice %79 {offsets = [0, 128], sizes = [16, 128], strides = [1, 1]} : vector<16x384xf32> to vector<16x128xf32>
    %89 = vector.extract_strided_slice %78 {offsets = [0, 128], sizes = [16, 128], strides = [1, 1]} : vector<16x384xf32> to vector<16x128xf32>
    %90 = arith.addf %88, %89 : vector<16x128xf32>
    %91 = arith.negf %90 : vector<16x128xf32>
    %92 = math.exp %91 : vector<16x128xf32>
    %cst_42 = arith.constant 1.000000e+00 : f32
    %93 = vector.broadcast %cst_42 : f32 to vector<16x128xf32>
    %94 = arith.addf %93, %92 : vector<16x128xf32>
    %95 = arith.divf %93, %94 : vector<16x128xf32>
    %96 = vector.extract_strided_slice %79 {offsets = [0, 256], sizes = [16, 128], strides = [1, 1]} : vector<16x384xf32> to vector<16x128xf32>
    %97 = vector.extract_strided_slice %78 {offsets = [0, 256], sizes = [16, 128], strides = [1, 1]} : vector<16x384xf32> to vector<16x128xf32>
    %98 = arith.addf %97, %30 : vector<16x128xf32>
    %99 = arith.mulf %87, %98 : vector<16x128xf32>
    %100 = arith.addf %96, %99 : vector<16x128xf32>
    %101 = math.tanh %100 : vector<16x128xf32>
    %cst_43 = arith.constant 1.000000e+00 : f32
    %102 = vector.broadcast %cst_43 : f32 to vector<16x128xf32>
    %103 = arith.subf %102, %95 : vector<16x128xf32>
    %104 = arith.mulf %103, %101 : vector<16x128xf32>
    %105 = arith.mulf %95, %69 : vector<16x128xf32>
    %106 = arith.addf %104, %105 : vector<16x128xf32>
    %c16 = arith.constant 16 : index
    %c0_44 = arith.constant 0 : index
    %107 = vector.load %arg12[%c16, %c0_44] : memref<64x384xf32, #tpu.memory_space<vmem>>, vector<8x384xf32>
    %c40 = arith.constant 40 : index
    %c0_45 = arith.constant 0 : index
    %108 = vector.load %arg13[%c40, %c0_45] : memref<64x384xf32, #tpu.memory_space<vmem>>, vector<8x384xf32>
    %109 = vector.extract_strided_slice %106 {offsets = [0, 0], sizes = [8, 128], strides = [1, 1]} : vector<16x128xf32> to vector<8x128xf32>
    %110 = tpu.concatenate %109, %31 in 1 : vector<8x128xf32>, vector<8x128xf32> -> vector<8x256xf32>
    %111 = vector.extract_strided_slice %106 {offsets = [8, 0], sizes = [8, 128], strides = [1, 1]} : vector<16x128xf32> to vector<8x128xf32>
    %112 = tpu.concatenate %31, %111 in 1 : vector<8x128xf32>, vector<8x128xf32> -> vector<8x256xf32>
    %113 = tpu.concatenate %110, %112 in 0 : vector<8x256xf32>, vector<8x256xf32> -> vector<16x256xf32>
    %114 = arith.truncf %113 : vector<16x256xf32> to vector<16x256xbf16>
    %cst_46 = arith.constant dense<0.000000e+00> : vector<16x384xf32>
    %115 = tpu.matmul %114, %29, %cst_46 {dimension_numbers = #tpu.dot_dimension_numbers<[1], [0], [0], [1], [0, 0, 1, 1], [], []>} : vector<16x256xbf16>, vector<256x384xbf16>, vector<16x384xf32> -> vector<16x384xf32>
    %116 = tpu.concatenate %107, %108 in 0 : vector<8x384xf32>, vector<8x384xf32> -> vector<16x384xf32>
    %117 = vector.extract_strided_slice %116 {offsets = [0, 0], sizes = [16, 128], strides = [1, 1]} : vector<16x384xf32> to vector<16x128xf32>
    %118 = vector.extract_strided_slice %115 {offsets = [0, 0], sizes = [16, 128], strides = [1, 1]} : vector<16x384xf32> to vector<16x128xf32>
    %119 = arith.addf %117, %118 : vector<16x128xf32>
    %120 = arith.negf %119 : vector<16x128xf32>
    %121 = math.exp %120 : vector<16x128xf32>
    %cst_47 = arith.constant 1.000000e+00 : f32
    %122 = vector.broadcast %cst_47 : f32 to vector<16x128xf32>
    %123 = arith.addf %122, %121 : vector<16x128xf32>
    %124 = arith.divf %122, %123 : vector<16x128xf32>
    %125 = vector.extract_strided_slice %116 {offsets = [0, 128], sizes = [16, 128], strides = [1, 1]} : vector<16x384xf32> to vector<16x128xf32>
    %126 = vector.extract_strided_slice %115 {offsets = [0, 128], sizes = [16, 128], strides = [1, 1]} : vector<16x384xf32> to vector<16x128xf32>
    %127 = arith.addf %125, %126 : vector<16x128xf32>
    %128 = arith.negf %127 : vector<16x128xf32>
    %129 = math.exp %128 : vector<16x128xf32>
    %cst_48 = arith.constant 1.000000e+00 : f32
    %130 = vector.broadcast %cst_48 : f32 to vector<16x128xf32>
    %131 = arith.addf %130, %129 : vector<16x128xf32>
    %132 = arith.divf %130, %131 : vector<16x128xf32>
    %133 = vector.extract_strided_slice %116 {offsets = [0, 256], sizes = [16, 128], strides = [1, 1]} : vector<16x384xf32> to vector<16x128xf32>
    %134 = vector.extract_strided_slice %115 {offsets = [0, 256], sizes = [16, 128], strides = [1, 1]} : vector<16x384xf32> to vector<16x128xf32>
    %135 = arith.addf %134, %30 : vector<16x128xf32>
    %136 = arith.mulf %124, %135 : vector<16x128xf32>
    %137 = arith.addf %133, %136 : vector<16x128xf32>
    %138 = math.tanh %137 : vector<16x128xf32>
    %cst_49 = arith.constant 1.000000e+00 : f32
    %139 = vector.broadcast %cst_49 : f32 to vector<16x128xf32>
    %140 = arith.subf %139, %132 : vector<16x128xf32>
    %141 = arith.mulf %140, %138 : vector<16x128xf32>
    %142 = arith.mulf %132, %106 : vector<16x128xf32>
    %143 = arith.addf %141, %142 : vector<16x128xf32>
    %c24 = arith.constant 24 : index
    %c0_50 = arith.constant 0 : index
    %144 = vector.load %arg12[%c24, %c0_50] : memref<64x384xf32, #tpu.memory_space<vmem>>, vector<8x384xf32>
    %c32 = arith.constant 32 : index
    %c0_51 = arith.constant 0 : index
    %145 = vector.load %arg13[%c32, %c0_51] : memref<64x384xf32, #tpu.memory_space<vmem>>, vector<8x384xf32>
    %146 = vector.extract_strided_slice %143 {offsets = [0, 0], sizes = [8, 128], strides = [1, 1]} : vector<16x128xf32> to vector<8x128xf32>
    %147 = tpu.concatenate %146, %31 in 1 : vector<8x128xf32>, vector<8x128xf32> -> vector<8x256xf32>
    %148 = vector.extract_strided_slice %143 {offsets = [8, 0], sizes = [8, 128], strides = [1, 1]} : vector<16x128xf32> to vector<8x128xf32>
    %149 = tpu.concatenate %31, %148 in 1 : vector<8x128xf32>, vector<8x128xf32> -> vector<8x256xf32>
    %150 = tpu.concatenate %147, %149 in 0 : vector<8x256xf32>, vector<8x256xf32> -> vector<16x256xf32>
    %151 = arith.truncf %150 : vector<16x256xf32> to vector<16x256xbf16>
    %cst_52 = arith.constant dense<0.000000e+00> : vector<16x384xf32>
    %152 = tpu.matmul %151, %29, %cst_52 {dimension_numbers = #tpu.dot_dimension_numbers<[1], [0], [0], [1], [0, 0, 1, 1], [], []>} : vector<16x256xbf16>, vector<256x384xbf16>, vector<16x384xf32> -> vector<16x384xf32>
    %153 = tpu.concatenate %144, %145 in 0 : vector<8x384xf32>, vector<8x384xf32> -> vector<16x384xf32>
    %154 = vector.extract_strided_slice %153 {offsets = [0, 0], sizes = [16, 128], strides = [1, 1]} : vector<16x384xf32> to vector<16x128xf32>
    %155 = vector.extract_strided_slice %152 {offsets = [0, 0], sizes = [16, 128], strides = [1, 1]} : vector<16x384xf32> to vector<16x128xf32>
    %156 = arith.addf %154, %155 : vector<16x128xf32>
    %157 = arith.negf %156 : vector<16x128xf32>
    %158 = math.exp %157 : vector<16x128xf32>
    %cst_53 = arith.constant 1.000000e+00 : f32
    %159 = vector.broadcast %cst_53 : f32 to vector<16x128xf32>
    %160 = arith.addf %159, %158 : vector<16x128xf32>
    %161 = arith.divf %159, %160 : vector<16x128xf32>
    %162 = vector.extract_strided_slice %153 {offsets = [0, 128], sizes = [16, 128], strides = [1, 1]} : vector<16x384xf32> to vector<16x128xf32>
    %163 = vector.extract_strided_slice %152 {offsets = [0, 128], sizes = [16, 128], strides = [1, 1]} : vector<16x384xf32> to vector<16x128xf32>
    %164 = arith.addf %162, %163 : vector<16x128xf32>
    %165 = arith.negf %164 : vector<16x128xf32>
    %166 = math.exp %165 : vector<16x128xf32>
    %cst_54 = arith.constant 1.000000e+00 : f32
    %167 = vector.broadcast %cst_54 : f32 to vector<16x128xf32>
    %168 = arith.addf %167, %166 : vector<16x128xf32>
    %169 = arith.divf %167, %168 : vector<16x128xf32>
    %170 = vector.extract_strided_slice %153 {offsets = [0, 256], sizes = [16, 128], strides = [1, 1]} : vector<16x384xf32> to vector<16x128xf32>
    %171 = vector.extract_strided_slice %152 {offsets = [0, 256], sizes = [16, 128], strides = [1, 1]} : vector<16x384xf32> to vector<16x128xf32>
    %172 = arith.addf %171, %30 : vector<16x128xf32>
    %173 = arith.mulf %161, %172 : vector<16x128xf32>
    %174 = arith.addf %170, %173 : vector<16x128xf32>
    %175 = math.tanh %174 : vector<16x128xf32>
    %cst_55 = arith.constant 1.000000e+00 : f32
    %176 = vector.broadcast %cst_55 : f32 to vector<16x128xf32>
    %177 = arith.subf %176, %169 : vector<16x128xf32>
    %178 = arith.mulf %177, %175 : vector<16x128xf32>
    %179 = arith.mulf %169, %143 : vector<16x128xf32>
    %180 = arith.addf %178, %179 : vector<16x128xf32>
    %c32_56 = arith.constant 32 : index
    %c0_57 = arith.constant 0 : index
    %181 = vector.load %arg12[%c32_56, %c0_57] : memref<64x384xf32, #tpu.memory_space<vmem>>, vector<8x384xf32>
    %c24_58 = arith.constant 24 : index
    %c0_59 = arith.constant 0 : index
    %182 = vector.load %arg13[%c24_58, %c0_59] : memref<64x384xf32, #tpu.memory_space<vmem>>, vector<8x384xf32>
    %183 = vector.extract_strided_slice %180 {offsets = [0, 0], sizes = [8, 128], strides = [1, 1]} : vector<16x128xf32> to vector<8x128xf32>
    %184 = tpu.concatenate %183, %31 in 1 : vector<8x128xf32>, vector<8x128xf32> -> vector<8x256xf32>
    %185 = vector.extract_strided_slice %180 {offsets = [8, 0], sizes = [8, 128], strides = [1, 1]} : vector<16x128xf32> to vector<8x128xf32>
    %186 = tpu.concatenate %31, %185 in 1 : vector<8x128xf32>, vector<8x128xf32> -> vector<8x256xf32>
    %187 = tpu.concatenate %184, %186 in 0 : vector<8x256xf32>, vector<8x256xf32> -> vector<16x256xf32>
    %188 = arith.truncf %187 : vector<16x256xf32> to vector<16x256xbf16>
    %cst_60 = arith.constant dense<0.000000e+00> : vector<16x384xf32>
    %189 = tpu.matmul %188, %29, %cst_60 {dimension_numbers = #tpu.dot_dimension_numbers<[1], [0], [0], [1], [0, 0, 1, 1], [], []>} : vector<16x256xbf16>, vector<256x384xbf16>, vector<16x384xf32> -> vector<16x384xf32>
    %190 = tpu.concatenate %181, %182 in 0 : vector<8x384xf32>, vector<8x384xf32> -> vector<16x384xf32>
    %191 = vector.extract_strided_slice %190 {offsets = [0, 0], sizes = [16, 128], strides = [1, 1]} : vector<16x384xf32> to vector<16x128xf32>
    %192 = vector.extract_strided_slice %189 {offsets = [0, 0], sizes = [16, 128], strides = [1, 1]} : vector<16x384xf32> to vector<16x128xf32>
    %193 = arith.addf %191, %192 : vector<16x128xf32>
    %194 = arith.negf %193 : vector<16x128xf32>
    %195 = math.exp %194 : vector<16x128xf32>
    %cst_61 = arith.constant 1.000000e+00 : f32
    %196 = vector.broadcast %cst_61 : f32 to vector<16x128xf32>
    %197 = arith.addf %196, %195 : vector<16x128xf32>
    %198 = arith.divf %196, %197 : vector<16x128xf32>
    %199 = vector.extract_strided_slice %190 {offsets = [0, 128], sizes = [16, 128], strides = [1, 1]} : vector<16x384xf32> to vector<16x128xf32>
    %200 = vector.extract_strided_slice %189 {offsets = [0, 128], sizes = [16, 128], strides = [1, 1]} : vector<16x384xf32> to vector<16x128xf32>
    %201 = arith.addf %199, %200 : vector<16x128xf32>
    %202 = arith.negf %201 : vector<16x128xf32>
    %203 = math.exp %202 : vector<16x128xf32>
    %cst_62 = arith.constant 1.000000e+00 : f32
    %204 = vector.broadcast %cst_62 : f32 to vector<16x128xf32>
    %205 = arith.addf %204, %203 : vector<16x128xf32>
    %206 = arith.divf %204, %205 : vector<16x128xf32>
    %207 = vector.extract_strided_slice %190 {offsets = [0, 256], sizes = [16, 128], strides = [1, 1]} : vector<16x384xf32> to vector<16x128xf32>
    %208 = vector.extract_strided_slice %189 {offsets = [0, 256], sizes = [16, 128], strides = [1, 1]} : vector<16x384xf32> to vector<16x128xf32>
    %209 = arith.addf %208, %30 : vector<16x128xf32>
    %210 = arith.mulf %198, %209 : vector<16x128xf32>
    %211 = arith.addf %207, %210 : vector<16x128xf32>
    %212 = math.tanh %211 : vector<16x128xf32>
    %cst_63 = arith.constant 1.000000e+00 : f32
    %213 = vector.broadcast %cst_63 : f32 to vector<16x128xf32>
    %214 = arith.subf %213, %206 : vector<16x128xf32>
    %215 = arith.mulf %214, %212 : vector<16x128xf32>
    %216 = arith.mulf %206, %180 : vector<16x128xf32>
    %217 = arith.addf %215, %216 : vector<16x128xf32>
    %c40_64 = arith.constant 40 : index
    %c0_65 = arith.constant 0 : index
    %218 = vector.load %arg12[%c40_64, %c0_65] : memref<64x384xf32, #tpu.memory_space<vmem>>, vector<8x384xf32>
    %c16_66 = arith.constant 16 : index
    %c0_67 = arith.constant 0 : index
    %219 = vector.load %arg13[%c16_66, %c0_67] : memref<64x384xf32, #tpu.memory_space<vmem>>, vector<8x384xf32>
    %220 = vector.extract_strided_slice %217 {offsets = [0, 0], sizes = [8, 128], strides = [1, 1]} : vector<16x128xf32> to vector<8x128xf32>
    %221 = tpu.concatenate %220, %31 in 1 : vector<8x128xf32>, vector<8x128xf32> -> vector<8x256xf32>
    %222 = vector.extract_strided_slice %217 {offsets = [8, 0], sizes = [8, 128], strides = [1, 1]} : vector<16x128xf32> to vector<8x128xf32>
    %223 = tpu.concatenate %31, %222 in 1 : vector<8x128xf32>, vector<8x128xf32> -> vector<8x256xf32>
    %224 = tpu.concatenate %221, %223 in 0 : vector<8x256xf32>, vector<8x256xf32> -> vector<16x256xf32>
    %225 = arith.truncf %224 : vector<16x256xf32> to vector<16x256xbf16>
    %cst_68 = arith.constant dense<0.000000e+00> : vector<16x384xf32>
    %226 = tpu.matmul %225, %29, %cst_68 {dimension_numbers = #tpu.dot_dimension_numbers<[1], [0], [0], [1], [0, 0, 1, 1], [], []>} : vector<16x256xbf16>, vector<256x384xbf16>, vector<16x384xf32> -> vector<16x384xf32>
    %227 = tpu.concatenate %218, %219 in 0 : vector<8x384xf32>, vector<8x384xf32> -> vector<16x384xf32>
    %228 = vector.extract_strided_slice %227 {offsets = [0, 0], sizes = [16, 128], strides = [1, 1]} : vector<16x384xf32> to vector<16x128xf32>
    %229 = vector.extract_strided_slice %226 {offsets = [0, 0], sizes = [16, 128], strides = [1, 1]} : vector<16x384xf32> to vector<16x128xf32>
    %230 = arith.addf %228, %229 : vector<16x128xf32>
    %231 = arith.negf %230 : vector<16x128xf32>
    %232 = math.exp %231 : vector<16x128xf32>
    %cst_69 = arith.constant 1.000000e+00 : f32
    %233 = vector.broadcast %cst_69 : f32 to vector<16x128xf32>
    %234 = arith.addf %233, %232 : vector<16x128xf32>
    %235 = arith.divf %233, %234 : vector<16x128xf32>
    %236 = vector.extract_strided_slice %227 {offsets = [0, 128], sizes = [16, 128], strides = [1, 1]} : vector<16x384xf32> to vector<16x128xf32>
    %237 = vector.extract_strided_slice %226 {offsets = [0, 128], sizes = [16, 128], strides = [1, 1]} : vector<16x384xf32> to vector<16x128xf32>
    %238 = arith.addf %236, %237 : vector<16x128xf32>
    %239 = arith.negf %238 : vector<16x128xf32>
    %240 = math.exp %239 : vector<16x128xf32>
    %cst_70 = arith.constant 1.000000e+00 : f32
    %241 = vector.broadcast %cst_70 : f32 to vector<16x128xf32>
    %242 = arith.addf %241, %240 : vector<16x128xf32>
    %243 = arith.divf %241, %242 : vector<16x128xf32>
    %244 = vector.extract_strided_slice %227 {offsets = [0, 256], sizes = [16, 128], strides = [1, 1]} : vector<16x384xf32> to vector<16x128xf32>
    %245 = vector.extract_strided_slice %226 {offsets = [0, 256], sizes = [16, 128], strides = [1, 1]} : vector<16x384xf32> to vector<16x128xf32>
    %246 = arith.addf %245, %30 : vector<16x128xf32>
    %247 = arith.mulf %235, %246 : vector<16x128xf32>
    %248 = arith.addf %244, %247 : vector<16x128xf32>
    %249 = math.tanh %248 : vector<16x128xf32>
    %cst_71 = arith.constant 1.000000e+00 : f32
    %250 = vector.broadcast %cst_71 : f32 to vector<16x128xf32>
    %251 = arith.subf %250, %243 : vector<16x128xf32>
    %252 = arith.mulf %251, %249 : vector<16x128xf32>
    %253 = arith.mulf %243, %217 : vector<16x128xf32>
    %254 = arith.addf %252, %253 : vector<16x128xf32>
    %c48_72 = arith.constant 48 : index
    %c0_73 = arith.constant 0 : index
    %255 = vector.load %arg12[%c48_72, %c0_73] : memref<64x384xf32, #tpu.memory_space<vmem>>, vector<8x384xf32>
    %c8_74 = arith.constant 8 : index
    %c0_75 = arith.constant 0 : index
    %256 = vector.load %arg13[%c8_74, %c0_75] : memref<64x384xf32, #tpu.memory_space<vmem>>, vector<8x384xf32>
    %257 = vector.extract_strided_slice %254 {offsets = [0, 0], sizes = [8, 128], strides = [1, 1]} : vector<16x128xf32> to vector<8x128xf32>
    %258 = tpu.concatenate %257, %31 in 1 : vector<8x128xf32>, vector<8x128xf32> -> vector<8x256xf32>
    %259 = vector.extract_strided_slice %254 {offsets = [8, 0], sizes = [8, 128], strides = [1, 1]} : vector<16x128xf32> to vector<8x128xf32>
    %260 = tpu.concatenate %31, %259 in 1 : vector<8x128xf32>, vector<8x128xf32> -> vector<8x256xf32>
    %261 = tpu.concatenate %258, %260 in 0 : vector<8x256xf32>, vector<8x256xf32> -> vector<16x256xf32>
    %262 = arith.truncf %261 : vector<16x256xf32> to vector<16x256xbf16>
    %cst_76 = arith.constant dense<0.000000e+00> : vector<16x384xf32>
    %263 = tpu.matmul %262, %29, %cst_76 {dimension_numbers = #tpu.dot_dimension_numbers<[1], [0], [0], [1], [0, 0, 1, 1], [], []>} : vector<16x256xbf16>, vector<256x384xbf16>, vector<16x384xf32> -> vector<16x384xf32>
    %264 = tpu.concatenate %255, %256 in 0 : vector<8x384xf32>, vector<8x384xf32> -> vector<16x384xf32>
    %265 = vector.extract_strided_slice %264 {offsets = [0, 0], sizes = [16, 128], strides = [1, 1]} : vector<16x384xf32> to vector<16x128xf32>
    %266 = vector.extract_strided_slice %263 {offsets = [0, 0], sizes = [16, 128], strides = [1, 1]} : vector<16x384xf32> to vector<16x128xf32>
    %267 = arith.addf %265, %266 : vector<16x128xf32>
    %268 = arith.negf %267 : vector<16x128xf32>
    %269 = math.exp %268 : vector<16x128xf32>
    %cst_77 = arith.constant 1.000000e+00 : f32
    %270 = vector.broadcast %cst_77 : f32 to vector<16x128xf32>
    %271 = arith.addf %270, %269 : vector<16x128xf32>
    %272 = arith.divf %270, %271 : vector<16x128xf32>
    %273 = vector.extract_strided_slice %264 {offsets = [0, 128], sizes = [16, 128], strides = [1, 1]} : vector<16x384xf32> to vector<16x128xf32>
    %274 = vector.extract_strided_slice %263 {offsets = [0, 128], sizes = [16, 128], strides = [1, 1]} : vector<16x384xf32> to vector<16x128xf32>
    %275 = arith.addf %273, %274 : vector<16x128xf32>
    %276 = arith.negf %275 : vector<16x128xf32>
    %277 = math.exp %276 : vector<16x128xf32>
    %cst_78 = arith.constant 1.000000e+00 : f32
    %278 = vector.broadcast %cst_78 : f32 to vector<16x128xf32>
    %279 = arith.addf %278, %277 : vector<16x128xf32>
    %280 = arith.divf %278, %279 : vector<16x128xf32>
    %281 = vector.extract_strided_slice %264 {offsets = [0, 256], sizes = [16, 128], strides = [1, 1]} : vector<16x384xf32> to vector<16x128xf32>
    %282 = vector.extract_strided_slice %263 {offsets = [0, 256], sizes = [16, 128], strides = [1, 1]} : vector<16x384xf32> to vector<16x128xf32>
    %283 = arith.addf %282, %30 : vector<16x128xf32>
    %284 = arith.mulf %272, %283 : vector<16x128xf32>
    %285 = arith.addf %281, %284 : vector<16x128xf32>
    %286 = math.tanh %285 : vector<16x128xf32>
    %cst_79 = arith.constant 1.000000e+00 : f32
    %287 = vector.broadcast %cst_79 : f32 to vector<16x128xf32>
    %288 = arith.subf %287, %280 : vector<16x128xf32>
    %289 = arith.mulf %288, %286 : vector<16x128xf32>
    %290 = arith.mulf %280, %254 : vector<16x128xf32>
    %291 = arith.addf %289, %290 : vector<16x128xf32>
    %c56_80 = arith.constant 56 : index
    %c0_81 = arith.constant 0 : index
    %292 = vector.load %arg12[%c56_80, %c0_81] : memref<64x384xf32, #tpu.memory_space<vmem>>, vector<8x384xf32>
    %c0_82 = arith.constant 0 : index
    %c0_83 = arith.constant 0 : index
    %293 = vector.load %arg13[%c0_82, %c0_83] : memref<64x384xf32, #tpu.memory_space<vmem>>, vector<8x384xf32>
    %294 = vector.extract_strided_slice %291 {offsets = [0, 0], sizes = [8, 128], strides = [1, 1]} : vector<16x128xf32> to vector<8x128xf32>
    %295 = tpu.concatenate %294, %31 in 1 : vector<8x128xf32>, vector<8x128xf32> -> vector<8x256xf32>
    %296 = vector.extract_strided_slice %291 {offsets = [8, 0], sizes = [8, 128], strides = [1, 1]} : vector<16x128xf32> to vector<8x128xf32>
    %297 = tpu.concatenate %31, %296 in 1 : vector<8x128xf32>, vector<8x128xf32> -> vector<8x256xf32>
    %298 = tpu.concatenate %295, %297 in 0 : vector<8x256xf32>, vector<8x256xf32> -> vector<16x256xf32>
    %299 = arith.truncf %298 : vector<16x256xf32> to vector<16x256xbf16>
    %cst_84 = arith.constant dense<0.000000e+00> : vector<16x384xf32>
    %300 = tpu.matmul %299, %29, %cst_84 {dimension_numbers = #tpu.dot_dimension_numbers<[1], [0], [0], [1], [0, 0, 1, 1], [], []>} : vector<16x256xbf16>, vector<256x384xbf16>, vector<16x384xf32> -> vector<16x384xf32>
    %301 = tpu.concatenate %292, %293 in 0 : vector<8x384xf32>, vector<8x384xf32> -> vector<16x384xf32>
    %302 = vector.extract_strided_slice %301 {offsets = [0, 0], sizes = [16, 128], strides = [1, 1]} : vector<16x384xf32> to vector<16x128xf32>
    %303 = vector.extract_strided_slice %300 {offsets = [0, 0], sizes = [16, 128], strides = [1, 1]} : vector<16x384xf32> to vector<16x128xf32>
    %304 = arith.addf %302, %303 : vector<16x128xf32>
    %305 = arith.negf %304 : vector<16x128xf32>
    %306 = math.exp %305 : vector<16x128xf32>
    %cst_85 = arith.constant 1.000000e+00 : f32
    %307 = vector.broadcast %cst_85 : f32 to vector<16x128xf32>
    %308 = arith.addf %307, %306 : vector<16x128xf32>
    %309 = arith.divf %307, %308 : vector<16x128xf32>
    %310 = vector.extract_strided_slice %301 {offsets = [0, 128], sizes = [16, 128], strides = [1, 1]} : vector<16x384xf32> to vector<16x128xf32>
    %311 = vector.extract_strided_slice %300 {offsets = [0, 128], sizes = [16, 128], strides = [1, 1]} : vector<16x384xf32> to vector<16x128xf32>
    %312 = arith.addf %310, %311 : vector<16x128xf32>
    %313 = arith.negf %312 : vector<16x128xf32>
    %314 = math.exp %313 : vector<16x128xf32>
    %cst_86 = arith.constant 1.000000e+00 : f32
    %315 = vector.broadcast %cst_86 : f32 to vector<16x128xf32>
    %316 = arith.addf %315, %314 : vector<16x128xf32>
    %317 = arith.divf %315, %316 : vector<16x128xf32>
    %318 = vector.extract_strided_slice %301 {offsets = [0, 256], sizes = [16, 128], strides = [1, 1]} : vector<16x384xf32> to vector<16x128xf32>
    %319 = vector.extract_strided_slice %300 {offsets = [0, 256], sizes = [16, 128], strides = [1, 1]} : vector<16x384xf32> to vector<16x128xf32>
    %320 = arith.addf %319, %30 : vector<16x128xf32>
    %321 = arith.mulf %309, %320 : vector<16x128xf32>
    %322 = arith.addf %318, %321 : vector<16x128xf32>
    %323 = math.tanh %322 : vector<16x128xf32>
    %cst_87 = arith.constant 1.000000e+00 : f32
    %324 = vector.broadcast %cst_87 : f32 to vector<16x128xf32>
    %325 = arith.subf %324, %317 : vector<16x128xf32>
    %326 = arith.mulf %325, %323 : vector<16x128xf32>
    %327 = arith.mulf %317, %291 : vector<16x128xf32>
    %328 = arith.addf %326, %327 : vector<16x128xf32>
    %c0_88 = arith.constant 0 : index
    %c0_89 = arith.constant 0 : index
    %329 = vector.load %arg14[%c0_88, %c0_89] : memref<16x128xf32, #tpu.memory_space<vmem>>, vector<16x128xf32>
    tpu.vector_store %arg14[%c0_88, %c0_89], %328 {strides = array<i32>} : memref<16x128xf32, #tpu.memory_space<vmem>>, vector<16x128xf32>,
    %c0_i32_90 = arith.constant 0 : i32
    %330 = arith.cmpi eq, %arg0, %c0_i32_90 : i32
    %331 = arith.extui %330 : i1 to i32
    %c0_i32_91 = arith.constant 0 : i32
    %332 = arith.cmpi ne, %331, %c0_i32_91 : i32
    scf.if %332 {
      %333 = vector.extract_strided_slice %328 {offsets = [0, 0], sizes = [8, 128], strides = [1, 1]} : vector<16x128xf32> to vector<8x128xf32>
      %c0_92 = arith.constant 0 : index
      %c0_93 = arith.constant 0 : index
      %334 = vector.load %arg10[%c0_92, %c0_93] : memref<8x128xf32, #tpu.memory_space<vmem>>, vector<8x128xf32>
      tpu.vector_store %arg10[%c0_92, %c0_93], %333 {strides = array<i32>} : memref<8x128xf32, #tpu.memory_space<vmem>>, vector<8x128xf32>,
      %335 = vector.extract_strided_slice %328 {offsets = [8, 0], sizes = [8, 128], strides = [1, 1]} : vector<16x128xf32> to vector<8x128xf32>
      %c0_94 = arith.constant 0 : index
      %c0_95 = arith.constant 0 : index
      %336 = vector.load %arg11[%c0_94, %c0_95] : memref<8x128xf32, #tpu.memory_space<vmem>>, vector<8x128xf32>
      tpu.vector_store %arg11[%c0_94, %c0_95], %335 {strides = array<i32>} : memref<8x128xf32, #tpu.memory_space<vmem>>, vector<8x128xf32>,
    } else {
    }
    return
  }
  func.func @transform_0(%arg0: i32) -> (i32, i32) {
    %c0_i32 = arith.constant 0 : i32
    %c0_i32_0 = arith.constant 0 : i32
    return %arg0, %c0_i32 : i32, i32
  }
  func.func @transform_1(%arg0: i32) -> (i32, i32) {
    %c0_i32 = arith.constant 0 : i32
    %c0_i32_0 = arith.constant 0 : i32
    return %arg0, %c0_i32 : i32, i32
  }
  func.func @transform_2(%arg0: i32) -> (i32, i32) {
    %c0_i32 = arith.constant 0 : i32
    %c0_i32_0 = arith.constant 0 : i32
    %c0_i32_1 = arith.constant 0 : i32
    return %c0_i32, %c0_i32_0 : i32, i32
  }
  func.func @transform_3(%arg0: i32) -> (i32, i32) {
    %c0_i32 = arith.constant 0 : i32
    %c0_i32_0 = arith.constant 0 : i32
    %c0_i32_1 = arith.constant 0 : i32
    return %c0_i32, %c0_i32_0 : i32, i32
  }
  func.func @transform_4(%arg0: i32) -> (i32, i32) {
    %c0_i32 = arith.constant 0 : i32
    %c0_i32_0 = arith.constant 0 : i32
    %c0_i32_1 = arith.constant 0 : i32
    return %c0_i32, %c0_i32_0 : i32, i32
  }
  func.func @transform_5(%arg0: i32) -> (i32, i32) {
    %c0_i32 = arith.constant 0 : i32
    %c0_i32_0 = arith.constant 0 : i32
    %c0_i32_1 = arith.constant 0 : i32
    return %c0_i32, %c0_i32_0 : i32, i32
  }
  func.func @transform_6(%arg0: i32) -> (i32, i32) {
    %c0_i32 = arith.constant 0 : i32
    %c0_i32_0 = arith.constant 0 : i32
    %c0_i32_1 = arith.constant 0 : i32
    return %c0_i32, %c0_i32_0 : i32, i32
  }
  func.func @transform_7(%arg0: i32) -> (i32, i32) {
    %c0_i32 = arith.constant 0 : i32
    %c0_i32_0 = arith.constant 0 : i32
    %c0_i32_1 = arith.constant 0 : i32
    return %c0_i32, %c0_i32_0 : i32, i32
  }
  func.func @transform_8(%arg0: i32) -> (i32, i32) {
    %c0_i32 = arith.constant 0 : i32
    %c0_i32_0 = arith.constant 0 : i32
    %c0_i32_1 = arith.constant 0 : i32
    return %c0_i32, %c0_i32_0 : i32, i32
  }
  func.func @transform_9(%arg0: i32) -> (i32, i32) {
    %c0_i32 = arith.constant 0 : i32
    %c0_i32_0 = arith.constant 0 : i32
    %c0_i32_1 = arith.constant 0 : i32
    return %c0_i32, %c0_i32_0 : i32, i32
  }
  func.func @transform_10(%arg0: i32) -> (i32, i32) {
    %c0_i32 = arith.constant 0 : i32
    %c0_i32_0 = arith.constant 0 : i32
    %c0_i32_1 = arith.constant 0 : i32
    return %c0_i32, %c0_i32_0 : i32, i32
  }
}

</mosaic_0001>

<llo_original>
// kernel: lstm_classifier_forward.2
$region0: #{lstm_classifier_forward.2}
  #allocation0 [shape = 'u32[]', space=smem, size = 0x4, offset = 0x4, fixed_abs, tag = 'smem constant byte address 0x4 - core index']
  #allocation1 [shape = 'u32[72,128]{1,0:T(1,128)}', space=vmem, size = 0x9000, scoped, tag = 'internal scratch']
  #allocation2 [shape = 'f32[64,384]{1,0:T(8,128)}', space=vmem, size = 0x18000, scoped, tag = 'scratch operand']
  #allocation3 [shape = 'f32[64,384]{1,0:T(8,128)}', space=vmem, size = 0x18000, scoped, tag = 'scratch operand']
  #allocation4 [shape = 'f32[16,128]{1,0:T(8,128)}', space=vmem, size = 0x2000, scoped, tag = 'scratch operand']
  %s0 = inlined_call_operand.vmem [shape: bf16[64,32], index: 0, kind: input, shape index: {}]
  %s1 = inlined_call_operand.vmem [shape: bf16[32,384], index: 1, kind: input, shape index: {}]
  %s2 = inlined_call_operand.hbm [shape: bf16[32,384], index: 2, kind: input, shape index: {}]
  %s3 = inlined_call_operand.vmem [shape: f32[1,384], index: 3, kind: input, shape index: {}]
  %s4 = inlined_call_operand.vmem [shape: f32[1,384], index: 4, kind: input, shape index: {}]
  %s5 = inlined_call_operand.vmem [shape: bf16[256,384], index: 5, kind: input, shape index: {}]
  %s6 = inlined_call_operand.vmem [shape: f32[1,128], index: 6, kind: input, shape index: {}]
  %s7 = inlined_call_operand.vmem [shape: f32[1,128], index: 7, kind: input, shape index: {}]
  %s8 = inlined_call_operand.vmem [shape: bf16[8,8,128], index: 8, kind: output, shape index: {0}]
  %s9 = inlined_call_operand.vmem [shape: bf16[8,8,128], index: 9, kind: output, shape index: {1}]
  %s10 = inlined_call_operand.hbm [shape: f32[8,128], index: 10, kind: output, shape index: {2}]
  %s11 = inlined_call_operand.hbm [shape: f32[8,128], index: 11, kind: output, shape index: {3}]
  %12 = xla_tuple %s8, %s9, %s10, %s11
  %s13 = sld [smem:[#allocation0]]
  $region78: #{lstm_classifier_forward.2} parent=0
    _
  %s15 = ssub.s32 1, %s13
  %s16 = scalar_select 0, %s15, %s13
  $region1: #{lstm_classifier_forward.2} parent=0
    #allocation5 [shape = 'u8[24576]{0}', space=vmem, size = 0x6000, scoped, tag = 'input window, operand 2, single buffered']
    #allocation6 [shape = 's32[1]{0}', space=sflag, size = 0x4, scoped, tag = 'scoped memory for lstm_classifier_forward.2']
    #allocation7 [shape = 's32[1]{0}', space=sflag, size = 0x4, scoped, tag = 'scoped memory for lstm_classifier_forward.2']
    #allocation8 [shape = 'u8[4096]{0}', space=vmem, size = 0x1000, scoped, tag = 'output window, operand 2, single buffered']
    #allocation9 [shape = 'u8[4096]{0}', space=vmem, size = 0x1000, scoped, tag = 'output window, operand 3, single buffered']
    #allocation10 [shape = 's32[1]{0}', space=sflag, size = 0x4, scoped, tag = 'scoped memory for lstm_classifier_forward.2']
    %17 = vsyncpa [#allocation6], 0
    %18 = vsyncpa [#allocation7], 0
    %19 = vsyncpa [#allocation10], 0
    // Predicated region
    $region2: #{lstm_classifier_forward.2} parent=1 // pred_check
      _
    $region3: #{lstm_classifier_forward.2} parent=1 // pred_check_branch
      %21 = sbr.rel (0) target = $region5
    $region4: #{lstm_classifier_forward.2} parent=1 // pred_region
      _
    $region5: #{lstm_classifier_forward.2} parent=1 // pred_fallthru
      _
    // Predicated region
    $region6: #{lstm_classifier_forward.2} parent=1 // pred_check
      _
    $region7: #{lstm_classifier_forward.2} parent=1 // pred_check_branch
      %23 = sbr.rel (0) target = $region9
    $region8: #{lstm_classifier_forward.2} parent=1 // pred_region
      _
    $region9: #{lstm_classifier_forward.2} parent=1 // pred_fallthru
      _
    // Predicated region
    $region10: #{lstm_classifier_forward.2} parent=1 // pred_check
      _
    $region11: #{lstm_classifier_forward.2} parent=1 // pred_check_branch
      %25 = sbr.rel (0) target = $region13
    $region12: #{lstm_classifier_forward.2} parent=1 // pred_region
      %27 = vsyncadd [#allocation6], 0
      %s28 = sshll.u32 %s2, 4
      %s29 = int_to_ptr.hbm [resolvable:$true] %s28
      %s30 = sshll.u32 [#allocation5], 4
      %s31 = int_to_ptr.vmem [resolvable:$true] %s30
      %36 = dma.hbm_to_vmem [thread:$0]  %s29, 768, %s31, [#allocation6], 192, 192, 12
    $region13: #{lstm_classifier_forward.2} parent=1 // pred_fallthru
      _
    // Predicated region
    $region14: #{lstm_classifier_forward.2} parent=1 // pred_check
      _
    $region15: #{lstm_classifier_forward.2} parent=1 // pred_check_branch
      %38 = sbr.rel (0) target = $region17
    $region16: #{lstm_classifier_forward.2} parent=1 // pred_region
      _
    $region17: #{lstm_classifier_forward.2} parent=1 // pred_fallthru
      _
    // Predicated region
    $region18: #{lstm_classifier_forward.2} parent=1 // pred_check
      _
    $region19: #{lstm_classifier_forward.2} parent=1 // pred_check_branch
      %40 = sbr.rel (0) target = $region21
    $region20: #{lstm_classifier_forward.2} parent=1 // pred_region
      _
    $region21: #{lstm_classifier_forward.2} parent=1 // pred_fallthru
      _
    // Predicated region
    $region22: #{lstm_classifier_forward.2} parent=1 // pred_check
      _
    $region23: #{lstm_classifier_forward.2} parent=1 // pred_check_branch
      %42 = sbr.rel (0) target = $region25
    $region24: #{lstm_classifier_forward.2} parent=1 // pred_region
      _
    $region25: #{lstm_classifier_forward.2} parent=1 // pred_fallthru
      _
    // Predicated region
    $region26: #{lstm_classifier_forward.2} parent=1 // pred_check
      _
    $region27: #{lstm_classifier_forward.2} parent=1 // pred_check_branch
      %44 = sbr.rel (0) target = $region29
    $region28: #{lstm_classifier_forward.2} parent=1 // pred_region
      _
    $region29: #{lstm_classifier_forward.2} parent=1 // pred_fallthru
      _
    // Predicated region
    $region30: #{lstm_classifier_forward.2} parent=1 // pred_check
      _
    $region31: #{lstm_classifier_forward.2} parent=1 // pred_check_branch
      %46 = sbr.rel (0) target = $region33
    $region32: #{lstm_classifier_forward.2} parent=1 // pred_region
      _
    $region33: #{lstm_classifier_forward.2} parent=1 // pred_fallthru
      _
    // Predicated region
    $region34: #{lstm_classifier_forward.2} parent=1 // pred_check
      _
    $region35: #{lstm_classifier_forward.2} parent=1 // pred_check_branch
      %48 = sbr.rel (0) target = $region37
    $region36: #{lstm_classifier_forward.2} parent=1 // pred_region
      %50 = dma.done [#allocation6], 768
    $region37: #{lstm_classifier_forward.2} parent=1 // pred_fallthru
      _
    %s51 = ssub.s32 0, 0
    %s52 = smul.u32 8, %s51
    %p53 = scmp.lt.s32.totalorder %s52, 7
    %s54 = scalar_select %p53, %s52, 7
    %s55 = smul.addr %s54, 4
    %s56 = scalar_lea.vmem %s9, %s55
    %s57 = ssub.s32 0, 0
    %s58 = smul.u32 8, %s57
    %p59 = scmp.lt.s32.totalorder %s58, 7
    %s60 = scalar_select %p59, %s58, 7
    %s61 = smul.addr %s60, 4
    %s62 = scalar_lea.vmem %s9, %s61
    %s63 = ssub.s32 0, 0
    %s64 = smul.u32 8, %s63
    %p66 = scmp.eq.s32.totalorder 0, 0
    // Predicated region
    $region38: #{lstm_classifier_forward.2} parent=1 // pred_check
      %p67 = pneg %p66
    $region39: #{lstm_classifier_forward.2} parent=1 // pred_check_branch
      %69 = sbr.rel (%p67) target = $region41
    $region40: #{lstm_classifier_forward.2} parent=1 // pred_region
      %70 = vst [vmem:[#allocation4] sm:$0xff] 0.0
      %71 = vst [vmem:[#allocation4 + $0x8] sm:$0xff] 0.0
    $region41: #{lstm_classifier_forward.2} parent=1 // pred_fallthru
      _
    %v72 = vld [vmem:[%s0] sm:$0xf]
    %v73 = vld [vmem:[%s0 + $0x4] sm:$0xf]
    %v74 = vld [vmem:[%s0 + $0x8] sm:$0xf]
    %v75 = vld [vmem:[%s0 + $0xc] sm:$0xf]
    %v76 = vld [vmem:[%s0 + $0x10] sm:$0xf]
    %v77 = vld [vmem:[%s0 + $0x14] sm:$0xf]
    %v78 = vld [vmem:[%s0 + $0x18] sm:$0xf]
    %v79 = vld [vmem:[%s0 + $0x1c] sm:$0xf]
    %v80 = vld [vmem:[%s1] sm:$0xff]
    %v81 = vld [vmem:[%s1 + $0x8] sm:$0xf]
    %v82 = vld [vmem:[%s1 + $0xc] sm:$0xff]
    %v83 = vld [vmem:[%s1 + $0x14] sm:$0xf]
    %v84 = vld [vmem:[%s1 + $0x18] sm:$0xff]
    %v85 = vld [vmem:[%s1 + $0x20] sm:$0xf]
    %v86 = vld [vmem:[%s1 + $0x24] sm:$0xff]
    %v87 = vld [vmem:[%s1 + $0x2c] sm:$0xf]
    %v88 = vld [vmem:[%s3] sm:$0x7]
    %v90 = vperm.slane %v88, 0
    %v91 = vperm.slane %v88, 1
    %v92 = vperm.slane %v88, 2
    %v104 = vunpack.c.l.b16 %v72
    %v105 = vunpack.c.l.b16 %v73
    %v106 = vunpack.c.l.b16 %v74
    %v107 = vunpack.c.l.b16 %v75
    %v108 = vunpack.c.l.b16 %v76
    %v109 = vunpack.c.l.b16 %v77
    %v110 = vunpack.c.l.b16 %v78
    %v111 = vunpack.c.l.b16 %v79
    %v112 = vpack.c.b16 %v105, %v104
    %v113 = vpack.c.b16 %v107, %v106
    %v114 = vpack.c.b16 %v109, %v108
    %v115 = vpack.c.b16 %v111, %v110
    %v124 = vunpack.c.l.b16 %v80
    %v125 = vunpack.c.h.b16 %v80
    %v126 = vunpack.c.l.b16 %v81
    %v127 = vunpack.c.l.b16 %v82
    %v128 = vunpack.c.h.b16 %v82
    %v129 = vunpack.c.l.b16 %v83
    %v130 = vunpack.c.l.b16 %v84
    %v131 = vunpack.c.h.b16 %v84
    %v132 = vunpack.c.l.b16 %v85
    %v133 = vunpack.c.l.b16 %v86
    %v134 = vunpack.c.h.b16 %v86
    %v135 = vunpack.c.l.b16 %v87
    %v136 = vpack.c.b16 %v127, %v124
    %v137 = vpack.c.b16 %v128, %v125
    %v138 = vpack.c.b16 %v129, %v126
    %v139 = vpack.c.b16 %v133, %v130
    %v140 = vpack.c.b16 %v134, %v131
    %v141 = vpack.c.b16 %v135, %v132
    %vm148 = vcmask 261120
    %v150 = vsel %vm148, %v112, 0
    %v153 = vsel %vm148, %v113, 0
    %v156 = vsel %vm148, %v114, 0
    %v159 = vsel %vm148, %v115, 0
    %161 = vmatpush.bf16.msra.mxu0 0
    %162 = vmatpush.bf16.msra.mxu0 0
    %163 = vmatpush.bf16.msra.mxu0 0
    %164 = vmatpush.bf16.msra.mxu0 0
    %165 = vmatpush.bf16.msra.mxu0 0
    %166 = vmatpush.bf16.msra.mxu0 0
    %167 = vmatpush.bf16.msra.mxu0 %v139
    %168 = vmatpush.bf16.msra.mxu0 %v136
    %169 = vmatmul.bf16.gmra.mxu0 %v150
    %v170 = vpop.f32.mrf.mxu0
    %v171 = vadd.f32 %v90, %v170
    %v172 = vpop.f32.mrf.mxu0
    %v173 = vadd.f32 %v90, %v172
    %174 = vmatmul.bf16.gmra.mxu0 %v153
    %v175 = vpop.f32.mrf.mxu0
    %v176 = vadd.f32 %v90, %v175
    %v177 = vpop.f32.mrf.mxu0
    %v178 = vadd.f32 %v90, %v177
    %179 = vmatmul.bf16.gmra.mxu0 %v156
    %v180 = vpop.f32.mrf.mxu0
    %v181 = vadd.f32 %v90, %v180
    %v182 = vpop.f32.mrf.mxu0
    %v183 = vadd.f32 %v90, %v182
    %184 = vmatmul.bf16.gmra.mxu0 %v159
    %v185 = vpop.f32.mrf.mxu0
    %v186 = vadd.f32 %v90, %v185
    %v187 = vpop.f32.mrf.mxu0
    %v188 = vadd.f32 %v90, %v187
    %189 = vdwg.mxu0
    %190 = vmatpush.bf16.msra.mxu0 0
    %191 = vmatpush.bf16.msra.mxu0 0
    %192 = vmatpush.bf16.msra.mxu0 0
    %193 = vmatpush.bf16.msra.mxu0 0
    %194 = vmatpush.bf16.msra.mxu0 0
    %195 = vmatpush.bf16.msra.mxu0 0
    %196 = vmatpush.bf16.msra.mxu0 %v140
    %197 = vmatpush.bf16.msra.mxu0 %v137
    %198 = vmatmul.bf16.gmra.mxu0 %v150
    %v199 = vpop.f32.mrf.mxu0
    %v200 = vadd.f32 %v91, %v199
    %v201 = vpop.f32.mrf.mxu0
    %v202 = vadd.f32 %v91, %v201
    %203 = vmatmul.bf16.gmra.mxu0 %v153
    %v204 = vpop.f32.mrf.mxu0
    %v205 = vadd.f32 %v91, %v204
    %v206 = vpop.f32.mrf.mxu0
    %v207 = vadd.f32 %v91, %v206
    %208 = vmatmul.bf16.gmra.mxu0 %v156
    %v209 = vpop.f32.mrf.mxu0
    %v210 = vadd.f32 %v91, %v209
    %v211 = vpop.f32.mrf.mxu0
    %v212 = vadd.f32 %v91, %v211
    %213 = vmatmul.bf16.gmra.mxu0 %v159
    %v214 = vpop.f32.mrf.mxu0
    %v215 = vadd.f32 %v91, %v214
    %v216 = vpop.f32.mrf.mxu0
    %v217 = vadd.f32 %v91, %v216
    %218 = vdwg.mxu0
    %219 = vmatpush.bf16.msra.mxu0 0
    %220 = vmatpush.bf16.msra.mxu0 0
    %221 = vmatpush.bf16.msra.mxu0 0
    %222 = vmatpush.bf16.msra.mxu0 0
    %223 = vmatpush.bf16.msra.mxu0 0
    %224 = vmatpush.bf16.msra.mxu0 0
    %225 = vmatpush.bf16.msra.mxu0 %v141
    %226 = vmatpush.bf16.msra.mxu0 %v138
    %227 = vmatmul.bf16.gmra.mxu0 %v150
    %v228 = vpop.f32.mrf.mxu0
    %v229 = vadd.f32 %v92, %v228
    %v230 = vpop.f32.mrf.mxu0
    %v231 = vadd.f32 %v92, %v230
    %232 = vmatmul.bf16.gmra.mxu0 %v153
    %v233 = vpop.f32.mrf.mxu0
    %v234 = vadd.f32 %v92, %v233
    %v235 = vpop.f32.mrf.mxu0
    %v236 = vadd.f32 %v92, %v235
    %237 = vmatmul.bf16.gmra.mxu0 %v156
    %v238 = vpop.f32.mrf.mxu0
    %v239 = vadd.f32 %v92, %v238
    %v240 = vpop.f32.mrf.mxu0
    %v241 = vadd.f32 %v92, %v240
    %242 = vmatmul.bf16.gmra.mxu0 %v159
    %v243 = vpop.f32.mrf.mxu0
    %v244 = vadd.f32 %v92, %v243
    %v245 = vpop.f32.mrf.mxu0
    %v246 = vadd.f32 %v92, %v245
    %247 = vdwg.mxu0
    %248 = vst [vmem:[#allocation2] sm:$0xff] %v171
    %249 = vst [vmem:[#allocation2 + $0x8] sm:$0xff] %v200
    %250 = vst [vmem:[#allocation2 + $0x10] sm:$0xff] %v229
    %251 = vst [vmem:[#allocation2 + $0x18] sm:$0xff] %v173
    %252 = vst [vmem:[#allocation2 + $0x20] sm:$0xff] %v202
    %253 = vst [vmem:[#allocation2 + $0x28] sm:$0xff] %v231
    %254 = vst [vmem:[#allocation2 + $0x30] sm:$0xff] %v176
    %255 = vst [vmem:[#allocation2 + $0x38] sm:$0xff] %v205
    %256 = vst [vmem:[#allocation2 + $0x40] sm:$0xff] %v234
    %257 = vst [vmem:[#allocation2 + $0x48] sm:$0xff] %v178
    %258 = vst [vmem:[#allocation2 + $0x50] sm:$0xff] %v207
    %259 = vst [vmem:[#allocation2 + $0x58] sm:$0xff] %v236
    %260 = vst [vmem:[#allocation2 + $0x60] sm:$0xff] %v181
    %261 = vst [vmem:[#allocation2 + $0x68] sm:$0xff] %v210
    %262 = vst [vmem:[#allocation2 + $0x70] sm:$0xff] %v239
    %263 = vst [vmem:[#allocation2 + $0x78] sm:$0xff] %v183
    %264 = vst [vmem:[#allocation2 + $0x80] sm:$0xff] %v212
    %265 = vst [vmem:[#allocation2 + $0x88] sm:$0xff] %v241
    %266 = vst [vmem:[#allocation2 + $0x90] sm:$0xff] %v186
    %267 = vst [vmem:[#allocation2 + $0x98] sm:$0xff] %v215
    %268 = vst [vmem:[#allocation2 + $0xa0] sm:$0xff] %v244
    %269 = vst [vmem:[#allocation2 + $0xa8] sm:$0xff] %v188
    %270 = vst [vmem:[#allocation2 + $0xb0] sm:$0xff] %v217
    %271 = vst [vmem:[#allocation2 + $0xb8] sm:$0xff] %v246
    %v272 = vld [vmem:[#allocation5] sm:$0xff]
    %v273 = vld [vmem:[#allocation5 + $0x8] sm:$0xf]
    %v274 = vld [vmem:[#allocation5 + $0xc] sm:$0xff]
    %v275 = vld [vmem:[#allocation5 + $0x14] sm:$0xf]
    %v276 = vld [vmem:[#allocation5 + $0x18] sm:$0xff]
    %v277 = vld [vmem:[#allocation5 + $0x20] sm:$0xf]
    %v278 = vld [vmem:[#allocation5 + $0x24] sm:$0xff]
    %v279 = vld [vmem:[#allocation5 + $0x2c] sm:$0xf]
    %v280 = vld [vmem:[%s4] sm:$0x7]
    %v282 = vperm.slane %v280, 0
    %v283 = vperm.slane %v280, 1
    %v284 = vperm.slane %v280, 2
    %v296 = vunpack.c.l.b16 %v272
    %v297 = vunpack.c.h.b16 %v272
    %v298 = vunpack.c.l.b16 %v273
    %v299 = vunpack.c.l.b16 %v274
    %v300 = vunpack.c.h.b16 %v274
    %v301 = vunpack.c.l.b16 %v275
    %v302 = vunpack.c.l.b16 %v276
    %v303 = vunpack.c.h.b16 %v276
    %v304 = vunpack.c.l.b16 %v277
    %v305 = vunpack.c.l.b16 %v278
    %v306 = vunpack.c.h.b16 %v278
    %v307 = vunpack.c.l.b16 %v279
    %v308 = vpack.c.b16 %v299, %v296
    %v309 = vpack.c.b16 %v300, %v297
    %v310 = vpack.c.b16 %v301, %v298
    %v311 = vpack.c.b16 %v305, %v302
    %v312 = vpack.c.b16 %v306, %v303
    %v313 = vpack.c.b16 %v307, %v304
    %320 = vmatpush.bf16.msra.mxu0 0
    %321 = vmatpush.bf16.msra.mxu0 0
    %322 = vmatpush.bf16.msra.mxu0 0
    %323 = vmatpush.bf16.msra.mxu0 0
    %324 = vmatpush.bf16.msra.mxu0 0
    %325 = vmatpush.bf16.msra.mxu0 0
    %326 = vmatpush.bf16.msra.mxu0 %v311
    %327 = vmatpush.bf16.msra.mxu0 %v308
    %328 = vmatmul.bf16.gmra.mxu0 %v150
    %v329 = vpop.f32.mrf.mxu0
    %v330 = vadd.f32 %v282, %v329
    %v331 = vpop.f32.mrf.mxu0
    %v332 = vadd.f32 %v282, %v331
    %333 = vmatmul.bf16.gmra.mxu0 %v153
    %v334 = vpop.f32.mrf.mxu0
    %v335 = vadd.f32 %v282, %v334
    %v336 = vpop.f32.mrf.mxu0
    %v337 = vadd.f32 %v282, %v336
    %338 = vmatmul.bf16.gmra.mxu0 %v156
    %v339 = vpop.f32.mrf.mxu0
    %v340 = vadd.f32 %v282, %v339
    %v341 = vpop.f32.mrf.mxu0
    %v342 = vadd.f32 %v282, %v341
    %343 = vmatmul.bf16.gmra.mxu0 %v159
    %v344 = vpop.f32.mrf.mxu0
    %v345 = vadd.f32 %v282, %v344
    %v346 = vpop.f32.mrf.mxu0
    %v347 = vadd.f32 %v282, %v346
    %348 = vdwg.mxu0
    %349 = vmatpush.bf16.msra.mxu0 0
    %350 = vmatpush.bf16.msra.mxu0 0
    %351 = vmatpush.bf16.msra.mxu0 0
    %352 = vmatpush.bf16.msra.mxu0 0
    %353 = vmatpush.bf16.msra.mxu0 0
    %354 = vmatpush.bf16.msra.mxu0 0
    %355 = vmatpush.bf16.msra.mxu0 %v312
    %356 = vmatpush.bf16.msra.mxu0 %v309
    %357 = vmatmul.bf16.gmra.mxu0 %v150
    %v358 = vpop.f32.mrf.mxu0
    %v359 = vadd.f32 %v283, %v358
    %v360 = vpop.f32.mrf.mxu0
    %v361 = vadd.f32 %v283, %v360
    %362 = vmatmul.bf16.gmra.mxu0 %v153
    %v363 = vpop.f32.mrf.mxu0
    %v364 = vadd.f32 %v283, %v363
    %v365 = vpop.f32.mrf.mxu0
    %v366 = vadd.f32 %v283, %v365
    %367 = vmatmul.bf16.gmra.mxu0 %v156
    %v368 = vpop.f32.mrf.mxu0
    %v369 = vadd.f32 %v283, %v368
    %v370 = vpop.f32.mrf.mxu0
    %v371 = vadd.f32 %v283, %v370
    %372 = vmatmul.bf16.gmra.mxu0 %v159
    %v373 = vpop.f32.mrf.mxu0
    %v374 = vadd.f32 %v283, %v373
    %v375 = vpop.f32.mrf.mxu0
    %v376 = vadd.f32 %v283, %v375
    %377 = vdwg.mxu0
    %378 = vmatpush.bf16.msra.mxu0 0
    %379 = vmatpush.bf16.msra.mxu0 0
    %380 = vmatpush.bf16.msra.mxu0 0
    %381 = vmatpush.bf16.msra.mxu0 0
    %382 = vmatpush.bf16.msra.mxu0 0
    %383 = vmatpush.bf16.msra.mxu0 0
    %384 = vmatpush.bf16.msra.mxu0 %v313
    %385 = vmatpush.bf16.msra.mxu0 %v310
    %386 = vmatmul.bf16.gmra.mxu0 %v150
    %v387 = vpop.f32.mrf.mxu0
    %v388 = vadd.f32 %v284, %v387
    %v389 = vpop.f32.mrf.mxu0
    %v390 = vadd.f32 %v284, %v389
    %391 = vmatmul.bf16.gmra.mxu0 %v153
    %v392 = vpop.f32.mrf.mxu0
    %v393 = vadd.f32 %v284, %v392
    %v394 = vpop.f32.mrf.mxu0
    %v395 = vadd.f32 %v284, %v394
    %396 = vmatmul.bf16.gmra.mxu0 %v156
    %v397 = vpop.f32.mrf.mxu0
    %v398 = vadd.f32 %v284, %v397
    %v399 = vpop.f32.mrf.mxu0
    %v400 = vadd.f32 %v284, %v399
    %401 = vmatmul.bf16.gmra.mxu0 %v159
    %v402 = vpop.f32.mrf.mxu0
    %v403 = vadd.f32 %v284, %v402
    %v404 = vpop.f32.mrf.mxu0
    %v405 = vadd.f32 %v284, %v404
    %406 = vdwg.mxu0
    %407 = vst [vmem:[#allocation3] sm:$0xff] %v330
    %408 = vst [vmem:[#allocation3 + $0x8] sm:$0xff] %v359
    %409 = vst [vmem:[#allocation3 + $0x10] sm:$0xff] %v388
    %410 = vst [vmem:[#allocation3 + $0x18] sm:$0xff] %v332
    %411 = vst [vmem:[#allocation3 + $0x20] sm:$0xff] %v361
    %412 = vst [vmem:[#allocation3 + $0x28] sm:$0xff] %v390
    %413 = vst [vmem:[#allocation3 + $0x30] sm:$0xff] %v335
    %414 = vst [vmem:[#allocation3 + $0x38] sm:$0xff] %v364
    %415 = vst [vmem:[#allocation3 + $0x40] sm:$0xff] %v393
    %416 = vst [vmem:[#allocation3 + $0x48] sm:$0xff] %v337
    %417 = vst [vmem:[#allocation3 + $0x50] sm:$0xff] %v366
    %418 = vst [vmem:[#allocation3 + $0x58] sm:$0xff] %v395
    %419 = vst [vmem:[#allocation3 + $0x60] sm:$0xff] %v340
    %420 = vst [vmem:[#allocation3 + $0x68] sm:$0xff] %v369
    %421 = vst [vmem:[#allocation3 + $0x70] sm:$0xff] %v398
    %422 = vst [vmem:[#allocation3 + $0x78] sm:$0xff] %v342
    %423 = vst [vmem:[#allocation3 + $0x80] sm:$0xff] %v371
    %424 = vst [vmem:[#allocation3 + $0x88] sm:$0xff] %v400
    %425 = vst [vmem:[#allocation3 + $0x90] sm:$0xff] %v345
    %426 = vst [vmem:[#allocation3 + $0x98] sm:$0xff] %v374
    %427 = vst [vmem:[#allocation3 + $0xa0] sm:$0xff] %v403
    %428 = vst [vmem:[#allocation3 + $0xa8] sm:$0xff] %v347
    %429 = vst [vmem:[#allocation3 + $0xb0] sm:$0xff] %v376
    %430 = vst [vmem:[#allocation3 + $0xb8] sm:$0xff] %v405
    %v431 = vld [vmem:[%s6] sm:$0x1]
    %v433 = vperm.slane %v431, 0
    %v435 = vld [vmem:[%s7] sm:$0x1]
    %v437 = vperm.slane %v435, 0
    %v439 = vld [vmem:[%s5] sm:$0xff]
    %v440 = vld [vmem:[%s5 + $0x8] sm:$0xf]
    %v441 = vld [vmem:[%s5 + $0xc] sm:$0xff]
    %v442 = vld [vmem:[%s5 + $0x14] sm:$0xf]
    %v443 = vld [vmem:[%s5 + $0x18] sm:$0xff]
    %v444 = vld [vmem:[%s5 + $0x20] sm:$0xf]
    %v445 = vld [vmem:[%s5 + $0x24] sm:$0xff]
    %v446 = vld [vmem:[%s5 + $0x2c] sm:$0xf]
    %v447 = vld [vmem:[%s5 + $0x30] sm:$0xff]
    %v448 = vld [vmem:[%s5 + $0x38] sm:$0xf]
    %v449 = vld [vmem:[%s5 + $0x3c] sm:$0xff]
    %v450 = vld [vmem:[%s5 + $0x44] sm:$0xf]
    %v451 = vld [vmem:[%s5 + $0x48] sm:$0xff]
    %v452 = vld [vmem:[%s5 + $0x50] sm:$0xf]
    %v453 = vld [vmem:[%s5 + $0x54] sm:$0xff]
    %v454 = vld [vmem:[%s5 + $0x5c] sm:$0xf]
    %v455 = vld [vmem:[%s5 + $0x60] sm:$0xff]
    %v456 = vld [vmem:[%s5 + $0x68] sm:$0xf]
    %v457 = vld [vmem:[%s5 + $0x6c] sm:$0xff]
    %v458 = vld [vmem:[%s5 + $0x74] sm:$0xf]
    %v459 = vld [vmem:[%s5 + $0x78] sm:$0xff]
    %v460 = vld [vmem:[%s5 + $0x80] sm:$0xf]
    %v461 = vld [vmem:[%s5 + $0x84] sm:$0xff]
    %v462 = vld [vmem:[%s5 + $0x8c] sm:$0xf]
    %v463 = vld [vmem:[%s5 + $0x90] sm:$0xff]
    %v464 = vld [vmem:[%s5 + $0x98] sm:$0xf]
    %v465 = vld [vmem:[%s5 + $0x9c] sm:$0xff]
    %v466 = vld [vmem:[%s5 + $0xa4] sm:$0xf]
    %v467 = vld [vmem:[%s5 + $0xa8] sm:$0xff]
    %v468 = vld [vmem:[%s5 + $0xb0] sm:$0xf]
    %v469 = vld [vmem:[%s5 + $0xb4] sm:$0xff]
    %v470 = vld [vmem:[%s5 + $0xbc] sm:$0xf]
    %v471 = vld [vmem:[%s5 + $0xc0] sm:$0xff]
    %v472 = vld [vmem:[%s5 + $0xc8] sm:$0xf]
    %v473 = vld [vmem:[%s5 + $0xcc] sm:$0xff]
    %v474 = vld [vmem:[%s5 + $0xd4] sm:$0xf]
    %v475 = vld [vmem:[%s5 + $0xd8] sm:$0xff]
    %v476 = vld [vmem:[%s5 + $0xe0] sm:$0xf]
    %v477 = vld [vmem:[%s5 + $0xe4] sm:$0xff]
    %v478 = vld [vmem:[%s5 + $0xec] sm:$0xf]
    %v479 = vld [vmem:[%s5 + $0xf0] sm:$0xff]
    %v480 = vld [vmem:[%s5 + $0xf8] sm:$0xf]
    %v481 = vld [vmem:[%s5 + $0xfc] sm:$0xff]
    %v482 = vld [vmem:[%s5 + $0x104] sm:$0xf]
    %v483 = vld [vmem:[%s5 + $0x108] sm:$0xff]
    %v484 = vld [vmem:[%s5 + $0x110] sm:$0xf]
    %v485 = vld [vmem:[%s5 + $0x114] sm:$0xff]
    %v486 = vld [vmem:[%s5 + $0x11c] sm:$0xf]
    %v487 = vld [vmem:[%s5 + $0x120] sm:$0xff]
    %v488 = vld [vmem:[%s5 + $0x128] sm:$0xf]
    %v489 = vld [vmem:[%s5 + $0x12c] sm:$0xff]
    %v490 = vld [vmem:[%s5 + $0x134] sm:$0xf]
    %v491 = vld [vmem:[%s5 + $0x138] sm:$0xff]
    %v492 = vld [vmem:[%s5 + $0x140] sm:$0xf]
    %v493 = vld [vmem:[%s5 + $0x144] sm:$0xff]
    %v494 = vld [vmem:[%s5 + $0x14c] sm:$0xf]
    %v495 = vld [vmem:[%s5 + $0x150] sm:$0xff]
    %v496 = vld [vmem:[%s5 + $0x158] sm:$0xf]
    %v497 = vld [vmem:[%s5 + $0x15c] sm:$0xff]
    %v498 = vld [vmem:[%s5 + $0x164] sm:$0xf]
    %v499 = vld [vmem:[%s5 + $0x168] sm:$0xff]
    %v500 = vld [vmem:[%s5 + $0x170] sm:$0xf]
    %v501 = vld [vmem:[%s5 + $0x174] sm:$0xff]
    %v502 = vld [vmem:[%s5 + $0x17c] sm:$0xf]
    %v503 = vld [vmem:[#allocation4] sm:$0xff]
    %v504 = vld [vmem:[#allocation4 + $0x8] sm:$0xff]
    %v505 = vld [vmem:[#allocation2] sm:$0xff]
    %v506 = vld [vmem:[#allocation2 + $0x8] sm:$0xff]
    %v507 = vld [vmem:[#allocation2 + $0x10] sm:$0xff]
    %v508 = vld [vmem:[#allocation3 + $0xa8] sm:$0xff]
    %v509 = vld [vmem:[#allocation3 + $0xb0] sm:$0xff]
    %v510 = vld [vmem:[#allocation3 + $0xb8] sm:$0xff]
    %v511 = vpack.c.bf16 0.0, %v503
    %v512 = vpack.c.bf16 %v504, 0.0
    %v577 = vunpack.c.l.b16 %v439
    %v578 = vunpack.c.h.b16 %v439
    %v579 = vunpack.c.l.b16 %v440
    %v580 = vunpack.c.l.b16 %v441
    %v581 = vunpack.c.h.b16 %v441
    %v582 = vunpack.c.l.b16 %v442
    %v583 = vunpack.c.l.b16 %v443
    %v584 = vunpack.c.h.b16 %v443
    %v585 = vunpack.c.l.b16 %v444
    %v586 = vunpack.c.l.b16 %v445
    %v587 = vunpack.c.h.b16 %v445
    %v588 = vunpack.c.l.b16 %v446
    %v589 = vunpack.c.l.b16 %v447
    %v590 = vunpack.c.h.b16 %v447
    %v591 = vunpack.c.l.b16 %v448
    %v592 = vunpack.c.l.b16 %v449
    %v593 = vunpack.c.h.b16 %v449
    %v594 = vunpack.c.l.b16 %v450
    %v595 = vunpack.c.l.b16 %v451
    %v596 = vunpack.c.h.b16 %v451
    %v597 = vunpack.c.l.b16 %v452
    %v598 = vunpack.c.l.b16 %v453
    %v599 = vunpack.c.h.b16 %v453
    %v600 = vunpack.c.l.b16 %v454
    %v601 = vunpack.c.l.b16 %v455
    %v602 = vunpack.c.h.b16 %v455
    %v603 = vunpack.c.l.b16 %v456
    %v604 = vunpack.c.l.b16 %v457
    %v605 = vunpack.c.h.b16 %v457
    %v606 = vunpack.c.l.b16 %v458
    %v607 = vunpack.c.l.b16 %v459
    %v608 = vunpack.c.h.b16 %v459
    %v609 = vunpack.c.l.b16 %v460
    %v610 = vunpack.c.l.b16 %v461
    %v611 = vunpack.c.h.b16 %v461
    %v612 = vunpack.c.l.b16 %v462
    %v613 = vunpack.c.l.b16 %v463
    %v614 = vunpack.c.h.b16 %v463
    %v615 = vunpack.c.l.b16 %v464
    %v616 = vunpack.c.l.b16 %v465
    %v617 = vunpack.c.h.b16 %v465
    %v618 = vunpack.c.l.b16 %v466
    %v619 = vunpack.c.l.b16 %v467
    %v620 = vunpack.c.h.b16 %v467
    %v621 = vunpack.c.l.b16 %v468
    %v622 = vunpack.c.l.b16 %v469
    %v623 = vunpack.c.h.b16 %v469
    %v624 = vunpack.c.l.b16 %v470
    %v625 = vunpack.c.l.b16 %v471
    %v626 = vunpack.c.h.b16 %v471
    %v627 = vunpack.c.l.b16 %v472
    %v628 = vunpack.c.l.b16 %v473
    %v629 = vunpack.c.h.b16 %v473
    %v630 = vunpack.c.l.b16 %v474
    %v631 = vunpack.c.l.b16 %v475
    %v632 = vunpack.c.h.b16 %v475
    %v633 = vunpack.c.l.b16 %v476
    %v634 = vunpack.c.l.b16 %v477
    %v635 = vunpack.c.h.b16 %v477
    %v636 = vunpack.c.l.b16 %v478
    %v637 = vunpack.c.l.b16 %v479
    %v638 = vunpack.c.h.b16 %v479
    %v639 = vunpack.c.l.b16 %v480
    %v640 = vunpack.c.l.b16 %v481
    %v641 = vunpack.c.h.b16 %v481
    %v642 = vunpack.c.l.b16 %v482
    %v643 = vunpack.c.l.b16 %v483
    %v644 = vunpack.c.h.b16 %v483
    %v645 = vunpack.c.l.b16 %v484
    %v646 = vunpack.c.l.b16 %v485
    %v647 = vunpack.c.h.b16 %v485
    %v648 = vunpack.c.l.b16 %v486
    %v649 = vunpack.c.l.b16 %v487
    %v650 = vunpack.c.h.b16 %v487
    %v651 = vunpack.c.l.b16 %v488
    %v652 = vunpack.c.l.b16 %v489
    %v653 = vunpack.c.h.b16 %v489
    %v654 = vunpack.c.l.b16 %v490
    %v655 = vunpack.c.l.b16 %v491
    %v656 = vunpack.c.h.b16 %v491
    %v657 = vunpack.c.l.b16 %v492
    %v658 = vunpack.c.l.b16 %v493
    %v659 = vunpack.c.h.b16 %v493
    %v660 = vunpack.c.l.b16 %v494
    %v661 = vunpack.c.l.b16 %v495
    %v662 = vunpack.c.h.b16 %v495
    %v663 = vunpack.c.l.b16 %v496
    %v664 = vunpack.c.l.b16 %v497
    %v665 = vunpack.c.h.b16 %v497
    %v666 = vunpack.c.l.b16 %v498
    %v667 = vunpack.c.l.b16 %v499
    %v668 = vunpack.c.h.b16 %v499
    %v669 = vunpack.c.l.b16 %v500
    %v670 = vunpack.c.l.b16 %v501
    %v671 = vunpack.c.h.b16 %v501
    %v672 = vunpack.c.l.b16 %v502
    %v673 = vpack.c.b16 %v580, %v577
    %v674 = vpack.c.b16 %v581, %v578
    %v675 = vpack.c.b16 %v582, %v579
    %v676 = vpack.c.b16 %v586, %v583
    %v677 = vpack.c.b16 %v587, %v584
    %v678 = vpack.c.b16 %v588, %v585
    %v679 = vpack.c.b16 %v592, %v589
    %v680 = vpack.c.b16 %v593, %v590
    %v681 = vpack.c.b16 %v594, %v591
    %v682 = vpack.c.b16 %v598, %v595
    %v683 = vpack.c.b16 %v599, %v596
    %v684 = vpack.c.b16 %v600, %v597
    %v685 = vpack.c.b16 %v604, %v601
    %v686 = vpack.c.b16 %v605, %v602
    %v687 = vpack.c.b16 %v606, %v603
    %v688 = vpack.c.b16 %v610, %v607
    %v689 = vpack.c.b16 %v611, %v608
    %v690 = vpack.c.b16 %v612, %v609
    %v691 = vpack.c.b16 %v616, %v613
    %v692 = vpack.c.b16 %v617, %v614
    %v693 = vpack.c.b16 %v618, %v615
    %v694 = vpack.c.b16 %v622, %v619
    %v695 = vpack.c.b16 %v623, %v620
    %v696 = vpack.c.b16 %v624, %v621
    %v697 = vpack.c.b16 %v628, %v625
    %v698 = vpack.c.b16 %v629, %v626
    %v699 = vpack.c.b16 %v630, %v627
    %v700 = vpack.c.b16 %v634, %v631
    %v701 = vpack.c.b16 %v635, %v632
    %v702 = vpack.c.b16 %v636, %v633
    %v703 = vpack.c.b16 %v640, %v637
    %v704 = vpack.c.b16 %v641, %v638
    %v705 = vpack.c.b16 %v642, %v639
    %v706 = vpack.c.b16 %v646, %v643
    %v707 = vpack.c.b16 %v647, %v644
    %v708 = vpack.c.b16 %v648, %v645
    %v709 = vpack.c.b16 %v652, %v649
    %v710 = vpack.c.b16 %v653, %v650
    %v711 = vpack.c.b16 %v654, %v651
    %v712 = vpack.c.b16 %v658, %v655
    %v713 = vpack.c.b16 %v659, %v656
    %v714 = vpack.c.b16 %v660, %v657
    %v715 = vpack.c.b16 %v664, %v661
    %v716 = vpack.c.b16 %v665, %v662
    %v717 = vpack.c.b16 %v666, %v663
    %v718 = vpack.c.b16 %v670, %v667
    %v719 = vpack.c.b16 %v671, %v668
    %v720 = vpack.c.b16 %v672, %v669
    %769 = vmatpush.bf16.msra.mxu0 %v694
    %770 = vmatpush.bf16.msra.mxu0 %v691
    %771 = vmatpush.bf16.msra.mxu0 %v688
    %772 = vmatpush.bf16.msra.mxu0 %v685
    %773 = vmatpush.bf16.msra.mxu0 %v682
    %774 = vmatpush.bf16.msra.mxu0 %v679
    %775 = vmatpush.bf16.msra.mxu0 %v676
    %776 = vmatpush.bf16.msra.mxu0 %v673
    %777 = vmatmul.bf16.gmra.mxu0 %v511
    %v778 = vpop.f32.mrf.mxu0
    %v779 = vadd.f32 0.0, %v778
    %v780 = vpop.f32.mrf.mxu0
    %v781 = vadd.f32 0.0, %v780
    %782 = vdwg.mxu0
    %783 = vmatpush.bf16.msra.mxu0 %v718
    %784 = vmatpush.bf16.msra.mxu0 %v715
    %785 = vmatpush.bf16.msra.mxu0 %v712
    %786 = vmatpush.bf16.msra.mxu0 %v709
    %787 = vmatpush.bf16.msra.mxu0 %v706
    %788 = vmatpush.bf16.msra.mxu0 %v703
    %789 = vmatpush.bf16.msra.mxu0 %v700
    %790 = vmatpush.bf16.msra.mxu0 %v697
    %791 = vmatmul.bf16.gmra.mxu0 %v512
    %v792 = vpop.f32.mrf.mxu0
    %v793 = vadd.f32 %v779, %v792
    %v794 = vpop.f32.mrf.mxu0
    %v795 = vadd.f32 %v781, %v794
    %796 = vdwg.mxu0
    %797 = vmatpush.bf16.msra.mxu0 %v695
    %798 = vmatpush.bf16.msra.mxu0 %v692
    %799 = vmatpush.bf16.msra.mxu0 %v689
    %800 = vmatpush.bf16.msra.mxu0 %v686
    %801 = vmatpush.bf16.msra.mxu0 %v683
    %802 = vmatpush.bf16.msra.mxu0 %v680
    %803 = vmatpush.bf16.msra.mxu0 %v677
    %804 = vmatpush.bf16.msra.mxu0 %v674
    %805 = vmatmul.bf16.gmra.mxu0 %v511
    %v806 = vpop.f32.mrf.mxu0
    %v807 = vadd.f32 0.0, %v806
    %v808 = vpop.f32.mrf.mxu0
    %v809 = vadd.f32 0.0, %v808
    %810 = vdwg.mxu0
    %811 = vmatpush.bf16.msra.mxu0 %v719
    %812 = vmatpush.bf16.msra.mxu0 %v716
    %813 = vmatpush.bf16.msra.mxu0 %v713
    %814 = vmatpush.bf16.msra.mxu0 %v710
    %815 = vmatpush.bf16.msra.mxu0 %v707
    %816 = vmatpush.bf16.msra.mxu0 %v704
    %817 = vmatpush.bf16.msra.mxu0 %v701
    %818 = vmatpush.bf16.msra.mxu0 %v698
    %819 = vmatmul.bf16.gmra.mxu0 %v512
    %v820 = vpop.f32.mrf.mxu0
    %v821 = vadd.f32 %v807, %v820
    %v822 = vpop.f32.mrf.mxu0
    %v823 = vadd.f32 %v809, %v822
    %824 = vdwg.mxu0
    %825 = vmatpush.bf16.msra.mxu0 %v696
    %826 = vmatpush.bf16.msra.mxu0 %v693
    %827 = vmatpush.bf16.msra.mxu0 %v690
    %828 = vmatpush.bf16.msra.mxu0 %v687
    %829 = vmatpush.bf16.msra.mxu0 %v684
    %830 = vmatpush.bf16.msra.mxu0 %v681
    %831 = vmatpush.bf16.msra.mxu0 %v678
    %832 = vmatpush.bf16.msra.mxu0 %v675
    %833 = vmatmul.bf16.gmra.mxu0 %v511
    %v834 = vpop.f32.mrf.mxu0
    %v835 = vadd.f32 0.0, %v834
    %v836 = vpop.f32.mrf.mxu0
    %v837 = vadd.f32 0.0, %v836
    %838 = vdwg.mxu0
    %839 = vmatpush.bf16.msra.mxu0 %v720
    %840 = vmatpush.bf16.msra.mxu0 %v717
    %841 = vmatpush.bf16.msra.mxu0 %v714
    %842 = vmatpush.bf16.msra.mxu0 %v711
    %843 = vmatpush.bf16.msra.mxu0 %v708
    %844 = vmatpush.bf16.msra.mxu0 %v705
    %845 = vmatpush.bf16.msra.mxu0 %v702
    %846 = vmatpush.bf16.msra.mxu0 %v699
    %847 = vmatmul.bf16.gmra.mxu0 %v512
    %v848 = vpop.f32.mrf.mxu0
    %v849 = vadd.f32 %v835, %v848
    %v850 = vpop.f32.mrf.mxu0
    %v851 = vadd.f32 %v837, %v850
    %852 = vdwg.mxu0
    %v853 = vadd.f32 %v505, %v793
    %v854 = vadd.f32 %v508, %v795
    %v855 = vxor.u32 %v853, 2147483648
    %v856 = vxor.u32 %v854, 2147483648
    %v857 = vmul.f32 %v855, 1.442695
    %v858 = vpow.pop %v857
    %v859 = vmul.f32 %v856, 1.442695
    %v860 = vpow.pop %v859
    %v861 = vadd.f32 %v858, 1.0
    %v862 = vadd.f32 %v860, 1.0
    %v863 = vrcp.pop %v861
    %v864 = vmul.f32 %v861, %v863
    %v865 = vsub.f32 1.0, %v864
    %v866 = vmul.f32 %v863, %v865
    %v867 = vadd.f32 %v863, %v866
    %vm868 = vweird.f32 %v861
    %vm869 = vweird.f32 %v863
    %vm870 = vmor %vm868, %vm869
    %v871 = vsel %vm870, %v863, %v867
    %v872 = vand.u32 2147483647, %v861
    %vm873 = vcmp.eq.f32.partialorder %v872, 8.507059e+37
    %v874 = vand.u32 %v861, 2147483648
    %v875 = vor.u32 1.1754944e-38, %v874
    %v876 = vsel %vm873, %v875, %v871
    %v877 = vmul.f32 1.0, %v876
    %v878 = vrcp.pop %v862
    %v879 = vmul.f32 %v862, %v878
    %v880 = vsub.f32 1.0, %v879
    %v881 = vmul.f32 %v878, %v880
    %v882 = vadd.f32 %v878, %v881
    %vm883 = vweird.f32 %v862
    %vm884 = vweird.f32 %v878
    %vm885 = vmor %vm883, %vm884
    %v886 = vsel %vm885, %v878, %v882
    %v887 = vand.u32 2147483647, %v862
    %vm888 = vcmp.eq.f32.partialorder %v887, 8.507059e+37
    %v889 = vand.u32 %v862, 2147483648
    %v890 = vor.u32 1.1754944e-38, %v889
    %v891 = vsel %vm888, %v890, %v886
    %v892 = vmul.f32 1.0, %v891
    %v893 = vadd.f32 %v506, %v821
    %v894 = vadd.f32 %v509, %v823
    %v895 = vxor.u32 %v893, 2147483648
    %v896 = vxor.u32 %v894, 2147483648
    %v897 = vmul.f32 %v895, 1.442695
    %v898 = vpow.pop %v897
    %v899 = vmul.f32 %v896, 1.442695
    %v900 = vpow.pop %v899
    %v901 = vadd.f32 %v898, 1.0
    %v902 = vadd.f32 %v900, 1.0
    %v903 = vrcp.pop %v901
    %v904 = vmul.f32 %v901, %v903
    %v905 = vsub.f32 1.0, %v904
    %v906 = vmul.f32 %v903, %v905
    %v907 = vadd.f32 %v903, %v906
    %vm908 = vweird.f32 %v901
    %vm909 = vweird.f32 %v903
    %vm910 = vmor %vm908, %vm909
    %v911 = vsel %vm910, %v903, %v907
    %v912 = vand.u32 2147483647, %v901
    %vm913 = vcmp.eq.f32.partialorder %v912, 8.507059e+37
    %v914 = vand.u32 %v901, 2147483648
    %v915 = vor.u32 1.1754944e-38, %v914
    %v916 = vsel %vm913, %v915, %v911
    %v917 = vmul.f32 1.0, %v916
    %v918 = vrcp.pop %v902
    %v919 = vmul.f32 %v902, %v918
    %v920 = vsub.f32 1.0, %v919
    %v921 = vmul.f32 %v918, %v920
    %v922 = vadd.f32 %v918, %v921
    %vm923 = vweird.f32 %v902
    %vm924 = vweird.f32 %v918
    %vm925 = vmor %vm923, %vm924
    %v926 = vsel %vm925, %v918, %v922
    %v927 = vand.u32 2147483647, %v902
    %vm928 = vcmp.eq.f32.partialorder %v927, 8.507059e+37
    %v929 = vand.u32 %v902, 2147483648
    %v930 = vor.u32 1.1754944e-38, %v929
    %v931 = vsel %vm928, %v930, %v926
    %v932 = vmul.f32 1.0, %v931
    %v933 = vadd.f32 %v849, %v433
    %v934 = vadd.f32 %v851, %v437
    %v935 = vmul.f32 %v877, %v933
    %v936 = vmul.f32 %v892, %v934
    %v937 = vadd.f32 %v507, %v935
    %v938 = vadd.f32 %v510, %v936
    %v939 = vtanh.pop %v937
    %v940 = vtanh.pop %v938
    %v941 = vsub.f32 1.0, %v917
    %v942 = vsub.f32 1.0, %v932
    %v943 = vmul.f32 %v941, %v939
    %v944 = vmul.f32 %v942, %v940
    %v945 = vmul.f32 %v917, %v503
    %v946 = vmul.f32 %v932, %v504
    %v947 = vadd.f32 %v943, %v945
    %v948 = vadd.f32 %v944, %v946
    %v949 = vpack.c.bf16 %v947, %v947
    %950 = vst [vmem:[%s8] sm:$0xf] %v949
    %v951 = vpack.c.bf16 %v948, %v948
    %s952 = scalar_lea.vmem %s62, 28
    %953 = vst [vmem:[%s952] sm:$0xf] %v951
    %v954 = vld [vmem:[#allocation2 + $0x18] sm:$0xff]
    %v955 = vld [vmem:[#allocation2 + $0x20] sm:$0xff]
    %v956 = vld [vmem:[#allocation2 + $0x28] sm:$0xff]
    %v957 = vld [vmem:[#allocation3 + $0x90] sm:$0xff]
    %v958 = vld [vmem:[#allocation3 + $0x98] sm:$0xff]
    %v959 = vld [vmem:[#allocation3 + $0xa0] sm:$0xff]
    %v960 = vpack.c.bf16 0.0, %v947
    %v961 = vpack.c.bf16 %v948, 0.0
    %962 = vmatpush.bf16.msra.mxu0 %v694
    %963 = vmatpush.bf16.msra.mxu0 %v691
    %964 = vmatpush.bf16.msra.mxu0 %v688
    %965 = vmatpush.bf16.msra.mxu0 %v685
    %966 = vmatpush.bf16.msra.mxu0 %v682
    %967 = vmatpush.bf16.msra.mxu0 %v679
    %968 = vmatpush.bf16.msra.mxu0 %v676
    %969 = vmatpush.bf16.msra.mxu0 %v673
    %970 = vmatmul.bf16.gmra.mxu0 %v960
    %v971 = vpop.f32.mrf.mxu0
    %v972 = vadd.f32 0.0, %v971
    %v973 = vpop.f32.mrf.mxu0
    %v974 = vadd.f32 0.0, %v973
    %975 = vdwg.mxu0
    %976 = vmatpush.bf16.msra.mxu0 %v718
    %977 = vmatpush.bf16.msra.mxu0 %v715
    %978 = vmatpush.bf16.msra.mxu0 %v712
    %979 = vmatpush.bf16.msra.mxu0 %v709
    %980 = vmatpush.bf16.msra.mxu0 %v706
    %981 = vmatpush.bf16.msra.mxu0 %v703
    %982 = vmatpush.bf16.msra.mxu0 %v700
    %983 = vmatpush.bf16.msra.mxu0 %v697
    %984 = vmatmul.bf16.gmra.mxu0 %v961
    %v985 = vpop.f32.mrf.mxu0
    %v986 = vadd.f32 %v972, %v985
    %v987 = vpop.f32.mrf.mxu0
    %v988 = vadd.f32 %v974, %v987
    %989 = vdwg.mxu0
    %990 = vmatpush.bf16.msra.mxu0 %v695
    %991 = vmatpush.bf16.msra.mxu0 %v692
    %992 = vmatpush.bf16.msra.mxu0 %v689
    %993 = vmatpush.bf16.msra.mxu0 %v686
    %994 = vmatpush.bf16.msra.mxu0 %v683
    %995 = vmatpush.bf16.msra.mxu0 %v680
    %996 = vmatpush.bf16.msra.mxu0 %v677
    %997 = vmatpush.bf16.msra.mxu0 %v674
    %998 = vmatmul.bf16.gmra.mxu0 %v960
    %v999 = vpop.f32.mrf.mxu0
    %v1000 = vadd.f32 0.0, %v999
    %v1001 = vpop.f32.mrf.mxu0
    %v1002 = vadd.f32 0.0, %v1001
    %1003 = vdwg.mxu0
    %1004 = vmatpush.bf16.msra.mxu0 %v719
    %1005 = vmatpush.bf16.msra.mxu0 %v716
    %1006 = vmatpush.bf16.msra.mxu0 %v713
    %1007 = vmatpush.bf16.msra.mxu0 %v710
    %1008 = vmatpush.bf16.msra.mxu0 %v707
    %1009 = vmatpush.bf16.msra.mxu0 %v704
    %1010 = vmatpush.bf16.msra.mxu0 %v701
    %1011 = vmatpush.bf16.msra.mxu0 %v698
    %1012 = vmatmul.bf16.gmra.mxu0 %v961
    %v1013 = vpop.f32.mrf.mxu0
    %v1014 = vadd.f32 %v1000, %v1013
    %v1015 = vpop.f32.mrf.mxu0
    %v1016 = vadd.f32 %v1002, %v1015
    %1017 = vdwg.mxu0
    %1018 = vmatpush.bf16.msra.mxu0 %v696
    %1019 = vmatpush.bf16.msra.mxu0 %v693
    %1020 = vmatpush.bf16.msra.mxu0 %v690
    %1021 = vmatpush.bf16.msra.mxu0 %v687
    %1022 = vmatpush.bf16.msra.mxu0 %v684
    %1023 = vmatpush.bf16.msra.mxu0 %v681
    %1024 = vmatpush.bf16.msra.mxu0 %v678
    %1025 = vmatpush.bf16.msra.mxu0 %v675
    %1026 = vmatmul.bf16.gmra.mxu0 %v960
    %v1027 = vpop.f32.mrf.mxu0
    %v1028 = vadd.f32 0.0, %v1027
    %v1029 = vpop.f32.mrf.mxu0
    %v1030 = vadd.f32 0.0, %v1029
    %1031 = vdwg.mxu0
    %1032 = vmatpush.bf16.msra.mxu0 %v720
    %1033 = vmatpush.bf16.msra.mxu0 %v717
    %1034 = vmatpush.bf16.msra.mxu0 %v714
    %1035 = vmatpush.bf16.msra.mxu0 %v711
    %1036 = vmatpush.bf16.msra.mxu0 %v708
    %1037 = vmatpush.bf16.msra.mxu0 %v705
    %1038 = vmatpush.bf16.msra.mxu0 %v702
    %1039 = vmatpush.bf16.msra.mxu0 %v699
    %1040 = vmatmul.bf16.gmra.mxu0 %v961
    %v1041 = vpop.f32.mrf.mxu0
    %v1042 = vadd.f32 %v1028, %v1041
    %v1043 = vpop.f32.mrf.mxu0
    %v1044 = vadd.f32 %v1030, %v1043
    %1045 = vdwg.mxu0
    %v1046 = vadd.f32 %v954, %v986
    %v1047 = vadd.f32 %v957, %v988
    %v1048 = vxor.u32 %v1046, 2147483648
    %v1049 = vxor.u32 %v1047, 2147483648
    %v1050 = vmul.f32 %v1048, 1.442695
    %v1051 = vpow.pop %v1050
    %v1052 = vmul.f32 %v1049, 1.442695
    %v1053 = vpow.pop %v1052
    %v1054 = vadd.f32 %v1051, 1.0
    %v1055 = vadd.f32 %v1053, 1.0
    %v1056 = vrcp.pop %v1054
    %v1057 = vmul.f32 %v1054, %v1056
    %v1058 = vsub.f32 1.0, %v1057
    %v1059 = vmul.f32 %v1056, %v1058
    %v1060 = vadd.f32 %v1056, %v1059
    %vm1061 = vweird.f32 %v1054
    %vm1062 = vweird.f32 %v1056
    %vm1063 = vmor %vm1061, %vm1062
    %v1064 = vsel %vm1063, %v1056, %v1060
    %v1065 = vand.u32 2147483647, %v1054
    %vm1066 = vcmp.eq.f32.partialorder %v1065, 8.507059e+37
    %v1067 = vand.u32 %v1054, 2147483648
    %v1068 = vor.u32 1.1754944e-38, %v1067
    %v1069 = vsel %vm1066, %v1068, %v1064
    %v1070 = vmul.f32 1.0, %v1069
    %v1071 = vrcp.pop %v1055
    %v1072 = vmul.f32 %v1055, %v1071
    %v1073 = vsub.f32 1.0, %v1072
    %v1074 = vmul.f32 %v1071, %v1073
    %v1075 = vadd.f32 %v1071, %v1074
    %vm1076 = vweird.f32 %v1055
    %vm1077 = vweird.f32 %v1071
    %vm1078 = vmor %vm1076, %vm1077
    %v1079 = vsel %vm1078, %v1071, %v1075
    %v1080 = vand.u32 2147483647, %v1055
    %vm1081 = vcmp.eq.f32.partialorder %v1080, 8.507059e+37
    %v1082 = vand.u32 %v1055, 2147483648
    %v1083 = vor.u32 1.1754944e-38, %v1082
    %v1084 = vsel %vm1081, %v1083, %v1079
    %v1085 = vmul.f32 1.0, %v1084
    %v1086 = vadd.f32 %v955, %v1014
    %v1087 = vadd.f32 %v958, %v1016
    %v1088 = vxor.u32 %v1086, 2147483648
    %v1089 = vxor.u32 %v1087, 2147483648
    %v1090 = vmul.f32 %v1088, 1.442695
    %v1091 = vpow.pop %v1090
    %v1092 = vmul.f32 %v1089, 1.442695
    %v1093 = vpow.pop %v1092
    %v1094 = vadd.f32 %v1091, 1.0
    %v1095 = vadd.f32 %v1093, 1.0
    %v1096 = vrcp.pop %v1094
    %v1097 = vmul.f32 %v1094, %v1096
    %v1098 = vsub.f32 1.0, %v1097
    %v1099 = vmul.f32 %v1096, %v1098
    %v1100 = vadd.f32 %v1096, %v1099
    %vm1101 = vweird.f32 %v1094
    %vm1102 = vweird.f32 %v1096
    %vm1103 = vmor %vm1101, %vm1102
    %v1104 = vsel %vm1103, %v1096, %v1100
    %v1105 = vand.u32 2147483647, %v1094
    %vm1106 = vcmp.eq.f32.partialorder %v1105, 8.507059e+37
    %v1107 = vand.u32 %v1094, 2147483648
    %v1108 = vor.u32 1.1754944e-38, %v1107
    %v1109 = vsel %vm1106, %v1108, %v1104
    %v1110 = vmul.f32 1.0, %v1109
    %v1111 = vrcp.pop %v1095
    %v1112 = vmul.f32 %v1095, %v1111
    %v1113 = vsub.f32 1.0, %v1112
    %v1114 = vmul.f32 %v1111, %v1113
    %v1115 = vadd.f32 %v1111, %v1114
    %vm1116 = vweird.f32 %v1095
    %vm1117 = vweird.f32 %v1111
    %vm1118 = vmor %vm1116, %vm1117
    %v1119 = vsel %vm1118, %v1111, %v1115
    %v1120 = vand.u32 2147483647, %v1095
    %vm1121 = vcmp.eq.f32.partialorder %v1120, 8.507059e+37
    %v1122 = vand.u32 %v1095, 2147483648
    %v1123 = vor.u32 1.1754944e-38, %v1122
    %v1124 = vsel %vm1121, %v1123, %v1119
    %v1125 = vmul.f32 1.0, %v1124
    %v1126 = vadd.f32 %v1042, %v433
    %v1127 = vadd.f32 %v1044, %v437
    %v1128 = vmul.f32 %v1070, %v1126
    %v1129 = vmul.f32 %v1085, %v1127
    %v1130 = vadd.f32 %v956, %v1128
    %v1131 = vadd.f32 %v959, %v1129
    %v1132 = vtanh.pop %v1130
    %v1133 = vtanh.pop %v1131
    %v1134 = vsub.f32 1.0, %v1110
    %v1135 = vsub.f32 1.0, %v1125
    %v1136 = vmul.f32 %v1134, %v1132
    %v1137 = vmul.f32 %v1135, %v1133
    %v1138 = vmul.f32 %v1110, %v947
    %v1139 = vmul.f32 %v1125, %v948
    %v1140 = vadd.f32 %v1136, %v1138
    %v1141 = vadd.f32 %v1137, %v1139
    %v1142 = vpack.c.bf16 %v1140, %v1140
    %s1143 = scalar_lea.vmem %s8, 4
    %1144 = vst [vmem:[%s1143] sm:$0xf] %v1142
    %v1145 = vpack.c.bf16 %v1141, %v1141
    %s1146 = scalar_lea.vmem %s62, 24
    %1147 = vst [vmem:[%s1146] sm:$0xf] %v1145
    %v1148 = vld [vmem:[#allocation2 + $0x30] sm:$0xff]
    %v1149 = vld [vmem:[#allocation2 + $0x38] sm:$0xff]
    %v1150 = vld [vmem:[#allocation2 + $0x40] sm:$0xff]
    %v1151 = vld [vmem:[#allocation3 + $0x78] sm:$0xff]
    %v1152 = vld [vmem:[#allocation3 + $0x80] sm:$0xff]
    %v1153 = vld [vmem:[#allocation3 + $0x88] sm:$0xff]
    %v1154 = vpack.c.bf16 0.0, %v1140
    %v1155 = vpack.c.bf16 %v1141, 0.0
    %1156 = vmatpush.bf16.msra.mxu0 %v694
    %1157 = vmatpush.bf16.msra.mxu0 %v691
    %1158 = vmatpush.bf16.msra.mxu0 %v688
    %1159 = vmatpush.bf16.msra.mxu0 %v685
    %1160 = vmatpush.bf16.msra.mxu0 %v682
    %1161 = vmatpush.bf16.msra.mxu0 %v679
    %1162 = vmatpush.bf16.msra.mxu0 %v676
    %1163 = vmatpush.bf16.msra.mxu0 %v673
    %1164 = vmatmul.bf16.gmra.mxu0 %v1154
    %v1165 = vpop.f32.mrf.mxu0
    %v1166 = vadd.f32 0.0, %v1165
    %v1167 = vpop.f32.mrf.mxu0
    %v1168 = vadd.f32 0.0, %v1167
    %1169 = vdwg.mxu0
    %1170 = vmatpush.bf16.msra.mxu0 %v718
    %1171 = vmatpush.bf16.msra.mxu0 %v715
    %1172 = vmatpush.bf16.msra.mxu0 %v712
    %1173 = vmatpush.bf16.msra.mxu0 %v709
    %1174 = vmatpush.bf16.msra.mxu0 %v706
    %1175 = vmatpush.bf16.msra.mxu0 %v703
    %1176 = vmatpush.bf16.msra.mxu0 %v700
    %1177 = vmatpush.bf16.msra.mxu0 %v697
    %1178 = vmatmul.bf16.gmra.mxu0 %v1155
    %v1179 = vpop.f32.mrf.mxu0
    %v1180 = vadd.f32 %v1166, %v1179
    %v1181 = vpop.f32.mrf.mxu0
    %v1182 = vadd.f32 %v1168, %v1181
    %1183 = vdwg.mxu0
    %1184 = vmatpush.bf16.msra.mxu0 %v695
    %1185 = vmatpush.bf16.msra.mxu0 %v692
    %1186 = vmatpush.bf16.msra.mxu0 %v689
    %1187 = vmatpush.bf16.msra.mxu0 %v686
    %1188 = vmatpush.bf16.msra.mxu0 %v683
    %1189 = vmatpush.bf16.msra.mxu0 %v680
    %1190 = vmatpush.bf16.msra.mxu0 %v677
    %1191 = vmatpush.bf16.msra.mxu0 %v674
    %1192 = vmatmul.bf16.gmra.mxu0 %v1154
    %v1193 = vpop.f32.mrf.mxu0
    %v1194 = vadd.f32 0.0, %v1193
    %v1195 = vpop.f32.mrf.mxu0
    %v1196 = vadd.f32 0.0, %v1195
    %1197 = vdwg.mxu0
    %1198 = vmatpush.bf16.msra.mxu0 %v719
    %1199 = vmatpush.bf16.msra.mxu0 %v716
    %1200 = vmatpush.bf16.msra.mxu0 %v713
    %1201 = vmatpush.bf16.msra.mxu0 %v710
    %1202 = vmatpush.bf16.msra.mxu0 %v707
    %1203 = vmatpush.bf16.msra.mxu0 %v704
    %1204 = vmatpush.bf16.msra.mxu0 %v701
    %1205 = vmatpush.bf16.msra.mxu0 %v698
    %1206 = vmatmul.bf16.gmra.mxu0 %v1155
    %v1207 = vpop.f32.mrf.mxu0
    %v1208 = vadd.f32 %v1194, %v1207
    %v1209 = vpop.f32.mrf.mxu0
    %v1210 = vadd.f32 %v1196, %v1209
    %1211 = vdwg.mxu0
    %1212 = vmatpush.bf16.msra.mxu0 %v696
    %1213 = vmatpush.bf16.msra.mxu0 %v693
    %1214 = vmatpush.bf16.msra.mxu0 %v690
    %1215 = vmatpush.bf16.msra.mxu0 %v687
    %1216 = vmatpush.bf16.msra.mxu0 %v684
    %1217 = vmatpush.bf16.msra.mxu0 %v681
    %1218 = vmatpush.bf16.msra.mxu0 %v678
    %1219 = vmatpush.bf16.msra.mxu0 %v675
    %1220 = vmatmul.bf16.gmra.mxu0 %v1154
    %v1221 = vpop.f32.mrf.mxu0
    %v1222 = vadd.f32 0.0, %v1221
    %v1223 = vpop.f32.mrf.mxu0
    %v1224 = vadd.f32 0.0, %v1223
    %1225 = vdwg.mxu0
    %1226 = vmatpush.bf16.msra.mxu0 %v720
    %1227 = vmatpush.bf16.msra.mxu0 %v717
    %1228 = vmatpush.bf16.msra.mxu0 %v714
    %1229 = vmatpush.bf16.msra.mxu0 %v711
    %1230 = vmatpush.bf16.msra.mxu0 %v708
    %1231 = vmatpush.bf16.msra.mxu0 %v705
    %1232 = vmatpush.bf16.msra.mxu0 %v702
    %1233 = vmatpush.bf16.msra.mxu0 %v699
    %1234 = vmatmul.bf16.gmra.mxu0 %v1155
    %v1235 = vpop.f32.mrf.mxu0
    %v1236 = vadd.f32 %v1222, %v1235
    %v1237 = vpop.f32.mrf.mxu0
    %v1238 = vadd.f32 %v1224, %v1237
    %1239 = vdwg.mxu0
    %v1240 = vadd.f32 %v1148, %v1180
    %v1241 = vadd.f32 %v1151, %v1182
    %v1242 = vxor.u32 %v1240, 2147483648
    %v1243 = vxor.u32 %v1241, 2147483648
    %v1244 = vmul.f32 %v1242, 1.442695
    %v1245 = vpow.pop %v1244
    %v1246 = vmul.f32 %v1243, 1.442695
    %v1247 = vpow.pop %v1246
    %v1248 = vadd.f32 %v1245, 1.0
    %v1249 = vadd.f32 %v1247, 1.0
    %v1250 = vrcp.pop %v1248
    %v1251 = vmul.f32 %v1248, %v1250
    %v1252 = vsub.f32 1.0, %v1251
    %v1253 = vmul.f32 %v1250, %v1252
    %v1254 = vadd.f32 %v1250, %v1253
    %vm1255 = vweird.f32 %v1248
    %vm1256 = vweird.f32 %v1250
    %vm1257 = vmor %vm1255, %vm1256
    %v1258 = vsel %vm1257, %v1250, %v1254
    %v1259 = vand.u32 2147483647, %v1248
    %vm1260 = vcmp.eq.f32.partialorder %v1259, 8.507059e+37
    %v1261 = vand.u32 %v1248, 2147483648
    %v1262 = vor.u32 1.1754944e-38, %v1261
    %v1263 = vsel %vm1260, %v1262, %v1258
    %v1264 = vmul.f32 1.0, %v1263
    %v1265 = vrcp.pop %v1249
    %v1266 = vmul.f32 %v1249, %v1265
    %v1267 = vsub.f32 1.0, %v1266
    %v1268 = vmul.f32 %v1265, %v1267
    %v1269 = vadd.f32 %v1265, %v1268
    %vm1270 = vweird.f32 %v1249
    %vm1271 = vweird.f32 %v1265
    %vm1272 = vmor %vm1270, %vm1271
    %v1273 = vsel %vm1272, %v1265, %v1269
    %v1274 = vand.u32 2147483647, %v1249
    %vm1275 = vcmp.eq.f32.partialorder %v1274, 8.507059e+37
    %v1276 = vand.u32 %v1249, 2147483648
    %v1277 = vor.u32 1.1754944e-38, %v1276
    %v1278 = vsel %vm1275, %v1277, %v1273
    %v1279 = vmul.f32 1.0, %v1278
    %v1280 = vadd.f32 %v1149, %v1208
    %v1281 = vadd.f32 %v1152, %v1210
    %v1282 = vxor.u32 %v1280, 2147483648
    %v1283 = vxor.u32 %v1281, 2147483648
    %v1284 = vmul.f32 %v1282, 1.442695
    %v1285 = vpow.pop %v1284
    %v1286 = vmul.f32 %v1283, 1.442695
    %v1287 = vpow.pop %v1286
    %v1288 = vadd.f32 %v1285, 1.0
    %v1289 = vadd.f32 %v1287, 1.0
    %v1290 = vrcp.pop %v1288
    %v1291 = vmul.f32 %v1288, %v1290
    %v1292 = vsub.f32 1.0, %v1291
    %v1293 = vmul.f32 %v1290, %v1292
    %v1294 = vadd.f32 %v1290, %v1293
    %vm1295 = vweird.f32 %v1288
    %vm1296 = vweird.f32 %v1290
    %vm1297 = vmor %vm1295, %vm1296
    %v1298 = vsel %vm1297, %v1290, %v1294
    %v1299 = vand.u32 2147483647, %v1288
    %vm1300 = vcmp.eq.f32.partialorder %v1299, 8.507059e+37
    %v1301 = vand.u32 %v1288, 2147483648
    %v1302 = vor.u32 1.1754944e-38, %v1301
    %v1303 = vsel %vm1300, %v1302, %v1298
    %v1304 = vmul.f32 1.0, %v1303
    %v1305 = vrcp.pop %v1289
    %v1306 = vmul.f32 %v1289, %v1305
    %v1307 = vsub.f32 1.0, %v1306
    %v1308 = vmul.f32 %v1305, %v1307
    %v1309 = vadd.f32 %v1305, %v1308
    %vm1310 = vweird.f32 %v1289
    %vm1311 = vweird.f32 %v1305
    %vm1312 = vmor %vm1310, %vm1311
    %v1313 = vsel %vm1312, %v1305, %v1309
    %v1314 = vand.u32 2147483647, %v1289
    %vm1315 = vcmp.eq.f32.partialorder %v1314, 8.507059e+37
    %v1316 = vand.u32 %v1289, 2147483648
    %v1317 = vor.u32 1.1754944e-38, %v1316
    %v1318 = vsel %vm1315, %v1317, %v1313
    %v1319 = vmul.f32 1.0, %v1318
    %v1320 = vadd.f32 %v1236, %v433
    %v1321 = vadd.f32 %v1238, %v437
    %v1322 = vmul.f32 %v1264, %v1320
    %v1323 = vmul.f32 %v1279, %v1321
    %v1324 = vadd.f32 %v1150, %v1322
    %v1325 = vadd.f32 %v1153, %v1323
    %v1326 = vtanh.pop %v1324
    %v1327 = vtanh.pop %v1325
    %v1328 = vsub.f32 1.0, %v1304
    %v1329 = vsub.f32 1.0, %v1319
    %v1330 = vmul.f32 %v1328, %v1326
    %v1331 = vmul.f32 %v1329, %v1327
    %v1332 = vmul.f32 %v1304, %v1140
    %v1333 = vmul.f32 %v1319, %v1141
    %v1334 = vadd.f32 %v1330, %v1332
    %v1335 = vadd.f32 %v1331, %v1333
    %v1336 = vpack.c.bf16 %v1334, %v1334
    %s1337 = scalar_lea.vmem %s8, 8
    %1338 = vst [vmem:[%s1337] sm:$0xf] %v1336
    %v1339 = vpack.c.bf16 %v1335, %v1335
    %s1340 = scalar_lea.vmem %s62, 20
    %1341 = vst [vmem:[%s1340] sm:$0xf] %v1339
    %v1342 = vld [vmem:[#allocation2 + $0x48] sm:$0xff]
    %v1343 = vld [vmem:[#allocation2 + $0x50] sm:$0xff]
    %v1344 = vld [vmem:[#allocation2 + $0x58] sm:$0xff]
    %v1345 = vld [vmem:[#allocation3 + $0x60] sm:$0xff]
    %v1346 = vld [vmem:[#allocation3 + $0x68] sm:$0xff]
    %v1347 = vld [vmem:[#allocation3 + $0x70] sm:$0xff]
    %v1348 = vpack.c.bf16 0.0, %v1334
    %v1349 = vpack.c.bf16 %v1335, 0.0
    %1350 = vmatpush.bf16.msra.mxu0 %v694
    %1351 = vmatpush.bf16.msra.mxu0 %v691
    %1352 = vmatpush.bf16.msra.mxu0 %v688
    %1353 = vmatpush.bf16.msra.mxu0 %v685
    %1354 = vmatpush.bf16.msra.mxu0 %v682
    %1355 = vmatpush.bf16.msra.mxu0 %v679
    %1356 = vmatpush.bf16.msra.mxu0 %v676
    %1357 = vmatpush.bf16.msra.mxu0 %v673
    %1358 = vmatmul.bf16.gmra.mxu0 %v1348
    %v1359 = vpop.f32.mrf.mxu0
    %v1360 = vadd.f32 0.0, %v1359
    %v1361 = vpop.f32.mrf.mxu0
    %v1362 = vadd.f32 0.0, %v1361
    %1363 = vdwg.mxu0
    %1364 = vmatpush.bf16.msra.mxu0 %v718
    %1365 = vmatpush.bf16.msra.mxu0 %v715
    %1366 = vmatpush.bf16.msra.mxu0 %v712
    %1367 = vmatpush.bf16.msra.mxu0 %v709
    %1368 = vmatpush.bf16.msra.mxu0 %v706
    %1369 = vmatpush.bf16.msra.mxu0 %v703
    %1370 = vmatpush.bf16.msra.mxu0 %v700
    %1371 = vmatpush.bf16.msra.mxu0 %v697
    %1372 = vmatmul.bf16.gmra.mxu0 %v1349
    %v1373 = vpop.f32.mrf.mxu0
    %v1374 = vadd.f32 %v1360, %v1373
    %v1375 = vpop.f32.mrf.mxu0
    %v1376 = vadd.f32 %v1362, %v1375
    %1377 = vdwg.mxu0
    %1378 = vmatpush.bf16.msra.mxu0 %v695
    %1379 = vmatpush.bf16.msra.mxu0 %v692
    %1380 = vmatpush.bf16.msra.mxu0 %v689
    %1381 = vmatpush.bf16.msra.mxu0 %v686
    %1382 = vmatpush.bf16.msra.mxu0 %v683
    %1383 = vmatpush.bf16.msra.mxu0 %v680
    %1384 = vmatpush.bf16.msra.mxu0 %v677
    %1385 = vmatpush.bf16.msra.mxu0 %v674
    %1386 = vmatmul.bf16.gmra.mxu0 %v1348
    %v1387 = vpop.f32.mrf.mxu0
    %v1388 = vadd.f32 0.0, %v1387
    %v1389 = vpop.f32.mrf.mxu0
    %v1390 = vadd.f32 0.0, %v1389
    %1391 = vdwg.mxu0
    %1392 = vmatpush.bf16.msra.mxu0 %v719
    %1393 = vmatpush.bf16.msra.mxu0 %v716
    %1394 = vmatpush.bf16.msra.mxu0 %v713
    %1395 = vmatpush.bf16.msra.mxu0 %v710
    %1396 = vmatpush.bf16.msra.mxu0 %v707
    %1397 = vmatpush.bf16.msra.mxu0 %v704
    %1398 = vmatpush.bf16.msra.mxu0 %v701
    %1399 = vmatpush.bf16.msra.mxu0 %v698
    %1400 = vmatmul.bf16.gmra.mxu0 %v1349
    %v1401 = vpop.f32.mrf.mxu0
    %v1402 = vadd.f32 %v1388, %v1401
    %v1403 = vpop.f32.mrf.mxu0
    %v1404 = vadd.f32 %v1390, %v1403
    %1405 = vdwg.mxu0
    %1406 = vmatpush.bf16.msra.mxu0 %v696
    %1407 = vmatpush.bf16.msra.mxu0 %v693
    %1408 = vmatpush.bf16.msra.mxu0 %v690
    %1409 = vmatpush.bf16.msra.mxu0 %v687
    %1410 = vmatpush.bf16.msra.mxu0 %v684
    %1411 = vmatpush.bf16.msra.mxu0 %v681
    %1412 = vmatpush.bf16.msra.mxu0 %v678
    %1413 = vmatpush.bf16.msra.mxu0 %v675
    %1414 = vmatmul.bf16.gmra.mxu0 %v1348
    %v1415 = vpop.f32.mrf.mxu0
    %v1416 = vadd.f32 0.0, %v1415
    %v1417 = vpop.f32.mrf.mxu0
    %v1418 = vadd.f32 0.0, %v1417
    %1419 = vdwg.mxu0
    %1420 = vmatpush.bf16.msra.mxu0 %v720
    %1421 = vmatpush.bf16.msra.mxu0 %v717
    %1422 = vmatpush.bf16.msra.mxu0 %v714
    %1423 = vmatpush.bf16.msra.mxu0 %v711
    %1424 = vmatpush.bf16.msra.mxu0 %v708
    %1425 = vmatpush.bf16.msra.mxu0 %v705
    %1426 = vmatpush.bf16.msra.mxu0 %v702
    %1427 = vmatpush.bf16.msra.mxu0 %v699
    %1428 = vmatmul.bf16.gmra.mxu0 %v1349
    %v1429 = vpop.f32.mrf.mxu0
    %v1430 = vadd.f32 %v1416, %v1429
    %v1431 = vpop.f32.mrf.mxu0
    %v1432 = vadd.f32 %v1418, %v1431
    %1433 = vdwg.mxu0
    %v1434 = vadd.f32 %v1342, %v1374
    %v1435 = vadd.f32 %v1345, %v1376
    %v1436 = vxor.u32 %v1434, 2147483648
    %v1437 = vxor.u32 %v1435, 2147483648
    %v1438 = vmul.f32 %v1436, 1.442695
    %v1439 = vpow.pop %v1438
    %v1440 = vmul.f32 %v1437, 1.442695
    %v1441 = vpow.pop %v1440
    %v1442 = vadd.f32 %v1439, 1.0
    %v1443 = vadd.f32 %v1441, 1.0
    %v1444 = vrcp.pop %v1442
    %v1445 = vmul.f32 %v1442, %v1444
    %v1446 = vsub.f32 1.0, %v1445
    %v1447 = vmul.f32 %v1444, %v1446
    %v1448 = vadd.f32 %v1444, %v1447
    %vm1449 = vweird.f32 %v1442
    %vm1450 = vweird.f32 %v1444
    %vm1451 = vmor %vm1449, %vm1450
    %v1452 = vsel %vm1451, %v1444, %v1448
    %v1453 = vand.u32 2147483647, %v1442
    %vm1454 = vcmp.eq.f32.partialorder %v1453, 8.507059e+37
    %v1455 = vand.u32 %v1442, 2147483648
    %v1456 = vor.u32 1.1754944e-38, %v1455
    %v1457 = vsel %vm1454, %v1456, %v1452
    %v1458 = vmul.f32 1.0, %v1457
    %v1459 = vrcp.pop %v1443
    %v1460 = vmul.f32 %v1443, %v1459
    %v1461 = vsub.f32 1.0, %v1460
    %v1462 = vmul.f32 %v1459, %v1461
    %v1463 = vadd.f32 %v1459, %v1462
    %vm1464 = vweird.f32 %v1443
    %vm1465 = vweird.f32 %v1459
    %vm1466 = vmor %vm1464, %vm1465
    %v1467 = vsel %vm1466, %v1459, %v1463
    %v1468 = vand.u32 2147483647, %v1443
    %vm1469 = vcmp.eq.f32.partialorder %v1468, 8.507059e+37
    %v1470 = vand.u32 %v1443, 2147483648
    %v1471 = vor.u32 1.1754944e-38, %v1470
    %v1472 = vsel %vm1469, %v1471, %v1467
    %v1473 = vmul.f32 1.0, %v1472
    %v1474 = vadd.f32 %v1343, %v1402
    %v1475 = vadd.f32 %v1346, %v1404
    %v1476 = vxor.u32 %v1474, 2147483648
    %v1477 = vxor.u32 %v1475, 2147483648
    %v1478 = vmul.f32 %v1476, 1.442695
    %v1479 = vpow.pop %v1478
    %v1480 = vmul.f32 %v1477, 1.442695
    %v1481 = vpow.pop %v1480
    %v1482 = vadd.f32 %v1479, 1.0
    %v1483 = vadd.f32 %v1481, 1.0
    %v1484 = vrcp.pop %v1482
    %v1485 = vmul.f32 %v1482, %v1484
    %v1486 = vsub.f32 1.0, %v1485
    %v1487 = vmul.f32 %v1484, %v1486
    %v1488 = vadd.f32 %v1484, %v1487
    %vm1489 = vweird.f32 %v1482
    %vm1490 = vweird.f32 %v1484
    %vm1491 = vmor %vm1489, %vm1490
    %v1492 = vsel %vm1491, %v1484, %v1488
    %v1493 = vand.u32 2147483647, %v1482
    %vm1494 = vcmp.eq.f32.partialorder %v1493, 8.507059e+37
    %v1495 = vand.u32 %v1482, 2147483648
    %v1496 = vor.u32 1.1754944e-38, %v1495
    %v1497 = vsel %vm1494, %v1496, %v1492
    %v1498 = vmul.f32 1.0, %v1497
    %v1499 = vrcp.pop %v1483
    %v1500 = vmul.f32 %v1483, %v1499
    %v1501 = vsub.f32 1.0, %v1500
    %v1502 = vmul.f32 %v1499, %v1501
    %v1503 = vadd.f32 %v1499, %v1502
    %vm1504 = vweird.f32 %v1483
    %vm1505 = vweird.f32 %v1499
    %vm1506 = vmor %vm1504, %vm1505
    %v1507 = vsel %vm1506, %v1499, %v1503
    %v1508 = vand.u32 2147483647, %v1483
    %vm1509 = vcmp.eq.f32.partialorder %v1508, 8.507059e+37
    %v1510 = vand.u32 %v1483, 2147483648
    %v1511 = vor.u32 1.1754944e-38, %v1510
    %v1512 = vsel %vm1509, %v1511, %v1507
    %v1513 = vmul.f32 1.0, %v1512
    %v1514 = vadd.f32 %v1430, %v433
    %v1515 = vadd.f32 %v1432, %v437
    %v1516 = vmul.f32 %v1458, %v1514
    %v1517 = vmul.f32 %v1473, %v1515
    %v1518 = vadd.f32 %v1344, %v1516
    %v1519 = vadd.f32 %v1347, %v1517
    %v1520 = vtanh.pop %v1518
    %v1521 = vtanh.pop %v1519
    %v1522 = vsub.f32 1.0, %v1498
    %v1523 = vsub.f32 1.0, %v1513
    %v1524 = vmul.f32 %v1522, %v1520
    %v1525 = vmul.f32 %v1523, %v1521
    %v1526 = vmul.f32 %v1498, %v1334
    %v1527 = vmul.f32 %v1513, %v1335
    %v1528 = vadd.f32 %v1524, %v1526
    %v1529 = vadd.f32 %v1525, %v1527
    %v1530 = vpack.c.bf16 %v1528, %v1528
    %s1531 = scalar_lea.vmem %s8, 12
    %1532 = vst [vmem:[%s1531] sm:$0xf] %v1530
    %v1533 = vpack.c.bf16 %v1529, %v1529
    %s1534 = scalar_lea.vmem %s62, 16
    %1535 = vst [vmem:[%s1534] sm:$0xf] %v1533
    %v1536 = vld [vmem:[#allocation2 + $0x60] sm:$0xff]
    %v1537 = vld [vmem:[#allocation2 + $0x68] sm:$0xff]
    %v1538 = vld [vmem:[#allocation2 + $0x70] sm:$0xff]
    %v1539 = vld [vmem:[#allocation3 + $0x48] sm:$0xff]
    %v1540 = vld [vmem:[#allocation3 + $0x50] sm:$0xff]
    %v1541 = vld [vmem:[#allocation3 + $0x58] sm:$0xff]
    %v1542 = vpack.c.bf16 0.0, %v1528
    %v1543 = vpack.c.bf16 %v1529, 0.0
    %1544 = vmatpush.bf16.msra.mxu0 %v694
    %1545 = vmatpush.bf16.msra.mxu0 %v691
    %1546 = vmatpush.bf16.msra.mxu0 %v688
    %1547 = vmatpush.bf16.msra.mxu0 %v685
    %1548 = vmatpush.bf16.msra.mxu0 %v682
    %1549 = vmatpush.bf16.msra.mxu0 %v679
    %1550 = vmatpush.bf16.msra.mxu0 %v676
    %1551 = vmatpush.bf16.msra.mxu0 %v673
    %1552 = vmatmul.bf16.gmra.mxu0 %v1542
    %v1553 = vpop.f32.mrf.mxu0
    %v1554 = vadd.f32 0.0, %v1553
    %v1555 = vpop.f32.mrf.mxu0
    %v1556 = vadd.f32 0.0, %v1555
    %1557 = vdwg.mxu0
    %1558 = vmatpush.bf16.msra.mxu0 %v718
    %1559 = vmatpush.bf16.msra.mxu0 %v715
    %1560 = vmatpush.bf16.msra.mxu0 %v712
    %1561 = vmatpush.bf16.msra.mxu0 %v709
    %1562 = vmatpush.bf16.msra.mxu0 %v706
    %1563 = vmatpush.bf16.msra.mxu0 %v703
    %1564 = vmatpush.bf16.msra.mxu0 %v700
    %1565 = vmatpush.bf16.msra.mxu0 %v697
    %1566 = vmatmul.bf16.gmra.mxu0 %v1543
    %v1567 = vpop.f32.mrf.mxu0
    %v1568 = vadd.f32 %v1554, %v1567
    %v1569 = vpop.f32.mrf.mxu0
    %v1570 = vadd.f32 %v1556, %v1569
    %1571 = vdwg.mxu0
    %1572 = vmatpush.bf16.msra.mxu0 %v695
    %1573 = vmatpush.bf16.msra.mxu0 %v692
    %1574 = vmatpush.bf16.msra.mxu0 %v689
    %1575 = vmatpush.bf16.msra.mxu0 %v686
    %1576 = vmatpush.bf16.msra.mxu0 %v683
    %1577 = vmatpush.bf16.msra.mxu0 %v680
    %1578 = vmatpush.bf16.msra.mxu0 %v677
    %1579 = vmatpush.bf16.msra.mxu0 %v674
    %1580 = vmatmul.bf16.gmra.mxu0 %v1542
    %v1581 = vpop.f32.mrf.mxu0
    %v1582 = vadd.f32 0.0, %v1581
    %v1583 = vpop.f32.mrf.mxu0
    %v1584 = vadd.f32 0.0, %v1583
    %1585 = vdwg.mxu0
    %1586 = vmatpush.bf16.msra.mxu0 %v719
    %1587 = vmatpush.bf16.msra.mxu0 %v716
    %1588 = vmatpush.bf16.msra.mxu0 %v713
    %1589 = vmatpush.bf16.msra.mxu0 %v710
    %1590 = vmatpush.bf16.msra.mxu0 %v707
    %1591 = vmatpush.bf16.msra.mxu0 %v704
    %1592 = vmatpush.bf16.msra.mxu0 %v701
    %1593 = vmatpush.bf16.msra.mxu0 %v698
    %1594 = vmatmul.bf16.gmra.mxu0 %v1543
    %v1595 = vpop.f32.mrf.mxu0
    %v1596 = vadd.f32 %v1582, %v1595
    %v1597 = vpop.f32.mrf.mxu0
    %v1598 = vadd.f32 %v1584, %v1597
    %1599 = vdwg.mxu0
    %1600 = vmatpush.bf16.msra.mxu0 %v696
    %1601 = vmatpush.bf16.msra.mxu0 %v693
    %1602 = vmatpush.bf16.msra.mxu0 %v690
    %1603 = vmatpush.bf16.msra.mxu0 %v687
    %1604 = vmatpush.bf16.msra.mxu0 %v684
    %1605 = vmatpush.bf16.msra.mxu0 %v681
    %1606 = vmatpush.bf16.msra.mxu0 %v678
    %1607 = vmatpush.bf16.msra.mxu0 %v675
    %1608 = vmatmul.bf16.gmra.mxu0 %v1542
    %v1609 = vpop.f32.mrf.mxu0
    %v1610 = vadd.f32 0.0, %v1609
    %v1611 = vpop.f32.mrf.mxu0
    %v1612 = vadd.f32 0.0, %v1611
    %1613 = vdwg.mxu0
    %1614 = vmatpush.bf16.msra.mxu0 %v720
    %1615 = vmatpush.bf16.msra.mxu0 %v717
    %1616 = vmatpush.bf16.msra.mxu0 %v714
    %1617 = vmatpush.bf16.msra.mxu0 %v711
    %1618 = vmatpush.bf16.msra.mxu0 %v708
    %1619 = vmatpush.bf16.msra.mxu0 %v705
    %1620 = vmatpush.bf16.msra.mxu0 %v702
    %1621 = vmatpush.bf16.msra.mxu0 %v699
    %1622 = vmatmul.bf16.gmra.mxu0 %v1543
    %v1623 = vpop.f32.mrf.mxu0
    %v1624 = vadd.f32 %v1610, %v1623
    %v1625 = vpop.f32.mrf.mxu0
    %v1626 = vadd.f32 %v1612, %v1625
    %1627 = vdwg.mxu0
    %v1628 = vadd.f32 %v1536, %v1568
    %v1629 = vadd.f32 %v1539, %v1570
    %v1630 = vxor.u32 %v1628, 2147483648
    %v1631 = vxor.u32 %v1629, 2147483648
    %v1632 = vmul.f32 %v1630, 1.442695
    %v1633 = vpow.pop %v1632
    %v1634 = vmul.f32 %v1631, 1.442695
    %v1635 = vpow.pop %v1634
    %v1636 = vadd.f32 %v1633, 1.0
    %v1637 = vadd.f32 %v1635, 1.0
    %v1638 = vrcp.pop %v1636
    %v1639 = vmul.f32 %v1636, %v1638
    %v1640 = vsub.f32 1.0, %v1639
    %v1641 = vmul.f32 %v1638, %v1640
    %v1642 = vadd.f32 %v1638, %v1641
    %vm1643 = vweird.f32 %v1636
    %vm1644 = vweird.f32 %v1638
    %vm1645 = vmor %vm1643, %vm1644
    %v1646 = vsel %vm1645, %v1638, %v1642
    %v1647 = vand.u32 2147483647, %v1636
    %vm1648 = vcmp.eq.f32.partialorder %v1647, 8.507059e+37
    %v1649 = vand.u32 %v1636, 2147483648
    %v1650 = vor.u32 1.1754944e-38, %v1649
    %v1651 = vsel %vm1648, %v1650, %v1646
    %v1652 = vmul.f32 1.0, %v1651
    %v1653 = vrcp.pop %v1637
    %v1654 = vmul.f32 %v1637, %v1653
    %v1655 = vsub.f32 1.0, %v1654
    %v1656 = vmul.f32 %v1653, %v1655
    %v1657 = vadd.f32 %v1653, %v1656
    %vm1658 = vweird.f32 %v1637
    %vm1659 = vweird.f32 %v1653
    %vm1660 = vmor %vm1658, %vm1659
    %v1661 = vsel %vm1660, %v1653, %v1657
    %v1662 = vand.u32 2147483647, %v1637
    %vm1663 = vcmp.eq.f32.partialorder %v1662, 8.507059e+37
    %v1664 = vand.u32 %v1637, 2147483648
    %v1665 = vor.u32 1.1754944e-38, %v1664
    %v1666 = vsel %vm1663, %v1665, %v1661
    %v1667 = vmul.f32 1.0, %v1666
    %v1668 = vadd.f32 %v1537, %v1596
    %v1669 = vadd.f32 %v1540, %v1598
    %v1670 = vxor.u32 %v1668, 2147483648
    %v1671 = vxor.u32 %v1669, 2147483648
    %v1672 = vmul.f32 %v1670, 1.442695
    %v1673 = vpow.pop %v1672
    %v1674 = vmul.f32 %v1671, 1.442695
    %v1675 = vpow.pop %v1674
    %v1676 = vadd.f32 %v1673, 1.0
    %v1677 = vadd.f32 %v1675, 1.0
    %v1678 = vrcp.pop %v1676
    %v1679 = vmul.f32 %v1676, %v1678
    %v1680 = vsub.f32 1.0, %v1679
    %v1681 = vmul.f32 %v1678, %v1680
    %v1682 = vadd.f32 %v1678, %v1681
    %vm1683 = vweird.f32 %v1676
    %vm1684 = vweird.f32 %v1678
    %vm1685 = vmor %vm1683, %vm1684
    %v1686 = vsel %vm1685, %v1678, %v1682
    %v1687 = vand.u32 2147483647, %v1676
    %vm1688 = vcmp.eq.f32.partialorder %v1687, 8.507059e+37
    %v1689 = vand.u32 %v1676, 2147483648
    %v1690 = vor.u32 1.1754944e-38, %v1689
    %v1691 = vsel %vm1688, %v1690, %v1686
    %v1692 = vmul.f32 1.0, %v1691
    %v1693 = vrcp.pop %v1677
    %v1694 = vmul.f32 %v1677, %v1693
    %v1695 = vsub.f32 1.0, %v1694
    %v1696 = vmul.f32 %v1693, %v1695
    %v1697 = vadd.f32 %v1693, %v1696
    %vm1698 = vweird.f32 %v1677
    %vm1699 = vweird.f32 %v1693
    %vm1700 = vmor %vm1698, %vm1699
    %v1701 = vsel %vm1700, %v1693, %v1697
    %v1702 = vand.u32 2147483647, %v1677
    %vm1703 = vcmp.eq.f32.partialorder %v1702, 8.507059e+37
    %v1704 = vand.u32 %v1677, 2147483648
    %v1705 = vor.u32 1.1754944e-38, %v1704
    %v1706 = vsel %vm1703, %v1705, %v1701
    %v1707 = vmul.f32 1.0, %v1706
    %v1708 = vadd.f32 %v1624, %v433
    %v1709 = vadd.f32 %v1626, %v437
    %v1710 = vmul.f32 %v1652, %v1708
    %v1711 = vmul.f32 %v1667, %v1709
    %v1712 = vadd.f32 %v1538, %v1710
    %v1713 = vadd.f32 %v1541, %v1711
    %v1714 = vtanh.pop %v1712
    %v1715 = vtanh.pop %v1713
    %v1716 = vsub.f32 1.0, %v1692
    %v1717 = vsub.f32 1.0, %v1707
    %v1718 = vmul.f32 %v1716, %v1714
    %v1719 = vmul.f32 %v1717, %v1715
    %v1720 = vmul.f32 %v1692, %v1528
    %v1721 = vmul.f32 %v1707, %v1529
    %v1722 = vadd.f32 %v1718, %v1720
    %v1723 = vadd.f32 %v1719, %v1721
    %v1724 = vpack.c.bf16 %v1722, %v1722
    %s1725 = scalar_lea.vmem %s8, 16
    %1726 = vst [vmem:[%s1725] sm:$0xf] %v1724
    %v1727 = vpack.c.bf16 %v1723, %v1723
    %s1728 = scalar_lea.vmem %s62, 12
    %1729 = vst [vmem:[%s1728] sm:$0xf] %v1727
    %v1730 = vld [vmem:[#allocation2 + $0x78] sm:$0xff]
    %v1731 = vld [vmem:[#allocation2 + $0x80] sm:$0xff]
    %v1732 = vld [vmem:[#allocation2 + $0x88] sm:$0xff]
    %v1733 = vld [vmem:[#allocation3 + $0x30] sm:$0xff]
    %v1734 = vld [vmem:[#allocation3 + $0x38] sm:$0xff]
    %v1735 = vld [vmem:[#allocation3 + $0x40] sm:$0xff]
    %v1736 = vpack.c.bf16 0.0, %v1722
    %v1737 = vpack.c.bf16 %v1723, 0.0
    %1738 = vmatpush.bf16.msra.mxu0 %v694
    %1739 = vmatpush.bf16.msra.mxu0 %v691
    %1740 = vmatpush.bf16.msra.mxu0 %v688
    %1741 = vmatpush.bf16.msra.mxu0 %v685
    %1742 = vmatpush.bf16.msra.mxu0 %v682
    %1743 = vmatpush.bf16.msra.mxu0 %v679
    %1744 = vmatpush.bf16.msra.mxu0 %v676
    %1745 = vmatpush.bf16.msra.mxu0 %v673
    %1746 = vmatmul.bf16.gmra.mxu0 %v1736
    %v1747 = vpop.f32.mrf.mxu0
    %v1748 = vadd.f32 0.0, %v1747
    %v1749 = vpop.f32.mrf.mxu0
    %v1750 = vadd.f32 0.0, %v1749
    %1751 = vdwg.mxu0
    %1752 = vmatpush.bf16.msra.mxu0 %v718
    %1753 = vmatpush.bf16.msra.mxu0 %v715
    %1754 = vmatpush.bf16.msra.mxu0 %v712
    %1755 = vmatpush.bf16.msra.mxu0 %v709
    %1756 = vmatpush.bf16.msra.mxu0 %v706
    %1757 = vmatpush.bf16.msra.mxu0 %v703
    %1758 = vmatpush.bf16.msra.mxu0 %v700
    %1759 = vmatpush.bf16.msra.mxu0 %v697
    %1760 = vmatmul.bf16.gmra.mxu0 %v1737
    %v1761 = vpop.f32.mrf.mxu0
    %v1762 = vadd.f32 %v1748, %v1761
    %v1763 = vpop.f32.mrf.mxu0
    %v1764 = vadd.f32 %v1750, %v1763
    %1765 = vdwg.mxu0
    %1766 = vmatpush.bf16.msra.mxu0 %v695
    %1767 = vmatpush.bf16.msra.mxu0 %v692
    %1768 = vmatpush.bf16.msra.mxu0 %v689
    %1769 = vmatpush.bf16.msra.mxu0 %v686
    %1770 = vmatpush.bf16.msra.mxu0 %v683
    %1771 = vmatpush.bf16.msra.mxu0 %v680
    %1772 = vmatpush.bf16.msra.mxu0 %v677
    %1773 = vmatpush.bf16.msra.mxu0 %v674
    %1774 = vmatmul.bf16.gmra.mxu0 %v1736
    %v1775 = vpop.f32.mrf.mxu0
    %v1776 = vadd.f32 0.0, %v1775
    %v1777 = vpop.f32.mrf.mxu0
    %v1778 = vadd.f32 0.0, %v1777
    %1779 = vdwg.mxu0
    %1780 = vmatpush.bf16.msra.mxu0 %v719
    %1781 = vmatpush.bf16.msra.mxu0 %v716
    %1782 = vmatpush.bf16.msra.mxu0 %v713
    %1783 = vmatpush.bf16.msra.mxu0 %v710
    %1784 = vmatpush.bf16.msra.mxu0 %v707
    %1785 = vmatpush.bf16.msra.mxu0 %v704
    %1786 = vmatpush.bf16.msra.mxu0 %v701
    %1787 = vmatpush.bf16.msra.mxu0 %v698
    %1788 = vmatmul.bf16.gmra.mxu0 %v1737
    %v1789 = vpop.f32.mrf.mxu0
    %v1790 = vadd.f32 %v1776, %v1789
    %v1791 = vpop.f32.mrf.mxu0
    %v1792 = vadd.f32 %v1778, %v1791
    %1793 = vdwg.mxu0
    %1794 = vmatpush.bf16.msra.mxu0 %v696
    %1795 = vmatpush.bf16.msra.mxu0 %v693
    %1796 = vmatpush.bf16.msra.mxu0 %v690
    %1797 = vmatpush.bf16.msra.mxu0 %v687
    %1798 = vmatpush.bf16.msra.mxu0 %v684
    %1799 = vmatpush.bf16.msra.mxu0 %v681
    %1800 = vmatpush.bf16.msra.mxu0 %v678
    %1801 = vmatpush.bf16.msra.mxu0 %v675
    %1802 = vmatmul.bf16.gmra.mxu0 %v1736
    %v1803 = vpop.f32.mrf.mxu0
    %v1804 = vadd.f32 0.0, %v1803
    %v1805 = vpop.f32.mrf.mxu0
    %v1806 = vadd.f32 0.0, %v1805
    %1807 = vdwg.mxu0
    %1808 = vmatpush.bf16.msra.mxu0 %v720
    %1809 = vmatpush.bf16.msra.mxu0 %v717
    %1810 = vmatpush.bf16.msra.mxu0 %v714
    %1811 = vmatpush.bf16.msra.mxu0 %v711
    %1812 = vmatpush.bf16.msra.mxu0 %v708
    %1813 = vmatpush.bf16.msra.mxu0 %v705
    %1814 = vmatpush.bf16.msra.mxu0 %v702
    %1815 = vmatpush.bf16.msra.mxu0 %v699
    %1816 = vmatmul.bf16.gmra.mxu0 %v1737
    %v1817 = vpop.f32.mrf.mxu0
    %v1818 = vadd.f32 %v1804, %v1817
    %v1819 = vpop.f32.mrf.mxu0
    %v1820 = vadd.f32 %v1806, %v1819
    %1821 = vdwg.mxu0
    %v1822 = vadd.f32 %v1730, %v1762
    %v1823 = vadd.f32 %v1733, %v1764
    %v1824 = vxor.u32 %v1822, 2147483648
    %v1825 = vxor.u32 %v1823, 2147483648
    %v1826 = vmul.f32 %v1824, 1.442695
    %v1827 = vpow.pop %v1826
    %v1828 = vmul.f32 %v1825, 1.442695
    %v1829 = vpow.pop %v1828
    %v1830 = vadd.f32 %v1827, 1.0
    %v1831 = vadd.f32 %v1829, 1.0
    %v1832 = vrcp.pop %v1830
    %v1833 = vmul.f32 %v1830, %v1832
    %v1834 = vsub.f32 1.0, %v1833
    %v1835 = vmul.f32 %v1832, %v1834
    %v1836 = vadd.f32 %v1832, %v1835
    %vm1837 = vweird.f32 %v1830
    %vm1838 = vweird.f32 %v1832
    %vm1839 = vmor %vm1837, %vm1838
    %v1840 = vsel %vm1839, %v1832, %v1836
    %v1841 = vand.u32 2147483647, %v1830
    %vm1842 = vcmp.eq.f32.partialorder %v1841, 8.507059e+37
    %v1843 = vand.u32 %v1830, 2147483648
    %v1844 = vor.u32 1.1754944e-38, %v1843
    %v1845 = vsel %vm1842, %v1844, %v1840
    %v1846 = vmul.f32 1.0, %v1845
    %v1847 = vrcp.pop %v1831
    %v1848 = vmul.f32 %v1831, %v1847
    %v1849 = vsub.f32 1.0, %v1848
    %v1850 = vmul.f32 %v1847, %v1849
    %v1851 = vadd.f32 %v1847, %v1850
    %vm1852 = vweird.f32 %v1831
    %vm1853 = vweird.f32 %v1847
    %vm1854 = vmor %vm1852, %vm1853
    %v1855 = vsel %vm1854, %v1847, %v1851
    %v1856 = vand.u32 2147483647, %v1831
    %vm1857 = vcmp.eq.f32.partialorder %v1856, 8.507059e+37
    %v1858 = vand.u32 %v1831, 2147483648
    %v1859 = vor.u32 1.1754944e-38, %v1858
    %v1860 = vsel %vm1857, %v1859, %v1855
    %v1861 = vmul.f32 1.0, %v1860
    %v1862 = vadd.f32 %v1731, %v1790
    %v1863 = vadd.f32 %v1734, %v1792
    %v1864 = vxor.u32 %v1862, 2147483648
    %v1865 = vxor.u32 %v1863, 2147483648
    %v1866 = vmul.f32 %v1864, 1.442695
    %v1867 = vpow.pop %v1866
    %v1868 = vmul.f32 %v1865, 1.442695
    %v1869 = vpow.pop %v1868
    %v1870 = vadd.f32 %v1867, 1.0
    %v1871 = vadd.f32 %v1869, 1.0
    %v1872 = vrcp.pop %v1870
    %v1873 = vmul.f32 %v1870, %v1872
    %v1874 = vsub.f32 1.0, %v1873
    %v1875 = vmul.f32 %v1872, %v1874
    %v1876 = vadd.f32 %v1872, %v1875
    %vm1877 = vweird.f32 %v1870
    %vm1878 = vweird.f32 %v1872
    %vm1879 = vmor %vm1877, %vm1878
    %v1880 = vsel %vm1879, %v1872, %v1876
    %v1881 = vand.u32 2147483647, %v1870
    %vm1882 = vcmp.eq.f32.partialorder %v1881, 8.507059e+37
    %v1883 = vand.u32 %v1870, 2147483648
    %v1884 = vor.u32 1.1754944e-38, %v1883
    %v1885 = vsel %vm1882, %v1884, %v1880
    %v1886 = vmul.f32 1.0, %v1885
    %v1887 = vrcp.pop %v1871
    %v1888 = vmul.f32 %v1871, %v1887
    %v1889 = vsub.f32 1.0, %v1888
    %v1890 = vmul.f32 %v1887, %v1889
    %v1891 = vadd.f32 %v1887, %v1890
    %vm1892 = vweird.f32 %v1871
    %vm1893 = vweird.f32 %v1887
    %vm1894 = vmor %vm1892, %vm1893
    %v1895 = vsel %vm1894, %v1887, %v1891
    %v1896 = vand.u32 2147483647, %v1871
    %vm1897 = vcmp.eq.f32.partialorder %v1896, 8.507059e+37
    %v1898 = vand.u32 %v1871, 2147483648
    %v1899 = vor.u32 1.1754944e-38, %v1898
    %v1900 = vsel %vm1897, %v1899, %v1895
    %v1901 = vmul.f32 1.0, %v1900
    %v1902 = vadd.f32 %v1818, %v433
    %v1903 = vadd.f32 %v1820, %v437
    %v1904 = vmul.f32 %v1846, %v1902
    %v1905 = vmul.f32 %v1861, %v1903
    %v1906 = vadd.f32 %v1732, %v1904
    %v1907 = vadd.f32 %v1735, %v1905
    %v1908 = vtanh.pop %v1906
    %v1909 = vtanh.pop %v1907
    %v1910 = vsub.f32 1.0, %v1886
    %v1911 = vsub.f32 1.0, %v1901
    %v1912 = vmul.f32 %v1910, %v1908
    %v1913 = vmul.f32 %v1911, %v1909
    %v1914 = vmul.f32 %v1886, %v1722
    %v1915 = vmul.f32 %v1901, %v1723
    %v1916 = vadd.f32 %v1912, %v1914
    %v1917 = vadd.f32 %v1913, %v1915
    %v1918 = vpack.c.bf16 %v1916, %v1916
    %s1919 = scalar_lea.vmem %s8, 20
    %1920 = vst [vmem:[%s1919] sm:$0xf] %v1918
    %v1921 = vpack.c.bf16 %v1917, %v1917
    %s1922 = scalar_lea.vmem %s62, 8
    %1923 = vst [vmem:[%s1922] sm:$0xf] %v1921
    %v1924 = vld [vmem:[#allocation2 + $0x90] sm:$0xff]
    %v1925 = vld [vmem:[#allocation2 + $0x98] sm:$0xff]
    %v1926 = vld [vmem:[#allocation2 + $0xa0] sm:$0xff]
    %v1927 = vld [vmem:[#allocation3 + $0x18] sm:$0xff]
    %v1928 = vld [vmem:[#allocation3 + $0x20] sm:$0xff]
    %v1929 = vld [vmem:[#allocation3 + $0x28] sm:$0xff]
    %v1930 = vpack.c.bf16 0.0, %v1916
    %v1931 = vpack.c.bf16 %v1917, 0.0
    %1932 = vmatpush.bf16.msra.mxu0 %v694
    %1933 = vmatpush.bf16.msra.mxu0 %v691
    %1934 = vmatpush.bf16.msra.mxu0 %v688
    %1935 = vmatpush.bf16.msra.mxu0 %v685
    %1936 = vmatpush.bf16.msra.mxu0 %v682
    %1937 = vmatpush.bf16.msra.mxu0 %v679
    %1938 = vmatpush.bf16.msra.mxu0 %v676
    %1939 = vmatpush.bf16.msra.mxu0 %v673
    %1940 = vmatmul.bf16.gmra.mxu0 %v1930
    %v1941 = vpop.f32.mrf.mxu0
    %v1942 = vadd.f32 0.0, %v1941
    %v1943 = vpop.f32.mrf.mxu0
    %v1944 = vadd.f32 0.0, %v1943
    %1945 = vdwg.mxu0
    %1946 = vmatpush.bf16.msra.mxu0 %v718
    %1947 = vmatpush.bf16.msra.mxu0 %v715
    %1948 = vmatpush.bf16.msra.mxu0 %v712
    %1949 = vmatpush.bf16.msra.mxu0 %v709
    %1950 = vmatpush.bf16.msra.mxu0 %v706
    %1951 = vmatpush.bf16.msra.mxu0 %v703
    %1952 = vmatpush.bf16.msra.mxu0 %v700
    %1953 = vmatpush.bf16.msra.mxu0 %v697
    %1954 = vmatmul.bf16.gmra.mxu0 %v1931
    %v1955 = vpop.f32.mrf.mxu0
    %v1956 = vadd.f32 %v1942, %v1955
    %v1957 = vpop.f32.mrf.mxu0
    %v1958 = vadd.f32 %v1944, %v1957
    %1959 = vdwg.mxu0
    %1960 = vmatpush.bf16.msra.mxu0 %v695
    %1961 = vmatpush.bf16.msra.mxu0 %v692
    %1962 = vmatpush.bf16.msra.mxu0 %v689
    %1963 = vmatpush.bf16.msra.mxu0 %v686
    %1964 = vmatpush.bf16.msra.mxu0 %v683
    %1965 = vmatpush.bf16.msra.mxu0 %v680
    %1966 = vmatpush.bf16.msra.mxu0 %v677
    %1967 = vmatpush.bf16.msra.mxu0 %v674
    %1968 = vmatmul.bf16.gmra.mxu0 %v1930
    %v1969 = vpop.f32.mrf.mxu0
    %v1970 = vadd.f32 0.0, %v1969
    %v1971 = vpop.f32.mrf.mxu0
    %v1972 = vadd.f32 0.0, %v1971
    %1973 = vdwg.mxu0
    %1974 = vmatpush.bf16.msra.mxu0 %v719
    %1975 = vmatpush.bf16.msra.mxu0 %v716
    %1976 = vmatpush.bf16.msra.mxu0 %v713
    %1977 = vmatpush.bf16.msra.mxu0 %v710
    %1978 = vmatpush.bf16.msra.mxu0 %v707
    %1979 = vmatpush.bf16.msra.mxu0 %v704
    %1980 = vmatpush.bf16.msra.mxu0 %v701
    %1981 = vmatpush.bf16.msra.mxu0 %v698
    %1982 = vmatmul.bf16.gmra.mxu0 %v1931
    %v1983 = vpop.f32.mrf.mxu0
    %v1984 = vadd.f32 %v1970, %v1983
    %v1985 = vpop.f32.mrf.mxu0
    %v1986 = vadd.f32 %v1972, %v1985
    %1987 = vdwg.mxu0
    %1988 = vmatpush.bf16.msra.mxu0 %v696
    %1989 = vmatpush.bf16.msra.mxu0 %v693
    %1990 = vmatpush.bf16.msra.mxu0 %v690
    %1991 = vmatpush.bf16.msra.mxu0 %v687
    %1992 = vmatpush.bf16.msra.mxu0 %v684
    %1993 = vmatpush.bf16.msra.mxu0 %v681
    %1994 = vmatpush.bf16.msra.mxu0 %v678
    %1995 = vmatpush.bf16.msra.mxu0 %v675
    %1996 = vmatmul.bf16.gmra.mxu0 %v1930
    %v1997 = vpop.f32.mrf.mxu0
    %v1998 = vadd.f32 0.0, %v1997
    %v1999 = vpop.f32.mrf.mxu0
    %v2000 = vadd.f32 0.0, %v1999
    %2001 = vdwg.mxu0
    %2002 = vmatpush.bf16.msra.mxu0 %v720
    %2003 = vmatpush.bf16.msra.mxu0 %v717
    %2004 = vmatpush.bf16.msra.mxu0 %v714
    %2005 = vmatpush.bf16.msra.mxu0 %v711
    %2006 = vmatpush.bf16.msra.mxu0 %v708
    %2007 = vmatpush.bf16.msra.mxu0 %v705
    %2008 = vmatpush.bf16.msra.mxu0 %v702
    %2009 = vmatpush.bf16.msra.mxu0 %v699
    %2010 = vmatmul.bf16.gmra.mxu0 %v1931
    %v2011 = vpop.f32.mrf.mxu0
    %v2012 = vadd.f32 %v1998, %v2011
    %v2013 = vpop.f32.mrf.mxu0
    %v2014 = vadd.f32 %v2000, %v2013
    %2015 = vdwg.mxu0
    %v2016 = vadd.f32 %v1924, %v1956
    %v2017 = vadd.f32 %v1927, %v1958
    %v2018 = vxor.u32 %v2016, 2147483648
    %v2019 = vxor.u32 %v2017, 2147483648
    %v2020 = vmul.f32 %v2018, 1.442695
    %v2021 = vpow.pop %v2020
    %v2022 = vmul.f32 %v2019, 1.442695
    %v2023 = vpow.pop %v2022
    %v2024 = vadd.f32 %v2021, 1.0
    %v2025 = vadd.f32 %v2023, 1.0
    %v2026 = vrcp.pop %v2024
    %v2027 = vmul.f32 %v2024, %v2026
    %v2028 = vsub.f32 1.0, %v2027
    %v2029 = vmul.f32 %v2026, %v2028
    %v2030 = vadd.f32 %v2026, %v2029
    %vm2031 = vweird.f32 %v2024
    %vm2032 = vweird.f32 %v2026
    %vm2033 = vmor %vm2031, %vm2032
    %v2034 = vsel %vm2033, %v2026, %v2030
    %v2035 = vand.u32 2147483647, %v2024
    %vm2036 = vcmp.eq.f32.partialorder %v2035, 8.507059e+37
    %v2037 = vand.u32 %v2024, 2147483648
    %v2038 = vor.u32 1.1754944e-38, %v2037
    %v2039 = vsel %vm2036, %v2038, %v2034
    %v2040 = vmul.f32 1.0, %v2039
    %v2041 = vrcp.pop %v2025
    %v2042 = vmul.f32 %v2025, %v2041
    %v2043 = vsub.f32 1.0, %v2042
    %v2044 = vmul.f32 %v2041, %v2043
    %v2045 = vadd.f32 %v2041, %v2044
    %vm2046 = vweird.f32 %v2025
    %vm2047 = vweird.f32 %v2041
    %vm2048 = vmor %vm2046, %vm2047
    %v2049 = vsel %vm2048, %v2041, %v2045
    %v2050 = vand.u32 2147483647, %v2025
    %vm2051 = vcmp.eq.f32.partialorder %v2050, 8.507059e+37
    %v2052 = vand.u32 %v2025, 2147483648
    %v2053 = vor.u32 1.1754944e-38, %v2052
    %v2054 = vsel %vm2051, %v2053, %v2049
    %v2055 = vmul.f32 1.0, %v2054
    %v2056 = vadd.f32 %v1925, %v1984
    %v2057 = vadd.f32 %v1928, %v1986
    %v2058 = vxor.u32 %v2056, 2147483648
    %v2059 = vxor.u32 %v2057, 2147483648
    %v2060 = vmul.f32 %v2058, 1.442695
    %v2061 = vpow.pop %v2060
    %v2062 = vmul.f32 %v2059, 1.442695
    %v2063 = vpow.pop %v2062
    %v2064 = vadd.f32 %v2061, 1.0
    %v2065 = vadd.f32 %v2063, 1.0
    %v2066 = vrcp.pop %v2064
    %v2067 = vmul.f32 %v2064, %v2066
    %v2068 = vsub.f32 1.0, %v2067
    %v2069 = vmul.f32 %v2066, %v2068
    %v2070 = vadd.f32 %v2066, %v2069
    %vm2071 = vweird.f32 %v2064
    %vm2072 = vweird.f32 %v2066
    %vm2073 = vmor %vm2071, %vm2072
    %v2074 = vsel %vm2073, %v2066, %v2070
    %v2075 = vand.u32 2147483647, %v2064
    %vm2076 = vcmp.eq.f32.partialorder %v2075, 8.507059e+37
    %v2077 = vand.u32 %v2064, 2147483648
    %v2078 = vor.u32 1.1754944e-38, %v2077
    %v2079 = vsel %vm2076, %v2078, %v2074
    %v2080 = vmul.f32 1.0, %v2079
    %v2081 = vrcp.pop %v2065
    %v2082 = vmul.f32 %v2065, %v2081
    %v2083 = vsub.f32 1.0, %v2082
    %v2084 = vmul.f32 %v2081, %v2083
    %v2085 = vadd.f32 %v2081, %v2084
    %vm2086 = vweird.f32 %v2065
    %vm2087 = vweird.f32 %v2081
    %vm2088 = vmor %vm2086, %vm2087
    %v2089 = vsel %vm2088, %v2081, %v2085
    %v2090 = vand.u32 2147483647, %v2065
    %vm2091 = vcmp.eq.f32.partialorder %v2090, 8.507059e+37
    %v2092 = vand.u32 %v2065, 2147483648
    %v2093 = vor.u32 1.1754944e-38, %v2092
    %v2094 = vsel %vm2091, %v2093, %v2089
    %v2095 = vmul.f32 1.0, %v2094
    %v2096 = vadd.f32 %v2012, %v433
    %v2097 = vadd.f32 %v2014, %v437
    %v2098 = vmul.f32 %v2040, %v2096
    %v2099 = vmul.f32 %v2055, %v2097
    %v2100 = vadd.f32 %v1926, %v2098
    %v2101 = vadd.f32 %v1929, %v2099
    %v2102 = vtanh.pop %v2100
    %v2103 = vtanh.pop %v2101
    %v2104 = vsub.f32 1.0, %v2080
    %v2105 = vsub.f32 1.0, %v2095
    %v2106 = vmul.f32 %v2104, %v2102
    %v2107 = vmul.f32 %v2105, %v2103
    %v2108 = vmul.f32 %v2080, %v1916
    %v2109 = vmul.f32 %v2095, %v1917
    %v2110 = vadd.f32 %v2106, %v2108
    %v2111 = vadd.f32 %v2107, %v2109
    %v2112 = vpack.c.bf16 %v2110, %v2110
    %s2113 = scalar_lea.vmem %s8, 24
    %2114 = vst [vmem:[%s2113] sm:$0xf] %v2112
    %v2115 = vpack.c.bf16 %v2111, %v2111
    %s2116 = scalar_lea.vmem %s62, 4
    %2117 = vst [vmem:[%s2116] sm:$0xf] %v2115
    %v2118 = vld [vmem:[#allocation2 + $0xa8] sm:$0xff]
    %v2119 = vld [vmem:[#allocation2 + $0xb0] sm:$0xff]
    %v2120 = vld [vmem:[#allocation2 + $0xb8] sm:$0xff]
    %v2121 = vld [vmem:[#allocation3] sm:$0xff]
    %v2122 = vld [vmem:[#allocation3 + $0x8] sm:$0xff]
    %v2123 = vld [vmem:[#allocation3 + $0x10] sm:$0xff]
    %v2124 = vpack.c.bf16 0.0, %v2110
    %v2125 = vpack.c.bf16 %v2111, 0.0
    %2126 = vmatpush.bf16.msra.mxu0 %v694
    %2127 = vmatpush.bf16.msra.mxu0 %v691
    %2128 = vmatpush.bf16.msra.mxu0 %v688
    %2129 = vmatpush.bf16.msra.mxu0 %v685
    %2130 = vmatpush.bf16.msra.mxu0 %v682
    %2131 = vmatpush.bf16.msra.mxu0 %v679
    %2132 = vmatpush.bf16.msra.mxu0 %v676
    %2133 = vmatpush.bf16.msra.mxu0 %v673
    %2134 = vmatmul.bf16.gmra.mxu0 %v2124
    %v2135 = vpop.f32.mrf.mxu0
    %v2136 = vadd.f32 0.0, %v2135
    %v2137 = vpop.f32.mrf.mxu0
    %v2138 = vadd.f32 0.0, %v2137
    %2139 = vdwg.mxu0
    %2140 = vmatpush.bf16.msra.mxu0 %v718
    %2141 = vmatpush.bf16.msra.mxu0 %v715
    %2142 = vmatpush.bf16.msra.mxu0 %v712
    %2143 = vmatpush.bf16.msra.mxu0 %v709
    %2144 = vmatpush.bf16.msra.mxu0 %v706
    %2145 = vmatpush.bf16.msra.mxu0 %v703
    %2146 = vmatpush.bf16.msra.mxu0 %v700
    %2147 = vmatpush.bf16.msra.mxu0 %v697
    %2148 = vmatmul.bf16.gmra.mxu0 %v2125
    %v2149 = vpop.f32.mrf.mxu0
    %v2150 = vadd.f32 %v2136, %v2149
    %v2151 = vpop.f32.mrf.mxu0
    %v2152 = vadd.f32 %v2138, %v2151
    %2153 = vdwg.mxu0
    %2154 = vmatpush.bf16.msra.mxu0 %v695
    %2155 = vmatpush.bf16.msra.mxu0 %v692
    %2156 = vmatpush.bf16.msra.mxu0 %v689
    %2157 = vmatpush.bf16.msra.mxu0 %v686
    %2158 = vmatpush.bf16.msra.mxu0 %v683
    %2159 = vmatpush.bf16.msra.mxu0 %v680
    %2160 = vmatpush.bf16.msra.mxu0 %v677
    %2161 = vmatpush.bf16.msra.mxu0 %v674
    %2162 = vmatmul.bf16.gmra.mxu0 %v2124
    %v2163 = vpop.f32.mrf.mxu0
    %v2164 = vadd.f32 0.0, %v2163
    %v2165 = vpop.f32.mrf.mxu0
    %v2166 = vadd.f32 0.0, %v2165
    %2167 = vdwg.mxu0
    %2168 = vmatpush.bf16.msra.mxu0 %v719
    %2169 = vmatpush.bf16.msra.mxu0 %v716
    %2170 = vmatpush.bf16.msra.mxu0 %v713
    %2171 = vmatpush.bf16.msra.mxu0 %v710
    %2172 = vmatpush.bf16.msra.mxu0 %v707
    %2173 = vmatpush.bf16.msra.mxu0 %v704
    %2174 = vmatpush.bf16.msra.mxu0 %v701
    %2175 = vmatpush.bf16.msra.mxu0 %v698
    %2176 = vmatmul.bf16.gmra.mxu0 %v2125
    %v2177 = vpop.f32.mrf.mxu0
    %v2178 = vadd.f32 %v2164, %v2177
    %v2179 = vpop.f32.mrf.mxu0
    %v2180 = vadd.f32 %v2166, %v2179
    %2181 = vdwg.mxu0
    %2182 = vmatpush.bf16.msra.mxu0 %v696
    %2183 = vmatpush.bf16.msra.mxu0 %v693
    %2184 = vmatpush.bf16.msra.mxu0 %v690
    %2185 = vmatpush.bf16.msra.mxu0 %v687
    %2186 = vmatpush.bf16.msra.mxu0 %v684
    %2187 = vmatpush.bf16.msra.mxu0 %v681
    %2188 = vmatpush.bf16.msra.mxu0 %v678
    %2189 = vmatpush.bf16.msra.mxu0 %v675
    %2190 = vmatmul.bf16.gmra.mxu0 %v2124
    %v2191 = vpop.f32.mrf.mxu0
    %v2192 = vadd.f32 0.0, %v2191
    %v2193 = vpop.f32.mrf.mxu0
    %v2194 = vadd.f32 0.0, %v2193
    %2195 = vdwg.mxu0
    %2196 = vmatpush.bf16.msra.mxu0 %v720
    %2197 = vmatpush.bf16.msra.mxu0 %v717
    %2198 = vmatpush.bf16.msra.mxu0 %v714
    %2199 = vmatpush.bf16.msra.mxu0 %v711
    %2200 = vmatpush.bf16.msra.mxu0 %v708
    %2201 = vmatpush.bf16.msra.mxu0 %v705
    %2202 = vmatpush.bf16.msra.mxu0 %v702
    %2203 = vmatpush.bf16.msra.mxu0 %v699
    %2204 = vmatmul.bf16.gmra.mxu0 %v2125
    %v2205 = vpop.f32.mrf.mxu0
    %v2206 = vadd.f32 %v2192, %v2205
    %v2207 = vpop.f32.mrf.mxu0
    %v2208 = vadd.f32 %v2194, %v2207
    %2209 = vdwg.mxu0
    %v2210 = vadd.f32 %v2118, %v2150
    %v2211 = vadd.f32 %v2121, %v2152
    %v2212 = vxor.u32 %v2210, 2147483648
    %v2213 = vxor.u32 %v2211, 2147483648
    %v2214 = vmul.f32 %v2212, 1.442695
    %v2215 = vpow.pop %v2214
    %v2216 = vmul.f32 %v2213, 1.442695
    %v2217 = vpow.pop %v2216
    %v2218 = vadd.f32 %v2215, 1.0
    %v2219 = vadd.f32 %v2217, 1.0
    %v2220 = vrcp.pop %v2218
    %v2221 = vmul.f32 %v2218, %v2220
    %v2222 = vsub.f32 1.0, %v2221
    %v2223 = vmul.f32 %v2220, %v2222
    %v2224 = vadd.f32 %v2220, %v2223
    %vm2225 = vweird.f32 %v2218
    %vm2226 = vweird.f32 %v2220
    %vm2227 = vmor %vm2225, %vm2226
    %v2228 = vsel %vm2227, %v2220, %v2224
    %v2229 = vand.u32 2147483647, %v2218
    %vm2230 = vcmp.eq.f32.partialorder %v2229, 8.507059e+37
    %v2231 = vand.u32 %v2218, 2147483648
    %v2232 = vor.u32 1.1754944e-38, %v2231
    %v2233 = vsel %vm2230, %v2232, %v2228
    %v2234 = vmul.f32 1.0, %v2233
    %v2235 = vrcp.pop %v2219
    %v2236 = vmul.f32 %v2219, %v2235
    %v2237 = vsub.f32 1.0, %v2236
    %v2238 = vmul.f32 %v2235, %v2237
    %v2239 = vadd.f32 %v2235, %v2238
    %vm2240 = vweird.f32 %v2219
    %vm2241 = vweird.f32 %v2235
    %vm2242 = vmor %vm2240, %vm2241
    %v2243 = vsel %vm2242, %v2235, %v2239
    %v2244 = vand.u32 2147483647, %v2219
    %vm2245 = vcmp.eq.f32.partialorder %v2244, 8.507059e+37
    %v2246 = vand.u32 %v2219, 2147483648
    %v2247 = vor.u32 1.1754944e-38, %v2246
    %v2248 = vsel %vm2245, %v2247, %v2243
    %v2249 = vmul.f32 1.0, %v2248
    %v2250 = vadd.f32 %v2119, %v2178
    %v2251 = vadd.f32 %v2122, %v2180
    %v2252 = vxor.u32 %v2250, 2147483648
    %v2253 = vxor.u32 %v2251, 2147483648
    %v2254 = vmul.f32 %v2252, 1.442695
    %v2255 = vpow.pop %v2254
    %v2256 = vmul.f32 %v2253, 1.442695
    %v2257 = vpow.pop %v2256
    %v2258 = vadd.f32 %v2255, 1.0
    %v2259 = vadd.f32 %v2257, 1.0
    %v2260 = vrcp.pop %v2258
    %v2261 = vmul.f32 %v2258, %v2260
    %v2262 = vsub.f32 1.0, %v2261
    %v2263 = vmul.f32 %v2260, %v2262
    %v2264 = vadd.f32 %v2260, %v2263
    %vm2265 = vweird.f32 %v2258
    %vm2266 = vweird.f32 %v2260
    %vm2267 = vmor %vm2265, %vm2266
    %v2268 = vsel %vm2267, %v2260, %v2264
    %v2269 = vand.u32 2147483647, %v2258
    %vm2270 = vcmp.eq.f32.partialorder %v2269, 8.507059e+37
    %v2271 = vand.u32 %v2258, 2147483648
    %v2272 = vor.u32 1.1754944e-38, %v2271
    %v2273 = vsel %vm2270, %v2272, %v2268
    %v2274 = vmul.f32 1.0, %v2273
    %v2275 = vrcp.pop %v2259
    %v2276 = vmul.f32 %v2259, %v2275
    %v2277 = vsub.f32 1.0, %v2276
    %v2278 = vmul.f32 %v2275, %v2277
    %v2279 = vadd.f32 %v2275, %v2278
    %vm2280 = vweird.f32 %v2259
    %vm2281 = vweird.f32 %v2275
    %vm2282 = vmor %vm2280, %vm2281
    %v2283 = vsel %vm2282, %v2275, %v2279
    %v2284 = vand.u32 2147483647, %v2259
    %vm2285 = vcmp.eq.f32.partialorder %v2284, 8.507059e+37
    %v2286 = vand.u32 %v2259, 2147483648
    %v2287 = vor.u32 1.1754944e-38, %v2286
    %v2288 = vsel %vm2285, %v2287, %v2283
    %v2289 = vmul.f32 1.0, %v2288
    %v2290 = vadd.f32 %v2206, %v433
    %v2291 = vadd.f32 %v2208, %v437
    %v2292 = vmul.f32 %v2234, %v2290
    %v2293 = vmul.f32 %v2249, %v2291
    %v2294 = vadd.f32 %v2120, %v2292
    %v2295 = vadd.f32 %v2123, %v2293
    %v2296 = vtanh.pop %v2294
    %v2297 = vtanh.pop %v2295
    %v2298 = vsub.f32 1.0, %v2274
    %v2299 = vsub.f32 1.0, %v2289
    %v2300 = vmul.f32 %v2298, %v2296
    %v2301 = vmul.f32 %v2299, %v2297
    %v2302 = vmul.f32 %v2274, %v2110
    %v2303 = vmul.f32 %v2289, %v2111
    %v2304 = vadd.f32 %v2300, %v2302
    %v2305 = vadd.f32 %v2301, %v2303
    %v2306 = vpack.c.bf16 %v2304, %v2304
    %s2307 = scalar_lea.vmem %s8, 28
    %2308 = vst [vmem:[%s2307] sm:$0xf] %v2306
    %v2309 = vpack.c.bf16 %v2305, %v2305
    %2310 = vst [vmem:[%s62] sm:$0xf] %v2309
    %2311 = vst [vmem:[#allocation4] sm:$0xff] %v2304
    %2312 = vst [vmem:[#allocation4 + $0x8] sm:$0xff] %v2305
    // Predicated region
    $region42: #{lstm_classifier_forward.2} parent=1 // pred_check
      %p2313 = pneg %p66
    $region43: #{lstm_classifier_forward.2} parent=1 // pred_check_branch
      %2315 = sbr.rel (%p2313) target = $region45
    $region44: #{lstm_classifier_forward.2} parent=1 // pred_region
      %2316 = vst [vmem:[#allocation8] sm:$0xff] %v2304
      %2317 = vst [vmem:[#allocation9] sm:$0xff] %v2305
    $region45: #{lstm_classifier_forward.2} parent=1 // pred_fallthru
      _
    %s2318 = ssub.s32 0, 0
    %s2319 = smul.u32 8, %s2318
    %p2320 = scmp.lt.s32.totalorder %s2319, 7
    %s2321 = scalar_select %p2320, %s2319, 7
    %s2322 = smul.addr %s2321, 4
    %s2323 = scalar_lea.vmem %s9, %s2322
    // Predicated region
    $region46: #{lstm_classifier_forward.2} parent=1 // pred_check
      _
    $region47: #{lstm_classifier_forward.2} parent=1 // pred_check_branch
      %2325 = sbr.rel (0) target = $region49
    $region48: #{lstm_classifier_forward.2} parent=1 // pred_region
      _
    $region49: #{lstm_classifier_forward.2} parent=1 // pred_fallthru
      _
    // Predicated region
    $region50: #{lstm_classifier_forward.2} parent=1 // pred_check
      _
    $region51: #{lstm_classifier_forward.2} parent=1 // pred_check_branch
      %2327 = sbr.rel (0) target = $region53
    $region52: #{lstm_classifier_forward.2} parent=1 // pred_region
      %s2328 = ssub.s32 0, 0
      %s2329 = smul.u32 8, %s2328
    $region53: #{lstm_classifier_forward.2} parent=1 // pred_fallthru
      _
    // Predicated region
    $region54: #{lstm_classifier_forward.2} parent=1 // pred_check
      _
    $region55: #{lstm_classifier_forward.2} parent=1 // pred_check_branch
      %2331 = sbr.rel (0) target = $region57
    $region56: #{lstm_classifier_forward.2} parent=1 // pred_region
      %2333 = vsyncadd [#allocation7], 0
      %s2335 = sshll.u32 [#allocation8], 4
      %s2336 = int_to_ptr.vmem [resolvable:$true] %s2335
      %s2337 = sshll.u32 %s10, 4
      %s2338 = int_to_ptr.hbm [resolvable:$true] %s2337
      %2340 = dma.vmem_to_hbm [thread:$0]  %s2336, 128, %s2338, [#allocation7]
    $region57: #{lstm_classifier_forward.2} parent=1 // pred_fallthru
      _
    // Predicated region
    $region58: #{lstm_classifier_forward.2} parent=1 // pred_check
      _
    $region59: #{lstm_classifier_forward.2} parent=1 // pred_check_branch
      %2342 = sbr.rel (0) target = $region61
    $region60: #{lstm_classifier_forward.2} parent=1 // pred_region
      %2344 = vsyncadd [#allocation10], 0
      %s2346 = sshll.u32 [#allocation9], 4
      %s2347 = int_to_ptr.vmem [resolvable:$true] %s2346
      %s2348 = sshll.u32 %s11, 4
      %s2349 = int_to_ptr.hbm [resolvable:$true] %s2348
      %2351 = dma.vmem_to_hbm [thread:$0]  %s2347, 128, %s2349, [#allocation10]
    $region61: #{lstm_classifier_forward.2} parent=1 // pred_fallthru
      _
    // Predicated region
    $region62: #{lstm_classifier_forward.2} parent=1 // pred_check
      _
    $region63: #{lstm_classifier_forward.2} parent=1 // pred_check_branch
      %2353 = sbr.rel (0) target = $region65
    $region64: #{lstm_classifier_forward.2} parent=1 // pred_region
      _
    $region65: #{lstm_classifier_forward.2} parent=1 // pred_fallthru
      _
    // Predicated region
    $region66: #{lstm_classifier_forward.2} parent=1 // pred_check
      _
    $region67: #{lstm_classifier_forward.2} parent=1 // pred_check_branch
      %2355 = sbr.rel (0) target = $region69
    $region68: #{lstm_classifier_forward.2} parent=1 // pred_region
      %s2356 = ssub.s32 0, 0
      %s2357 = smul.u32 8, %s2356
      %p2358 = scmp.lt.s32.totalorder %s2357, 7
      %s2359 = scalar_select %p2358, %s2357, 7
      %s2360 = smul.addr %s2359, 4
      %s2361 = scalar_lea.vmem %s9, %s2360
    $region69: #{lstm_classifier_forward.2} parent=1 // pred_fallthru
      _
    // Predicated region
    $region70: #{lstm_classifier_forward.2} parent=1 // pred_check
      _
    $region71: #{lstm_classifier_forward.2} parent=1 // pred_check_branch
      %2363 = sbr.rel (0) target = $region73
    $region72: #{lstm_classifier_forward.2} parent=1 // pred_region
      %2365 = dma.done [#allocation7], 128
    $region73: #{lstm_classifier_forward.2} parent=1 // pred_fallthru
      _
    // Predicated region
    $region74: #{lstm_classifier_forward.2} parent=1 // pred_check
      _
    $region75: #{lstm_classifier_forward.2} parent=1 // pred_check_branch
      %2367 = sbr.rel (0) target = $region77
    $region76: #{lstm_classifier_forward.2} parent=1 // pred_region
      %2369 = dma.done [#allocation10], 128
    $region77: #{lstm_classifier_forward.2} parent=1 // pred_fallthru
      _
    %2370 = vsyncpa [#allocation6], 1
    %2371 = vsyncpa [#allocation7], 1
    %2372 = vsyncpa [#allocation10], 1

// kernel: lstm_classifier_forward.3
$region0: #{lstm_classifier_forward.3}
  #allocation0 [shape = 'u32[]', space=smem, size = 0x4, offset = 0x4, fixed_abs, tag = 'smem constant byte address 0x4 - core index']
  #allocation1 [shape = 'u32[72,128]{1,0:T(1,128)}', space=vmem, size = 0x9000, scoped, tag = 'internal scratch']
  #allocation2 [shape = 'f32[64,384]{1,0:T(8,128)}', space=vmem, size = 0x18000, scoped, tag = 'scratch operand']
  #allocation3 [shape = 'f32[64,384]{1,0:T(8,128)}', space=vmem, size = 0x18000, scoped, tag = 'scratch operand']
  #allocation4 [shape = 'f32[16,128]{1,0:T(8,128)}', space=vmem, size = 0x2000, scoped, tag = 'scratch operand']
  %s0 = inlined_call_operand.vmem [shape: bf16[64,128], index: 0, kind: input, shape index: {}]
  %s1 = inlined_call_operand.vmem [shape: bf16[64,128], index: 1, kind: input, shape index: {}]
  %s2 = inlined_call_operand.hbm [shape: bf16[256,384], index: 2, kind: input, shape index: {}]
  %s3 = inlined_call_operand.hbm [shape: bf16[256,384], index: 3, kind: input, shape index: {}]
  %s4 = inlined_call_operand.vmem [shape: f32[1,384], index: 4, kind: input, shape index: {}]
  %s5 = inlined_call_operand.vmem [shape: f32[1,384], index: 5, kind: input, shape index: {}]
  %s6 = inlined_call_operand.hbm [shape: bf16[256,384], index: 6, kind: input, shape index: {}]
  %s7 = inlined_call_operand.vmem [shape: f32[1,128], index: 7, kind: input, shape index: {}]
  %s8 = inlined_call_operand.vmem [shape: f32[1,128], index: 8, kind: input, shape index: {}]
  %s9 = inlined_call_operand.vmem [shape: f32[8,128], index: 9, kind: output, shape index: {0}]
  %s10 = inlined_call_operand.vmem [shape: f32[8,128], index: 10, kind: output, shape index: {1}]
  %11 = xla_tuple %s9, %s10
  %s12 = sld [smem:[#allocation0]]
  $region74: #{lstm_classifier_forward.3} parent=0
    _
  %s14 = ssub.s32 1, %s12
  %s15 = scalar_select 0, %s14, %s12
  $region1: #{lstm_classifier_forward.3} parent=0
    #allocation5 [shape = 'u8[196608]{0}', space=vmem, size = 0x30000, scoped, tag = 'input window, operand 2, single buffered']
    #allocation6 [shape = 's32[1]{0}', space=sflag, size = 0x4, scoped, tag = 'scoped memory for lstm_classifier_forward.3']
    #allocation7 [shape = 'u8[196608]{0}', space=vmem, size = 0x30000, scoped, tag = 'input window, operand 3, single buffered']
    #allocation8 [shape = 's32[1]{0}', space=sflag, size = 0x4, scoped, tag = 'scoped memory for lstm_classifier_forward.3']
    #allocation9 [shape = 'u8[196608]{0}', space=vmem, size = 0x30000, scoped, tag = 'input window, operand 6, single buffered']
    %16 = vsyncpa [#allocation6], 0
    %17 = vsyncpa [#allocation8], 0
    // Predicated region
    $region2: #{lstm_classifier_forward.3} parent=1 // pred_check
      _
    $region3: #{lstm_classifier_forward.3} parent=1 // pred_check_branch
      %19 = sbr.rel (0) target = $region5
    $region4: #{lstm_classifier_forward.3} parent=1 // pred_region
      _
    $region5: #{lstm_classifier_forward.3} parent=1 // pred_fallthru
      _
    // Predicated region
    $region6: #{lstm_classifier_forward.3} parent=1 // pred_check
      _
    $region7: #{lstm_classifier_forward.3} parent=1 // pred_check_branch
      %21 = sbr.rel (0) target = $region9
    $region8: #{lstm_classifier_forward.3} parent=1 // pred_region
      _
    $region9: #{lstm_classifier_forward.3} parent=1 // pred_fallthru
      _
    // Predicated region
    $region10: #{lstm_classifier_forward.3} parent=1 // pred_check
      _
    $region11: #{lstm_classifier_forward.3} parent=1 // pred_check_branch
      %23 = sbr.rel (0) target = $region13
    $region12: #{lstm_classifier_forward.3} parent=1 // pred_region
      %25 = vsyncadd [#allocation6], 0
      %s26 = sshll.u32 %s2, 4
      %s27 = int_to_ptr.hbm [resolvable:$true] %s26
      %s28 = sshll.u32 [#allocation5], 4
      %s29 = int_to_ptr.vmem [resolvable:$true] %s28
      %34 = dma.hbm_to_vmem [thread:$0]  %s27, 6144, %s29, [#allocation6], 192, 192, 12
    $region13: #{lstm_classifier_forward.3} parent=1 // pred_fallthru
      _
    // Predicated region
    $region14: #{lstm_classifier_forward.3} parent=1 // pred_check
      _
    $region15: #{lstm_classifier_forward.3} parent=1 // pred_check_branch
      %36 = sbr.rel (0) target = $region17
    $region16: #{lstm_classifier_forward.3} parent=1 // pred_region
      %38 = vsyncadd [#allocation8], 0
      %s39 = sshll.u32 %s3, 4
      %s40 = int_to_ptr.hbm [resolvable:$true] %s39
      %s41 = sshll.u32 [#allocation7], 4
      %s42 = int_to_ptr.vmem [resolvable:$true] %s41
      %47 = dma.hbm_to_vmem [thread:$0]  %s40, 6144, %s42, [#allocation8], 192, 192, 12
    $region17: #{lstm_classifier_forward.3} parent=1 // pred_fallthru
      _
    // Predicated region
    $region18: #{lstm_classifier_forward.3} parent=1 // pred_check
      _
    $region19: #{lstm_classifier_forward.3} parent=1 // pred_check_branch
      %49 = sbr.rel (0) target = $region21
    $region20: #{lstm_classifier_forward.3} parent=1 // pred_region
      _
    $region21: #{lstm_classifier_forward.3} parent=1 // pred_fallthru
      _
    // Predicated region
    $region22: #{lstm_classifier_forward.3} parent=1 // pred_check
      _
    $region23: #{lstm_classifier_forward.3} parent=1 // pred_check_branch
      %51 = sbr.rel (0) target = $region25
    $region24: #{lstm_classifier_forward.3} parent=1 // pred_region
      _
    $region25: #{lstm_classifier_forward.3} parent=1 // pred_fallthru
      _
    // Predicated region
    $region26: #{lstm_classifier_forward.3} parent=1 // pred_check
      _
    $region27: #{lstm_classifier_forward.3} parent=1 // pred_check_branch
      %53 = sbr.rel (0) target = $region29
    $region28: #{lstm_classifier_forward.3} parent=1 // pred_region
      %55 = vsyncadd [#allocation8], 0
      %s56 = sshll.u32 %s6, 4
      %s57 = int_to_ptr.hbm [resolvable:$true] %s56
      %s58 = sshll.u32 [#allocation9], 4
      %s59 = int_to_ptr.vmem [resolvable:$true] %s58
      %64 = dma.hbm_to_vmem [thread:$0]  %s57, 6144, %s59, [#allocation8], 192, 192, 12
    $region29: #{lstm_classifier_forward.3} parent=1 // pred_fallthru
      _
    // Predicated region
    $region30: #{lstm_classifier_forward.3} parent=1 // pred_check
      _
    $region31: #{lstm_classifier_forward.3} parent=1 // pred_check_branch
      %66 = sbr.rel (0) target = $region33
    $region32: #{lstm_classifier_forward.3} parent=1 // pred_region
      _
    $region33: #{lstm_classifier_forward.3} parent=1 // pred_fallthru
      _
    // Predicated region
    $region34: #{lstm_classifier_forward.3} parent=1 // pred_check
      _
    $region35: #{lstm_classifier_forward.3} parent=1 // pred_check_branch
      %68 = sbr.rel (0) target = $region37
    $region36: #{lstm_classifier_forward.3} parent=1 // pred_region
      _
    $region37: #{lstm_classifier_forward.3} parent=1 // pred_fallthru
      _
    // Predicated region
    $region38: #{lstm_classifier_forward.3} parent=1 // pred_check
      _
    $region39: #{lstm_classifier_forward.3} parent=1 // pred_check_branch
      %70 = sbr.rel (0) target = $region41
    $region40: #{lstm_classifier_forward.3} parent=1 // pred_region
      %72 = dma.done [#allocation6], 6144
    $region41: #{lstm_classifier_forward.3} parent=1 // pred_fallthru
      _
    // Predicated region
    $region42: #{lstm_classifier_forward.3} parent=1 // pred_check
      _
    $region43: #{lstm_classifier_forward.3} parent=1 // pred_check_branch
      %74 = sbr.rel (0) target = $region45
    $region44: #{lstm_classifier_forward.3} parent=1 // pred_region
      %76 = dma.done [#allocation8], 6144
    $region45: #{lstm_classifier_forward.3} parent=1 // pred_fallthru
      _
    // Predicated region
    $region46: #{lstm_classifier_forward.3} parent=1 // pred_check
      _
    $region47: #{lstm_classifier_forward.3} parent=1 // pred_check_branch
      %78 = sbr.rel (0) target = $region49
    $region48: #{lstm_classifier_forward.3} parent=1 // pred_region
      %80 = dma.done [#allocation8], 6144
    $region49: #{lstm_classifier_forward.3} parent=1 // pred_fallthru
      _
    %p81 = scmp.eq.s32.totalorder 0, 0
    // Predicated region
    $region50: #{lstm_classifier_forward.3} parent=1 // pred_check
      %p82 = pneg %p81
    $region51: #{lstm_classifier_forward.3} parent=1 // pred_check_branch
      %84 = sbr.rel (%p82) target = $region53
    $region52: #{lstm_classifier_forward.3} parent=1 // pred_region
      %85 = vst [vmem:[#allocation4] sm:$0xff] 0.0
      %86 = vst [vmem:[#allocation4 + $0x8] sm:$0xff] 0.0
    $region53: #{lstm_classifier_forward.3} parent=1 // pred_fallthru
      _
    %v87 = vld [vmem:[%s0] sm:$0xf]
    %v88 = vld [vmem:[%s0 + $0x4] sm:$0xf]
    %v89 = vld [vmem:[%s0 + $0x8] sm:$0xf]
    %v90 = vld [vmem:[%s0 + $0xc] sm:$0xf]
    %v91 = vld [vmem:[%s0 + $0x10] sm:$0xf]
    %v92 = vld [vmem:[%s0 + $0x14] sm:$0xf]
    %v93 = vld [vmem:[%s0 + $0x18] sm:$0xf]
    %v94 = vld [vmem:[%s0 + $0x1c] sm:$0xf]
    %v95 = vld [vmem:[%s1] sm:$0xf]
    %v96 = vld [vmem:[%s1 + $0x4] sm:$0xf]
    %v97 = vld [vmem:[%s1 + $0x8] sm:$0xf]
    %v98 = vld [vmem:[%s1 + $0xc] sm:$0xf]
    %v99 = vld [vmem:[%s1 + $0x10] sm:$0xf]
    %v100 = vld [vmem:[%s1 + $0x14] sm:$0xf]
    %v101 = vld [vmem:[%s1 + $0x18] sm:$0xf]
    %v102 = vld [vmem:[%s1 + $0x1c] sm:$0xf]
    %v103 = vld [vmem:[#allocation5] sm:$0xff]
    %v104 = vld [vmem:[#allocation5 + $0x8] sm:$0xf]
    %v105 = vld [vmem:[#allocation5 + $0xc] sm:$0xff]
    %v106 = vld [vmem:[#allocation5 + $0x14] sm:$0xf]
    %v107 = vld [vmem:[#allocation5 + $0x18] sm:$0xff]
    %v108 = vld [vmem:[#allocation5 + $0x20] sm:$0xf]
    %v109 = vld [vmem:[#allocation5 + $0x24] sm:$0xff]
    %v110 = vld [vmem:[#allocation5 + $0x2c] sm:$0xf]
    %v111 = vld [vmem:[#allocation5 + $0x30] sm:$0xff]
    %v112 = vld [vmem:[#allocation5 + $0x38] sm:$0xf]
    %v113 = vld [vmem:[#allocation5 + $0x3c] sm:$0xff]
    %v114 = vld [vmem:[#allocation5 + $0x44] sm:$0xf]
    %v115 = vld [vmem:[#allocation5 + $0x48] sm:$0xff]
    %v116 = vld [vmem:[#allocation5 + $0x50] sm:$0xf]
    %v117 = vld [vmem:[#allocation5 + $0x54] sm:$0xff]
    %v118 = vld [vmem:[#allocation5 + $0x5c] sm:$0xf]
    %v119 = vld [vmem:[#allocation5 + $0x60] sm:$0xff]
    %v120 = vld [vmem:[#allocation5 + $0x68] sm:$0xf]
    %v121 = vld [vmem:[#allocation5 + $0x6c] sm:$0xff]
    %v122 = vld [vmem:[#allocation5 + $0x74] sm:$0xf]
    %v123 = vld [vmem:[#allocation5 + $0x78] sm:$0xff]
    %v124 = vld [vmem:[#allocation5 + $0x80] sm:$0xf]
    %v125 = vld [vmem:[#allocation5 + $0x84] sm:$0xff]
    %v126 = vld [vmem:[#allocation5 + $0x8c] sm:$0xf]
    %v127 = vld [vmem:[#allocation5 + $0x90] sm:$0xff]
    %v128 = vld [vmem:[#allocation5 + $0x98] sm:$0xf]
    %v129 = vld [vmem:[#allocation5 + $0x9c] sm:$0xff]
    %v130 = vld [vmem:[#allocation5 + $0xa4] sm:$0xf]
    %v131 = vld [vmem:[#allocation5 + $0xa8] sm:$0xff]
    %v132 = vld [vmem:[#allocation5 + $0xb0] sm:$0xf]
    %v133 = vld [vmem:[#allocation5 + $0xb4] sm:$0xff]
    %v134 = vld [vmem:[#allocation5 + $0xbc] sm:$0xf]
    %v135 = vld [vmem:[#allocation5 + $0xc0] sm:$0xff]
    %v136 = vld [vmem:[#allocation5 + $0xc8] sm:$0xf]
    %v137 = vld [vmem:[#allocation5 + $0xcc] sm:$0xff]
    %v138 = vld [vmem:[#allocation5 + $0xd4] sm:$0xf]
    %v139 = vld [vmem:[#allocation5 + $0xd8] sm:$0xff]
    %v140 = vld [vmem:[#allocation5 + $0xe0] sm:$0xf]
    %v141 = vld [vmem:[#allocation5 + $0xe4] sm:$0xff]
    %v142 = vld [vmem:[#allocation5 + $0xec] sm:$0xf]
    %v143 = vld [vmem:[#allocation5 + $0xf0] sm:$0xff]
    %v144 = vld [vmem:[#allocation5 + $0xf8] sm:$0xf]
    %v145 = vld [vmem:[#allocation5 + $0xfc] sm:$0xff]
    %v146 = vld [vmem:[#allocation5 + $0x104] sm:$0xf]
    %v147 = vld [vmem:[#allocation5 + $0x108] sm:$0xff]
    %v148 = vld [vmem:[#allocation5 + $0x110] sm:$0xf]
    %v149 = vld [vmem:[#allocation5 + $0x114] sm:$0xff]
    %v150 = vld [vmem:[#allocation5 + $0x11c] sm:$0xf]
    %v151 = vld [vmem:[#allocation5 + $0x120] sm:$0xff]
    %v152 = vld [vmem:[#allocation5 + $0x128] sm:$0xf]
    %v153 = vld [vmem:[#allocation5 + $0x12c] sm:$0xff]
    %v154 = vld [vmem:[#allocation5 + $0x134] sm:$0xf]
    %v155 = vld [vmem:[#allocation5 + $0x138] sm:$0xff]
    %v156 = vld [vmem:[#allocation5 + $0x140] sm:$0xf]
    %v157 = vld [vmem:[#allocation5 + $0x144] sm:$0xff]
    %v158 = vld [vmem:[#allocation5 + $0x14c] sm:$0xf]
    %v159 = vld [vmem:[#allocation5 + $0x150] sm:$0xff]
    %v160 = vld [vmem:[#allocation5 + $0x158] sm:$0xf]
    %v161 = vld [vmem:[#allocation5 + $0x15c] sm:$0xff]
    %v162 = vld [vmem:[#allocation5 + $0x164] sm:$0xf]
    %v163 = vld [vmem:[#allocation5 + $0x168] sm:$0xff]
    %v164 = vld [vmem:[#allocation5 + $0x170] sm:$0xf]
    %v165 = vld [vmem:[#allocation5 + $0x174] sm:$0xff]
    %v166 = vld [vmem:[#allocation5 + $0x17c] sm:$0xf]
    %v175 = vunpack.c.l.b16 %v95
    %v176 = vunpack.c.l.b16 %v96
    %v177 = vunpack.c.l.b16 %v97
    %v178 = vunpack.c.l.b16 %v98
    %v179 = vunpack.c.l.b16 %v99
    %v180 = vunpack.c.l.b16 %v100
    %v181 = vunpack.c.l.b16 %v101
    %v182 = vunpack.c.l.b16 %v102
    %v183 = vpack.c.b16 %v176, %v175
    %v184 = vpack.c.b16 %v178, %v177
    %v185 = vpack.c.b16 %v180, %v179
    %v186 = vpack.c.b16 %v182, %v181
    %v223 = vunpack.c.l.b16 %v135
    %v224 = vunpack.c.h.b16 %v135
    %v225 = vunpack.c.l.b16 %v136
    %v226 = vunpack.c.l.b16 %v137
    %v227 = vunpack.c.h.b16 %v137
    %v228 = vunpack.c.l.b16 %v138
    %v229 = vunpack.c.l.b16 %v139
    %v230 = vunpack.c.h.b16 %v139
    %v231 = vunpack.c.l.b16 %v140
    %v232 = vunpack.c.l.b16 %v141
    %v233 = vunpack.c.h.b16 %v141
    %v234 = vunpack.c.l.b16 %v142
    %v235 = vunpack.c.l.b16 %v143
    %v236 = vunpack.c.h.b16 %v143
    %v237 = vunpack.c.l.b16 %v144
    %v238 = vunpack.c.l.b16 %v145
    %v239 = vunpack.c.h.b16 %v145
    %v240 = vunpack.c.l.b16 %v146
    %v241 = vunpack.c.l.b16 %v147
    %v242 = vunpack.c.h.b16 %v147
    %v243 = vunpack.c.l.b16 %v148
    %v244 = vunpack.c.l.b16 %v149
    %v245 = vunpack.c.h.b16 %v149
    %v246 = vunpack.c.l.b16 %v150
    %v247 = vunpack.c.l.b16 %v151
    %v248 = vunpack.c.h.b16 %v151
    %v249 = vunpack.c.l.b16 %v152
    %v250 = vunpack.c.l.b16 %v153
    %v251 = vunpack.c.h.b16 %v153
    %v252 = vunpack.c.l.b16 %v154
    %v253 = vunpack.c.l.b16 %v155
    %v254 = vunpack.c.h.b16 %v155
    %v255 = vunpack.c.l.b16 %v156
    %v256 = vunpack.c.l.b16 %v157
    %v257 = vunpack.c.h.b16 %v157
    %v258 = vunpack.c.l.b16 %v158
    %v259 = vunpack.c.l.b16 %v159
    %v260 = vunpack.c.h.b16 %v159
    %v261 = vunpack.c.l.b16 %v160
    %v262 = vunpack.c.l.b16 %v161
    %v263 = vunpack.c.h.b16 %v161
    %v264 = vunpack.c.l.b16 %v162
    %v265 = vunpack.c.l.b16 %v163
    %v266 = vunpack.c.h.b16 %v163
    %v267 = vunpack.c.l.b16 %v164
    %v268 = vunpack.c.l.b16 %v165
    %v269 = vunpack.c.h.b16 %v165
    %v270 = vunpack.c.l.b16 %v166
    %v271 = vpack.c.b16 %v226, %v223
    %v272 = vpack.c.b16 %v227, %v224
    %v273 = vpack.c.b16 %v228, %v225
    %v274 = vpack.c.b16 %v232, %v229
    %v275 = vpack.c.b16 %v233, %v230
    %v276 = vpack.c.b16 %v234, %v231
    %v277 = vpack.c.b16 %v238, %v235
    %v278 = vpack.c.b16 %v239, %v236
    %v279 = vpack.c.b16 %v240, %v237
    %v280 = vpack.c.b16 %v244, %v241
    %v281 = vpack.c.b16 %v245, %v242
    %v282 = vpack.c.b16 %v246, %v243
    %v283 = vpack.c.b16 %v250, %v247
    %v284 = vpack.c.b16 %v251, %v248
    %v285 = vpack.c.b16 %v252, %v249
    %v286 = vpack.c.b16 %v256, %v253
    %v287 = vpack.c.b16 %v257, %v254
    %v288 = vpack.c.b16 %v258, %v255
    %v289 = vpack.c.b16 %v262, %v259
    %v290 = vpack.c.b16 %v263, %v260
    %v291 = vpack.c.b16 %v264, %v261
    %v292 = vpack.c.b16 %v268, %v265
    %v293 = vpack.c.b16 %v269, %v266
    %v294 = vpack.c.b16 %v270, %v267
    %319 = vmatpush.bf16.msra.mxu0 %v292
    %320 = vmatpush.bf16.msra.mxu0 %v289
    %321 = vmatpush.bf16.msra.mxu0 %v286
    %322 = vmatpush.bf16.msra.mxu0 %v283
    %323 = vmatpush.bf16.msra.mxu0 %v280
    %324 = vmatpush.bf16.msra.mxu0 %v277
    %325 = vmatpush.bf16.msra.mxu0 %v274
    %326 = vmatpush.bf16.msra.mxu0 %v271
    %327 = vmatmul.bf16.gmra.mxu0 %v183
    %v328 = vpop.f32.mrf.mxu0
    %v329 = vadd.f32 0.0, %v328
    %v330 = vpop.f32.mrf.mxu0
    %v331 = vadd.f32 0.0, %v330
    %332 = vmatmul.bf16.gmra.mxu0 %v184
    %v333 = vpop.f32.mrf.mxu0
    %v334 = vadd.f32 0.0, %v333
    %v335 = vpop.f32.mrf.mxu0
    %v336 = vadd.f32 0.0, %v335
    %337 = vmatmul.bf16.gmra.mxu0 %v185
    %v338 = vpop.f32.mrf.mxu0
    %v339 = vadd.f32 0.0, %v338
    %v340 = vpop.f32.mrf.mxu0
    %v341 = vadd.f32 0.0, %v340
    %342 = vmatmul.bf16.gmra.mxu0 %v186
    %v343 = vpop.f32.mrf.mxu0
    %v344 = vadd.f32 0.0, %v343
    %v345 = vpop.f32.mrf.mxu0
    %v346 = vadd.f32 0.0, %v345
    %347 = vdwg.mxu0
    %348 = vmatpush.bf16.msra.mxu0 %v293
    %349 = vmatpush.bf16.msra.mxu0 %v290
    %350 = vmatpush.bf16.msra.mxu0 %v287
    %351 = vmatpush.bf16.msra.mxu0 %v284
    %352 = vmatpush.bf16.msra.mxu0 %v281
    %353 = vmatpush.bf16.msra.mxu0 %v278
    %354 = vmatpush.bf16.msra.mxu0 %v275
    %355 = vmatpush.bf16.msra.mxu0 %v272
    %356 = vmatmul.bf16.gmra.mxu0 %v183
    %v357 = vpop.f32.mrf.mxu0
    %v358 = vadd.f32 0.0, %v357
    %v359 = vpop.f32.mrf.mxu0
    %v360 = vadd.f32 0.0, %v359
    %361 = vmatmul.bf16.gmra.mxu0 %v184
    %v362 = vpop.f32.mrf.mxu0
    %v363 = vadd.f32 0.0, %v362
    %v364 = vpop.f32.mrf.mxu0
    %v365 = vadd.f32 0.0, %v364
    %366 = vmatmul.bf16.gmra.mxu0 %v185
    %v367 = vpop.f32.mrf.mxu0
    %v368 = vadd.f32 0.0, %v367
    %v369 = vpop.f32.mrf.mxu0
    %v370 = vadd.f32 0.0, %v369
    %371 = vmatmul.bf16.gmra.mxu0 %v186
    %v372 = vpop.f32.mrf.mxu0
    %v373 = vadd.f32 0.0, %v372
    %v374 = vpop.f32.mrf.mxu0
    %v375 = vadd.f32 0.0, %v374
    %376 = vdwg.mxu0
    %377 = vmatpush.bf16.msra.mxu0 %v294
    %378 = vmatpush.bf16.msra.mxu0 %v291
    %379 = vmatpush.bf16.msra.mxu0 %v288
    %380 = vmatpush.bf16.msra.mxu0 %v285
    %381 = vmatpush.bf16.msra.mxu0 %v282
    %382 = vmatpush.bf16.msra.mxu0 %v279
    %383 = vmatpush.bf16.msra.mxu0 %v276
    %384 = vmatpush.bf16.msra.mxu0 %v273
    %385 = vmatmul.bf16.gmra.mxu0 %v183
    %v386 = vpop.f32.mrf.mxu0
    %v387 = vadd.f32 0.0, %v386
    %v388 = vpop.f32.mrf.mxu0
    %v389 = vadd.f32 0.0, %v388
    %390 = vmatmul.bf16.gmra.mxu0 %v184
    %v391 = vpop.f32.mrf.mxu0
    %v392 = vadd.f32 0.0, %v391
    %v393 = vpop.f32.mrf.mxu0
    %v394 = vadd.f32 0.0, %v393
    %395 = vmatmul.bf16.gmra.mxu0 %v185
    %v396 = vpop.f32.mrf.mxu0
    %v397 = vadd.f32 0.0, %v396
    %v398 = vpop.f32.mrf.mxu0
    %v399 = vadd.f32 0.0, %v398
    %400 = vmatmul.bf16.gmra.mxu0 %v186
    %v401 = vpop.f32.mrf.mxu0
    %v402 = vadd.f32 0.0, %v401
    %v403 = vpop.f32.mrf.mxu0
    %v404 = vadd.f32 0.0, %v403
    %405 = vdwg.mxu0
    %v414 = vunpack.c.l.b16 %v87
    %v415 = vunpack.c.l.b16 %v88
    %v416 = vunpack.c.l.b16 %v89
    %v417 = vunpack.c.l.b16 %v90
    %v418 = vunpack.c.l.b16 %v91
    %v419 = vunpack.c.l.b16 %v92
    %v420 = vunpack.c.l.b16 %v93
    %v421 = vunpack.c.l.b16 %v94
    %v422 = vpack.c.b16 %v415, %v414
    %v423 = vpack.c.b16 %v417, %v416
    %v424 = vpack.c.b16 %v419, %v418
    %v425 = vpack.c.b16 %v421, %v420
    %v462 = vunpack.c.l.b16 %v103
    %v463 = vunpack.c.h.b16 %v103
    %v464 = vunpack.c.l.b16 %v104
    %v465 = vunpack.c.l.b16 %v105
    %v466 = vunpack.c.h.b16 %v105
    %v467 = vunpack.c.l.b16 %v106
    %v468 = vunpack.c.l.b16 %v107
    %v469 = vunpack.c.h.b16 %v107
    %v470 = vunpack.c.l.b16 %v108
    %v471 = vunpack.c.l.b16 %v109
    %v472 = vunpack.c.h.b16 %v109
    %v473 = vunpack.c.l.b16 %v110
    %v474 = vunpack.c.l.b16 %v111
    %v475 = vunpack.c.h.b16 %v111
    %v476 = vunpack.c.l.b16 %v112
    %v477 = vunpack.c.l.b16 %v113
    %v478 = vunpack.c.h.b16 %v113
    %v479 = vunpack.c.l.b16 %v114
    %v480 = vunpack.c.l.b16 %v115
    %v481 = vunpack.c.h.b16 %v115
    %v482 = vunpack.c.l.b16 %v116
    %v483 = vunpack.c.l.b16 %v117
    %v484 = vunpack.c.h.b16 %v117
    %v485 = vunpack.c.l.b16 %v118
    %v486 = vunpack.c.l.b16 %v119
    %v487 = vunpack.c.h.b16 %v119
    %v488 = vunpack.c.l.b16 %v120
    %v489 = vunpack.c.l.b16 %v121
    %v490 = vunpack.c.h.b16 %v121
    %v491 = vunpack.c.l.b16 %v122
    %v492 = vunpack.c.l.b16 %v123
    %v493 = vunpack.c.h.b16 %v123
    %v494 = vunpack.c.l.b16 %v124
    %v495 = vunpack.c.l.b16 %v125
    %v496 = vunpack.c.h.b16 %v125
    %v497 = vunpack.c.l.b16 %v126
    %v498 = vunpack.c.l.b16 %v127
    %v499 = vunpack.c.h.b16 %v127
    %v500 = vunpack.c.l.b16 %v128
    %v501 = vunpack.c.l.b16 %v129
    %v502 = vunpack.c.h.b16 %v129
    %v503 = vunpack.c.l.b16 %v130
    %v504 = vunpack.c.l.b16 %v131
    %v505 = vunpack.c.h.b16 %v131
    %v506 = vunpack.c.l.b16 %v132
    %v507 = vunpack.c.l.b16 %v133
    %v508 = vunpack.c.h.b16 %v133
    %v509 = vunpack.c.l.b16 %v134
    %v510 = vpack.c.b16 %v465, %v462
    %v511 = vpack.c.b16 %v466, %v463
    %v512 = vpack.c.b16 %v467, %v464
    %v513 = vpack.c.b16 %v471, %v468
    %v514 = vpack.c.b16 %v472, %v469
    %v515 = vpack.c.b16 %v473, %v470
    %v516 = vpack.c.b16 %v477, %v474
    %v517 = vpack.c.b16 %v478, %v475
    %v518 = vpack.c.b16 %v479, %v476
    %v519 = vpack.c.b16 %v483, %v480
    %v520 = vpack.c.b16 %v484, %v481
    %v521 = vpack.c.b16 %v485, %v482
    %v522 = vpack.c.b16 %v489, %v486
    %v523 = vpack.c.b16 %v490, %v487
    %v524 = vpack.c.b16 %v491, %v488
    %v525 = vpack.c.b16 %v495, %v492
    %v526 = vpack.c.b16 %v496, %v493
    %v527 = vpack.c.b16 %v497, %v494
    %v528 = vpack.c.b16 %v501, %v498
    %v529 = vpack.c.b16 %v502, %v499
    %v530 = vpack.c.b16 %v503, %v500
    %v531 = vpack.c.b16 %v507, %v504
    %v532 = vpack.c.b16 %v508, %v505
    %v533 = vpack.c.b16 %v509, %v506
    %558 = vmatpush.bf16.msra.mxu0 %v531
    %559 = vmatpush.bf16.msra.mxu0 %v528
    %560 = vmatpush.bf16.msra.mxu0 %v525
    %561 = vmatpush.bf16.msra.mxu0 %v522
    %562 = vmatpush.bf16.msra.mxu0 %v519
    %563 = vmatpush.bf16.msra.mxu0 %v516
    %564 = vmatpush.bf16.msra.mxu0 %v513
    %565 = vmatpush.bf16.msra.mxu0 %v510
    %566 = vmatmul.bf16.gmra.mxu0 %v422
    %v567 = vpop.f32.mrf.mxu0
    %v568 = vadd.f32 %v329, %v567
    %v569 = vpop.f32.mrf.mxu0
    %v570 = vadd.f32 %v331, %v569
    %571 = vmatmul.bf16.gmra.mxu0 %v423
    %v572 = vpop.f32.mrf.mxu0
    %v573 = vadd.f32 %v334, %v572
    %v574 = vpop.f32.mrf.mxu0
    %v575 = vadd.f32 %v336, %v574
    %576 = vmatmul.bf16.gmra.mxu0 %v424
    %v577 = vpop.f32.mrf.mxu0
    %v578 = vadd.f32 %v339, %v577
    %v579 = vpop.f32.mrf.mxu0
    %v580 = vadd.f32 %v341, %v579
    %581 = vmatmul.bf16.gmra.mxu0 %v425
    %v582 = vpop.f32.mrf.mxu0
    %v583 = vadd.f32 %v344, %v582
    %v584 = vpop.f32.mrf.mxu0
    %v585 = vadd.f32 %v346, %v584
    %586 = vdwg.mxu0
    %587 = vmatpush.bf16.msra.mxu0 %v532
    %588 = vmatpush.bf16.msra.mxu0 %v529
    %589 = vmatpush.bf16.msra.mxu0 %v526
    %590 = vmatpush.bf16.msra.mxu0 %v523
    %591 = vmatpush.bf16.msra.mxu0 %v520
    %592 = vmatpush.bf16.msra.mxu0 %v517
    %593 = vmatpush.bf16.msra.mxu0 %v514
    %594 = vmatpush.bf16.msra.mxu0 %v511
    %595 = vmatmul.bf16.gmra.mxu0 %v422
    %v596 = vpop.f32.mrf.mxu0
    %v597 = vadd.f32 %v358, %v596
    %v598 = vpop.f32.mrf.mxu0
    %v599 = vadd.f32 %v360, %v598
    %600 = vmatmul.bf16.gmra.mxu0 %v423
    %v601 = vpop.f32.mrf.mxu0
    %v602 = vadd.f32 %v363, %v601
    %v603 = vpop.f32.mrf.mxu0
    %v604 = vadd.f32 %v365, %v603
    %605 = vmatmul.bf16.gmra.mxu0 %v424
    %v606 = vpop.f32.mrf.mxu0
    %v607 = vadd.f32 %v368, %v606
    %v608 = vpop.f32.mrf.mxu0
    %v609 = vadd.f32 %v370, %v608
    %610 = vmatmul.bf16.gmra.mxu0 %v425
    %v611 = vpop.f32.mrf.mxu0
    %v612 = vadd.f32 %v373, %v611
    %v613 = vpop.f32.mrf.mxu0
    %v614 = vadd.f32 %v375, %v613
    %615 = vdwg.mxu0
    %616 = vmatpush.bf16.msra.mxu0 %v533
    %617 = vmatpush.bf16.msra.mxu0 %v530
    %618 = vmatpush.bf16.msra.mxu0 %v527
    %619 = vmatpush.bf16.msra.mxu0 %v524
    %620 = vmatpush.bf16.msra.mxu0 %v521
    %621 = vmatpush.bf16.msra.mxu0 %v518
    %622 = vmatpush.bf16.msra.mxu0 %v515
    %623 = vmatpush.bf16.msra.mxu0 %v512
    %624 = vmatmul.bf16.gmra.mxu0 %v422
    %v625 = vpop.f32.mrf.mxu0
    %v626 = vadd.f32 %v387, %v625
    %v627 = vpop.f32.mrf.mxu0
    %v628 = vadd.f32 %v389, %v627
    %629 = vmatmul.bf16.gmra.mxu0 %v423
    %v630 = vpop.f32.mrf.mxu0
    %v631 = vadd.f32 %v392, %v630
    %v632 = vpop.f32.mrf.mxu0
    %v633 = vadd.f32 %v394, %v632
    %634 = vmatmul.bf16.gmra.mxu0 %v424
    %v635 = vpop.f32.mrf.mxu0
    %v636 = vadd.f32 %v397, %v635
    %v637 = vpop.f32.mrf.mxu0
    %v638 = vadd.f32 %v399, %v637
    %639 = vmatmul.bf16.gmra.mxu0 %v425
    %v640 = vpop.f32.mrf.mxu0
    %v641 = vadd.f32 %v402, %v640
    %v642 = vpop.f32.mrf.mxu0
    %v643 = vadd.f32 %v404, %v642
    %644 = vdwg.mxu0
    %v645 = vld [vmem:[%s4] sm:$0x7]
    %v647 = vperm.slane %v645, 0
    %v648 = vperm.slane %v645, 1
    %v649 = vperm.slane %v645, 2
    %v653 = vadd.f32 %v568, %v647
    %v654 = vadd.f32 %v597, %v648
    %v655 = vadd.f32 %v626, %v649
    %v656 = vadd.f32 %v570, %v647
    %v657 = vadd.f32 %v599, %v648
    %v658 = vadd.f32 %v628, %v649
    %v659 = vadd.f32 %v573, %v647
    %v660 = vadd.f32 %v602, %v648
    %v661 = vadd.f32 %v631, %v649
    %v662 = vadd.f32 %v575, %v647
    %v663 = vadd.f32 %v604, %v648
    %v664 = vadd.f32 %v633, %v649
    %v665 = vadd.f32 %v578, %v647
    %v666 = vadd.f32 %v607, %v648
    %v667 = vadd.f32 %v636, %v649
    %v668 = vadd.f32 %v580, %v647
    %v669 = vadd.f32 %v609, %v648
    %v670 = vadd.f32 %v638, %v649
    %v671 = vadd.f32 %v583, %v647
    %v672 = vadd.f32 %v612, %v648
    %v673 = vadd.f32 %v641, %v649
    %v674 = vadd.f32 %v585, %v647
    %v675 = vadd.f32 %v614, %v648
    %v676 = vadd.f32 %v643, %v649
    %677 = vst [vmem:[#allocation2] sm:$0xff] %v653
    %678 = vst [vmem:[#allocation2 + $0x8] sm:$0xff] %v654
    %679 = vst [vmem:[#allocation2 + $0x10] sm:$0xff] %v655
    %680 = vst [vmem:[#allocation2 + $0x18] sm:$0xff] %v656
    %681 = vst [vmem:[#allocation2 + $0x20] sm:$0xff] %v657
    %682 = vst [vmem:[#allocation2 + $0x28] sm:$0xff] %v658
    %683 = vst [vmem:[#allocation2 + $0x30] sm:$0xff] %v659
    %684 = vst [vmem:[#allocation2 + $0x38] sm:$0xff] %v660
    %685 = vst [vmem:[#allocation2 + $0x40] sm:$0xff] %v661
    %686 = vst [vmem:[#allocation2 + $0x48] sm:$0xff] %v662
    %687 = vst [vmem:[#allocation2 + $0x50] sm:$0xff] %v663
    %688 = vst [vmem:[#allocation2 + $0x58] sm:$0xff] %v664
    %689 = vst [vmem:[#allocation2 + $0x60] sm:$0xff] %v665
    %690 = vst [vmem:[#allocation2 + $0x68] sm:$0xff] %v666
    %691 = vst [vmem:[#allocation2 + $0x70] sm:$0xff] %v667
    %692 = vst [vmem:[#allocation2 + $0x78] sm:$0xff] %v668
    %693 = vst [vmem:[#allocation2 + $0x80] sm:$0xff] %v669
    %694 = vst [vmem:[#allocation2 + $0x88] sm:$0xff] %v670
    %695 = vst [vmem:[#allocation2 + $0x90] sm:$0xff] %v671
    %696 = vst [vmem:[#allocation2 + $0x98] sm:$0xff] %v672
    %697 = vst [vmem:[#allocation2 + $0xa0] sm:$0xff] %v673
    %698 = vst [vmem:[#allocation2 + $0xa8] sm:$0xff] %v674
    %699 = vst [vmem:[#allocation2 + $0xb0] sm:$0xff] %v675
    %700 = vst [vmem:[#allocation2 + $0xb8] sm:$0xff] %v676
    %v701 = vld [vmem:[#allocation7] sm:$0xff]
    %v702 = vld [vmem:[#allocation7 + $0x8] sm:$0xf]
    %v703 = vld [vmem:[#allocation7 + $0xc] sm:$0xff]
    %v704 = vld [vmem:[#allocation7 + $0x14] sm:$0xf]
    %v705 = vld [vmem:[#allocation7 + $0x18] sm:$0xff]
    %v706 = vld [vmem:[#allocation7 + $0x20] sm:$0xf]
    %v707 = vld [vmem:[#allocation7 + $0x24] sm:$0xff]
    %v708 = vld [vmem:[#allocation7 + $0x2c] sm:$0xf]
    %v709 = vld [vmem:[#allocation7 + $0x30] sm:$0xff]
    %v710 = vld [vmem:[#allocation7 + $0x38] sm:$0xf]
    %v711 = vld [vmem:[#allocation7 + $0x3c] sm:$0xff]
    %v712 = vld [vmem:[#allocation7 + $0x44] sm:$0xf]
    %v713 = vld [vmem:[#allocation7 + $0x48] sm:$0xff]
    %v714 = vld [vmem:[#allocation7 + $0x50] sm:$0xf]
    %v715 = vld [vmem:[#allocation7 + $0x54] sm:$0xff]
    %v716 = vld [vmem:[#allocation7 + $0x5c] sm:$0xf]
    %v717 = vld [vmem:[#allocation7 + $0x60] sm:$0xff]
    %v718 = vld [vmem:[#allocation7 + $0x68] sm:$0xf]
    %v719 = vld [vmem:[#allocation7 + $0x6c] sm:$0xff]
    %v720 = vld [vmem:[#allocation7 + $0x74] sm:$0xf]
    %v721 = vld [vmem:[#allocation7 + $0x78] sm:$0xff]
    %v722 = vld [vmem:[#allocation7 + $0x80] sm:$0xf]
    %v723 = vld [vmem:[#allocation7 + $0x84] sm:$0xff]
    %v724 = vld [vmem:[#allocation7 + $0x8c] sm:$0xf]
    %v725 = vld [vmem:[#allocation7 + $0x90] sm:$0xff]
    %v726 = vld [vmem:[#allocation7 + $0x98] sm:$0xf]
    %v727 = vld [vmem:[#allocation7 + $0x9c] sm:$0xff]
    %v728 = vld [vmem:[#allocation7 + $0xa4] sm:$0xf]
    %v729 = vld [vmem:[#allocation7 + $0xa8] sm:$0xff]
    %v730 = vld [vmem:[#allocation7 + $0xb0] sm:$0xf]
    %v731 = vld [vmem:[#allocation7 + $0xb4] sm:$0xff]
    %v732 = vld [vmem:[#allocation7 + $0xbc] sm:$0xf]
    %v733 = vld [vmem:[#allocation7 + $0xc0] sm:$0xff]
    %v734 = vld [vmem:[#allocation7 + $0xc8] sm:$0xf]
    %v735 = vld [vmem:[#allocation7 + $0xcc] sm:$0xff]
    %v736 = vld [vmem:[#allocation7 + $0xd4] sm:$0xf]
    %v737 = vld [vmem:[#allocation7 + $0xd8] sm:$0xff]
    %v738 = vld [vmem:[#allocation7 + $0xe0] sm:$0xf]
    %v739 = vld [vmem:[#allocation7 + $0xe4] sm:$0xff]
    %v740 = vld [vmem:[#allocation7 + $0xec] sm:$0xf]
    %v741 = vld [vmem:[#allocation7 + $0xf0] sm:$0xff]
    %v742 = vld [vmem:[#allocation7 + $0xf8] sm:$0xf]
    %v743 = vld [vmem:[#allocation7 + $0xfc] sm:$0xff]
    %v744 = vld [vmem:[#allocation7 + $0x104] sm:$0xf]
    %v745 = vld [vmem:[#allocation7 + $0x108] sm:$0xff]
    %v746 = vld [vmem:[#allocation7 + $0x110] sm:$0xf]
    %v747 = vld [vmem:[#allocation7 + $0x114] sm:$0xff]
    %v748 = vld [vmem:[#allocation7 + $0x11c] sm:$0xf]
    %v749 = vld [vmem:[#allocation7 + $0x120] sm:$0xff]
    %v750 = vld [vmem:[#allocation7 + $0x128] sm:$0xf]
    %v751 = vld [vmem:[#allocation7 + $0x12c] sm:$0xff]
    %v752 = vld [vmem:[#allocation7 + $0x134] sm:$0xf]
    %v753 = vld [vmem:[#allocation7 + $0x138] sm:$0xff]
    %v754 = vld [vmem:[#allocation7 + $0x140] sm:$0xf]
    %v755 = vld [vmem:[#allocation7 + $0x144] sm:$0xff]
    %v756 = vld [vmem:[#allocation7 + $0x14c] sm:$0xf]
    %v757 = vld [vmem:[#allocation7 + $0x150] sm:$0xff]
    %v758 = vld [vmem:[#allocation7 + $0x158] sm:$0xf]
    %v759 = vld [vmem:[#allocation7 + $0x15c] sm:$0xff]
    %v760 = vld [vmem:[#allocation7 + $0x164] sm:$0xf]
    %v761 = vld [vmem:[#allocation7 + $0x168] sm:$0xff]
    %v762 = vld [vmem:[#allocation7 + $0x170] sm:$0xf]
    %v763 = vld [vmem:[#allocation7 + $0x174] sm:$0xff]
    %v764 = vld [vmem:[#allocation7 + $0x17c] sm:$0xf]
    %v797 = vunpack.c.l.b16 %v733
    %v798 = vunpack.c.h.b16 %v733
    %v799 = vunpack.c.l.b16 %v734
    %v800 = vunpack.c.l.b16 %v735
    %v801 = vunpack.c.h.b16 %v735
    %v802 = vunpack.c.l.b16 %v736
    %v803 = vunpack.c.l.b16 %v737
    %v804 = vunpack.c.h.b16 %v737
    %v805 = vunpack.c.l.b16 %v738
    %v806 = vunpack.c.l.b16 %v739
    %v807 = vunpack.c.h.b16 %v739
    %v808 = vunpack.c.l.b16 %v740
    %v809 = vunpack.c.l.b16 %v741
    %v810 = vunpack.c.h.b16 %v741
    %v811 = vunpack.c.l.b16 %v742
    %v812 = vunpack.c.l.b16 %v743
    %v813 = vunpack.c.h.b16 %v743
    %v814 = vunpack.c.l.b16 %v744
    %v815 = vunpack.c.l.b16 %v745
    %v816 = vunpack.c.h.b16 %v745
    %v817 = vunpack.c.l.b16 %v746
    %v818 = vunpack.c.l.b16 %v747
    %v819 = vunpack.c.h.b16 %v747
    %v820 = vunpack.c.l.b16 %v748
    %v821 = vunpack.c.l.b16 %v749
    %v822 = vunpack.c.h.b16 %v749
    %v823 = vunpack.c.l.b16 %v750
    %v824 = vunpack.c.l.b16 %v751
    %v825 = vunpack.c.h.b16 %v751
    %v826 = vunpack.c.l.b16 %v752
    %v827 = vunpack.c.l.b16 %v753
    %v828 = vunpack.c.h.b16 %v753
    %v829 = vunpack.c.l.b16 %v754
    %v830 = vunpack.c.l.b16 %v755
    %v831 = vunpack.c.h.b16 %v755
    %v832 = vunpack.c.l.b16 %v756
    %v833 = vunpack.c.l.b16 %v757
    %v834 = vunpack.c.h.b16 %v757
    %v835 = vunpack.c.l.b16 %v758
    %v836 = vunpack.c.l.b16 %v759
    %v837 = vunpack.c.h.b16 %v759
    %v838 = vunpack.c.l.b16 %v760
    %v839 = vunpack.c.l.b16 %v761
    %v840 = vunpack.c.h.b16 %v761
    %v841 = vunpack.c.l.b16 %v762
    %v842 = vunpack.c.l.b16 %v763
    %v843 = vunpack.c.h.b16 %v763
    %v844 = vunpack.c.l.b16 %v764
    %v845 = vpack.c.b16 %v800, %v797
    %v846 = vpack.c.b16 %v801, %v798
    %v847 = vpack.c.b16 %v802, %v799
    %v848 = vpack.c.b16 %v806, %v803
    %v849 = vpack.c.b16 %v807, %v804
    %v850 = vpack.c.b16 %v808, %v805
    %v851 = vpack.c.b16 %v812, %v809
    %v852 = vpack.c.b16 %v813, %v810
    %v853 = vpack.c.b16 %v814, %v811
    %v854 = vpack.c.b16 %v818, %v815
    %v855 = vpack.c.b16 %v819, %v816
    %v856 = vpack.c.b16 %v820, %v817
    %v857 = vpack.c.b16 %v824, %v821
    %v858 = vpack.c.b16 %v825, %v822
    %v859 = vpack.c.b16 %v826, %v823
    %v860 = vpack.c.b16 %v830, %v827
    %v861 = vpack.c.b16 %v831, %v828
    %v862 = vpack.c.b16 %v832, %v829
    %v863 = vpack.c.b16 %v836, %v833
    %v864 = vpack.c.b16 %v837, %v834
    %v865 = vpack.c.b16 %v838, %v835
    %v866 = vpack.c.b16 %v842, %v839
    %v867 = vpack.c.b16 %v843, %v840
    %v868 = vpack.c.b16 %v844, %v841
    %893 = vmatpush.bf16.msra.mxu0 %v866
    %894 = vmatpush.bf16.msra.mxu0 %v863
    %895 = vmatpush.bf16.msra.mxu0 %v860
    %896 = vmatpush.bf16.msra.mxu0 %v857
    %897 = vmatpush.bf16.msra.mxu0 %v854
    %898 = vmatpush.bf16.msra.mxu0 %v851
    %899 = vmatpush.bf16.msra.mxu0 %v848
    %900 = vmatpush.bf16.msra.mxu0 %v845
    %901 = vmatmul.bf16.gmra.mxu0 %v183
    %v902 = vpop.f32.mrf.mxu0
    %v903 = vadd.f32 0.0, %v902
    %v904 = vpop.f32.mrf.mxu0
    %v905 = vadd.f32 0.0, %v904
    %906 = vmatmul.bf16.gmra.mxu0 %v184
    %v907 = vpop.f32.mrf.mxu0
    %v908 = vadd.f32 0.0, %v907
    %v909 = vpop.f32.mrf.mxu0
    %v910 = vadd.f32 0.0, %v909
    %911 = vmatmul.bf16.gmra.mxu0 %v185
    %v912 = vpop.f32.mrf.mxu0
    %v913 = vadd.f32 0.0, %v912
    %v914 = vpop.f32.mrf.mxu0
    %v915 = vadd.f32 0.0, %v914
    %916 = vmatmul.bf16.gmra.mxu0 %v186
    %v917 = vpop.f32.mrf.mxu0
    %v918 = vadd.f32 0.0, %v917
    %v919 = vpop.f32.mrf.mxu0
    %v920 = vadd.f32 0.0, %v919
    %921 = vdwg.mxu0
    %922 = vmatpush.bf16.msra.mxu0 %v867
    %923 = vmatpush.bf16.msra.mxu0 %v864
    %924 = vmatpush.bf16.msra.mxu0 %v861
    %925 = vmatpush.bf16.msra.mxu0 %v858
    %926 = vmatpush.bf16.msra.mxu0 %v855
    %927 = vmatpush.bf16.msra.mxu0 %v852
    %928 = vmatpush.bf16.msra.mxu0 %v849
    %929 = vmatpush.bf16.msra.mxu0 %v846
    %930 = vmatmul.bf16.gmra.mxu0 %v183
    %v931 = vpop.f32.mrf.mxu0
    %v932 = vadd.f32 0.0, %v931
    %v933 = vpop.f32.mrf.mxu0
    %v934 = vadd.f32 0.0, %v933
    %935 = vmatmul.bf16.gmra.mxu0 %v184
    %v936 = vpop.f32.mrf.mxu0
    %v937 = vadd.f32 0.0, %v936
    %v938 = vpop.f32.mrf.mxu0
    %v939 = vadd.f32 0.0, %v938
    %940 = vmatmul.bf16.gmra.mxu0 %v185
    %v941 = vpop.f32.mrf.mxu0
    %v942 = vadd.f32 0.0, %v941
    %v943 = vpop.f32.mrf.mxu0
    %v944 = vadd.f32 0.0, %v943
    %945 = vmatmul.bf16.gmra.mxu0 %v186
    %v946 = vpop.f32.mrf.mxu0
    %v947 = vadd.f32 0.0, %v946
    %v948 = vpop.f32.mrf.mxu0
    %v949 = vadd.f32 0.0, %v948
    %950 = vdwg.mxu0
    %951 = vmatpush.bf16.msra.mxu0 %v868
    %952 = vmatpush.bf16.msra.mxu0 %v865
    %953 = vmatpush.bf16.msra.mxu0 %v862
    %954 = vmatpush.bf16.msra.mxu0 %v859
    %955 = vmatpush.bf16.msra.mxu0 %v856
    %956 = vmatpush.bf16.msra.mxu0 %v853
    %957 = vmatpush.bf16.msra.mxu0 %v850
    %958 = vmatpush.bf16.msra.mxu0 %v847
    %959 = vmatmul.bf16.gmra.mxu0 %v183
    %v960 = vpop.f32.mrf.mxu0
    %v961 = vadd.f32 0.0, %v960
    %v962 = vpop.f32.mrf.mxu0
    %v963 = vadd.f32 0.0, %v962
    %964 = vmatmul.bf16.gmra.mxu0 %v184
    %v965 = vpop.f32.mrf.mxu0
    %v966 = vadd.f32 0.0, %v965
    %v967 = vpop.f32.mrf.mxu0
    %v968 = vadd.f32 0.0, %v967
    %969 = vmatmul.bf16.gmra.mxu0 %v185
    %v970 = vpop.f32.mrf.mxu0
    %v971 = vadd.f32 0.0, %v970
    %v972 = vpop.f32.mrf.mxu0
    %v973 = vadd.f32 0.0, %v972
    %974 = vmatmul.bf16.gmra.mxu0 %v186
    %v975 = vpop.f32.mrf.mxu0
    %v976 = vadd.f32 0.0, %v975
    %v977 = vpop.f32.mrf.mxu0
    %v978 = vadd.f32 0.0, %v977
    %979 = vdwg.mxu0
    %v1012 = vunpack.c.l.b16 %v701
    %v1013 = vunpack.c.h.b16 %v701
    %v1014 = vunpack.c.l.b16 %v702
    %v1015 = vunpack.c.l.b16 %v703
    %v1016 = vunpack.c.h.b16 %v703
    %v1017 = vunpack.c.l.b16 %v704
    %v1018 = vunpack.c.l.b16 %v705
    %v1019 = vunpack.c.h.b16 %v705
    %v1020 = vunpack.c.l.b16 %v706
    %v1021 = vunpack.c.l.b16 %v707
    %v1022 = vunpack.c.h.b16 %v707
    %v1023 = vunpack.c.l.b16 %v708
    %v1024 = vunpack.c.l.b16 %v709
    %v1025 = vunpack.c.h.b16 %v709
    %v1026 = vunpack.c.l.b16 %v710
    %v1027 = vunpack.c.l.b16 %v711
    %v1028 = vunpack.c.h.b16 %v711
    %v1029 = vunpack.c.l.b16 %v712
    %v1030 = vunpack.c.l.b16 %v713
    %v1031 = vunpack.c.h.b16 %v713
    %v1032 = vunpack.c.l.b16 %v714
    %v1033 = vunpack.c.l.b16 %v715
    %v1034 = vunpack.c.h.b16 %v715
    %v1035 = vunpack.c.l.b16 %v716
    %v1036 = vunpack.c.l.b16 %v717
    %v1037 = vunpack.c.h.b16 %v717
    %v1038 = vunpack.c.l.b16 %v718
    %v1039 = vunpack.c.l.b16 %v719
    %v1040 = vunpack.c.h.b16 %v719
    %v1041 = vunpack.c.l.b16 %v720
    %v1042 = vunpack.c.l.b16 %v721
    %v1043 = vunpack.c.h.b16 %v721
    %v1044 = vunpack.c.l.b16 %v722
    %v1045 = vunpack.c.l.b16 %v723
    %v1046 = vunpack.c.h.b16 %v723
    %v1047 = vunpack.c.l.b16 %v724
    %v1048 = vunpack.c.l.b16 %v725
    %v1049 = vunpack.c.h.b16 %v725
    %v1050 = vunpack.c.l.b16 %v726
    %v1051 = vunpack.c.l.b16 %v727
    %v1052 = vunpack.c.h.b16 %v727
    %v1053 = vunpack.c.l.b16 %v728
    %v1054 = vunpack.c.l.b16 %v729
    %v1055 = vunpack.c.h.b16 %v729
    %v1056 = vunpack.c.l.b16 %v730
    %v1057 = vunpack.c.l.b16 %v731
    %v1058 = vunpack.c.h.b16 %v731
    %v1059 = vunpack.c.l.b16 %v732
    %v1060 = vpack.c.b16 %v1015, %v1012
    %v1061 = vpack.c.b16 %v1016, %v1013
    %v1062 = vpack.c.b16 %v1017, %v1014
    %v1063 = vpack.c.b16 %v1021, %v1018
    %v1064 = vpack.c.b16 %v1022, %v1019
    %v1065 = vpack.c.b16 %v1023, %v1020
    %v1066 = vpack.c.b16 %v1027, %v1024
    %v1067 = vpack.c.b16 %v1028, %v1025
    %v1068 = vpack.c.b16 %v1029, %v1026
    %v1069 = vpack.c.b16 %v1033, %v1030
    %v1070 = vpack.c.b16 %v1034, %v1031
    %v1071 = vpack.c.b16 %v1035, %v1032
    %v1072 = vpack.c.b16 %v1039, %v1036
    %v1073 = vpack.c.b16 %v1040, %v1037
    %v1074 = vpack.c.b16 %v1041, %v1038
    %v1075 = vpack.c.b16 %v1045, %v1042
    %v1076 = vpack.c.b16 %v1046, %v1043
    %v1077 = vpack.c.b16 %v1047, %v1044
    %v1078 = vpack.c.b16 %v1051, %v1048
    %v1079 = vpack.c.b16 %v1052, %v1049
    %v1080 = vpack.c.b16 %v1053, %v1050
    %v1081 = vpack.c.b16 %v1057, %v1054
    %v1082 = vpack.c.b16 %v1058, %v1055
    %v1083 = vpack.c.b16 %v1059, %v1056
    %1108 = vmatpush.bf16.msra.mxu0 %v1081
    %1109 = vmatpush.bf16.msra.mxu0 %v1078
    %1110 = vmatpush.bf16.msra.mxu0 %v1075
    %1111 = vmatpush.bf16.msra.mxu0 %v1072
    %1112 = vmatpush.bf16.msra.mxu0 %v1069
    %1113 = vmatpush.bf16.msra.mxu0 %v1066
    %1114 = vmatpush.bf16.msra.mxu0 %v1063
    %1115 = vmatpush.bf16.msra.mxu0 %v1060
    %1116 = vmatmul.bf16.gmra.mxu0 %v422
    %v1117 = vpop.f32.mrf.mxu0
    %v1118 = vadd.f32 %v903, %v1117
    %v1119 = vpop.f32.mrf.mxu0
    %v1120 = vadd.f32 %v905, %v1119
    %1121 = vmatmul.bf16.gmra.mxu0 %v423
    %v1122 = vpop.f32.mrf.mxu0
    %v1123 = vadd.f32 %v908, %v1122
    %v1124 = vpop.f32.mrf.mxu0
    %v1125 = vadd.f32 %v910, %v1124
    %1126 = vmatmul.bf16.gmra.mxu0 %v424
    %v1127 = vpop.f32.mrf.mxu0
    %v1128 = vadd.f32 %v913, %v1127
    %v1129 = vpop.f32.mrf.mxu0
    %v1130 = vadd.f32 %v915, %v1129
    %1131 = vmatmul.bf16.gmra.mxu0 %v425
    %v1132 = vpop.f32.mrf.mxu0
    %v1133 = vadd.f32 %v918, %v1132
    %v1134 = vpop.f32.mrf.mxu0
    %v1135 = vadd.f32 %v920, %v1134
    %1136 = vdwg.mxu0
    %1137 = vmatpush.bf16.msra.mxu0 %v1082
    %1138 = vmatpush.bf16.msra.mxu0 %v1079
    %1139 = vmatpush.bf16.msra.mxu0 %v1076
    %1140 = vmatpush.bf16.msra.mxu0 %v1073
    %1141 = vmatpush.bf16.msra.mxu0 %v1070
    %1142 = vmatpush.bf16.msra.mxu0 %v1067
    %1143 = vmatpush.bf16.msra.mxu0 %v1064
    %1144 = vmatpush.bf16.msra.mxu0 %v1061
    %1145 = vmatmul.bf16.gmra.mxu0 %v422
    %v1146 = vpop.f32.mrf.mxu0
    %v1147 = vadd.f32 %v932, %v1146
    %v1148 = vpop.f32.mrf.mxu0
    %v1149 = vadd.f32 %v934, %v1148
    %1150 = vmatmul.bf16.gmra.mxu0 %v423
    %v1151 = vpop.f32.mrf.mxu0
    %v1152 = vadd.f32 %v937, %v1151
    %v1153 = vpop.f32.mrf.mxu0
    %v1154 = vadd.f32 %v939, %v1153
    %1155 = vmatmul.bf16.gmra.mxu0 %v424
    %v1156 = vpop.f32.mrf.mxu0
    %v1157 = vadd.f32 %v942, %v1156
    %v1158 = vpop.f32.mrf.mxu0
    %v1159 = vadd.f32 %v944, %v1158
    %1160 = vmatmul.bf16.gmra.mxu0 %v425
    %v1161 = vpop.f32.mrf.mxu0
    %v1162 = vadd.f32 %v947, %v1161
    %v1163 = vpop.f32.mrf.mxu0
    %v1164 = vadd.f32 %v949, %v1163
    %1165 = vdwg.mxu0
    %1166 = vmatpush.bf16.msra.mxu0 %v1083
    %1167 = vmatpush.bf16.msra.mxu0 %v1080
    %1168 = vmatpush.bf16.msra.mxu0 %v1077
    %1169 = vmatpush.bf16.msra.mxu0 %v1074
    %1170 = vmatpush.bf16.msra.mxu0 %v1071
    %1171 = vmatpush.bf16.msra.mxu0 %v1068
    %1172 = vmatpush.bf16.msra.mxu0 %v1065
    %1173 = vmatpush.bf16.msra.mxu0 %v1062
    %1174 = vmatmul.bf16.gmra.mxu0 %v422
    %v1175 = vpop.f32.mrf.mxu0
    %v1176 = vadd.f32 %v961, %v1175
    %v1177 = vpop.f32.mrf.mxu0
    %v1178 = vadd.f32 %v963, %v1177
    %1179 = vmatmul.bf16.gmra.mxu0 %v423
    %v1180 = vpop.f32.mrf.mxu0
    %v1181 = vadd.f32 %v966, %v1180
    %v1182 = vpop.f32.mrf.mxu0
    %v1183 = vadd.f32 %v968, %v1182
    %1184 = vmatmul.bf16.gmra.mxu0 %v424
    %v1185 = vpop.f32.mrf.mxu0
    %v1186 = vadd.f32 %v971, %v1185
    %v1187 = vpop.f32.mrf.mxu0
    %v1188 = vadd.f32 %v973, %v1187
    %1189 = vmatmul.bf16.gmra.mxu0 %v425
    %v1190 = vpop.f32.mrf.mxu0
    %v1191 = vadd.f32 %v976, %v1190
    %v1192 = vpop.f32.mrf.mxu0
    %v1193 = vadd.f32 %v978, %v1192
    %1194 = vdwg.mxu0
    %v1195 = vld [vmem:[%s5] sm:$0x7]
    %v1197 = vperm.slane %v1195, 0
    %v1198 = vperm.slane %v1195, 1
    %v1199 = vperm.slane %v1195, 2
    %v1203 = vadd.f32 %v1118, %v1197
    %v1204 = vadd.f32 %v1147, %v1198
    %v1205 = vadd.f32 %v1176, %v1199
    %v1206 = vadd.f32 %v1120, %v1197
    %v1207 = vadd.f32 %v1149, %v1198
    %v1208 = vadd.f32 %v1178, %v1199
    %v1209 = vadd.f32 %v1123, %v1197
    %v1210 = vadd.f32 %v1152, %v1198
    %v1211 = vadd.f32 %v1181, %v1199
    %v1212 = vadd.f32 %v1125, %v1197
    %v1213 = vadd.f32 %v1154, %v1198
    %v1214 = vadd.f32 %v1183, %v1199
    %v1215 = vadd.f32 %v1128, %v1197
    %v1216 = vadd.f32 %v1157, %v1198
    %v1217 = vadd.f32 %v1186, %v1199
    %v1218 = vadd.f32 %v1130, %v1197
    %v1219 = vadd.f32 %v1159, %v1198
    %v1220 = vadd.f32 %v1188, %v1199
    %v1221 = vadd.f32 %v1133, %v1197
    %v1222 = vadd.f32 %v1162, %v1198
    %v1223 = vadd.f32 %v1191, %v1199
    %v1224 = vadd.f32 %v1135, %v1197
    %v1225 = vadd.f32 %v1164, %v1198
    %v1226 = vadd.f32 %v1193, %v1199
    %1227 = vst [vmem:[#allocation3] sm:$0xff] %v1203
    %1228 = vst [vmem:[#allocation3 + $0x8] sm:$0xff] %v1204
    %1229 = vst [vmem:[#allocation3 + $0x10] sm:$0xff] %v1205
    %1230 = vst [vmem:[#allocation3 + $0x18] sm:$0xff] %v1206
    %1231 = vst [vmem:[#allocation3 + $0x20] sm:$0xff] %v1207
    %1232 = vst [vmem:[#allocation3 + $0x28] sm:$0xff] %v1208
    %1233 = vst [vmem:[#allocation3 + $0x30] sm:$0xff] %v1209
    %1234 = vst [vmem:[#allocation3 + $0x38] sm:$0xff] %v1210
    %1235 = vst [vmem:[#allocation3 + $0x40] sm:$0xff] %v1211
    %1236 = vst [vmem:[#allocation3 + $0x48] sm:$0xff] %v1212
    %1237 = vst [vmem:[#allocation3 + $0x50] sm:$0xff] %v1213
    %1238 = vst [vmem:[#allocation3 + $0x58] sm:$0xff] %v1214
    %1239 = vst [vmem:[#allocation3 + $0x60] sm:$0xff] %v1215
    %1240 = vst [vmem:[#allocation3 + $0x68] sm:$0xff] %v1216
    %1241 = vst [vmem:[#allocation3 + $0x70] sm:$0xff] %v1217
    %1242 = vst [vmem:[#allocation3 + $0x78] sm:$0xff] %v1218
    %1243 = vst [vmem:[#allocation3 + $0x80] sm:$0xff] %v1219
    %1244 = vst [vmem:[#allocation3 + $0x88] sm:$0xff] %v1220
    %1245 = vst [vmem:[#allocation3 + $0x90] sm:$0xff] %v1221
    %1246 = vst [vmem:[#allocation3 + $0x98] sm:$0xff] %v1222
    %1247 = vst [vmem:[#allocation3 + $0xa0] sm:$0xff] %v1223
    %1248 = vst [vmem:[#allocation3 + $0xa8] sm:$0xff] %v1224
    %1249 = vst [vmem:[#allocation3 + $0xb0] sm:$0xff] %v1225
    %1250 = vst [vmem:[#allocation3 + $0xb8] sm:$0xff] %v1226
    %v1251 = vld [vmem:[%s7] sm:$0x1]
    %v1253 = vperm.slane %v1251, 0
    %v1255 = vld [vmem:[%s8] sm:$0x1]
    %v1257 = vperm.slane %v1255, 0
    %v1259 = vld [vmem:[#allocation9] sm:$0xff]
    %v1260 = vld [vmem:[#allocation9 + $0x8] sm:$0xf]
    %v1261 = vld [vmem:[#allocation9 + $0xc] sm:$0xff]
    %v1262 = vld [vmem:[#allocation9 + $0x14] sm:$0xf]
    %v1263 = vld [vmem:[#allocation9 + $0x18] sm:$0xff]
    %v1264 = vld [vmem:[#allocation9 + $0x20] sm:$0xf]
    %v1265 = vld [vmem:[#allocation9 + $0x24] sm:$0xff]
    %v1266 = vld [vmem:[#allocation9 + $0x2c] sm:$0xf]
    %v1267 = vld [vmem:[#allocation9 + $0x30] sm:$0xff]
    %v1268 = vld [vmem:[#allocation9 + $0x38] sm:$0xf]
    %v1269 = vld [vmem:[#allocation9 + $0x3c] sm:$0xff]
    %v1270 = vld [vmem:[#allocation9 + $0x44] sm:$0xf]
    %v1271 = vld [vmem:[#allocation9 + $0x48] sm:$0xff]
    %v1272 = vld [vmem:[#allocation9 + $0x50] sm:$0xf]
    %v1273 = vld [vmem:[#allocation9 + $0x54] sm:$0xff]
    %v1274 = vld [vmem:[#allocation9 + $0x5c] sm:$0xf]
    %v1275 = vld [vmem:[#allocation9 + $0x60] sm:$0xff]
    %v1276 = vld [vmem:[#allocation9 + $0x68] sm:$0xf]
    %v1277 = vld [vmem:[#allocation9 + $0x6c] sm:$0xff]
    %v1278 = vld [vmem:[#allocation9 + $0x74] sm:$0xf]
    %v1279 = vld [vmem:[#allocation9 + $0x78] sm:$0xff]
    %v1280 = vld [vmem:[#allocation9 + $0x80] sm:$0xf]
    %v1281 = vld [vmem:[#allocation9 + $0x84] sm:$0xff]
    %v1282 = vld [vmem:[#allocation9 + $0x8c] sm:$0xf]
    %v1283 = vld [vmem:[#allocation9 + $0x90] sm:$0xff]
    %v1284 = vld [vmem:[#allocation9 + $0x98] sm:$0xf]
    %v1285 = vld [vmem:[#allocation9 + $0x9c] sm:$0xff]
    %v1286 = vld [vmem:[#allocation9 + $0xa4] sm:$0xf]
    %v1287 = vld [vmem:[#allocation9 + $0xa8] sm:$0xff]
    %v1288 = vld [vmem:[#allocation9 + $0xb0] sm:$0xf]
    %v1289 = vld [vmem:[#allocation9 + $0xb4] sm:$0xff]
    %v1290 = vld [vmem:[#allocation9 + $0xbc] sm:$0xf]
    %v1291 = vld [vmem:[#allocation9 + $0xc0] sm:$0xff]
    %v1292 = vld [vmem:[#allocation9 + $0xc8] sm:$0xf]
    %v1293 = vld [vmem:[#allocation9 + $0xcc] sm:$0xff]
    %v1294 = vld [vmem:[#allocation9 + $0xd4] sm:$0xf]
    %v1295 = vld [vmem:[#allocation9 + $0xd8] sm:$0xff]
    %v1296 = vld [vmem:[#allocation9 + $0xe0] sm:$0xf]
    %v1297 = vld [vmem:[#allocation9 + $0xe4] sm:$0xff]
    %v1298 = vld [vmem:[#allocation9 + $0xec] sm:$0xf]
    %v1299 = vld [vmem:[#allocation9 + $0xf0] sm:$0xff]
    %v1300 = vld [vmem:[#allocation9 + $0xf8] sm:$0xf]
    %v1301 = vld [vmem:[#allocation9 + $0xfc] sm:$0xff]
    %v1302 = vld [vmem:[#allocation9 + $0x104] sm:$0xf]
    %v1303 = vld [vmem:[#allocation9 + $0x108] sm:$0xff]
    %v1304 = vld [vmem:[#allocation9 + $0x110] sm:$0xf]
    %v1305 = vld [vmem:[#allocation9 + $0x114] sm:$0xff]
    %v1306 = vld [vmem:[#allocation9 + $0x11c] sm:$0xf]
    %v1307 = vld [vmem:[#allocation9 + $0x120] sm:$0xff]
    %v1308 = vld [vmem:[#allocation9 + $0x128] sm:$0xf]
    %v1309 = vld [vmem:[#allocation9 + $0x12c] sm:$0xff]
    %v1310 = vld [vmem:[#allocation9 + $0x134] sm:$0xf]
    %v1311 = vld [vmem:[#allocation9 + $0x138] sm:$0xff]
    %v1312 = vld [vmem:[#allocation9 + $0x140] sm:$0xf]
    %v1313 = vld [vmem:[#allocation9 + $0x144] sm:$0xff]
    %v1314 = vld [vmem:[#allocation9 + $0x14c] sm:$0xf]
    %v1315 = vld [vmem:[#allocation9 + $0x150] sm:$0xff]
    %v1316 = vld [vmem:[#allocation9 + $0x158] sm:$0xf]
    %v1317 = vld [vmem:[#allocation9 + $0x15c] sm:$0xff]
    %v1318 = vld [vmem:[#allocation9 + $0x164] sm:$0xf]
    %v1319 = vld [vmem:[#allocation9 + $0x168] sm:$0xff]
    %v1320 = vld [vmem:[#allocation9 + $0x170] sm:$0xf]
    %v1321 = vld [vmem:[#allocation9 + $0x174] sm:$0xff]
    %v1322 = vld [vmem:[#allocation9 + $0x17c] sm:$0xf]
    %v1323 = vld [vmem:[#allocation4] sm:$0xff]
    %v1324 = vld [vmem:[#allocation4 + $0x8] sm:$0xff]
    %v1325 = vld [vmem:[#allocation2] sm:$0xff]
    %v1326 = vld [vmem:[#allocation2 + $0x8] sm:$0xff]
    %v1327 = vld [vmem:[#allocation2 + $0x10] sm:$0xff]
    %v1328 = vld [vmem:[#allocation3 + $0xa8] sm:$0xff]
    %v1329 = vld [vmem:[#allocation3 + $0xb0] sm:$0xff]
    %v1330 = vld [vmem:[#allocation3 + $0xb8] sm:$0xff]
    %v1331 = vpack.c.bf16 0.0, %v1323
    %v1332 = vpack.c.bf16 %v1324, 0.0
    %v1397 = vunpack.c.l.b16 %v1259
    %v1398 = vunpack.c.h.b16 %v1259
    %v1399 = vunpack.c.l.b16 %v1260
    %v1400 = vunpack.c.l.b16 %v1261
    %v1401 = vunpack.c.h.b16 %v1261
    %v1402 = vunpack.c.l.b16 %v1262
    %v1403 = vunpack.c.l.b16 %v1263
    %v1404 = vunpack.c.h.b16 %v1263
    %v1405 = vunpack.c.l.b16 %v1264
    %v1406 = vunpack.c.l.b16 %v1265
    %v1407 = vunpack.c.h.b16 %v1265
    %v1408 = vunpack.c.l.b16 %v1266
    %v1409 = vunpack.c.l.b16 %v1267
    %v1410 = vunpack.c.h.b16 %v1267
    %v1411 = vunpack.c.l.b16 %v1268
    %v1412 = vunpack.c.l.b16 %v1269
    %v1413 = vunpack.c.h.b16 %v1269
    %v1414 = vunpack.c.l.b16 %v1270
    %v1415 = vunpack.c.l.b16 %v1271
    %v1416 = vunpack.c.h.b16 %v1271
    %v1417 = vunpack.c.l.b16 %v1272
    %v1418 = vunpack.c.l.b16 %v1273
    %v1419 = vunpack.c.h.b16 %v1273
    %v1420 = vunpack.c.l.b16 %v1274
    %v1421 = vunpack.c.l.b16 %v1275
    %v1422 = vunpack.c.h.b16 %v1275
    %v1423 = vunpack.c.l.b16 %v1276
    %v1424 = vunpack.c.l.b16 %v1277
    %v1425 = vunpack.c.h.b16 %v1277
    %v1426 = vunpack.c.l.b16 %v1278
    %v1427 = vunpack.c.l.b16 %v1279
    %v1428 = vunpack.c.h.b16 %v1279
    %v1429 = vunpack.c.l.b16 %v1280
    %v1430 = vunpack.c.l.b16 %v1281
    %v1431 = vunpack.c.h.b16 %v1281
    %v1432 = vunpack.c.l.b16 %v1282
    %v1433 = vunpack.c.l.b16 %v1283
    %v1434 = vunpack.c.h.b16 %v1283
    %v1435 = vunpack.c.l.b16 %v1284
    %v1436 = vunpack.c.l.b16 %v1285
    %v1437 = vunpack.c.h.b16 %v1285
    %v1438 = vunpack.c.l.b16 %v1286
    %v1439 = vunpack.c.l.b16 %v1287
    %v1440 = vunpack.c.h.b16 %v1287
    %v1441 = vunpack.c.l.b16 %v1288
    %v1442 = vunpack.c.l.b16 %v1289
    %v1443 = vunpack.c.h.b16 %v1289
    %v1444 = vunpack.c.l.b16 %v1290
    %v1445 = vunpack.c.l.b16 %v1291
    %v1446 = vunpack.c.h.b16 %v1291
    %v1447 = vunpack.c.l.b16 %v1292
    %v1448 = vunpack.c.l.b16 %v1293
    %v1449 = vunpack.c.h.b16 %v1293
    %v1450 = vunpack.c.l.b16 %v1294
    %v1451 = vunpack.c.l.b16 %v1295
    %v1452 = vunpack.c.h.b16 %v1295
    %v1453 = vunpack.c.l.b16 %v1296
    %v1454 = vunpack.c.l.b16 %v1297
    %v1455 = vunpack.c.h.b16 %v1297
    %v1456 = vunpack.c.l.b16 %v1298
    %v1457 = vunpack.c.l.b16 %v1299
    %v1458 = vunpack.c.h.b16 %v1299
    %v1459 = vunpack.c.l.b16 %v1300
    %v1460 = vunpack.c.l.b16 %v1301
    %v1461 = vunpack.c.h.b16 %v1301
    %v1462 = vunpack.c.l.b16 %v1302
    %v1463 = vunpack.c.l.b16 %v1303
    %v1464 = vunpack.c.h.b16 %v1303
    %v1465 = vunpack.c.l.b16 %v1304
    %v1466 = vunpack.c.l.b16 %v1305
    %v1467 = vunpack.c.h.b16 %v1305
    %v1468 = vunpack.c.l.b16 %v1306
    %v1469 = vunpack.c.l.b16 %v1307
    %v1470 = vunpack.c.h.b16 %v1307
    %v1471 = vunpack.c.l.b16 %v1308
    %v1472 = vunpack.c.l.b16 %v1309
    %v1473 = vunpack.c.h.b16 %v1309
    %v1474 = vunpack.c.l.b16 %v1310
    %v1475 = vunpack.c.l.b16 %v1311
    %v1476 = vunpack.c.h.b16 %v1311
    %v1477 = vunpack.c.l.b16 %v1312
    %v1478 = vunpack.c.l.b16 %v1313
    %v1479 = vunpack.c.h.b16 %v1313
    %v1480 = vunpack.c.l.b16 %v1314
    %v1481 = vunpack.c.l.b16 %v1315
    %v1482 = vunpack.c.h.b16 %v1315
    %v1483 = vunpack.c.l.b16 %v1316
    %v1484 = vunpack.c.l.b16 %v1317
    %v1485 = vunpack.c.h.b16 %v1317
    %v1486 = vunpack.c.l.b16 %v1318
    %v1487 = vunpack.c.l.b16 %v1319
    %v1488 = vunpack.c.h.b16 %v1319
    %v1489 = vunpack.c.l.b16 %v1320
    %v1490 = vunpack.c.l.b16 %v1321
    %v1491 = vunpack.c.h.b16 %v1321
    %v1492 = vunpack.c.l.b16 %v1322
    %v1493 = vpack.c.b16 %v1400, %v1397
    %v1494 = vpack.c.b16 %v1401, %v1398
    %v1495 = vpack.c.b16 %v1402, %v1399
    %v1496 = vpack.c.b16 %v1406, %v1403
    %v1497 = vpack.c.b16 %v1407, %v1404
    %v1498 = vpack.c.b16 %v1408, %v1405
    %v1499 = vpack.c.b16 %v1412, %v1409
    %v1500 = vpack.c.b16 %v1413, %v1410
    %v1501 = vpack.c.b16 %v1414, %v1411
    %v1502 = vpack.c.b16 %v1418, %v1415
    %v1503 = vpack.c.b16 %v1419, %v1416
    %v1504 = vpack.c.b16 %v1420, %v1417
    %v1505 = vpack.c.b16 %v1424, %v1421
    %v1506 = vpack.c.b16 %v1425, %v1422
    %v1507 = vpack.c.b16 %v1426, %v1423
    %v1508 = vpack.c.b16 %v1430, %v1427
    %v1509 = vpack.c.b16 %v1431, %v1428
    %v1510 = vpack.c.b16 %v1432, %v1429
    %v1511 = vpack.c.b16 %v1436, %v1433
    %v1512 = vpack.c.b16 %v1437, %v1434
    %v1513 = vpack.c.b16 %v1438, %v1435
    %v1514 = vpack.c.b16 %v1442, %v1439
    %v1515 = vpack.c.b16 %v1443, %v1440
    %v1516 = vpack.c.b16 %v1444, %v1441
    %v1517 = vpack.c.b16 %v1448, %v1445
    %v1518 = vpack.c.b16 %v1449, %v1446
    %v1519 = vpack.c.b16 %v1450, %v1447
    %v1520 = vpack.c.b16 %v1454, %v1451
    %v1521 = vpack.c.b16 %v1455, %v1452
    %v1522 = vpack.c.b16 %v1456, %v1453
    %v1523 = vpack.c.b16 %v1460, %v1457
    %v1524 = vpack.c.b16 %v1461, %v1458
    %v1525 = vpack.c.b16 %v1462, %v1459
    %v1526 = vpack.c.b16 %v1466, %v1463
    %v1527 = vpack.c.b16 %v1467, %v1464
    %v1528 = vpack.c.b16 %v1468, %v1465
    %v1529 = vpack.c.b16 %v1472, %v1469
    %v1530 = vpack.c.b16 %v1473, %v1470
    %v1531 = vpack.c.b16 %v1474, %v1471
    %v1532 = vpack.c.b16 %v1478, %v1475
    %v1533 = vpack.c.b16 %v1479, %v1476
    %v1534 = vpack.c.b16 %v1480, %v1477
    %v1535 = vpack.c.b16 %v1484, %v1481
    %v1536 = vpack.c.b16 %v1485, %v1482
    %v1537 = vpack.c.b16 %v1486, %v1483
    %v1538 = vpack.c.b16 %v1490, %v1487
    %v1539 = vpack.c.b16 %v1491, %v1488
    %v1540 = vpack.c.b16 %v1492, %v1489
    %1589 = vmatpush.bf16.msra.mxu0 %v1514
    %1590 = vmatpush.bf16.msra.mxu0 %v1511
    %1591 = vmatpush.bf16.msra.mxu0 %v1508
    %1592 = vmatpush.bf16.msra.mxu0 %v1505
    %1593 = vmatpush.bf16.msra.mxu0 %v1502
    %1594 = vmatpush.bf16.msra.mxu0 %v1499
    %1595 = vmatpush.bf16.msra.mxu0 %v1496
    %1596 = vmatpush.bf16.msra.mxu0 %v1493
    %1597 = vmatmul.bf16.gmra.mxu0 %v1331
    %v1598 = vpop.f32.mrf.mxu0
    %v1599 = vadd.f32 0.0, %v1598
    %v1600 = vpop.f32.mrf.mxu0
    %v1601 = vadd.f32 0.0, %v1600
    %1602 = vdwg.mxu0
    %1603 = vmatpush.bf16.msra.mxu0 %v1538
    %1604 = vmatpush.bf16.msra.mxu0 %v1535
    %1605 = vmatpush.bf16.msra.mxu0 %v1532
    %1606 = vmatpush.bf16.msra.mxu0 %v1529
    %1607 = vmatpush.bf16.msra.mxu0 %v1526
    %1608 = vmatpush.bf16.msra.mxu0 %v1523
    %1609 = vmatpush.bf16.msra.mxu0 %v1520
    %1610 = vmatpush.bf16.msra.mxu0 %v1517
    %1611 = vmatmul.bf16.gmra.mxu0 %v1332
    %v1612 = vpop.f32.mrf.mxu0
    %v1613 = vadd.f32 %v1599, %v1612
    %v1614 = vpop.f32.mrf.mxu0
    %v1615 = vadd.f32 %v1601, %v1614
    %1616 = vdwg.mxu0
    %1617 = vmatpush.bf16.msra.mxu0 %v1515
    %1618 = vmatpush.bf16.msra.mxu0 %v1512
    %1619 = vmatpush.bf16.msra.mxu0 %v1509
    %1620 = vmatpush.bf16.msra.mxu0 %v1506
    %1621 = vmatpush.bf16.msra.mxu0 %v1503
    %1622 = vmatpush.bf16.msra.mxu0 %v1500
    %1623 = vmatpush.bf16.msra.mxu0 %v1497
    %1624 = vmatpush.bf16.msra.mxu0 %v1494
    %1625 = vmatmul.bf16.gmra.mxu0 %v1331
    %v1626 = vpop.f32.mrf.mxu0
    %v1627 = vadd.f32 0.0, %v1626
    %v1628 = vpop.f32.mrf.mxu0
    %v1629 = vadd.f32 0.0, %v1628
    %1630 = vdwg.mxu0
    %1631 = vmatpush.bf16.msra.mxu0 %v1539
    %1632 = vmatpush.bf16.msra.mxu0 %v1536
    %1633 = vmatpush.bf16.msra.mxu0 %v1533
    %1634 = vmatpush.bf16.msra.mxu0 %v1530
    %1635 = vmatpush.bf16.msra.mxu0 %v1527
    %1636 = vmatpush.bf16.msra.mxu0 %v1524
    %1637 = vmatpush.bf16.msra.mxu0 %v1521
    %1638 = vmatpush.bf16.msra.mxu0 %v1518
    %1639 = vmatmul.bf16.gmra.mxu0 %v1332
    %v1640 = vpop.f32.mrf.mxu0
    %v1641 = vadd.f32 %v1627, %v1640
    %v1642 = vpop.f32.mrf.mxu0
    %v1643 = vadd.f32 %v1629, %v1642
    %1644 = vdwg.mxu0
    %1645 = vmatpush.bf16.msra.mxu0 %v1516
    %1646 = vmatpush.bf16.msra.mxu0 %v1513
    %1647 = vmatpush.bf16.msra.mxu0 %v1510
    %1648 = vmatpush.bf16.msra.mxu0 %v1507
    %1649 = vmatpush.bf16.msra.mxu0 %v1504
    %1650 = vmatpush.bf16.msra.mxu0 %v1501
    %1651 = vmatpush.bf16.msra.mxu0 %v1498
    %1652 = vmatpush.bf16.msra.mxu0 %v1495
    %1653 = vmatmul.bf16.gmra.mxu0 %v1331
    %v1654 = vpop.f32.mrf.mxu0
    %v1655 = vadd.f32 0.0, %v1654
    %v1656 = vpop.f32.mrf.mxu0
    %v1657 = vadd.f32 0.0, %v1656
    %1658 = vdwg.mxu0
    %1659 = vmatpush.bf16.msra.mxu0 %v1540
    %1660 = vmatpush.bf16.msra.mxu0 %v1537
    %1661 = vmatpush.bf16.msra.mxu0 %v1534
    %1662 = vmatpush.bf16.msra.mxu0 %v1531
    %1663 = vmatpush.bf16.msra.mxu0 %v1528
    %1664 = vmatpush.bf16.msra.mxu0 %v1525
    %1665 = vmatpush.bf16.msra.mxu0 %v1522
    %1666 = vmatpush.bf16.msra.mxu0 %v1519
    %1667 = vmatmul.bf16.gmra.mxu0 %v1332
    %v1668 = vpop.f32.mrf.mxu0
    %v1669 = vadd.f32 %v1655, %v1668
    %v1670 = vpop.f32.mrf.mxu0
    %v1671 = vadd.f32 %v1657, %v1670
    %1672 = vdwg.mxu0
    %v1673 = vadd.f32 %v1325, %v1613
    %v1674 = vadd.f32 %v1328, %v1615
    %v1675 = vxor.u32 %v1673, 2147483648
    %v1676 = vxor.u32 %v1674, 2147483648
    %v1677 = vmul.f32 %v1675, 1.442695
    %v1678 = vpow.pop %v1677
    %v1679 = vmul.f32 %v1676, 1.442695
    %v1680 = vpow.pop %v1679
    %v1681 = vadd.f32 %v1678, 1.0
    %v1682 = vadd.f32 %v1680, 1.0
    %v1683 = vrcp.pop %v1681
    %v1684 = vmul.f32 %v1681, %v1683
    %v1685 = vsub.f32 1.0, %v1684
    %v1686 = vmul.f32 %v1683, %v1685
    %v1687 = vadd.f32 %v1683, %v1686
    %vm1688 = vweird.f32 %v1681
    %vm1689 = vweird.f32 %v1683
    %vm1690 = vmor %vm1688, %vm1689
    %v1691 = vsel %vm1690, %v1683, %v1687
    %v1692 = vand.u32 2147483647, %v1681
    %vm1693 = vcmp.eq.f32.partialorder %v1692, 8.507059e+37
    %v1694 = vand.u32 %v1681, 2147483648
    %v1695 = vor.u32 1.1754944e-38, %v1694
    %v1696 = vsel %vm1693, %v1695, %v1691
    %v1697 = vmul.f32 1.0, %v1696
    %v1698 = vrcp.pop %v1682
    %v1699 = vmul.f32 %v1682, %v1698
    %v1700 = vsub.f32 1.0, %v1699
    %v1701 = vmul.f32 %v1698, %v1700
    %v1702 = vadd.f32 %v1698, %v1701
    %vm1703 = vweird.f32 %v1682
    %vm1704 = vweird.f32 %v1698
    %vm1705 = vmor %vm1703, %vm1704
    %v1706 = vsel %vm1705, %v1698, %v1702
    %v1707 = vand.u32 2147483647, %v1682
    %vm1708 = vcmp.eq.f32.partialorder %v1707, 8.507059e+37
    %v1709 = vand.u32 %v1682, 2147483648
    %v1710 = vor.u32 1.1754944e-38, %v1709
    %v1711 = vsel %vm1708, %v1710, %v1706
    %v1712 = vmul.f32 1.0, %v1711
    %v1713 = vadd.f32 %v1326, %v1641
    %v1714 = vadd.f32 %v1329, %v1643
    %v1715 = vxor.u32 %v1713, 2147483648
    %v1716 = vxor.u32 %v1714, 2147483648
    %v1717 = vmul.f32 %v1715, 1.442695
    %v1718 = vpow.pop %v1717
    %v1719 = vmul.f32 %v1716, 1.442695
    %v1720 = vpow.pop %v1719
    %v1721 = vadd.f32 %v1718, 1.0
    %v1722 = vadd.f32 %v1720, 1.0
    %v1723 = vrcp.pop %v1721
    %v1724 = vmul.f32 %v1721, %v1723
    %v1725 = vsub.f32 1.0, %v1724
    %v1726 = vmul.f32 %v1723, %v1725
    %v1727 = vadd.f32 %v1723, %v1726
    %vm1728 = vweird.f32 %v1721
    %vm1729 = vweird.f32 %v1723
    %vm1730 = vmor %vm1728, %vm1729
    %v1731 = vsel %vm1730, %v1723, %v1727
    %v1732 = vand.u32 2147483647, %v1721
    %vm1733 = vcmp.eq.f32.partialorder %v1732, 8.507059e+37
    %v1734 = vand.u32 %v1721, 2147483648
    %v1735 = vor.u32 1.1754944e-38, %v1734
    %v1736 = vsel %vm1733, %v1735, %v1731
    %v1737 = vmul.f32 1.0, %v1736
    %v1738 = vrcp.pop %v1722
    %v1739 = vmul.f32 %v1722, %v1738
    %v1740 = vsub.f32 1.0, %v1739
    %v1741 = vmul.f32 %v1738, %v1740
    %v1742 = vadd.f32 %v1738, %v1741
    %vm1743 = vweird.f32 %v1722
    %vm1744 = vweird.f32 %v1738
    %vm1745 = vmor %vm1743, %vm1744
    %v1746 = vsel %vm1745, %v1738, %v1742
    %v1747 = vand.u32 2147483647, %v1722
    %vm1748 = vcmp.eq.f32.partialorder %v1747, 8.507059e+37
    %v1749 = vand.u32 %v1722, 2147483648
    %v1750 = vor.u32 1.1754944e-38, %v1749
    %v1751 = vsel %vm1748, %v1750, %v1746
    %v1752 = vmul.f32 1.0, %v1751
    %v1753 = vadd.f32 %v1669, %v1253
    %v1754 = vadd.f32 %v1671, %v1257
    %v1755 = vmul.f32 %v1697, %v1753
    %v1756 = vmul.f32 %v1712, %v1754
    %v1757 = vadd.f32 %v1327, %v1755
    %v1758 = vadd.f32 %v1330, %v1756
    %v1759 = vtanh.pop %v1757
    %v1760 = vtanh.pop %v1758
    %v1761 = vsub.f32 1.0, %v1737
    %v1762 = vsub.f32 1.0, %v1752
    %v1763 = vmul.f32 %v1761, %v1759
    %v1764 = vmul.f32 %v1762, %v1760
    %v1765 = vmul.f32 %v1737, %v1323
    %v1766 = vmul.f32 %v1752, %v1324
    %v1767 = vadd.f32 %v1763, %v1765
    %v1768 = vadd.f32 %v1764, %v1766
    %v1769 = vld [vmem:[#allocation2 + $0x18] sm:$0xff]
    %v1770 = vld [vmem:[#allocation2 + $0x20] sm:$0xff]
    %v1771 = vld [vmem:[#allocation2 + $0x28] sm:$0xff]
    %v1772 = vld [vmem:[#allocation3 + $0x90] sm:$0xff]
    %v1773 = vld [vmem:[#allocation3 + $0x98] sm:$0xff]
    %v1774 = vld [vmem:[#allocation3 + $0xa0] sm:$0xff]
    %v1775 = vpack.c.bf16 0.0, %v1767
    %v1776 = vpack.c.bf16 %v1768, 0.0
    %1777 = vmatpush.bf16.msra.mxu0 %v1514
    %1778 = vmatpush.bf16.msra.mxu0 %v1511
    %1779 = vmatpush.bf16.msra.mxu0 %v1508
    %1780 = vmatpush.bf16.msra.mxu0 %v1505
    %1781 = vmatpush.bf16.msra.mxu0 %v1502
    %1782 = vmatpush.bf16.msra.mxu0 %v1499
    %1783 = vmatpush.bf16.msra.mxu0 %v1496
    %1784 = vmatpush.bf16.msra.mxu0 %v1493
    %1785 = vmatmul.bf16.gmra.mxu0 %v1775
    %v1786 = vpop.f32.mrf.mxu0
    %v1787 = vadd.f32 0.0, %v1786
    %v1788 = vpop.f32.mrf.mxu0
    %v1789 = vadd.f32 0.0, %v1788
    %1790 = vdwg.mxu0
    %1791 = vmatpush.bf16.msra.mxu0 %v1538
    %1792 = vmatpush.bf16.msra.mxu0 %v1535
    %1793 = vmatpush.bf16.msra.mxu0 %v1532
    %1794 = vmatpush.bf16.msra.mxu0 %v1529
    %1795 = vmatpush.bf16.msra.mxu0 %v1526
    %1796 = vmatpush.bf16.msra.mxu0 %v1523
    %1797 = vmatpush.bf16.msra.mxu0 %v1520
    %1798 = vmatpush.bf16.msra.mxu0 %v1517
    %1799 = vmatmul.bf16.gmra.mxu0 %v1776
    %v1800 = vpop.f32.mrf.mxu0
    %v1801 = vadd.f32 %v1787, %v1800
    %v1802 = vpop.f32.mrf.mxu0
    %v1803 = vadd.f32 %v1789, %v1802
    %1804 = vdwg.mxu0
    %1805 = vmatpush.bf16.msra.mxu0 %v1515
    %1806 = vmatpush.bf16.msra.mxu0 %v1512
    %1807 = vmatpush.bf16.msra.mxu0 %v1509
    %1808 = vmatpush.bf16.msra.mxu0 %v1506
    %1809 = vmatpush.bf16.msra.mxu0 %v1503
    %1810 = vmatpush.bf16.msra.mxu0 %v1500
    %1811 = vmatpush.bf16.msra.mxu0 %v1497
    %1812 = vmatpush.bf16.msra.mxu0 %v1494
    %1813 = vmatmul.bf16.gmra.mxu0 %v1775
    %v1814 = vpop.f32.mrf.mxu0
    %v1815 = vadd.f32 0.0, %v1814
    %v1816 = vpop.f32.mrf.mxu0
    %v1817 = vadd.f32 0.0, %v1816
    %1818 = vdwg.mxu0
    %1819 = vmatpush.bf16.msra.mxu0 %v1539
    %1820 = vmatpush.bf16.msra.mxu0 %v1536
    %1821 = vmatpush.bf16.msra.mxu0 %v1533
    %1822 = vmatpush.bf16.msra.mxu0 %v1530
    %1823 = vmatpush.bf16.msra.mxu0 %v1527
    %1824 = vmatpush.bf16.msra.mxu0 %v1524
    %1825 = vmatpush.bf16.msra.mxu0 %v1521
    %1826 = vmatpush.bf16.msra.mxu0 %v1518
    %1827 = vmatmul.bf16.gmra.mxu0 %v1776
    %v1828 = vpop.f32.mrf.mxu0
    %v1829 = vadd.f32 %v1815, %v1828
    %v1830 = vpop.f32.mrf.mxu0
    %v1831 = vadd.f32 %v1817, %v1830
    %1832 = vdwg.mxu0
    %1833 = vmatpush.bf16.msra.mxu0 %v1516
    %1834 = vmatpush.bf16.msra.mxu0 %v1513
    %1835 = vmatpush.bf16.msra.mxu0 %v1510
    %1836 = vmatpush.bf16.msra.mxu0 %v1507
    %1837 = vmatpush.bf16.msra.mxu0 %v1504
    %1838 = vmatpush.bf16.msra.mxu0 %v1501
    %1839 = vmatpush.bf16.msra.mxu0 %v1498
    %1840 = vmatpush.bf16.msra.mxu0 %v1495
    %1841 = vmatmul.bf16.gmra.mxu0 %v1775
    %v1842 = vpop.f32.mrf.mxu0
    %v1843 = vadd.f32 0.0, %v1842
    %v1844 = vpop.f32.mrf.mxu0
    %v1845 = vadd.f32 0.0, %v1844
    %1846 = vdwg.mxu0
    %1847 = vmatpush.bf16.msra.mxu0 %v1540
    %1848 = vmatpush.bf16.msra.mxu0 %v1537
    %1849 = vmatpush.bf16.msra.mxu0 %v1534
    %1850 = vmatpush.bf16.msra.mxu0 %v1531
    %1851 = vmatpush.bf16.msra.mxu0 %v1528
    %1852 = vmatpush.bf16.msra.mxu0 %v1525
    %1853 = vmatpush.bf16.msra.mxu0 %v1522
    %1854 = vmatpush.bf16.msra.mxu0 %v1519
    %1855 = vmatmul.bf16.gmra.mxu0 %v1776
    %v1856 = vpop.f32.mrf.mxu0
    %v1857 = vadd.f32 %v1843, %v1856
    %v1858 = vpop.f32.mrf.mxu0
    %v1859 = vadd.f32 %v1845, %v1858
    %1860 = vdwg.mxu0
    %v1861 = vadd.f32 %v1769, %v1801
    %v1862 = vadd.f32 %v1772, %v1803
    %v1863 = vxor.u32 %v1861, 2147483648
    %v1864 = vxor.u32 %v1862, 2147483648
    %v1865 = vmul.f32 %v1863, 1.442695
    %v1866 = vpow.pop %v1865
    %v1867 = vmul.f32 %v1864, 1.442695
    %v1868 = vpow.pop %v1867
    %v1869 = vadd.f32 %v1866, 1.0
    %v1870 = vadd.f32 %v1868, 1.0
    %v1871 = vrcp.pop %v1869
    %v1872 = vmul.f32 %v1869, %v1871
    %v1873 = vsub.f32 1.0, %v1872
    %v1874 = vmul.f32 %v1871, %v1873
    %v1875 = vadd.f32 %v1871, %v1874
    %vm1876 = vweird.f32 %v1869
    %vm1877 = vweird.f32 %v1871
    %vm1878 = vmor %vm1876, %vm1877
    %v1879 = vsel %vm1878, %v1871, %v1875
    %v1880 = vand.u32 2147483647, %v1869
    %vm1881 = vcmp.eq.f32.partialorder %v1880, 8.507059e+37
    %v1882 = vand.u32 %v1869, 2147483648
    %v1883 = vor.u32 1.1754944e-38, %v1882
    %v1884 = vsel %vm1881, %v1883, %v1879
    %v1885 = vmul.f32 1.0, %v1884
    %v1886 = vrcp.pop %v1870
    %v1887 = vmul.f32 %v1870, %v1886
    %v1888 = vsub.f32 1.0, %v1887
    %v1889 = vmul.f32 %v1886, %v1888
    %v1890 = vadd.f32 %v1886, %v1889
    %vm1891 = vweird.f32 %v1870
    %vm1892 = vweird.f32 %v1886
    %vm1893 = vmor %vm1891, %vm1892
    %v1894 = vsel %vm1893, %v1886, %v1890
    %v1895 = vand.u32 2147483647, %v1870
    %vm1896 = vcmp.eq.f32.partialorder %v1895, 8.507059e+37
    %v1897 = vand.u32 %v1870, 2147483648
    %v1898 = vor.u32 1.1754944e-38, %v1897
    %v1899 = vsel %vm1896, %v1898, %v1894
    %v1900 = vmul.f32 1.0, %v1899
    %v1901 = vadd.f32 %v1770, %v1829
    %v1902 = vadd.f32 %v1773, %v1831
    %v1903 = vxor.u32 %v1901, 2147483648
    %v1904 = vxor.u32 %v1902, 2147483648
    %v1905 = vmul.f32 %v1903, 1.442695
    %v1906 = vpow.pop %v1905
    %v1907 = vmul.f32 %v1904, 1.442695
    %v1908 = vpow.pop %v1907
    %v1909 = vadd.f32 %v1906, 1.0
    %v1910 = vadd.f32 %v1908, 1.0
    %v1911 = vrcp.pop %v1909
    %v1912 = vmul.f32 %v1909, %v1911
    %v1913 = vsub.f32 1.0, %v1912
    %v1914 = vmul.f32 %v1911, %v1913
    %v1915 = vadd.f32 %v1911, %v1914
    %vm1916 = vweird.f32 %v1909
    %vm1917 = vweird.f32 %v1911
    %vm1918 = vmor %vm1916, %vm1917
    %v1919 = vsel %vm1918, %v1911, %v1915
    %v1920 = vand.u32 2147483647, %v1909
    %vm1921 = vcmp.eq.f32.partialorder %v1920, 8.507059e+37
    %v1922 = vand.u32 %v1909, 2147483648
    %v1923 = vor.u32 1.1754944e-38, %v1922
    %v1924 = vsel %vm1921, %v1923, %v1919
    %v1925 = vmul.f32 1.0, %v1924
    %v1926 = vrcp.pop %v1910
    %v1927 = vmul.f32 %v1910, %v1926
    %v1928 = vsub.f32 1.0, %v1927
    %v1929 = vmul.f32 %v1926, %v1928
    %v1930 = vadd.f32 %v1926, %v1929
    %vm1931 = vweird.f32 %v1910
    %vm1932 = vweird.f32 %v1926
    %vm1933 = vmor %vm1931, %vm1932
    %v1934 = vsel %vm1933, %v1926, %v1930
    %v1935 = vand.u32 2147483647, %v1910
    %vm1936 = vcmp.eq.f32.partialorder %v1935, 8.507059e+37
    %v1937 = vand.u32 %v1910, 2147483648
    %v1938 = vor.u32 1.1754944e-38, %v1937
    %v1939 = vsel %vm1936, %v1938, %v1934
    %v1940 = vmul.f32 1.0, %v1939
    %v1941 = vadd.f32 %v1857, %v1253
    %v1942 = vadd.f32 %v1859, %v1257
    %v1943 = vmul.f32 %v1885, %v1941
    %v1944 = vmul.f32 %v1900, %v1942
    %v1945 = vadd.f32 %v1771, %v1943
    %v1946 = vadd.f32 %v1774, %v1944
    %v1947 = vtanh.pop %v1945
    %v1948 = vtanh.pop %v1946
    %v1949 = vsub.f32 1.0, %v1925
    %v1950 = vsub.f32 1.0, %v1940
    %v1951 = vmul.f32 %v1949, %v1947
    %v1952 = vmul.f32 %v1950, %v1948
    %v1953 = vmul.f32 %v1925, %v1767
    %v1954 = vmul.f32 %v1940, %v1768
    %v1955 = vadd.f32 %v1951, %v1953
    %v1956 = vadd.f32 %v1952, %v1954
    %v1957 = vld [vmem:[#allocation2 + $0x30] sm:$0xff]
    %v1958 = vld [vmem:[#allocation2 + $0x38] sm:$0xff]
    %v1959 = vld [vmem:[#allocation2 + $0x40] sm:$0xff]
    %v1960 = vld [vmem:[#allocation3 + $0x78] sm:$0xff]
    %v1961 = vld [vmem:[#allocation3 + $0x80] sm:$0xff]
    %v1962 = vld [vmem:[#allocation3 + $0x88] sm:$0xff]
    %v1963 = vpack.c.bf16 0.0, %v1955
    %v1964 = vpack.c.bf16 %v1956, 0.0
    %1965 = vmatpush.bf16.msra.mxu0 %v1514
    %1966 = vmatpush.bf16.msra.mxu0 %v1511
    %1967 = vmatpush.bf16.msra.mxu0 %v1508
    %1968 = vmatpush.bf16.msra.mxu0 %v1505
    %1969 = vmatpush.bf16.msra.mxu0 %v1502
    %1970 = vmatpush.bf16.msra.mxu0 %v1499
    %1971 = vmatpush.bf16.msra.mxu0 %v1496
    %1972 = vmatpush.bf16.msra.mxu0 %v1493
    %1973 = vmatmul.bf16.gmra.mxu0 %v1963
    %v1974 = vpop.f32.mrf.mxu0
    %v1975 = vadd.f32 0.0, %v1974
    %v1976 = vpop.f32.mrf.mxu0
    %v1977 = vadd.f32 0.0, %v1976
    %1978 = vdwg.mxu0
    %1979 = vmatpush.bf16.msra.mxu0 %v1538
    %1980 = vmatpush.bf16.msra.mxu0 %v1535
    %1981 = vmatpush.bf16.msra.mxu0 %v1532
    %1982 = vmatpush.bf16.msra.mxu0 %v1529
    %1983 = vmatpush.bf16.msra.mxu0 %v1526
    %1984 = vmatpush.bf16.msra.mxu0 %v1523
    %1985 = vmatpush.bf16.msra.mxu0 %v1520
    %1986 = vmatpush.bf16.msra.mxu0 %v1517
    %1987 = vmatmul.bf16.gmra.mxu0 %v1964
    %v1988 = vpop.f32.mrf.mxu0
    %v1989 = vadd.f32 %v1975, %v1988
    %v1990 = vpop.f32.mrf.mxu0
    %v1991 = vadd.f32 %v1977, %v1990
    %1992 = vdwg.mxu0
    %1993 = vmatpush.bf16.msra.mxu0 %v1515
    %1994 = vmatpush.bf16.msra.mxu0 %v1512
    %1995 = vmatpush.bf16.msra.mxu0 %v1509
    %1996 = vmatpush.bf16.msra.mxu0 %v1506
    %1997 = vmatpush.bf16.msra.mxu0 %v1503
    %1998 = vmatpush.bf16.msra.mxu0 %v1500
    %1999 = vmatpush.bf16.msra.mxu0 %v1497
    %2000 = vmatpush.bf16.msra.mxu0 %v1494
    %2001 = vmatmul.bf16.gmra.mxu0 %v1963
    %v2002 = vpop.f32.mrf.mxu0
    %v2003 = vadd.f32 0.0, %v2002
    %v2004 = vpop.f32.mrf.mxu0
    %v2005 = vadd.f32 0.0, %v2004
    %2006 = vdwg.mxu0
    %2007 = vmatpush.bf16.msra.mxu0 %v1539
    %2008 = vmatpush.bf16.msra.mxu0 %v1536
    %2009 = vmatpush.bf16.msra.mxu0 %v1533
    %2010 = vmatpush.bf16.msra.mxu0 %v1530
    %2011 = vmatpush.bf16.msra.mxu0 %v1527
    %2012 = vmatpush.bf16.msra.mxu0 %v1524
    %2013 = vmatpush.bf16.msra.mxu0 %v1521
    %2014 = vmatpush.bf16.msra.mxu0 %v1518
    %2015 = vmatmul.bf16.gmra.mxu0 %v1964
    %v2016 = vpop.f32.mrf.mxu0
    %v2017 = vadd.f32 %v2003, %v2016
    %v2018 = vpop.f32.mrf.mxu0
    %v2019 = vadd.f32 %v2005, %v2018
    %2020 = vdwg.mxu0
    %2021 = vmatpush.bf16.msra.mxu0 %v1516
    %2022 = vmatpush.bf16.msra.mxu0 %v1513
    %2023 = vmatpush.bf16.msra.mxu0 %v1510
    %2024 = vmatpush.bf16.msra.mxu0 %v1507
    %2025 = vmatpush.bf16.msra.mxu0 %v1504
    %2026 = vmatpush.bf16.msra.mxu0 %v1501
    %2027 = vmatpush.bf16.msra.mxu0 %v1498
    %2028 = vmatpush.bf16.msra.mxu0 %v1495
    %2029 = vmatmul.bf16.gmra.mxu0 %v1963
    %v2030 = vpop.f32.mrf.mxu0
    %v2031 = vadd.f32 0.0, %v2030
    %v2032 = vpop.f32.mrf.mxu0
    %v2033 = vadd.f32 0.0, %v2032
    %2034 = vdwg.mxu0
    %2035 = vmatpush.bf16.msra.mxu0 %v1540
    %2036 = vmatpush.bf16.msra.mxu0 %v1537
    %2037 = vmatpush.bf16.msra.mxu0 %v1534
    %2038 = vmatpush.bf16.msra.mxu0 %v1531
    %2039 = vmatpush.bf16.msra.mxu0 %v1528
    %2040 = vmatpush.bf16.msra.mxu0 %v1525
    %2041 = vmatpush.bf16.msra.mxu0 %v1522
    %2042 = vmatpush.bf16.msra.mxu0 %v1519
    %2043 = vmatmul.bf16.gmra.mxu0 %v1964
    %v2044 = vpop.f32.mrf.mxu0
    %v2045 = vadd.f32 %v2031, %v2044
    %v2046 = vpop.f32.mrf.mxu0
    %v2047 = vadd.f32 %v2033, %v2046
    %2048 = vdwg.mxu0
    %v2049 = vadd.f32 %v1957, %v1989
    %v2050 = vadd.f32 %v1960, %v1991
    %v2051 = vxor.u32 %v2049, 2147483648
    %v2052 = vxor.u32 %v2050, 2147483648
    %v2053 = vmul.f32 %v2051, 1.442695
    %v2054 = vpow.pop %v2053
    %v2055 = vmul.f32 %v2052, 1.442695
    %v2056 = vpow.pop %v2055
    %v2057 = vadd.f32 %v2054, 1.0
    %v2058 = vadd.f32 %v2056, 1.0
    %v2059 = vrcp.pop %v2057
    %v2060 = vmul.f32 %v2057, %v2059
    %v2061 = vsub.f32 1.0, %v2060
    %v2062 = vmul.f32 %v2059, %v2061
    %v2063 = vadd.f32 %v2059, %v2062
    %vm2064 = vweird.f32 %v2057
    %vm2065 = vweird.f32 %v2059
    %vm2066 = vmor %vm2064, %vm2065
    %v2067 = vsel %vm2066, %v2059, %v2063
    %v2068 = vand.u32 2147483647, %v2057
    %vm2069 = vcmp.eq.f32.partialorder %v2068, 8.507059e+37
    %v2070 = vand.u32 %v2057, 2147483648
    %v2071 = vor.u32 1.1754944e-38, %v2070
    %v2072 = vsel %vm2069, %v2071, %v2067
    %v2073 = vmul.f32 1.0, %v2072
    %v2074 = vrcp.pop %v2058
    %v2075 = vmul.f32 %v2058, %v2074
    %v2076 = vsub.f32 1.0, %v2075
    %v2077 = vmul.f32 %v2074, %v2076
    %v2078 = vadd.f32 %v2074, %v2077
    %vm2079 = vweird.f32 %v2058
    %vm2080 = vweird.f32 %v2074
    %vm2081 = vmor %vm2079, %vm2080
    %v2082 = vsel %vm2081, %v2074, %v2078
    %v2083 = vand.u32 2147483647, %v2058
    %vm2084 = vcmp.eq.f32.partialorder %v2083, 8.507059e+37
    %v2085 = vand.u32 %v2058, 2147483648
    %v2086 = vor.u32 1.1754944e-38, %v2085
    %v2087 = vsel %vm2084, %v2086, %v2082
    %v2088 = vmul.f32 1.0, %v2087
    %v2089 = vadd.f32 %v1958, %v2017
    %v2090 = vadd.f32 %v1961, %v2019
    %v2091 = vxor.u32 %v2089, 2147483648
    %v2092 = vxor.u32 %v2090, 2147483648
    %v2093 = vmul.f32 %v2091, 1.442695
    %v2094 = vpow.pop %v2093
    %v2095 = vmul.f32 %v2092, 1.442695
    %v2096 = vpow.pop %v2095
    %v2097 = vadd.f32 %v2094, 1.0
    %v2098 = vadd.f32 %v2096, 1.0
    %v2099 = vrcp.pop %v2097
    %v2100 = vmul.f32 %v2097, %v2099
    %v2101 = vsub.f32 1.0, %v2100
    %v2102 = vmul.f32 %v2099, %v2101
    %v2103 = vadd.f32 %v2099, %v2102
    %vm2104 = vweird.f32 %v2097
    %vm2105 = vweird.f32 %v2099
    %vm2106 = vmor %vm2104, %vm2105
    %v2107 = vsel %vm2106, %v2099, %v2103
    %v2108 = vand.u32 2147483647, %v2097
    %vm2109 = vcmp.eq.f32.partialorder %v2108, 8.507059e+37
    %v2110 = vand.u32 %v2097, 2147483648
    %v2111 = vor.u32 1.1754944e-38, %v2110
    %v2112 = vsel %vm2109, %v2111, %v2107
    %v2113 = vmul.f32 1.0, %v2112
    %v2114 = vrcp.pop %v2098
    %v2115 = vmul.f32 %v2098, %v2114
    %v2116 = vsub.f32 1.0, %v2115
    %v2117 = vmul.f32 %v2114, %v2116
    %v2118 = vadd.f32 %v2114, %v2117
    %vm2119 = vweird.f32 %v2098
    %vm2120 = vweird.f32 %v2114
    %vm2121 = vmor %vm2119, %vm2120
    %v2122 = vsel %vm2121, %v2114, %v2118
    %v2123 = vand.u32 2147483647, %v2098
    %vm2124 = vcmp.eq.f32.partialorder %v2123, 8.507059e+37
    %v2125 = vand.u32 %v2098, 2147483648
    %v2126 = vor.u32 1.1754944e-38, %v2125
    %v2127 = vsel %vm2124, %v2126, %v2122
    %v2128 = vmul.f32 1.0, %v2127
    %v2129 = vadd.f32 %v2045, %v1253
    %v2130 = vadd.f32 %v2047, %v1257
    %v2131 = vmul.f32 %v2073, %v2129
    %v2132 = vmul.f32 %v2088, %v2130
    %v2133 = vadd.f32 %v1959, %v2131
    %v2134 = vadd.f32 %v1962, %v2132
    %v2135 = vtanh.pop %v2133
    %v2136 = vtanh.pop %v2134
    %v2137 = vsub.f32 1.0, %v2113
    %v2138 = vsub.f32 1.0, %v2128
    %v2139 = vmul.f32 %v2137, %v2135
    %v2140 = vmul.f32 %v2138, %v2136
    %v2141 = vmul.f32 %v2113, %v1955
    %v2142 = vmul.f32 %v2128, %v1956
    %v2143 = vadd.f32 %v2139, %v2141
    %v2144 = vadd.f32 %v2140, %v2142
    %v2145 = vld [vmem:[#allocation2 + $0x48] sm:$0xff]
    %v2146 = vld [vmem:[#allocation2 + $0x50] sm:$0xff]
    %v2147 = vld [vmem:[#allocation2 + $0x58] sm:$0xff]
    %v2148 = vld [vmem:[#allocation3 + $0x60] sm:$0xff]
    %v2149 = vld [vmem:[#allocation3 + $0x68] sm:$0xff]
    %v2150 = vld [vmem:[#allocation3 + $0x70] sm:$0xff]
    %v2151 = vpack.c.bf16 0.0, %v2143
    %v2152 = vpack.c.bf16 %v2144, 0.0
    %2153 = vmatpush.bf16.msra.mxu0 %v1514
    %2154 = vmatpush.bf16.msra.mxu0 %v1511
    %2155 = vmatpush.bf16.msra.mxu0 %v1508
    %2156 = vmatpush.bf16.msra.mxu0 %v1505
    %2157 = vmatpush.bf16.msra.mxu0 %v1502
    %2158 = vmatpush.bf16.msra.mxu0 %v1499
    %2159 = vmatpush.bf16.msra.mxu0 %v1496
    %2160 = vmatpush.bf16.msra.mxu0 %v1493
    %2161 = vmatmul.bf16.gmra.mxu0 %v2151
    %v2162 = vpop.f32.mrf.mxu0
    %v2163 = vadd.f32 0.0, %v2162
    %v2164 = vpop.f32.mrf.mxu0
    %v2165 = vadd.f32 0.0, %v2164
    %2166 = vdwg.mxu0
    %2167 = vmatpush.bf16.msra.mxu0 %v1538
    %2168 = vmatpush.bf16.msra.mxu0 %v1535
    %2169 = vmatpush.bf16.msra.mxu0 %v1532
    %2170 = vmatpush.bf16.msra.mxu0 %v1529
    %2171 = vmatpush.bf16.msra.mxu0 %v1526
    %2172 = vmatpush.bf16.msra.mxu0 %v1523
    %2173 = vmatpush.bf16.msra.mxu0 %v1520
    %2174 = vmatpush.bf16.msra.mxu0 %v1517
    %2175 = vmatmul.bf16.gmra.mxu0 %v2152
    %v2176 = vpop.f32.mrf.mxu0
    %v2177 = vadd.f32 %v2163, %v2176
    %v2178 = vpop.f32.mrf.mxu0
    %v2179 = vadd.f32 %v2165, %v2178
    %2180 = vdwg.mxu0
    %2181 = vmatpush.bf16.msra.mxu0 %v1515
    %2182 = vmatpush.bf16.msra.mxu0 %v1512
    %2183 = vmatpush.bf16.msra.mxu0 %v1509
    %2184 = vmatpush.bf16.msra.mxu0 %v1506
    %2185 = vmatpush.bf16.msra.mxu0 %v1503
    %2186 = vmatpush.bf16.msra.mxu0 %v1500
    %2187 = vmatpush.bf16.msra.mxu0 %v1497
    %2188 = vmatpush.bf16.msra.mxu0 %v1494
    %2189 = vmatmul.bf16.gmra.mxu0 %v2151
    %v2190 = vpop.f32.mrf.mxu0
    %v2191 = vadd.f32 0.0, %v2190
    %v2192 = vpop.f32.mrf.mxu0
    %v2193 = vadd.f32 0.0, %v2192
    %2194 = vdwg.mxu0
    %2195 = vmatpush.bf16.msra.mxu0 %v1539
    %2196 = vmatpush.bf16.msra.mxu0 %v1536
    %2197 = vmatpush.bf16.msra.mxu0 %v1533
    %2198 = vmatpush.bf16.msra.mxu0 %v1530
    %2199 = vmatpush.bf16.msra.mxu0 %v1527
    %2200 = vmatpush.bf16.msra.mxu0 %v1524
    %2201 = vmatpush.bf16.msra.mxu0 %v1521
    %2202 = vmatpush.bf16.msra.mxu0 %v1518
    %2203 = vmatmul.bf16.gmra.mxu0 %v2152
    %v2204 = vpop.f32.mrf.mxu0
    %v2205 = vadd.f32 %v2191, %v2204
    %v2206 = vpop.f32.mrf.mxu0
    %v2207 = vadd.f32 %v2193, %v2206
    %2208 = vdwg.mxu0
    %2209 = vmatpush.bf16.msra.mxu0 %v1516
    %2210 = vmatpush.bf16.msra.mxu0 %v1513
    %2211 = vmatpush.bf16.msra.mxu0 %v1510
    %2212 = vmatpush.bf16.msra.mxu0 %v1507
    %2213 = vmatpush.bf16.msra.mxu0 %v1504
    %2214 = vmatpush.bf16.msra.mxu0 %v1501
    %2215 = vmatpush.bf16.msra.mxu0 %v1498
    %2216 = vmatpush.bf16.msra.mxu0 %v1495
    %2217 = vmatmul.bf16.gmra.mxu0 %v2151
    %v2218 = vpop.f32.mrf.mxu0
    %v2219 = vadd.f32 0.0, %v2218
    %v2220 = vpop.f32.mrf.mxu0
    %v2221 = vadd.f32 0.0, %v2220
    %2222 = vdwg.mxu0
    %2223 = vmatpush.bf16.msra.mxu0 %v1540
    %2224 = vmatpush.bf16.msra.mxu0 %v1537
    %2225 = vmatpush.bf16.msra.mxu0 %v1534
    %2226 = vmatpush.bf16.msra.mxu0 %v1531
    %2227 = vmatpush.bf16.msra.mxu0 %v1528
    %2228 = vmatpush.bf16.msra.mxu0 %v1525
    %2229 = vmatpush.bf16.msra.mxu0 %v1522
    %2230 = vmatpush.bf16.msra.mxu0 %v1519
    %2231 = vmatmul.bf16.gmra.mxu0 %v2152
    %v2232 = vpop.f32.mrf.mxu0
    %v2233 = vadd.f32 %v2219, %v2232
    %v2234 = vpop.f32.mrf.mxu0
    %v2235 = vadd.f32 %v2221, %v2234
    %2236 = vdwg.mxu0
    %v2237 = vadd.f32 %v2145, %v2177
    %v2238 = vadd.f32 %v2148, %v2179
    %v2239 = vxor.u32 %v2237, 2147483648
    %v2240 = vxor.u32 %v2238, 2147483648
    %v2241 = vmul.f32 %v2239, 1.442695
    %v2242 = vpow.pop %v2241
    %v2243 = vmul.f32 %v2240, 1.442695
    %v2244 = vpow.pop %v2243
    %v2245 = vadd.f32 %v2242, 1.0
    %v2246 = vadd.f32 %v2244, 1.0
    %v2247 = vrcp.pop %v2245
    %v2248 = vmul.f32 %v2245, %v2247
    %v2249 = vsub.f32 1.0, %v2248
    %v2250 = vmul.f32 %v2247, %v2249
    %v2251 = vadd.f32 %v2247, %v2250
    %vm2252 = vweird.f32 %v2245
    %vm2253 = vweird.f32 %v2247
    %vm2254 = vmor %vm2252, %vm2253
    %v2255 = vsel %vm2254, %v2247, %v2251
    %v2256 = vand.u32 2147483647, %v2245
    %vm2257 = vcmp.eq.f32.partialorder %v2256, 8.507059e+37
    %v2258 = vand.u32 %v2245, 2147483648
    %v2259 = vor.u32 1.1754944e-38, %v2258
    %v2260 = vsel %vm2257, %v2259, %v2255
    %v2261 = vmul.f32 1.0, %v2260
    %v2262 = vrcp.pop %v2246
    %v2263 = vmul.f32 %v2246, %v2262
    %v2264 = vsub.f32 1.0, %v2263
    %v2265 = vmul.f32 %v2262, %v2264
    %v2266 = vadd.f32 %v2262, %v2265
    %vm2267 = vweird.f32 %v2246
    %vm2268 = vweird.f32 %v2262
    %vm2269 = vmor %vm2267, %vm2268
    %v2270 = vsel %vm2269, %v2262, %v2266
    %v2271 = vand.u32 2147483647, %v2246
    %vm2272 = vcmp.eq.f32.partialorder %v2271, 8.507059e+37
    %v2273 = vand.u32 %v2246, 2147483648
    %v2274 = vor.u32 1.1754944e-38, %v2273
    %v2275 = vsel %vm2272, %v2274, %v2270
    %v2276 = vmul.f32 1.0, %v2275
    %v2277 = vadd.f32 %v2146, %v2205
    %v2278 = vadd.f32 %v2149, %v2207
    %v2279 = vxor.u32 %v2277, 2147483648
    %v2280 = vxor.u32 %v2278, 2147483648
    %v2281 = vmul.f32 %v2279, 1.442695
    %v2282 = vpow.pop %v2281
    %v2283 = vmul.f32 %v2280, 1.442695
    %v2284 = vpow.pop %v2283
    %v2285 = vadd.f32 %v2282, 1.0
    %v2286 = vadd.f32 %v2284, 1.0
    %v2287 = vrcp.pop %v2285
    %v2288 = vmul.f32 %v2285, %v2287
    %v2289 = vsub.f32 1.0, %v2288
    %v2290 = vmul.f32 %v2287, %v2289
    %v2291 = vadd.f32 %v2287, %v2290
    %vm2292 = vweird.f32 %v2285
    %vm2293 = vweird.f32 %v2287
    %vm2294 = vmor %vm2292, %vm2293
    %v2295 = vsel %vm2294, %v2287, %v2291
    %v2296 = vand.u32 2147483647, %v2285
    %vm2297 = vcmp.eq.f32.partialorder %v2296, 8.507059e+37
    %v2298 = vand.u32 %v2285, 2147483648
    %v2299 = vor.u32 1.1754944e-38, %v2298
    %v2300 = vsel %vm2297, %v2299, %v2295
    %v2301 = vmul.f32 1.0, %v2300
    %v2302 = vrcp.pop %v2286
    %v2303 = vmul.f32 %v2286, %v2302
    %v2304 = vsub.f32 1.0, %v2303
    %v2305 = vmul.f32 %v2302, %v2304
    %v2306 = vadd.f32 %v2302, %v2305
    %vm2307 = vweird.f32 %v2286
    %vm2308 = vweird.f32 %v2302
    %vm2309 = vmor %vm2307, %vm2308
    %v2310 = vsel %vm2309, %v2302, %v2306
    %v2311 = vand.u32 2147483647, %v2286
    %vm2312 = vcmp.eq.f32.partialorder %v2311, 8.507059e+37
    %v2313 = vand.u32 %v2286, 2147483648
    %v2314 = vor.u32 1.1754944e-38, %v2313
    %v2315 = vsel %vm2312, %v2314, %v2310
    %v2316 = vmul.f32 1.0, %v2315
    %v2317 = vadd.f32 %v2233, %v1253
    %v2318 = vadd.f32 %v2235, %v1257
    %v2319 = vmul.f32 %v2261, %v2317
    %v2320 = vmul.f32 %v2276, %v2318
    %v2321 = vadd.f32 %v2147, %v2319
    %v2322 = vadd.f32 %v2150, %v2320
    %v2323 = vtanh.pop %v2321
    %v2324 = vtanh.pop %v2322
    %v2325 = vsub.f32 1.0, %v2301
    %v2326 = vsub.f32 1.0, %v2316
    %v2327 = vmul.f32 %v2325, %v2323
    %v2328 = vmul.f32 %v2326, %v2324
    %v2329 = vmul.f32 %v2301, %v2143
    %v2330 = vmul.f32 %v2316, %v2144
    %v2331 = vadd.f32 %v2327, %v2329
    %v2332 = vadd.f32 %v2328, %v2330
    %v2333 = vld [vmem:[#allocation2 + $0x60] sm:$0xff]
    %v2334 = vld [vmem:[#allocation2 + $0x68] sm:$0xff]
    %v2335 = vld [vmem:[#allocation2 + $0x70] sm:$0xff]
    %v2336 = vld [vmem:[#allocation3 + $0x48] sm:$0xff]
    %v2337 = vld [vmem:[#allocation3 + $0x50] sm:$0xff]
    %v2338 = vld [vmem:[#allocation3 + $0x58] sm:$0xff]
    %v2339 = vpack.c.bf16 0.0, %v2331
    %v2340 = vpack.c.bf16 %v2332, 0.0
    %2341 = vmatpush.bf16.msra.mxu0 %v1514
    %2342 = vmatpush.bf16.msra.mxu0 %v1511
    %2343 = vmatpush.bf16.msra.mxu0 %v1508
    %2344 = vmatpush.bf16.msra.mxu0 %v1505
    %2345 = vmatpush.bf16.msra.mxu0 %v1502
    %2346 = vmatpush.bf16.msra.mxu0 %v1499
    %2347 = vmatpush.bf16.msra.mxu0 %v1496
    %2348 = vmatpush.bf16.msra.mxu0 %v1493
    %2349 = vmatmul.bf16.gmra.mxu0 %v2339
    %v2350 = vpop.f32.mrf.mxu0
    %v2351 = vadd.f32 0.0, %v2350
    %v2352 = vpop.f32.mrf.mxu0
    %v2353 = vadd.f32 0.0, %v2352
    %2354 = vdwg.mxu0
    %2355 = vmatpush.bf16.msra.mxu0 %v1538
    %2356 = vmatpush.bf16.msra.mxu0 %v1535
    %2357 = vmatpush.bf16.msra.mxu0 %v1532
    %2358 = vmatpush.bf16.msra.mxu0 %v1529
    %2359 = vmatpush.bf16.msra.mxu0 %v1526
    %2360 = vmatpush.bf16.msra.mxu0 %v1523
    %2361 = vmatpush.bf16.msra.mxu0 %v1520
    %2362 = vmatpush.bf16.msra.mxu0 %v1517
    %2363 = vmatmul.bf16.gmra.mxu0 %v2340
    %v2364 = vpop.f32.mrf.mxu0
    %v2365 = vadd.f32 %v2351, %v2364
    %v2366 = vpop.f32.mrf.mxu0
    %v2367 = vadd.f32 %v2353, %v2366
    %2368 = vdwg.mxu0
    %2369 = vmatpush.bf16.msra.mxu0 %v1515
    %2370 = vmatpush.bf16.msra.mxu0 %v1512
    %2371 = vmatpush.bf16.msra.mxu0 %v1509
    %2372 = vmatpush.bf16.msra.mxu0 %v1506
    %2373 = vmatpush.bf16.msra.mxu0 %v1503
    %2374 = vmatpush.bf16.msra.mxu0 %v1500
    %2375 = vmatpush.bf16.msra.mxu0 %v1497
    %2376 = vmatpush.bf16.msra.mxu0 %v1494
    %2377 = vmatmul.bf16.gmra.mxu0 %v2339
    %v2378 = vpop.f32.mrf.mxu0
    %v2379 = vadd.f32 0.0, %v2378
    %v2380 = vpop.f32.mrf.mxu0
    %v2381 = vadd.f32 0.0, %v2380
    %2382 = vdwg.mxu0
    %2383 = vmatpush.bf16.msra.mxu0 %v1539
    %2384 = vmatpush.bf16.msra.mxu0 %v1536
    %2385 = vmatpush.bf16.msra.mxu0 %v1533
    %2386 = vmatpush.bf16.msra.mxu0 %v1530
    %2387 = vmatpush.bf16.msra.mxu0 %v1527
    %2388 = vmatpush.bf16.msra.mxu0 %v1524
    %2389 = vmatpush.bf16.msra.mxu0 %v1521
    %2390 = vmatpush.bf16.msra.mxu0 %v1518
    %2391 = vmatmul.bf16.gmra.mxu0 %v2340
    %v2392 = vpop.f32.mrf.mxu0
    %v2393 = vadd.f32 %v2379, %v2392
    %v2394 = vpop.f32.mrf.mxu0
    %v2395 = vadd.f32 %v2381, %v2394
    %2396 = vdwg.mxu0
    %2397 = vmatpush.bf16.msra.mxu0 %v1516
    %2398 = vmatpush.bf16.msra.mxu0 %v1513
    %2399 = vmatpush.bf16.msra.mxu0 %v1510
    %2400 = vmatpush.bf16.msra.mxu0 %v1507
    %2401 = vmatpush.bf16.msra.mxu0 %v1504
    %2402 = vmatpush.bf16.msra.mxu0 %v1501
    %2403 = vmatpush.bf16.msra.mxu0 %v1498
    %2404 = vmatpush.bf16.msra.mxu0 %v1495
    %2405 = vmatmul.bf16.gmra.mxu0 %v2339
    %v2406 = vpop.f32.mrf.mxu0
    %v2407 = vadd.f32 0.0, %v2406
    %v2408 = vpop.f32.mrf.mxu0
    %v2409 = vadd.f32 0.0, %v2408
    %2410 = vdwg.mxu0
    %2411 = vmatpush.bf16.msra.mxu0 %v1540
    %2412 = vmatpush.bf16.msra.mxu0 %v1537
    %2413 = vmatpush.bf16.msra.mxu0 %v1534
    %2414 = vmatpush.bf16.msra.mxu0 %v1531
    %2415 = vmatpush.bf16.msra.mxu0 %v1528
    %2416 = vmatpush.bf16.msra.mxu0 %v1525
    %2417 = vmatpush.bf16.msra.mxu0 %v1522
    %2418 = vmatpush.bf16.msra.mxu0 %v1519
    %2419 = vmatmul.bf16.gmra.mxu0 %v2340
    %v2420 = vpop.f32.mrf.mxu0
    %v2421 = vadd.f32 %v2407, %v2420
    %v2422 = vpop.f32.mrf.mxu0
    %v2423 = vadd.f32 %v2409, %v2422
    %2424 = vdwg.mxu0
    %v2425 = vadd.f32 %v2333, %v2365
    %v2426 = vadd.f32 %v2336, %v2367
    %v2427 = vxor.u32 %v2425, 2147483648
    %v2428 = vxor.u32 %v2426, 2147483648
    %v2429 = vmul.f32 %v2427, 1.442695
    %v2430 = vpow.pop %v2429
    %v2431 = vmul.f32 %v2428, 1.442695
    %v2432 = vpow.pop %v2431
    %v2433 = vadd.f32 %v2430, 1.0
    %v2434 = vadd.f32 %v2432, 1.0
    %v2435 = vrcp.pop %v2433
    %v2436 = vmul.f32 %v2433, %v2435
    %v2437 = vsub.f32 1.0, %v2436
    %v2438 = vmul.f32 %v2435, %v2437
    %v2439 = vadd.f32 %v2435, %v2438
    %vm2440 = vweird.f32 %v2433
    %vm2441 = vweird.f32 %v2435
    %vm2442 = vmor %vm2440, %vm2441
    %v2443 = vsel %vm2442, %v2435, %v2439
    %v2444 = vand.u32 2147483647, %v2433
    %vm2445 = vcmp.eq.f32.partialorder %v2444, 8.507059e+37
    %v2446 = vand.u32 %v2433, 2147483648
    %v2447 = vor.u32 1.1754944e-38, %v2446
    %v2448 = vsel %vm2445, %v2447, %v2443
    %v2449 = vmul.f32 1.0, %v2448
    %v2450 = vrcp.pop %v2434
    %v2451 = vmul.f32 %v2434, %v2450
    %v2452 = vsub.f32 1.0, %v2451
    %v2453 = vmul.f32 %v2450, %v2452
    %v2454 = vadd.f32 %v2450, %v2453
    %vm2455 = vweird.f32 %v2434
    %vm2456 = vweird.f32 %v2450
    %vm2457 = vmor %vm2455, %vm2456
    %v2458 = vsel %vm2457, %v2450, %v2454
    %v2459 = vand.u32 2147483647, %v2434
    %vm2460 = vcmp.eq.f32.partialorder %v2459, 8.507059e+37
    %v2461 = vand.u32 %v2434, 2147483648
    %v2462 = vor.u32 1.1754944e-38, %v2461
    %v2463 = vsel %vm2460, %v2462, %v2458
    %v2464 = vmul.f32 1.0, %v2463
    %v2465 = vadd.f32 %v2334, %v2393
    %v2466 = vadd.f32 %v2337, %v2395
    %v2467 = vxor.u32 %v2465, 2147483648
    %v2468 = vxor.u32 %v2466, 2147483648
    %v2469 = vmul.f32 %v2467, 1.442695
    %v2470 = vpow.pop %v2469
    %v2471 = vmul.f32 %v2468, 1.442695
    %v2472 = vpow.pop %v2471
    %v2473 = vadd.f32 %v2470, 1.0
    %v2474 = vadd.f32 %v2472, 1.0
    %v2475 = vrcp.pop %v2473
    %v2476 = vmul.f32 %v2473, %v2475
    %v2477 = vsub.f32 1.0, %v2476
    %v2478 = vmul.f32 %v2475, %v2477
    %v2479 = vadd.f32 %v2475, %v2478
    %vm2480 = vweird.f32 %v2473
    %vm2481 = vweird.f32 %v2475
    %vm2482 = vmor %vm2480, %vm2481
    %v2483 = vsel %vm2482, %v2475, %v2479
    %v2484 = vand.u32 2147483647, %v2473
    %vm2485 = vcmp.eq.f32.partialorder %v2484, 8.507059e+37
    %v2486 = vand.u32 %v2473, 2147483648
    %v2487 = vor.u32 1.1754944e-38, %v2486
    %v2488 = vsel %vm2485, %v2487, %v2483
    %v2489 = vmul.f32 1.0, %v2488
    %v2490 = vrcp.pop %v2474
    %v2491 = vmul.f32 %v2474, %v2490
    %v2492 = vsub.f32 1.0, %v2491
    %v2493 = vmul.f32 %v2490, %v2492
    %v2494 = vadd.f32 %v2490, %v2493
    %vm2495 = vweird.f32 %v2474
    %vm2496 = vweird.f32 %v2490
    %vm2497 = vmor %vm2495, %vm2496
    %v2498 = vsel %vm2497, %v2490, %v2494
    %v2499 = vand.u32 2147483647, %v2474
    %vm2500 = vcmp.eq.f32.partialorder %v2499, 8.507059e+37
    %v2501 = vand.u32 %v2474, 2147483648
    %v2502 = vor.u32 1.1754944e-38, %v2501
    %v2503 = vsel %vm2500, %v2502, %v2498
    %v2504 = vmul.f32 1.0, %v2503
    %v2505 = vadd.f32 %v2421, %v1253
    %v2506 = vadd.f32 %v2423, %v1257
    %v2507 = vmul.f32 %v2449, %v2505
    %v2508 = vmul.f32 %v2464, %v2506
    %v2509 = vadd.f32 %v2335, %v2507
    %v2510 = vadd.f32 %v2338, %v2508
    %v2511 = vtanh.pop %v2509
    %v2512 = vtanh.pop %v2510
    %v2513 = vsub.f32 1.0, %v2489
    %v2514 = vsub.f32 1.0, %v2504
    %v2515 = vmul.f32 %v2513, %v2511
    %v2516 = vmul.f32 %v2514, %v2512
    %v2517 = vmul.f32 %v2489, %v2331
    %v2518 = vmul.f32 %v2504, %v2332
    %v2519 = vadd.f32 %v2515, %v2517
    %v2520 = vadd.f32 %v2516, %v2518
    %v2521 = vld [vmem:[#allocation2 + $0x78] sm:$0xff]
    %v2522 = vld [vmem:[#allocation2 + $0x80] sm:$0xff]
    %v2523 = vld [vmem:[#allocation2 + $0x88] sm:$0xff]
    %v2524 = vld [vmem:[#allocation3 + $0x30] sm:$0xff]
    %v2525 = vld [vmem:[#allocation3 + $0x38] sm:$0xff]
    %v2526 = vld [vmem:[#allocation3 + $0x40] sm:$0xff]
    %v2527 = vpack.c.bf16 0.0, %v2519
    %v2528 = vpack.c.bf16 %v2520, 0.0
    %2529 = vmatpush.bf16.msra.mxu0 %v1514
    %2530 = vmatpush.bf16.msra.mxu0 %v1511
    %2531 = vmatpush.bf16.msra.mxu0 %v1508
    %2532 = vmatpush.bf16.msra.mxu0 %v1505
    %2533 = vmatpush.bf16.msra.mxu0 %v1502
    %2534 = vmatpush.bf16.msra.mxu0 %v1499
    %2535 = vmatpush.bf16.msra.mxu0 %v1496
    %2536 = vmatpush.bf16.msra.mxu0 %v1493
    %2537 = vmatmul.bf16.gmra.mxu0 %v2527
    %v2538 = vpop.f32.mrf.mxu0
    %v2539 = vadd.f32 0.0, %v2538
    %v2540 = vpop.f32.mrf.mxu0
    %v2541 = vadd.f32 0.0, %v2540
    %2542 = vdwg.mxu0
    %2543 = vmatpush.bf16.msra.mxu0 %v1538
    %2544 = vmatpush.bf16.msra.mxu0 %v1535
    %2545 = vmatpush.bf16.msra.mxu0 %v1532
    %2546 = vmatpush.bf16.msra.mxu0 %v1529
    %2547 = vmatpush.bf16.msra.mxu0 %v1526
    %2548 = vmatpush.bf16.msra.mxu0 %v1523
    %2549 = vmatpush.bf16.msra.mxu0 %v1520
    %2550 = vmatpush.bf16.msra.mxu0 %v1517
    %2551 = vmatmul.bf16.gmra.mxu0 %v2528
    %v2552 = vpop.f32.mrf.mxu0
    %v2553 = vadd.f32 %v2539, %v2552
    %v2554 = vpop.f32.mrf.mxu0
    %v2555 = vadd.f32 %v2541, %v2554
    %2556 = vdwg.mxu0
    %2557 = vmatpush.bf16.msra.mxu0 %v1515
    %2558 = vmatpush.bf16.msra.mxu0 %v1512
    %2559 = vmatpush.bf16.msra.mxu0 %v1509
    %2560 = vmatpush.bf16.msra.mxu0 %v1506
    %2561 = vmatpush.bf16.msra.mxu0 %v1503
    %2562 = vmatpush.bf16.msra.mxu0 %v1500
    %2563 = vmatpush.bf16.msra.mxu0 %v1497
    %2564 = vmatpush.bf16.msra.mxu0 %v1494
    %2565 = vmatmul.bf16.gmra.mxu0 %v2527
    %v2566 = vpop.f32.mrf.mxu0
    %v2567 = vadd.f32 0.0, %v2566
    %v2568 = vpop.f32.mrf.mxu0
    %v2569 = vadd.f32 0.0, %v2568
    %2570 = vdwg.mxu0
    %2571 = vmatpush.bf16.msra.mxu0 %v1539
    %2572 = vmatpush.bf16.msra.mxu0 %v1536
    %2573 = vmatpush.bf16.msra.mxu0 %v1533
    %2574 = vmatpush.bf16.msra.mxu0 %v1530
    %2575 = vmatpush.bf16.msra.mxu0 %v1527
    %2576 = vmatpush.bf16.msra.mxu0 %v1524
    %2577 = vmatpush.bf16.msra.mxu0 %v1521
    %2578 = vmatpush.bf16.msra.mxu0 %v1518
    %2579 = vmatmul.bf16.gmra.mxu0 %v2528
    %v2580 = vpop.f32.mrf.mxu0
    %v2581 = vadd.f32 %v2567, %v2580
    %v2582 = vpop.f32.mrf.mxu0
    %v2583 = vadd.f32 %v2569, %v2582
    %2584 = vdwg.mxu0
    %2585 = vmatpush.bf16.msra.mxu0 %v1516
    %2586 = vmatpush.bf16.msra.mxu0 %v1513
    %2587 = vmatpush.bf16.msra.mxu0 %v1510
    %2588 = vmatpush.bf16.msra.mxu0 %v1507
    %2589 = vmatpush.bf16.msra.mxu0 %v1504
    %2590 = vmatpush.bf16.msra.mxu0 %v1501
    %2591 = vmatpush.bf16.msra.mxu0 %v1498
    %2592 = vmatpush.bf16.msra.mxu0 %v1495
    %2593 = vmatmul.bf16.gmra.mxu0 %v2527
    %v2594 = vpop.f32.mrf.mxu0
    %v2595 = vadd.f32 0.0, %v2594
    %v2596 = vpop.f32.mrf.mxu0
    %v2597 = vadd.f32 0.0, %v2596
    %2598 = vdwg.mxu0
    %2599 = vmatpush.bf16.msra.mxu0 %v1540
    %2600 = vmatpush.bf16.msra.mxu0 %v1537
    %2601 = vmatpush.bf16.msra.mxu0 %v1534
    %2602 = vmatpush.bf16.msra.mxu0 %v1531
    %2603 = vmatpush.bf16.msra.mxu0 %v1528
    %2604 = vmatpush.bf16.msra.mxu0 %v1525
    %2605 = vmatpush.bf16.msra.mxu0 %v1522
    %2606 = vmatpush.bf16.msra.mxu0 %v1519
    %2607 = vmatmul.bf16.gmra.mxu0 %v2528
    %v2608 = vpop.f32.mrf.mxu0
    %v2609 = vadd.f32 %v2595, %v2608
    %v2610 = vpop.f32.mrf.mxu0
    %v2611 = vadd.f32 %v2597, %v2610
    %2612 = vdwg.mxu0
    %v2613 = vadd.f32 %v2521, %v2553
    %v2614 = vadd.f32 %v2524, %v2555
    %v2615 = vxor.u32 %v2613, 2147483648
    %v2616 = vxor.u32 %v2614, 2147483648
    %v2617 = vmul.f32 %v2615, 1.442695
    %v2618 = vpow.pop %v2617
    %v2619 = vmul.f32 %v2616, 1.442695
    %v2620 = vpow.pop %v2619
    %v2621 = vadd.f32 %v2618, 1.0
    %v2622 = vadd.f32 %v2620, 1.0
    %v2623 = vrcp.pop %v2621
    %v2624 = vmul.f32 %v2621, %v2623
    %v2625 = vsub.f32 1.0, %v2624
    %v2626 = vmul.f32 %v2623, %v2625
    %v2627 = vadd.f32 %v2623, %v2626
    %vm2628 = vweird.f32 %v2621
    %vm2629 = vweird.f32 %v2623
    %vm2630 = vmor %vm2628, %vm2629
    %v2631 = vsel %vm2630, %v2623, %v2627
    %v2632 = vand.u32 2147483647, %v2621
    %vm2633 = vcmp.eq.f32.partialorder %v2632, 8.507059e+37
    %v2634 = vand.u32 %v2621, 2147483648
    %v2635 = vor.u32 1.1754944e-38, %v2634
    %v2636 = vsel %vm2633, %v2635, %v2631
    %v2637 = vmul.f32 1.0, %v2636
    %v2638 = vrcp.pop %v2622
    %v2639 = vmul.f32 %v2622, %v2638
    %v2640 = vsub.f32 1.0, %v2639
    %v2641 = vmul.f32 %v2638, %v2640
    %v2642 = vadd.f32 %v2638, %v2641
    %vm2643 = vweird.f32 %v2622
    %vm2644 = vweird.f32 %v2638
    %vm2645 = vmor %vm2643, %vm2644
    %v2646 = vsel %vm2645, %v2638, %v2642
    %v2647 = vand.u32 2147483647, %v2622
    %vm2648 = vcmp.eq.f32.partialorder %v2647, 8.507059e+37
    %v2649 = vand.u32 %v2622, 2147483648
    %v2650 = vor.u32 1.1754944e-38, %v2649
    %v2651 = vsel %vm2648, %v2650, %v2646
    %v2652 = vmul.f32 1.0, %v2651
    %v2653 = vadd.f32 %v2522, %v2581
    %v2654 = vadd.f32 %v2525, %v2583
    %v2655 = vxor.u32 %v2653, 2147483648
    %v2656 = vxor.u32 %v2654, 2147483648
    %v2657 = vmul.f32 %v2655, 1.442695
    %v2658 = vpow.pop %v2657
    %v2659 = vmul.f32 %v2656, 1.442695
    %v2660 = vpow.pop %v2659
    %v2661 = vadd.f32 %v2658, 1.0
    %v2662 = vadd.f32 %v2660, 1.0
    %v2663 = vrcp.pop %v2661
    %v2664 = vmul.f32 %v2661, %v2663
    %v2665 = vsub.f32 1.0, %v2664
    %v2666 = vmul.f32 %v2663, %v2665
    %v2667 = vadd.f32 %v2663, %v2666
    %vm2668 = vweird.f32 %v2661
    %vm2669 = vweird.f32 %v2663
    %vm2670 = vmor %vm2668, %vm2669
    %v2671 = vsel %vm2670, %v2663, %v2667
    %v2672 = vand.u32 2147483647, %v2661
    %vm2673 = vcmp.eq.f32.partialorder %v2672, 8.507059e+37
    %v2674 = vand.u32 %v2661, 2147483648
    %v2675 = vor.u32 1.1754944e-38, %v2674
    %v2676 = vsel %vm2673, %v2675, %v2671
    %v2677 = vmul.f32 1.0, %v2676
    %v2678 = vrcp.pop %v2662
    %v2679 = vmul.f32 %v2662, %v2678
    %v2680 = vsub.f32 1.0, %v2679
    %v2681 = vmul.f32 %v2678, %v2680
    %v2682 = vadd.f32 %v2678, %v2681
    %vm2683 = vweird.f32 %v2662
    %vm2684 = vweird.f32 %v2678
    %vm2685 = vmor %vm2683, %vm2684
    %v2686 = vsel %vm2685, %v2678, %v2682
    %v2687 = vand.u32 2147483647, %v2662
    %vm2688 = vcmp.eq.f32.partialorder %v2687, 8.507059e+37
    %v2689 = vand.u32 %v2662, 2147483648
    %v2690 = vor.u32 1.1754944e-38, %v2689
    %v2691 = vsel %vm2688, %v2690, %v2686
    %v2692 = vmul.f32 1.0, %v2691
    %v2693 = vadd.f32 %v2609, %v1253
    %v2694 = vadd.f32 %v2611, %v1257
    %v2695 = vmul.f32 %v2637, %v2693
    %v2696 = vmul.f32 %v2652, %v2694
    %v2697 = vadd.f32 %v2523, %v2695
    %v2698 = vadd.f32 %v2526, %v2696
    %v2699 = vtanh.pop %v2697
    %v2700 = vtanh.pop %v2698
    %v2701 = vsub.f32 1.0, %v2677
    %v2702 = vsub.f32 1.0, %v2692
    %v2703 = vmul.f32 %v2701, %v2699
    %v2704 = vmul.f32 %v2702, %v2700
    %v2705 = vmul.f32 %v2677, %v2519
    %v2706 = vmul.f32 %v2692, %v2520
    %v2707 = vadd.f32 %v2703, %v2705
    %v2708 = vadd.f32 %v2704, %v2706
    %v2709 = vld [vmem:[#allocation2 + $0x90] sm:$0xff]
    %v2710 = vld [vmem:[#allocation2 + $0x98] sm:$0xff]
    %v2711 = vld [vmem:[#allocation2 + $0xa0] sm:$0xff]
    %v2712 = vld [vmem:[#allocation3 + $0x18] sm:$0xff]
    %v2713 = vld [vmem:[#allocation3 + $0x20] sm:$0xff]
    %v2714 = vld [vmem:[#allocation3 + $0x28] sm:$0xff]
    %v2715 = vpack.c.bf16 0.0, %v2707
    %v2716 = vpack.c.bf16 %v2708, 0.0
    %2717 = vmatpush.bf16.msra.mxu0 %v1514
    %2718 = vmatpush.bf16.msra.mxu0 %v1511
    %2719 = vmatpush.bf16.msra.mxu0 %v1508
    %2720 = vmatpush.bf16.msra.mxu0 %v1505
    %2721 = vmatpush.bf16.msra.mxu0 %v1502
    %2722 = vmatpush.bf16.msra.mxu0 %v1499
    %2723 = vmatpush.bf16.msra.mxu0 %v1496
    %2724 = vmatpush.bf16.msra.mxu0 %v1493
    %2725 = vmatmul.bf16.gmra.mxu0 %v2715
    %v2726 = vpop.f32.mrf.mxu0
    %v2727 = vadd.f32 0.0, %v2726
    %v2728 = vpop.f32.mrf.mxu0
    %v2729 = vadd.f32 0.0, %v2728
    %2730 = vdwg.mxu0
    %2731 = vmatpush.bf16.msra.mxu0 %v1538
    %2732 = vmatpush.bf16.msra.mxu0 %v1535
    %2733 = vmatpush.bf16.msra.mxu0 %v1532
    %2734 = vmatpush.bf16.msra.mxu0 %v1529
    %2735 = vmatpush.bf16.msra.mxu0 %v1526
    %2736 = vmatpush.bf16.msra.mxu0 %v1523
    %2737 = vmatpush.bf16.msra.mxu0 %v1520
    %2738 = vmatpush.bf16.msra.mxu0 %v1517
    %2739 = vmatmul.bf16.gmra.mxu0 %v2716
    %v2740 = vpop.f32.mrf.mxu0
    %v2741 = vadd.f32 %v2727, %v2740
    %v2742 = vpop.f32.mrf.mxu0
    %v2743 = vadd.f32 %v2729, %v2742
    %2744 = vdwg.mxu0
    %2745 = vmatpush.bf16.msra.mxu0 %v1515
    %2746 = vmatpush.bf16.msra.mxu0 %v1512
    %2747 = vmatpush.bf16.msra.mxu0 %v1509
    %2748 = vmatpush.bf16.msra.mxu0 %v1506
    %2749 = vmatpush.bf16.msra.mxu0 %v1503
    %2750 = vmatpush.bf16.msra.mxu0 %v1500
    %2751 = vmatpush.bf16.msra.mxu0 %v1497
    %2752 = vmatpush.bf16.msra.mxu0 %v1494
    %2753 = vmatmul.bf16.gmra.mxu0 %v2715
    %v2754 = vpop.f32.mrf.mxu0
    %v2755 = vadd.f32 0.0, %v2754
    %v2756 = vpop.f32.mrf.mxu0
    %v2757 = vadd.f32 0.0, %v2756
    %2758 = vdwg.mxu0
    %2759 = vmatpush.bf16.msra.mxu0 %v1539
    %2760 = vmatpush.bf16.msra.mxu0 %v1536
    %2761 = vmatpush.bf16.msra.mxu0 %v1533
    %2762 = vmatpush.bf16.msra.mxu0 %v1530
    %2763 = vmatpush.bf16.msra.mxu0 %v1527
    %2764 = vmatpush.bf16.msra.mxu0 %v1524
    %2765 = vmatpush.bf16.msra.mxu0 %v1521
    %2766 = vmatpush.bf16.msra.mxu0 %v1518
    %2767 = vmatmul.bf16.gmra.mxu0 %v2716
    %v2768 = vpop.f32.mrf.mxu0
    %v2769 = vadd.f32 %v2755, %v2768
    %v2770 = vpop.f32.mrf.mxu0
    %v2771 = vadd.f32 %v2757, %v2770
    %2772 = vdwg.mxu0
    %2773 = vmatpush.bf16.msra.mxu0 %v1516
    %2774 = vmatpush.bf16.msra.mxu0 %v1513
    %2775 = vmatpush.bf16.msra.mxu0 %v1510
    %2776 = vmatpush.bf16.msra.mxu0 %v1507
    %2777 = vmatpush.bf16.msra.mxu0 %v1504
    %2778 = vmatpush.bf16.msra.mxu0 %v1501
    %2779 = vmatpush.bf16.msra.mxu0 %v1498
    %2780 = vmatpush.bf16.msra.mxu0 %v1495
    %2781 = vmatmul.bf16.gmra.mxu0 %v2715
    %v2782 = vpop.f32.mrf.mxu0
    %v2783 = vadd.f32 0.0, %v2782
    %v2784 = vpop.f32.mrf.mxu0
    %v2785 = vadd.f32 0.0, %v2784
    %2786 = vdwg.mxu0
    %2787 = vmatpush.bf16.msra.mxu0 %v1540
    %2788 = vmatpush.bf16.msra.mxu0 %v1537
    %2789 = vmatpush.bf16.msra.mxu0 %v1534
    %2790 = vmatpush.bf16.msra.mxu0 %v1531
    %2791 = vmatpush.bf16.msra.mxu0 %v1528
    %2792 = vmatpush.bf16.msra.mxu0 %v1525
    %2793 = vmatpush.bf16.msra.mxu0 %v1522
    %2794 = vmatpush.bf16.msra.mxu0 %v1519
    %2795 = vmatmul.bf16.gmra.mxu0 %v2716
    %v2796 = vpop.f32.mrf.mxu0
    %v2797 = vadd.f32 %v2783, %v2796
    %v2798 = vpop.f32.mrf.mxu0
    %v2799 = vadd.f32 %v2785, %v2798
    %2800 = vdwg.mxu0
    %v2801 = vadd.f32 %v2709, %v2741
    %v2802 = vadd.f32 %v2712, %v2743
    %v2803 = vxor.u32 %v2801, 2147483648
    %v2804 = vxor.u32 %v2802, 2147483648
    %v2805 = vmul.f32 %v2803, 1.442695
    %v2806 = vpow.pop %v2805
    %v2807 = vmul.f32 %v2804, 1.442695
    %v2808 = vpow.pop %v2807
    %v2809 = vadd.f32 %v2806, 1.0
    %v2810 = vadd.f32 %v2808, 1.0
    %v2811 = vrcp.pop %v2809
    %v2812 = vmul.f32 %v2809, %v2811
    %v2813 = vsub.f32 1.0, %v2812
    %v2814 = vmul.f32 %v2811, %v2813
    %v2815 = vadd.f32 %v2811, %v2814
    %vm2816 = vweird.f32 %v2809
    %vm2817 = vweird.f32 %v2811
    %vm2818 = vmor %vm2816, %vm2817
    %v2819 = vsel %vm2818, %v2811, %v2815
    %v2820 = vand.u32 2147483647, %v2809
    %vm2821 = vcmp.eq.f32.partialorder %v2820, 8.507059e+37
    %v2822 = vand.u32 %v2809, 2147483648
    %v2823 = vor.u32 1.1754944e-38, %v2822
    %v2824 = vsel %vm2821, %v2823, %v2819
    %v2825 = vmul.f32 1.0, %v2824
    %v2826 = vrcp.pop %v2810
    %v2827 = vmul.f32 %v2810, %v2826
    %v2828 = vsub.f32 1.0, %v2827
    %v2829 = vmul.f32 %v2826, %v2828
    %v2830 = vadd.f32 %v2826, %v2829
    %vm2831 = vweird.f32 %v2810
    %vm2832 = vweird.f32 %v2826
    %vm2833 = vmor %vm2831, %vm2832
    %v2834 = vsel %vm2833, %v2826, %v2830
    %v2835 = vand.u32 2147483647, %v2810
    %vm2836 = vcmp.eq.f32.partialorder %v2835, 8.507059e+37
    %v2837 = vand.u32 %v2810, 2147483648
    %v2838 = vor.u32 1.1754944e-38, %v2837
    %v2839 = vsel %vm2836, %v2838, %v2834
    %v2840 = vmul.f32 1.0, %v2839
    %v2841 = vadd.f32 %v2710, %v2769
    %v2842 = vadd.f32 %v2713, %v2771
    %v2843 = vxor.u32 %v2841, 2147483648
    %v2844 = vxor.u32 %v2842, 2147483648
    %v2845 = vmul.f32 %v2843, 1.442695
    %v2846 = vpow.pop %v2845
    %v2847 = vmul.f32 %v2844, 1.442695
    %v2848 = vpow.pop %v2847
    %v2849 = vadd.f32 %v2846, 1.0
    %v2850 = vadd.f32 %v2848, 1.0
    %v2851 = vrcp.pop %v2849
    %v2852 = vmul.f32 %v2849, %v2851
    %v2853 = vsub.f32 1.0, %v2852
    %v2854 = vmul.f32 %v2851, %v2853
    %v2855 = vadd.f32 %v2851, %v2854
    %vm2856 = vweird.f32 %v2849
    %vm2857 = vweird.f32 %v2851
    %vm2858 = vmor %vm2856, %vm2857
    %v2859 = vsel %vm2858, %v2851, %v2855
    %v2860 = vand.u32 2147483647, %v2849
    %vm2861 = vcmp.eq.f32.partialorder %v2860, 8.507059e+37
    %v2862 = vand.u32 %v2849, 2147483648
    %v2863 = vor.u32 1.1754944e-38, %v2862
    %v2864 = vsel %vm2861, %v2863, %v2859
    %v2865 = vmul.f32 1.0, %v2864
    %v2866 = vrcp.pop %v2850
    %v2867 = vmul.f32 %v2850, %v2866
    %v2868 = vsub.f32 1.0, %v2867
    %v2869 = vmul.f32 %v2866, %v2868
    %v2870 = vadd.f32 %v2866, %v2869
    %vm2871 = vweird.f32 %v2850
    %vm2872 = vweird.f32 %v2866
    %vm2873 = vmor %vm2871, %vm2872
    %v2874 = vsel %vm2873, %v2866, %v2870
    %v2875 = vand.u32 2147483647, %v2850
    %vm2876 = vcmp.eq.f32.partialorder %v2875, 8.507059e+37
    %v2877 = vand.u32 %v2850, 2147483648
    %v2878 = vor.u32 1.1754944e-38, %v2877
    %v2879 = vsel %vm2876, %v2878, %v2874
    %v2880 = vmul.f32 1.0, %v2879
    %v2881 = vadd.f32 %v2797, %v1253
    %v2882 = vadd.f32 %v2799, %v1257
    %v2883 = vmul.f32 %v2825, %v2881
    %v2884 = vmul.f32 %v2840, %v2882
    %v2885 = vadd.f32 %v2711, %v2883
    %v2886 = vadd.f32 %v2714, %v2884
    %v2887 = vtanh.pop %v2885
    %v2888 = vtanh.pop %v2886
    %v2889 = vsub.f32 1.0, %v2865
    %v2890 = vsub.f32 1.0, %v2880
    %v2891 = vmul.f32 %v2889, %v2887
    %v2892 = vmul.f32 %v2890, %v2888
    %v2893 = vmul.f32 %v2865, %v2707
    %v2894 = vmul.f32 %v2880, %v2708
    %v2895 = vadd.f32 %v2891, %v2893
    %v2896 = vadd.f32 %v2892, %v2894
    %v2897 = vld [vmem:[#allocation2 + $0xa8] sm:$0xff]
    %v2898 = vld [vmem:[#allocation2 + $0xb0] sm:$0xff]
    %v2899 = vld [vmem:[#allocation2 + $0xb8] sm:$0xff]
    %v2900 = vld [vmem:[#allocation3] sm:$0xff]
    %v2901 = vld [vmem:[#allocation3 + $0x8] sm:$0xff]
    %v2902 = vld [vmem:[#allocation3 + $0x10] sm:$0xff]
    %v2903 = vpack.c.bf16 0.0, %v2895
    %v2904 = vpack.c.bf16 %v2896, 0.0
    %2905 = vmatpush.bf16.msra.mxu0 %v1514
    %2906 = vmatpush.bf16.msra.mxu0 %v1511
    %2907 = vmatpush.bf16.msra.mxu0 %v1508
    %2908 = vmatpush.bf16.msra.mxu0 %v1505
    %2909 = vmatpush.bf16.msra.mxu0 %v1502
    %2910 = vmatpush.bf16.msra.mxu0 %v1499
    %2911 = vmatpush.bf16.msra.mxu0 %v1496
    %2912 = vmatpush.bf16.msra.mxu0 %v1493
    %2913 = vmatmul.bf16.gmra.mxu0 %v2903
    %v2914 = vpop.f32.mrf.mxu0
    %v2915 = vadd.f32 0.0, %v2914
    %v2916 = vpop.f32.mrf.mxu0
    %v2917 = vadd.f32 0.0, %v2916
    %2918 = vdwg.mxu0
    %2919 = vmatpush.bf16.msra.mxu0 %v1538
    %2920 = vmatpush.bf16.msra.mxu0 %v1535
    %2921 = vmatpush.bf16.msra.mxu0 %v1532
    %2922 = vmatpush.bf16.msra.mxu0 %v1529
    %2923 = vmatpush.bf16.msra.mxu0 %v1526
    %2924 = vmatpush.bf16.msra.mxu0 %v1523
    %2925 = vmatpush.bf16.msra.mxu0 %v1520
    %2926 = vmatpush.bf16.msra.mxu0 %v1517
    %2927 = vmatmul.bf16.gmra.mxu0 %v2904
    %v2928 = vpop.f32.mrf.mxu0
    %v2929 = vadd.f32 %v2915, %v2928
    %v2930 = vpop.f32.mrf.mxu0
    %v2931 = vadd.f32 %v2917, %v2930
    %2932 = vdwg.mxu0
    %2933 = vmatpush.bf16.msra.mxu0 %v1515
    %2934 = vmatpush.bf16.msra.mxu0 %v1512
    %2935 = vmatpush.bf16.msra.mxu0 %v1509
    %2936 = vmatpush.bf16.msra.mxu0 %v1506
    %2937 = vmatpush.bf16.msra.mxu0 %v1503
    %2938 = vmatpush.bf16.msra.mxu0 %v1500
    %2939 = vmatpush.bf16.msra.mxu0 %v1497
    %2940 = vmatpush.bf16.msra.mxu0 %v1494
    %2941 = vmatmul.bf16.gmra.mxu0 %v2903
    %v2942 = vpop.f32.mrf.mxu0
    %v2943 = vadd.f32 0.0, %v2942
    %v2944 = vpop.f32.mrf.mxu0
    %v2945 = vadd.f32 0.0, %v2944
    %2946 = vdwg.mxu0
    %2947 = vmatpush.bf16.msra.mxu0 %v1539
    %2948 = vmatpush.bf16.msra.mxu0 %v1536
    %2949 = vmatpush.bf16.msra.mxu0 %v1533
    %2950 = vmatpush.bf16.msra.mxu0 %v1530
    %2951 = vmatpush.bf16.msra.mxu0 %v1527
    %2952 = vmatpush.bf16.msra.mxu0 %v1524
    %2953 = vmatpush.bf16.msra.mxu0 %v1521
    %2954 = vmatpush.bf16.msra.mxu0 %v1518
    %2955 = vmatmul.bf16.gmra.mxu0 %v2904
    %v2956 = vpop.f32.mrf.mxu0
    %v2957 = vadd.f32 %v2943, %v2956
    %v2958 = vpop.f32.mrf.mxu0
    %v2959 = vadd.f32 %v2945, %v2958
    %2960 = vdwg.mxu0
    %2961 = vmatpush.bf16.msra.mxu0 %v1516
    %2962 = vmatpush.bf16.msra.mxu0 %v1513
    %2963 = vmatpush.bf16.msra.mxu0 %v1510
    %2964 = vmatpush.bf16.msra.mxu0 %v1507
    %2965 = vmatpush.bf16.msra.mxu0 %v1504
    %2966 = vmatpush.bf16.msra.mxu0 %v1501
    %2967 = vmatpush.bf16.msra.mxu0 %v1498
    %2968 = vmatpush.bf16.msra.mxu0 %v1495
    %2969 = vmatmul.bf16.gmra.mxu0 %v2903
    %v2970 = vpop.f32.mrf.mxu0
    %v2971 = vadd.f32 0.0, %v2970
    %v2972 = vpop.f32.mrf.mxu0
    %v2973 = vadd.f32 0.0, %v2972
    %2974 = vdwg.mxu0
    %2975 = vmatpush.bf16.msra.mxu0 %v1540
    %2976 = vmatpush.bf16.msra.mxu0 %v1537
    %2977 = vmatpush.bf16.msra.mxu0 %v1534
    %2978 = vmatpush.bf16.msra.mxu0 %v1531
    %2979 = vmatpush.bf16.msra.mxu0 %v1528
    %2980 = vmatpush.bf16.msra.mxu0 %v1525
    %2981 = vmatpush.bf16.msra.mxu0 %v1522
    %2982 = vmatpush.bf16.msra.mxu0 %v1519
    %2983 = vmatmul.bf16.gmra.mxu0 %v2904
    %v2984 = vpop.f32.mrf.mxu0
    %v2985 = vadd.f32 %v2971, %v2984
    %v2986 = vpop.f32.mrf.mxu0
    %v2987 = vadd.f32 %v2973, %v2986
    %2988 = vdwg.mxu0
    %v2989 = vadd.f32 %v2897, %v2929
    %v2990 = vadd.f32 %v2900, %v2931
    %v2991 = vxor.u32 %v2989, 2147483648
    %v2992 = vxor.u32 %v2990, 2147483648
    %v2993 = vmul.f32 %v2991, 1.442695
    %v2994 = vpow.pop %v2993
    %v2995 = vmul.f32 %v2992, 1.442695
    %v2996 = vpow.pop %v2995
    %v2997 = vadd.f32 %v2994, 1.0
    %v2998 = vadd.f32 %v2996, 1.0
    %v2999 = vrcp.pop %v2997
    %v3000 = vmul.f32 %v2997, %v2999
    %v3001 = vsub.f32 1.0, %v3000
    %v3002 = vmul.f32 %v2999, %v3001
    %v3003 = vadd.f32 %v2999, %v3002
    %vm3004 = vweird.f32 %v2997
    %vm3005 = vweird.f32 %v2999
    %vm3006 = vmor %vm3004, %vm3005
    %v3007 = vsel %vm3006, %v2999, %v3003
    %v3008 = vand.u32 2147483647, %v2997
    %vm3009 = vcmp.eq.f32.partialorder %v3008, 8.507059e+37
    %v3010 = vand.u32 %v2997, 2147483648
    %v3011 = vor.u32 1.1754944e-38, %v3010
    %v3012 = vsel %vm3009, %v3011, %v3007
    %v3013 = vmul.f32 1.0, %v3012
    %v3014 = vrcp.pop %v2998
    %v3015 = vmul.f32 %v2998, %v3014
    %v3016 = vsub.f32 1.0, %v3015
    %v3017 = vmul.f32 %v3014, %v3016
    %v3018 = vadd.f32 %v3014, %v3017
    %vm3019 = vweird.f32 %v2998
    %vm3020 = vweird.f32 %v3014
    %vm3021 = vmor %vm3019, %vm3020
    %v3022 = vsel %vm3021, %v3014, %v3018
    %v3023 = vand.u32 2147483647, %v2998
    %vm3024 = vcmp.eq.f32.partialorder %v3023, 8.507059e+37
    %v3025 = vand.u32 %v2998, 2147483648
    %v3026 = vor.u32 1.1754944e-38, %v3025
    %v3027 = vsel %vm3024, %v3026, %v3022
    %v3028 = vmul.f32 1.0, %v3027
    %v3029 = vadd.f32 %v2898, %v2957
    %v3030 = vadd.f32 %v2901, %v2959
    %v3031 = vxor.u32 %v3029, 2147483648
    %v3032 = vxor.u32 %v3030, 2147483648
    %v3033 = vmul.f32 %v3031, 1.442695
    %v3034 = vpow.pop %v3033
    %v3035 = vmul.f32 %v3032, 1.442695
    %v3036 = vpow.pop %v3035
    %v3037 = vadd.f32 %v3034, 1.0
    %v3038 = vadd.f32 %v3036, 1.0
    %v3039 = vrcp.pop %v3037
    %v3040 = vmul.f32 %v3037, %v3039
    %v3041 = vsub.f32 1.0, %v3040
    %v3042 = vmul.f32 %v3039, %v3041
    %v3043 = vadd.f32 %v3039, %v3042
    %vm3044 = vweird.f32 %v3037
    %vm3045 = vweird.f32 %v3039
    %vm3046 = vmor %vm3044, %vm3045
    %v3047 = vsel %vm3046, %v3039, %v3043
    %v3048 = vand.u32 2147483647, %v3037
    %vm3049 = vcmp.eq.f32.partialorder %v3048, 8.507059e+37
    %v3050 = vand.u32 %v3037, 2147483648
    %v3051 = vor.u32 1.1754944e-38, %v3050
    %v3052 = vsel %vm3049, %v3051, %v3047
    %v3053 = vmul.f32 1.0, %v3052
    %v3054 = vrcp.pop %v3038
    %v3055 = vmul.f32 %v3038, %v3054
    %v3056 = vsub.f32 1.0, %v3055
    %v3057 = vmul.f32 %v3054, %v3056
    %v3058 = vadd.f32 %v3054, %v3057
    %vm3059 = vweird.f32 %v3038
    %vm3060 = vweird.f32 %v3054
    %vm3061 = vmor %vm3059, %vm3060
    %v3062 = vsel %vm3061, %v3054, %v3058
    %v3063 = vand.u32 2147483647, %v3038
    %vm3064 = vcmp.eq.f32.partialorder %v3063, 8.507059e+37
    %v3065 = vand.u32 %v3038, 2147483648
    %v3066 = vor.u32 1.1754944e-38, %v3065
    %v3067 = vsel %vm3064, %v3066, %v3062
    %v3068 = vmul.f32 1.0, %v3067
    %v3069 = vadd.f32 %v2985, %v1253
    %v3070 = vadd.f32 %v2987, %v1257
    %v3071 = vmul.f32 %v3013, %v3069
    %v3072 = vmul.f32 %v3028, %v3070
    %v3073 = vadd.f32 %v2899, %v3071
    %v3074 = vadd.f32 %v2902, %v3072
    %v3075 = vtanh.pop %v3073
    %v3076 = vtanh.pop %v3074
    %v3077 = vsub.f32 1.0, %v3053
    %v3078 = vsub.f32 1.0, %v3068
    %v3079 = vmul.f32 %v3077, %v3075
    %v3080 = vmul.f32 %v3078, %v3076
    %v3081 = vmul.f32 %v3053, %v2895
    %v3082 = vmul.f32 %v3068, %v2896
    %v3083 = vadd.f32 %v3079, %v3081
    %v3084 = vadd.f32 %v3080, %v3082
    %3085 = vst [vmem:[#allocation4] sm:$0xff] %v3083
    %3086 = vst [vmem:[#allocation4 + $0x8] sm:$0xff] %v3084
    // Predicated region
    $region54: #{lstm_classifier_forward.3} parent=1 // pred_check
      %p3087 = pneg %p81
    $region55: #{lstm_classifier_forward.3} parent=1 // pred_check_branch
      %3089 = sbr.rel (%p3087) target = $region57
    $region56: #{lstm_classifier_forward.3} parent=1 // pred_region
      %3090 = vst [vmem:[%s9] sm:$0xff] %v3083
      %3091 = vst [vmem:[%s10] sm:$0xff] %v3084
    $region57: #{lstm_classifier_forward.3} parent=1 // pred_fallthru
      _
    // Predicated region
    $region58: #{lstm_classifier_forward.3} parent=1 // pred_check
      _
    $region59: #{lstm_classifier_forward.3} parent=1 // pred_check_branch
      %3093 = sbr.rel (0) target = $region61
    $region60: #{lstm_classifier_forward.3} parent=1 // pred_region
      _
    $region61: #{lstm_classifier_forward.3} parent=1 // pred_fallthru
      _
    // Predicated region
    $region62: #{lstm_classifier_forward.3} parent=1 // pred_check
      _
    $region63: #{lstm_classifier_forward.3} parent=1 // pred_check_branch
      %3095 = sbr.rel (0) target = $region65
    $region64: #{lstm_classifier_forward.3} parent=1 // pred_region
      _
    $region65: #{lstm_classifier_forward.3} parent=1 // pred_fallthru
      _
    // Predicated region
    $region66: #{lstm_classifier_forward.3} parent=1 // pred_check
      _
    $region67: #{lstm_classifier_forward.3} parent=1 // pred_check_branch
      %3097 = sbr.rel (0) target = $region69
    $region68: #{lstm_classifier_forward.3} parent=1 // pred_region
      _
    $region69: #{lstm_classifier_forward.3} parent=1 // pred_fallthru
      _
    // Predicated region
    $region70: #{lstm_classifier_forward.3} parent=1 // pred_check
      _
    $region71: #{lstm_classifier_forward.3} parent=1 // pred_check_branch
      %3099 = sbr.rel (0) target = $region73
    $region72: #{lstm_classifier_forward.3} parent=1 // pred_region
      _
    $region73: #{lstm_classifier_forward.3} parent=1 // pred_fallthru
      _
    %3100 = vsyncpa [#allocation6], 1
    %3101 = vsyncpa [#allocation8], 1

</llo_original>
